<compile_context>
chip_gen: v5e
topology: v5e:2x2
jax: 0.10.0
libtpu: 0.0.40
codegen_flags: <defaults>
</compile_context>

<pallas_src>
import functools

import jax
import jax.numpy as jnp
import numpy as np
from jax.experimental import pallas as pl
from jax.experimental.pallas import tpu as pltpu

# Matmul input dtype.  f32 keeps numerical parity with the f32 reference at the
# 5e-3 tolerance used below; set to jnp.bfloat16 (accumulation stays f32 via
# preferred_element_type) if ~1e-2 output tolerance is acceptable.
MATMUL_DTYPE = jnp.float32
VMEM_LIMIT = 32 * 1024 * 1024   # explicit scoped-VMEM budget (fits v5e/v6e/v7x)
LANE = 128


def _round_up(x, m):
    return ((x + m - 1) // m) * m


def _pick_tm(m):
    """Largest row tile that divides M, is a multiple of 8 and keeps >=2 grid
    steps (so both v7x TensorCores get work)."""
    for tm in (1024, 512, 256, 128, 64, 32, 16, 8):
        if m % tm == 0 and m // tm >= 2:
            return tm
    return m


# ----------------------------------------------------------------------------
# Pallas kernels
# ----------------------------------------------------------------------------
def _write_stats(y, stats_ref):
    # stats[0] = column sums, stats[1] = column sums of squares for this M tile
    # (fused BN pass 1).  Rows 2..7 are zero filler to keep the store aligned.
    row = jax.lax.broadcasted_iota(jnp.int32, stats_ref.shape, 0)
    s1 = jnp.sum(y, axis=0, keepdims=True)
    s2 = jnp.sum(y * y, axis=0, keepdims=True)
    stats_ref[...] = jnp.where(row == 0, s1, jnp.where(row == 1, s2, 0.0))


def _matmul_stats_kernel(a_ref, b_ref, o_ref, stats_ref):
    # First layer: plain matmul (raw latent input, no preceding activation).
    y = jnp.dot(a_ref[...], b_ref[...], preferred_element_type=jnp.float32)
    o_ref[...] = y
    _write_stats(y, stats_ref)


def _affine_lrelu_matmul_stats_kernel(a_ref, s_ref, t_ref, b_ref, o_ref,
                                      stats_ref):
    # Fused: previous layer's BN (per-column scale/shift) + LeakyReLU(0.1)
    # applied to the patch tile, then MXU matmul, then BN stats of the output.
    a = a_ref[...] * s_ref[...] + t_ref[...]
    a = jnp.where(a >= 0, a, 0.1 * a)
    y = jnp.dot(a, b_ref[...], preferred_element_type=jnp.float32)
    o_ref[...] = y
    _write_stats(y, stats_ref)


def _affine_lrelu_matmul_tanh_kernel(a_ref, s_ref, t_ref, b_ref, o_ref):
    # Final layer: previous BN + LeakyReLU prologue, matmul, Tanh epilogue.
    a = a_ref[...] * s_ref[...] + t_ref[...]
    a = jnp.where(a >= 0, a, 0.1 * a)
    o_ref[...] = jnp.tanh(
        jnp.dot(a, b_ref[...], preferred_element_type=jnp.float32))


def _matmul_tanh_kernel(a_ref, b_ref, o_ref):
    o_ref[...] = jnp.tanh(
        jnp.dot(a_ref[...], b_ref[...], preferred_element_type=jnp.float32))


# ----------------------------------------------------------------------------
# Pallas wrappers
# ----------------------------------------------------------------------------
def _in_specs(tm, k, n, with_affine):
    specs = [pl.BlockSpec((tm, k), lambda i: (i, 0))]
    if with_affine:
        specs += [pl.BlockSpec((1, k), lambda i: (0, 0)),
                  pl.BlockSpec((1, k), lambda i: (0, 0))]
    specs += [pl.BlockSpec((k, n), lambda i: (0, 0))]
    return specs


def matmul_bn_stats(a, b, s_cols=None, t_cols=None):
    """out = [lrelu(a*s+t)] @ b, plus per-column sum / sum-of-squares of out."""
    m, k = a.shape
    _, n = b.shape
    tm = _pick_tm(m)
    g = m // tm
    a = a.astype(MATMUL_DTYPE)
    b = b.astype(MATMUL_DTYPE)
    with_affine = s_cols is not None
    kernel = (_affine_lrelu_matmul_stats_kernel if with_affine
              else _matmul_stats_kernel)
    operands = [a]
    if with_affine:
        operands += [s_cols.reshape(1, k).astype(jnp.float32),
                     t_cols.reshape(1, k).astype(jnp.float32)]
    operands += [b]
    out, stats = pl.pallas_call(
        kernel,
        out_shape=(jax.ShapeDtypeStruct((m, n), jnp.float32),
                   jax.ShapeDtypeStruct((g * 8, n), jnp.float32)),
        grid=(g,),
        in_specs=_in_specs(tm, k, n, with_affine),
        out_specs=(pl.BlockSpec((tm, n), lambda i: (i, 0)),
                   pl.BlockSpec((8, n), lambda i: (i, 0))),
        compiler_params=pltpu.CompilerParams(
            dimension_semantics=("parallel",), vmem_limit_bytes=VMEM_LIMIT),
    )(*operands)
    stats = stats.reshape(g, 8, n)
    return out, stats[:, 0, :].sum(axis=0), stats[:, 1, :].sum(axis=0)


def matmul_tanh(a, b, s_cols=None, t_cols=None):
    m, k = a.shape
    _, n = b.shape
    tm = _pick_tm(m)
    a = a.astype(MATMUL_DTYPE)
    b = b.astype(MATMUL_DTYPE)
    with_affine = s_cols is not None
    kernel = (_affine_lrelu_matmul_tanh_kernel if with_affine
              else _matmul_tanh_kernel)
    operands = [a]
    if with_affine:
        operands += [s_cols.reshape(1, k).astype(jnp.float32),
                     t_cols.reshape(1, k).astype(jnp.float32)]
    operands += [b]
    return pl.pallas_call(
        kernel,
        out_shape=jax.ShapeDtypeStruct((m, n), jnp.float32),
        grid=(m // tm,),
        in_specs=_in_specs(tm, k, n, with_affine),
        out_specs=pl.BlockSpec((tm, n), lambda i: (i, 0)),
        compiler_params=pltpu.CompilerParams(
            dimension_semantics=("parallel",), vmem_limit_bytes=VMEM_LIMIT),
    )(*operands)


# ----------------------------------------------------------------------------
# Sub-pixel decomposition of the transposed convs (XLA glue)
# ----------------------------------------------------------------------------
# The module only uses two per-dim configs:
#   (k=4, s=2, p=1): output o = 2*b + r.  Phase r=0 uses inputs {b-1, b} with
#       taps {3, 1}; phase r=1 uses {b, b+1} with taps {2, 0}.  -> window of 3
#       input positions (spatial pad 1 each side); unused tap = None.
#   (k=1, s=1, p=0): identity along that dim.
_STRIDED = dict(window=3, phases=2, pad=1, taps=((3, 1, None), (None, 2, 0)))
_UNIT = dict(window=1, phases=1, pad=0, taps=((0,),))


def build_patches(x, dims, pad_value=None):
    """x: (N, D, H, W, C) channel-last -> (N*D*H*W, nwin*C) patches.
    No dilation zeros are ever materialized.  `pad_value` (per channel) lets
    the spatial padding represent the raw value whose BN-affine image is 0."""
    n, d, h, w, c = x.shape
    dd, dh, dw = dims
    pads = ((0, 0), (dd["pad"],) * 2, (dh["pad"],) * 2, (dw["pad"],) * 2, (0, 0))
    if pad_value is None:
        xp = jnp.pad(x, pads)
    else:
        v = pad_value.reshape(1, 1, 1, 1, c).astype(x.dtype)
        xp = jnp.pad(x - v, pads) + v
    slices = []
    for ud in range(dd["window"]):
        for uh in range(dh["window"]):
            for uw in range(dw["window"]):
                slices.append(xp[:, ud:ud + d, uh:uh + h, uw:uw + w, :])
    p = jnp.stack(slices, axis=4)              # (N, D, H, W, nwin, C)
    return p.reshape(n * d * h * w, len(slices) * c)


def build_phase_weight(w, dims, n_pad):
    """w: PyTorch ConvTranspose3d weight (Cin, Cout, KD, KH, KW) ->
    (nwin*Cin, n_pad) phase-combined matmul weight, zero-padded to n_pad lanes."""
    cin, cout = w.shape[0], w.shape[1]
    dd, dh, dw = dims
    zeros = jnp.zeros((cin, cout), w.dtype)
    phase_blocks = []
    for rd in range(dd["phases"]):
        for rh in range(dh["phases"]):
            for rw in range(dw["phases"]):
                rows = []
                for ud in range(dd["window"]):
                    for uh in range(dh["window"]):
                        for uw in range(dw["window"]):
                            td = dd["taps"][rd][ud]
                            th = dh["taps"][rh][uh]
                            tw = dw["taps"][rw][uw]
                            if td is None or th is None or tw is None:
                                rows.append(zeros)
                            else:
                                rows.append(w[:, :, td, th, tw])
                phase_blocks.append(jnp.stack(rows, axis=0))  # (nwin, Cin, Cout)
    wp = jnp.stack(phase_blocks, axis=2)        # (nwin, Cin, nphase, Cout)
    nwin, _, nph, _ = wp.shape
    w2 = wp.reshape(nwin * cin, nph * cout)
    return jnp.pad(w2, ((0, 0), (0, n_pad - nph * cout)))


def phase_to_spatial(y, spatial_in, dims, cout):
    """y: (N*D*H*W, >=nphase*cout) phase-combined -> (N, Do, Ho, Wo, cout)."""
    n, d, h, w = spatial_in
    pd, ph, pw = dims[0]["phases"], dims[1]["phases"], dims[2]["phases"]
    y = y[:, :pd * ph * pw * cout]
    y = y.reshape(n, d, h, w, pd, ph, pw, cout)
    y = y.transpose(0, 1, 4, 2, 5, 3, 6, 7)
    return y.reshape(n, d * pd, h * ph, w * pw, cout)


# ----------------------------------------------------------------------------
# Decoder forward (Pallas path) and pure-JAX reference
# ----------------------------------------------------------------------------
def _bn_affine(col_sum, col_sq, nph, cout, count, gamma, beta):
    """Per-channel BN scale/shift from fused column statistics (train mode)."""
    ch_sum = col_sum[:nph * cout].reshape(nph, cout).sum(axis=0)
    ch_sq = col_sq[:nph * cout].reshape(nph, cout).sum(axis=0)
    mean = ch_sum / count
    var = ch_sq / count - mean * mean            # biased (train-mode) var
    inv = jax.lax.rsqrt(var + 1e-5)
    scale_c = gamma * inv
    shift_c = beta - mean * scale_c
    return scale_c, shift_c


def decoder_forward_pallas(z, params):
    # NCDHW -> channel-last once; stay channel-last / phase-combined after.
    x = jnp.transpose(z, (0, 2, 3, 4, 1)).astype(jnp.float32)

    y = None                 # raw (pre-BN) phase-combined output of prev layer
    scale_c = shift_c = None  # pending BN affine of the layer that produced y
    spatial_rows = None       # (n, d, h, w) grid indexing the rows of y
    eff_dims = None           # phase structure of y's columns
    cur_cout = None           # channels per phase in y's columns
    cur_nph = None            # number of phases per row of y

    for p in params:
        dims = p["dims"]
        cout = p["cout"]
        is_unit = all(dd["window"] == 1 for dd in dims)

        if y is None:
            # First layer: consumes the raw latent; no fused activation prologue.
            n, d, h, w, _ = x.shape
            a = build_patches(x, dims)
            s_cols = t_cols = None
            nph = dims[0]["phases"] * dims[1]["phases"] * dims[2]["phases"]
            n_pad = _round_up(nph * cout, LANE)
            w2 = build_phase_weight(p["w"], dims, n_pad)
            spatial_rows, eff_dims, cur_cout, cur_nph = (n, d, h, w), dims, cout, nph
        elif is_unit:
            # 1x1x1 layer: stay in the phase-combined layout (no pixel-shuffle,
            # no patch build).  Weight becomes block-diagonal across inherited
            # phases; the pending BN+LeakyReLU is fused into this kernel.
            k_prev = y.shape[1]
            cin = scale_c.shape[0]
            a = y
            s_cols = jnp.pad(jnp.tile(scale_c, cur_nph),
                             (0, k_prev - cur_nph * cin))
            t_cols = jnp.pad(jnp.tile(shift_c, cur_nph),
                             (0, k_prev - cur_nph * cin))
            w2d = p["w"][:, :, 0, 0, 0]                            # (cin, cout)
            wbd = jnp.kron(jnp.eye(cur_nph, dtype=w2d.dtype), w2d)
            n_pad = _round_up(cur_nph * cout, LANE)
            w2 = jnp.pad(wbd, ((0, k_prev - wbd.shape[0]),
                               (0, n_pad - wbd.shape[1])))
            cur_cout = cout
            # spatial_rows / eff_dims / cur_nph unchanged
        else:
            # Strided layer: needs spatial neighbourhoods -> pixel-shuffle the
            # raw output once, build zero-free patches.  Pending BN+LeakyReLU is
            # fused into this kernel; the conv's zero-padding of the normalized
            # activation is reproduced by padding the raw one with -shift/scale.
            x_raw = phase_to_spatial(y, spatial_rows, eff_dims, cur_cout)
            n, d, h, w, _ = x_raw.shape
            safe = jnp.where(scale_c != 0, scale_c, 1.0)
            v = jnp.where(scale_c != 0, -shift_c / safe, 0.0)
            a = build_patches(x_raw, dims, pad_value=v)
            nwin = dims[0]["window"] * dims[1]["window"] * dims[2]["window"]
            nph = dims[0]["phases"] * dims[1]["phases"] * dims[2]["phases"]
            s_cols = jnp.tile(scale_c, nwin)
            t_cols = jnp.tile(shift_c, nwin)
            n_pad = _round_up(nph * cout, LANE)
            w2 = build_phase_weight(p["w"], dims, n_pad)
            spatial_rows, eff_dims, cur_cout, cur_nph = (n, d, h, w), dims, cout, nph

        if p["bn"]:
            y, col_sum, col_sq = matmul_bn_stats(a, w2, s_cols, t_cols)
            count = a.shape[0] * cur_nph        # = N*Do*Ho*Wo of this layer
            scale_c, shift_c = _bn_affine(col_sum, col_sq, cur_nph, cout, count,
                                          p["gamma"], p["beta"])
        else:
            y = matmul_tanh(a, w2, s_cols, t_cols)   # Tanh fused in epilogue

    out = phase_to_spatial(y, spatial_rows, eff_dims, cur_cout)
    return jnp.transpose(out, (0, 4, 1, 2, 3))        # back to NCDHW


def _ref_conv_transpose3d(x, w, stride, pad):
    kd, kh, kw = w.shape[2:]
    pd, ph, pw = pad
    wf = jnp.flip(w, axis=(2, 3, 4)).transpose(1, 0, 2, 3, 4)  # (Cout, Cin, ...)
    return jax.lax.conv_general_dilated(
        x, wf, window_strides=(1, 1, 1),
        padding=[(kd - 1 - pd, kd - 1 - pd),
                 (kh - 1 - ph, kh - 1 - ph),
                 (kw - 1 - pw, kw - 1 - pw)],
        lhs_dilation=stride,
        dimension_numbers=("NCDHW", "OIDHW", "NCDHW"),
        precision=jax.lax.Precision.HIGHEST)


def _ref_bn_lrelu(x, gamma, beta):
    mean = x.mean(axis=(0, 2, 3, 4), keepdims=True)
    var = ((x - mean) ** 2).mean(axis=(0, 2, 3, 4), keepdims=True)
    xn = (x - mean) / jnp.sqrt(var + 1e-5)
    y = xn * gamma.reshape(1, -1, 1, 1, 1) + beta.reshape(1, -1, 1, 1, 1)
    return jnp.where(y >= 0, y, 0.1 * y)


def decoder_forward_ref(z, params):
    x = z
    for p in params:
        x = _ref_conv_transpose3d(x, p["w"], p["stride"], p["pad"])
        if p["bn"]:
            x = _ref_bn_lrelu(x, p["gamma"], p["beta"])
        else:
            x = jnp.tanh(x)
    return x


# ----------------------------------------------------------------------------
# Deterministic parameter init (mirrors the module __init__ shapes)
# ----------------------------------------------------------------------------
def init_params(key, i3d_nch=4, nch=4, out_channels=3):
    S, U = _STRIDED, _UNIT
    specs = [
        # cin,     cout,          kernel,    stride,    pad,       dims,      bn
        (i3d_nch,  nch * 8,       (4, 4, 4), (2, 2, 2), (1, 1, 1), (S, S, S), True),
        (nch * 8,  nch * 4,       (1, 4, 4), (1, 2, 2), (0, 1, 1), (U, S, S), True),
        (nch * 4,  nch * 2,       (1, 4, 4), (1, 2, 2), (0, 1, 1), (U, S, S), True),
        (nch * 2,  nch * 1,       (1, 1, 1), (1, 1, 1), (0, 0, 0), (U, U, U), True),
        (nch * 1,  out_channels,  (1, 1, 1), (1, 1, 1), (0, 0, 0), (U, U, U), False),
    ]
    params = []
    for (cin, cout, k, s, p, dims, bn) in specs:
        key, k1, k2, k3 = jax.random.split(key, 4)
        w = 0.05 * jax.random.normal(k1, (cin, cout) + k, jnp.float32)
        gamma = (1.0 + 0.1 * jax.random.normal(k2, (cout,), jnp.float32)) if bn else None
        beta = (0.1 * jax.random.normal(k3, (cout,), jnp.float32)) if bn else None
        params.append(dict(w=w, gamma=gamma, beta=beta, stride=s, pad=p,
                           dims=dims, cout=cout, bn=bn))
    return params


if __name__ == "__main__":
    key = jax.random.PRNGKey(0)
    key, kz = jax.random.split(key)
    # small cfg: i3d_nch=4, nch=4, out_channels=3; latent z is NCDHW
    params = init_params(key, i3d_nch=4, nch=4, out_channels=3)
    z = 0.5 * jax.random.normal(kz, (2, 4, 2, 4, 4), jnp.float32)

    out = jax.jit(functools.partial(decoder_forward_pallas, params=params))(z)
    out = jax.block_until_ready(out)

    ref = jax.block_until_ready(decoder_forward_ref(z, params))

    assert out.shape == (2, 3, 4, 32, 32), out.shape
    err = float(np.max(np.abs(np.asarray(out) - np.asarray(ref))))
    assert np.allclose(np.asarray(out), np.asarray(ref), rtol=5e-3, atol=5e-3), err
    print("KERNEL_OK")
</pallas_src>

<mosaic_0001>
module attributes {stable_mosaic.version = 11 : i64} {
  func.func @_matmul_stats_kernel(%arg0: i32, %arg1: memref<32x108xf32, #tpu.memory_space<vmem>>, %arg2: memref<108x256xf32, #tpu.memory_space<vmem>>, %arg3: memref<32x256xf32, #tpu.memory_space<vmem>>, %arg4: memref<8x256xf32, #tpu.memory_space<vmem>>) attributes {dimension_semantics = [#tpu.dimension_semantics<parallel>], iteration_bounds = array<i64: 2>, scalar_prefetch = 0 : i64, scratch_operands = 0 : i64, tpu.core_type = #tpu.core_type<tc>, window_params = [{transform_indices = @transform_0, window_bounds = array<i64: 32, 108>}, {pipeline_mode = #tpu.pipeline_mode<synchronous>, transform_indices = @transform_1, window_bounds = array<i64: 108, 256>}, {transform_indices = @transform_2, window_bounds = array<i64: 32, 256>}, {transform_indices = @transform_3, window_bounds = array<i64: 8, 256>}]} {
    %c0 = arith.constant 0 : index
    %c0_0 = arith.constant 0 : index
    %0 = vector.load %arg1[%c0, %c0_0] : memref<32x108xf32, #tpu.memory_space<vmem>>, vector<32x108xf32>
    %c0_1 = arith.constant 0 : index
    %c0_2 = arith.constant 0 : index
    %1 = vector.load %arg2[%c0_1, %c0_2] : memref<108x256xf32, #tpu.memory_space<vmem>>, vector<108x256xf32>
    %cst = arith.constant dense<0.000000e+00> : vector<32x256xf32>
    %2 = tpu.matmul %0, %1, %cst {dimension_numbers = #tpu.dot_dimension_numbers<[1], [0], [0], [1], [0, 0, 1, 1], [], []>} : vector<32x108xf32>, vector<108x256xf32>, vector<32x256xf32> -> vector<32x256xf32>
    %c0_3 = arith.constant 0 : index
    %c0_4 = arith.constant 0 : index
    %3 = vector.load %arg3[%c0_3, %c0_4] : memref<32x256xf32, #tpu.memory_space<vmem>>, vector<32x256xf32>
    tpu.vector_store %arg3[%c0_3, %c0_4], %2 {strides = array<i32>} : memref<32x256xf32, #tpu.memory_space<vmem>>, vector<32x256xf32>,
    %4 = tpu.iota {dimensions = array<i32: 0>} : vector<8x256xi32>
    %cst_5 = arith.constant dense<0.000000e+00> : vector<256xf32>
    %5 = vector.multi_reduction <add>, %2, %cst_5 [0] : vector<32x256xf32> to vector<256xf32>
    %6 = vector.shape_cast %5 : vector<256xf32> to vector<1x256xf32>
    %7 = arith.mulf %2, %2 : vector<32x256xf32>
    %cst_6 = arith.constant dense<0.000000e+00> : vector<256xf32>
    %8 = vector.multi_reduction <add>, %7, %cst_6 [0] : vector<32x256xf32> to vector<256xf32>
    %9 = vector.shape_cast %8 : vector<256xf32> to vector<1x256xf32>
    %c0_i32 = arith.constant 0 : i32
    %10 = vector.broadcast %c0_i32 : i32 to vector<8x256xi32>
    %11 = arith.cmpi eq, %4, %10 : vector<8x256xi32>
    %c1_i32 = arith.constant 1 : i32
    %12 = vector.broadcast %c1_i32 : i32 to vector<8x256xi32>
    %13 = arith.cmpi eq, %4, %12 : vector<8x256xi32>
    %cst_7 = arith.constant 0.000000e+00 : f32
    %14 = vector.shape_cast %9 : vector<1x256xf32> to vector<1x256xf32>
    %15 = vector.broadcast %14 : vector<1x256xf32> to vector<8x256xf32>
    %16 = vector.broadcast %cst_7 : f32 to vector<8x256xf32>
    %17 = arith.select %13, %15, %16 : vector<8x256xi1>, vector<8x256xf32>
    %18 = vector.shape_cast %6 : vector<1x256xf32> to vector<1x256xf32>
    %19 = vector.broadcast %18 : vector<1x256xf32> to vector<8x256xf32>
    %20 = arith.select %11, %19, %17 : vector<8x256xi1>, vector<8x256xf32>
    %c0_8 = arith.constant 0 : index
    %c0_9 = arith.constant 0 : index
    %21 = vector.load %arg4[%c0_8, %c0_9] : memref<8x256xf32, #tpu.memory_space<vmem>>, vector<8x256xf32>
    tpu.vector_store %arg4[%c0_8, %c0_9], %20 {strides = array<i32>} : memref<8x256xf32, #tpu.memory_space<vmem>>, vector<8x256xf32>,
    return
  }
  func.func @transform_0(%arg0: i32) -> (i32, i32) {
    %c0_i32 = arith.constant 0 : i32
    %c0_i32_0 = arith.constant 0 : i32
    return %arg0, %c0_i32 : i32, i32
  }
  func.func @transform_1(%arg0: i32) -> (i32, i32) {
    %c0_i32 = arith.constant 0 : i32
    %c0_i32_0 = arith.constant 0 : i32
    %c0_i32_1 = arith.constant 0 : i32
    return %c0_i32, %c0_i32_0 : i32, i32
  }
  func.func @transform_2(%arg0: i32) -> (i32, i32) {
    %c0_i32 = arith.constant 0 : i32
    %c0_i32_0 = arith.constant 0 : i32
    return %arg0, %c0_i32 : i32, i32
  }
  func.func @transform_3(%arg0: i32) -> (i32, i32) {
    %c0_i32 = arith.constant 0 : i32
    %c0_i32_0 = arith.constant 0 : i32
    return %arg0, %c0_i32 : i32, i32
  }
}

module attributes {stable_mosaic.version = 11 : i64} {
  func.func @_affine_lrelu_matmul_stats_kernel(%arg0: i32, %arg1: memref<256x288xf32, #tpu.memory_space<vmem>>, %arg2: memref<1x288xf32, #tpu.memory_space<vmem>>, %arg3: memref<1x288xf32, #tpu.memory_space<vmem>>, %arg4: memref<288x128xf32, #tpu.memory_space<vmem>>, %arg5: memref<256x128xf32, #tpu.memory_space<vmem>>, %arg6: memref<8x128xf32, #tpu.memory_space<vmem>>) attributes {dimension_semantics = [#tpu.dimension_semantics<parallel>], iteration_bounds = array<i64: 2>, scalar_prefetch = 0 : i64, scratch_operands = 0 : i64, tpu.core_type = #tpu.core_type<tc>, window_params = [{transform_indices = @transform_0, window_bounds = array<i64: 256, 288>}, {pipeline_mode = #tpu.pipeline_mode<synchronous>, transform_indices = @transform_1, window_bounds = array<i64: 1, 288>}, {pipeline_mode = #tpu.pipeline_mode<synchronous>, transform_indices = @transform_2, window_bounds = array<i64: 1, 288>}, {pipeline_mode = #tpu.pipeline_mode<synchronous>, transform_indices = @transform_3, window_bounds = array<i64: 288, 128>}, {transform_indices = @transform_4, window_bounds = array<i64: 256, 128>}, {transform_indices = @transform_5, window_bounds = array<i64: 8, 128>}]} {
    %c0 = arith.constant 0 : index
    %c0_0 = arith.constant 0 : index
    %0 = vector.load %arg1[%c0, %c0_0] : memref<256x288xf32, #tpu.memory_space<vmem>>, vector<256x288xf32>
    %c0_1 = arith.constant 0 : index
    %c0_2 = arith.constant 0 : index
    %1 = vector.load %arg2[%c0_1, %c0_2] : memref<1x288xf32, #tpu.memory_space<vmem>>, vector<1x288xf32>
    %2 = vector.broadcast %1 : vector<1x288xf32> to vector<256x288xf32>
    %3 = arith.mulf %0, %2 : vector<256x288xf32>
    %c0_3 = arith.constant 0 : index
    %c0_4 = arith.constant 0 : index
    %4 = vector.load %arg3[%c0_3, %c0_4] : memref<1x288xf32, #tpu.memory_space<vmem>>, vector<1x288xf32>
    %5 = vector.broadcast %4 : vector<1x288xf32> to vector<256x288xf32>
    %6 = arith.addf %3, %5 : vector<256x288xf32>
    %cst = arith.constant 0.000000e+00 : f32
    %7 = vector.broadcast %cst : f32 to vector<256x288xf32>
    %8 = arith.cmpf oge, %6, %7 : vector<256x288xf32>
    %cst_5 = arith.constant 1.000000e-01 : f32
    %9 = vector.broadcast %cst_5 : f32 to vector<256x288xf32>
    %10 = arith.mulf %9, %6 : vector<256x288xf32>
    %11 = arith.select %8, %6, %10 : vector<256x288xi1>, vector<256x288xf32>
    %c0_6 = arith.constant 0 : index
    %c0_7 = arith.constant 0 : index
    %12 = vector.load %arg4[%c0_6, %c0_7] : memref<288x128xf32, #tpu.memory_space<vmem>>, vector<288x128xf32>
    %cst_8 = arith.constant dense<0.000000e+00> : vector<256x128xf32>
    %13 = tpu.matmul %11, %12, %cst_8 {dimension_numbers = #tpu.dot_dimension_numbers<[1], [0], [0], [1], [0, 0, 1, 1], [], []>} : vector<256x288xf32>, vector<288x128xf32>, vector<256x128xf32> -> vector<256x128xf32>
    %c0_9 = arith.constant 0 : index
    %c0_10 = arith.constant 0 : index
    %14 = vector.load %arg5[%c0_9, %c0_10] : memref<256x128xf32, #tpu.memory_space<vmem>>, vector<256x128xf32>
    tpu.vector_store %arg5[%c0_9, %c0_10], %13 {strides = array<i32>} : memref<256x128xf32, #tpu.memory_space<vmem>>, vector<256x128xf32>,
    %15 = tpu.iota {dimensions = array<i32: 0>} : vector<8x128xi32>
    %cst_11 = arith.constant dense<0.000000e+00> : vector<128xf32>
    %16 = vector.multi_reduction <add>, %13, %cst_11 [0] : vector<256x128xf32> to vector<128xf32>
    %17 = vector.shape_cast %16 : vector<128xf32> to vector<1x128xf32>
    %18 = arith.mulf %13, %13 : vector<256x128xf32>
    %cst_12 = arith.constant dense<0.000000e+00> : vector<128xf32>
    %19 = vector.multi_reduction <add>, %18, %cst_12 [0] : vector<256x128xf32> to vector<128xf32>
    %20 = vector.shape_cast %19 : vector<128xf32> to vector<1x128xf32>
    %c0_i32 = arith.constant 0 : i32
    %21 = vector.broadcast %c0_i32 : i32 to vector<8x128xi32>
    %22 = arith.cmpi eq, %15, %21 : vector<8x128xi32>
    %c1_i32 = arith.constant 1 : i32
    %23 = vector.broadcast %c1_i32 : i32 to vector<8x128xi32>
    %24 = arith.cmpi eq, %15, %23 : vector<8x128xi32>
    %cst_13 = arith.constant 0.000000e+00 : f32
    %25 = vector.shape_cast %20 : vector<1x128xf32> to vector<1x128xf32>
    %26 = vector.broadcast %25 : vector<1x128xf32> to vector<8x128xf32>
    %27 = vector.broadcast %cst_13 : f32 to vector<8x128xf32>
    %28 = arith.select %24, %26, %27 : vector<8x128xi1>, vector<8x128xf32>
    %29 = vector.shape_cast %17 : vector<1x128xf32> to vector<1x128xf32>
    %30 = vector.broadcast %29 : vector<1x128xf32> to vector<8x128xf32>
    %31 = arith.select %22, %30, %28 : vector<8x128xi1>, vector<8x128xf32>
    %c0_14 = arith.constant 0 : index
    %c0_15 = arith.constant 0 : index
    %32 = vector.load %arg6[%c0_14, %c0_15] : memref<8x128xf32, #tpu.memory_space<vmem>>, vector<8x128xf32>
    tpu.vector_store %arg6[%c0_14, %c0_15], %31 {strides = array<i32>} : memref<8x128xf32, #tpu.memory_space<vmem>>, vector<8x128xf32>,
    return
  }
  func.func @transform_0(%arg0: i32) -> (i32, i32) {
    %c0_i32 = arith.constant 0 : i32
    %c0_i32_0 = arith.constant 0 : i32
    return %arg0, %c0_i32 : i32, i32
  }
  func.func @transform_1(%arg0: i32) -> (i32, i32) {
    %c0_i32 = arith.constant 0 : i32
    %c0_i32_0 = arith.constant 0 : i32
    %c0_i32_1 = arith.constant 0 : i32
    return %c0_i32, %c0_i32_0 : i32, i32
  }
  func.func @transform_2(%arg0: i32) -> (i32, i32) {
    %c0_i32 = arith.constant 0 : i32
    %c0_i32_0 = arith.constant 0 : i32
    %c0_i32_1 = arith.constant 0 : i32
    return %c0_i32, %c0_i32_0 : i32, i32
  }
  func.func @transform_3(%arg0: i32) -> (i32, i32) {
    %c0_i32 = arith.constant 0 : i32
    %c0_i32_0 = arith.constant 0 : i32
    %c0_i32_1 = arith.constant 0 : i32
    return %c0_i32, %c0_i32_0 : i32, i32
  }
  func.func @transform_4(%arg0: i32) -> (i32, i32) {
    %c0_i32 = arith.constant 0 : i32
    %c0_i32_0 = arith.constant 0 : i32
    return %arg0, %c0_i32 : i32, i32
  }
  func.func @transform_5(%arg0: i32) -> (i32, i32) {
    %c0_i32 = arith.constant 0 : i32
    %c0_i32_0 = arith.constant 0 : i32
    return %arg0, %c0_i32 : i32, i32
  }
}

module attributes {stable_mosaic.version = 11 : i64} {
  func.func @_affine_lrelu_matmul_stats_kernel(%arg0: i32, %arg1: memref<1024x144xf32, #tpu.memory_space<vmem>>, %arg2: memref<1x144xf32, #tpu.memory_space<vmem>>, %arg3: memref<1x144xf32, #tpu.memory_space<vmem>>, %arg4: memref<144x128xf32, #tpu.memory_space<vmem>>, %arg5: memref<1024x128xf32, #tpu.memory_space<vmem>>, %arg6: memref<8x128xf32, #tpu.memory_space<vmem>>) attributes {dimension_semantics = [#tpu.dimension_semantics<parallel>], iteration_bounds = array<i64: 2>, scalar_prefetch = 0 : i64, scratch_operands = 0 : i64, tpu.core_type = #tpu.core_type<tc>, window_params = [{transform_indices = @transform_0, window_bounds = array<i64: 1024, 144>}, {pipeline_mode = #tpu.pipeline_mode<synchronous>, transform_indices = @transform_1, window_bounds = array<i64: 1, 144>}, {pipeline_mode = #tpu.pipeline_mode<synchronous>, transform_indices = @transform_2, window_bounds = array<i64: 1, 144>}, {pipeline_mode = #tpu.pipeline_mode<synchronous>, transform_indices = @transform_3, window_bounds = array<i64: 144, 128>}, {transform_indices = @transform_4, window_bounds = array<i64: 1024, 128>}, {transform_indices = @transform_5, window_bounds = array<i64: 8, 128>}]} {
    %c0 = arith.constant 0 : index
    %c0_0 = arith.constant 0 : index
    %0 = vector.load %arg1[%c0, %c0_0] : memref<1024x144xf32, #tpu.memory_space<vmem>>, vector<1024x144xf32>
    %c0_1 = arith.constant 0 : index
    %c0_2 = arith.constant 0 : index
    %1 = vector.load %arg2[%c0_1, %c0_2] : memref<1x144xf32, #tpu.memory_space<vmem>>, vector<1x144xf32>
    %2 = vector.broadcast %1 : vector<1x144xf32> to vector<1024x144xf32>
    %3 = arith.mulf %0, %2 : vector<1024x144xf32>
    %c0_3 = arith.constant 0 : index
    %c0_4 = arith.constant 0 : index
    %4 = vector.load %arg3[%c0_3, %c0_4] : memref<1x144xf32, #tpu.memory_space<vmem>>, vector<1x144xf32>
    %5 = vector.broadcast %4 : vector<1x144xf32> to vector<1024x144xf32>
    %6 = arith.addf %3, %5 : vector<1024x144xf32>
    %cst = arith.constant 0.000000e+00 : f32
    %7 = vector.broadcast %cst : f32 to vector<1024x144xf32>
    %8 = arith.cmpf oge, %6, %7 : vector<1024x144xf32>
    %cst_5 = arith.constant 1.000000e-01 : f32
    %9 = vector.broadcast %cst_5 : f32 to vector<1024x144xf32>
    %10 = arith.mulf %9, %6 : vector<1024x144xf32>
    %11 = arith.select %8, %6, %10 : vector<1024x144xi1>, vector<1024x144xf32>
    %c0_6 = arith.constant 0 : index
    %c0_7 = arith.constant 0 : index
    %12 = vector.load %arg4[%c0_6, %c0_7] : memref<144x128xf32, #tpu.memory_space<vmem>>, vector<144x128xf32>
    %cst_8 = arith.constant dense<0.000000e+00> : vector<1024x128xf32>
    %13 = tpu.matmul %11, %12, %cst_8 {dimension_numbers = #tpu.dot_dimension_numbers<[1], [0], [0], [1], [0, 0, 1, 1], [], []>} : vector<1024x144xf32>, vector<144x128xf32>, vector<1024x128xf32> -> vector<1024x128xf32>
    %c0_9 = arith.constant 0 : index
    %c0_10 = arith.constant 0 : index
    %14 = vector.load %arg5[%c0_9, %c0_10] : memref<1024x128xf32, #tpu.memory_space<vmem>>, vector<1024x128xf32>
    tpu.vector_store %arg5[%c0_9, %c0_10], %13 {strides = array<i32>} : memref<1024x128xf32, #tpu.memory_space<vmem>>, vector<1024x128xf32>,
    %15 = tpu.iota {dimensions = array<i32: 0>} : vector<8x128xi32>
    %cst_11 = arith.constant dense<0.000000e+00> : vector<128xf32>
    %16 = vector.multi_reduction <add>, %13, %cst_11 [0] : vector<1024x128xf32> to vector<128xf32>
    %17 = vector.shape_cast %16 : vector<128xf32> to vector<1x128xf32>
    %18 = arith.mulf %13, %13 : vector<1024x128xf32>
    %cst_12 = arith.constant dense<0.000000e+00> : vector<128xf32>
    %19 = vector.multi_reduction <add>, %18, %cst_12 [0] : vector<1024x128xf32> to vector<128xf32>
    %20 = vector.shape_cast %19 : vector<128xf32> to vector<1x128xf32>
    %c0_i32 = arith.constant 0 : i32
    %21 = vector.broadcast %c0_i32 : i32 to vector<8x128xi32>
    %22 = arith.cmpi eq, %15, %21 : vector<8x128xi32>
    %c1_i32 = arith.constant 1 : i32
    %23 = vector.broadcast %c1_i32 : i32 to vector<8x128xi32>
    %24 = arith.cmpi eq, %15, %23 : vector<8x128xi32>
    %cst_13 = arith.constant 0.000000e+00 : f32
    %25 = vector.shape_cast %20 : vector<1x128xf32> to vector<1x128xf32>
    %26 = vector.broadcast %25 : vector<1x128xf32> to vector<8x128xf32>
    %27 = vector.broadcast %cst_13 : f32 to vector<8x128xf32>
    %28 = arith.select %24, %26, %27 : vector<8x128xi1>, vector<8x128xf32>
    %29 = vector.shape_cast %17 : vector<1x128xf32> to vector<1x128xf32>
    %30 = vector.broadcast %29 : vector<1x128xf32> to vector<8x128xf32>
    %31 = arith.select %22, %30, %28 : vector<8x128xi1>, vector<8x128xf32>
    %c0_14 = arith.constant 0 : index
    %c0_15 = arith.constant 0 : index
    %32 = vector.load %arg6[%c0_14, %c0_15] : memref<8x128xf32, #tpu.memory_space<vmem>>, vector<8x128xf32>
    tpu.vector_store %arg6[%c0_14, %c0_15], %31 {strides = array<i32>} : memref<8x128xf32, #tpu.memory_space<vmem>>, vector<8x128xf32>,
    return
  }
  func.func @transform_0(%arg0: i32) -> (i32, i32) {
    %c0_i32 = arith.constant 0 : i32
    %c0_i32_0 = arith.constant 0 : i32
    return %arg0, %c0_i32 : i32, i32
  }
  func.func @transform_1(%arg0: i32) -> (i32, i32) {
    %c0_i32 = arith.constant 0 : i32
    %c0_i32_0 = arith.constant 0 : i32
    %c0_i32_1 = arith.constant 0 : i32
    return %c0_i32, %c0_i32_0 : i32, i32
  }
  func.func @transform_2(%arg0: i32) -> (i32, i32) {
    %c0_i32 = arith.constant 0 : i32
    %c0_i32_0 = arith.constant 0 : i32
    %c0_i32_1 = arith.constant 0 : i32
    return %c0_i32, %c0_i32_0 : i32, i32
  }
  func.func @transform_3(%arg0: i32) -> (i32, i32) {
    %c0_i32 = arith.constant 0 : i32
    %c0_i32_0 = arith.constant 0 : i32
    %c0_i32_1 = arith.constant 0 : i32
    return %c0_i32, %c0_i32_0 : i32, i32
  }
  func.func @transform_4(%arg0: i32) -> (i32, i32) {
    %c0_i32 = arith.constant 0 : i32
    %c0_i32_0 = arith.constant 0 : i32
    return %arg0, %c0_i32 : i32, i32
  }
  func.func @transform_5(%arg0: i32) -> (i32, i32) {
    %c0_i32 = arith.constant 0 : i32
    %c0_i32_0 = arith.constant 0 : i32
    return %arg0, %c0_i32 : i32, i32
  }
}

module attributes {stable_mosaic.version = 11 : i64} {
  func.func @_affine_lrelu_matmul_stats_kernel(%arg0: i32, %arg1: memref<1024x128xf32, #tpu.memory_space<vmem>>, %arg2: memref<1x128xf32, #tpu.memory_space<vmem>>, %arg3: memref<1x128xf32, #tpu.memory_space<vmem>>, %arg4: memref<128x128xf32, #tpu.memory_space<vmem>>, %arg5: memref<1024x128xf32, #tpu.memory_space<vmem>>, %arg6: memref<8x128xf32, #tpu.memory_space<vmem>>) attributes {dimension_semantics = [#tpu.dimension_semantics<parallel>], iteration_bounds = array<i64: 2>, scalar_prefetch = 0 : i64, scratch_operands = 0 : i64, tpu.core_type = #tpu.core_type<tc>, window_params = [{transform_indices = @transform_0, window_bounds = array<i64: 1024, 128>}, {pipeline_mode = #tpu.pipeline_mode<synchronous>, transform_indices = @transform_1, window_bounds = array<i64: 1, 128>}, {pipeline_mode = #tpu.pipeline_mode<synchronous>, transform_indices = @transform_2, window_bounds = array<i64: 1, 128>}, {pipeline_mode = #tpu.pipeline_mode<synchronous>, transform_indices = @transform_3, window_bounds = array<i64: 128, 128>}, {transform_indices = @transform_4, window_bounds = array<i64: 1024, 128>}, {transform_indices = @transform_5, window_bounds = array<i64: 8, 128>}]} {
    %c0 = arith.constant 0 : index
    %c0_0 = arith.constant 0 : index
    %0 = vector.load %arg1[%c0, %c0_0] : memref<1024x128xf32, #tpu.memory_space<vmem>>, vector<1024x128xf32>
    %c0_1 = arith.constant 0 : index
    %c0_2 = arith.constant 0 : index
    %1 = vector.load %arg2[%c0_1, %c0_2] : memref<1x128xf32, #tpu.memory_space<vmem>>, vector<1x128xf32>
    %2 = vector.broadcast %1 : vector<1x128xf32> to vector<1024x128xf32>
    %3 = arith.mulf %0, %2 : vector<1024x128xf32>
    %c0_3 = arith.constant 0 : index
    %c0_4 = arith.constant 0 : index
    %4 = vector.load %arg3[%c0_3, %c0_4] : memref<1x128xf32, #tpu.memory_space<vmem>>, vector<1x128xf32>
    %5 = vector.broadcast %4 : vector<1x128xf32> to vector<1024x128xf32>
    %6 = arith.addf %3, %5 : vector<1024x128xf32>
    %cst = arith.constant 0.000000e+00 : f32
    %7 = vector.broadcast %cst : f32 to vector<1024x128xf32>
    %8 = arith.cmpf oge, %6, %7 : vector<1024x128xf32>
    %cst_5 = arith.constant 1.000000e-01 : f32
    %9 = vector.broadcast %cst_5 : f32 to vector<1024x128xf32>
    %10 = arith.mulf %9, %6 : vector<1024x128xf32>
    %11 = arith.select %8, %6, %10 : vector<1024x128xi1>, vector<1024x128xf32>
    %c0_6 = arith.constant 0 : index
    %c0_7 = arith.constant 0 : index
    %12 = vector.load %arg4[%c0_6, %c0_7] : memref<128x128xf32, #tpu.memory_space<vmem>>, vector<128x128xf32>
    %cst_8 = arith.constant dense<0.000000e+00> : vector<1024x128xf32>
    %13 = tpu.matmul %11, %12, %cst_8 {dimension_numbers = #tpu.dot_dimension_numbers<[1], [0], [0], [1], [0, 0, 1, 1], [], []>} : vector<1024x128xf32>, vector<128x128xf32>, vector<1024x128xf32> -> vector<1024x128xf32>
    %c0_9 = arith.constant 0 : index
    %c0_10 = arith.constant 0 : index
    %14 = vector.load %arg5[%c0_9, %c0_10] : memref<1024x128xf32, #tpu.memory_space<vmem>>, vector<1024x128xf32>
    tpu.vector_store %arg5[%c0_9, %c0_10], %13 {strides = array<i32>} : memref<1024x128xf32, #tpu.memory_space<vmem>>, vector<1024x128xf32>,
    %15 = tpu.iota {dimensions = array<i32: 0>} : vector<8x128xi32>
    %cst_11 = arith.constant dense<0.000000e+00> : vector<128xf32>
    %16 = vector.multi_reduction <add>, %13, %cst_11 [0] : vector<1024x128xf32> to vector<128xf32>
    %17 = vector.shape_cast %16 : vector<128xf32> to vector<1x128xf32>
    %18 = arith.mulf %13, %13 : vector<1024x128xf32>
    %cst_12 = arith.constant dense<0.000000e+00> : vector<128xf32>
    %19 = vector.multi_reduction <add>, %18, %cst_12 [0] : vector<1024x128xf32> to vector<128xf32>
    %20 = vector.shape_cast %19 : vector<128xf32> to vector<1x128xf32>
    %c0_i32 = arith.constant 0 : i32
    %21 = vector.broadcast %c0_i32 : i32 to vector<8x128xi32>
    %22 = arith.cmpi eq, %15, %21 : vector<8x128xi32>
    %c1_i32 = arith.constant 1 : i32
    %23 = vector.broadcast %c1_i32 : i32 to vector<8x128xi32>
    %24 = arith.cmpi eq, %15, %23 : vector<8x128xi32>
    %cst_13 = arith.constant 0.000000e+00 : f32
    %25 = vector.shape_cast %20 : vector<1x128xf32> to vector<1x128xf32>
    %26 = vector.broadcast %25 : vector<1x128xf32> to vector<8x128xf32>
    %27 = vector.broadcast %cst_13 : f32 to vector<8x128xf32>
    %28 = arith.select %24, %26, %27 : vector<8x128xi1>, vector<8x128xf32>
    %29 = vector.shape_cast %17 : vector<1x128xf32> to vector<1x128xf32>
    %30 = vector.broadcast %29 : vector<1x128xf32> to vector<8x128xf32>
    %31 = arith.select %22, %30, %28 : vector<8x128xi1>, vector<8x128xf32>
    %c0_14 = arith.constant 0 : index
    %c0_15 = arith.constant 0 : index
    %32 = vector.load %arg6[%c0_14, %c0_15] : memref<8x128xf32, #tpu.memory_space<vmem>>, vector<8x128xf32>
    tpu.vector_store %arg6[%c0_14, %c0_15], %31 {strides = array<i32>} : memref<8x128xf32, #tpu.memory_space<vmem>>, vector<8x128xf32>,
    return
  }
  func.func @transform_0(%arg0: i32) -> (i32, i32) {
    %c0_i32 = arith.constant 0 : i32
    %c0_i32_0 = arith.constant 0 : i32
    return %arg0, %c0_i32 : i32, i32
  }
  func.func @transform_1(%arg0: i32) -> (i32, i32) {
    %c0_i32 = arith.constant 0 : i32
    %c0_i32_0 = arith.constant 0 : i32
    %c0_i32_1 = arith.constant 0 : i32
    return %c0_i32, %c0_i32_0 : i32, i32
  }
  func.func @transform_2(%arg0: i32) -> (i32, i32) {
    %c0_i32 = arith.constant 0 : i32
    %c0_i32_0 = arith.constant 0 : i32
    %c0_i32_1 = arith.constant 0 : i32
    return %c0_i32, %c0_i32_0 : i32, i32
  }
  func.func @transform_3(%arg0: i32) -> (i32, i32) {
    %c0_i32 = arith.constant 0 : i32
    %c0_i32_0 = arith.constant 0 : i32
    %c0_i32_1 = arith.constant 0 : i32
    return %c0_i32, %c0_i32_0 : i32, i32
  }
  func.func @transform_4(%arg0: i32) -> (i32, i32) {
    %c0_i32 = arith.constant 0 : i32
    %c0_i32_0 = arith.constant 0 : i32
    return %arg0, %c0_i32 : i32, i32
  }
  func.func @transform_5(%arg0: i32) -> (i32, i32) {
    %c0_i32 = arith.constant 0 : i32
    %c0_i32_0 = arith.constant 0 : i32
    return %arg0, %c0_i32 : i32, i32
  }
}

module attributes {stable_mosaic.version = 11 : i64} {
  func.func @_affine_lrelu_matmul_tanh_kernel(%arg0: i32, %arg1: memref<1024x128xf32, #tpu.memory_space<vmem>>, %arg2: memref<1x128xf32, #tpu.memory_space<vmem>>, %arg3: memref<1x128xf32, #tpu.memory_space<vmem>>, %arg4: memref<128x128xf32, #tpu.memory_space<vmem>>, %arg5: memref<1024x128xf32, #tpu.memory_space<vmem>>) attributes {dimension_semantics = [#tpu.dimension_semantics<parallel>], iteration_bounds = array<i64: 2>, scalar_prefetch = 0 : i64, scratch_operands = 0 : i64, tpu.core_type = #tpu.core_type<tc>, window_params = [{transform_indices = @transform_0, window_bounds = array<i64: 1024, 128>}, {pipeline_mode = #tpu.pipeline_mode<synchronous>, transform_indices = @transform_1, window_bounds = array<i64: 1, 128>}, {pipeline_mode = #tpu.pipeline_mode<synchronous>, transform_indices = @transform_2, window_bounds = array<i64: 1, 128>}, {pipeline_mode = #tpu.pipeline_mode<synchronous>, transform_indices = @transform_3, window_bounds = array<i64: 128, 128>}, {transform_indices = @transform_4, window_bounds = array<i64: 1024, 128>}]} {
    %c0 = arith.constant 0 : index
    %c0_0 = arith.constant 0 : index
    %0 = vector.load %arg1[%c0, %c0_0] : memref<1024x128xf32, #tpu.memory_space<vmem>>, vector<1024x128xf32>
    %c0_1 = arith.constant 0 : index
    %c0_2 = arith.constant 0 : index
    %1 = vector.load %arg2[%c0_1, %c0_2] : memref<1x128xf32, #tpu.memory_space<vmem>>, vector<1x128xf32>
    %2 = vector.broadcast %1 : vector<1x128xf32> to vector<1024x128xf32>
    %3 = arith.mulf %0, %2 : vector<1024x128xf32>
    %c0_3 = arith.constant 0 : index
    %c0_4 = arith.constant 0 : index
    %4 = vector.load %arg3[%c0_3, %c0_4] : memref<1x128xf32, #tpu.memory_space<vmem>>, vector<1x128xf32>
    %5 = vector.broadcast %4 : vector<1x128xf32> to vector<1024x128xf32>
    %6 = arith.addf %3, %5 : vector<1024x128xf32>
    %cst = arith.constant 0.000000e+00 : f32
    %7 = vector.broadcast %cst : f32 to vector<1024x128xf32>
    %8 = arith.cmpf oge, %6, %7 : vector<1024x128xf32>
    %cst_5 = arith.constant 1.000000e-01 : f32
    %9 = vector.broadcast %cst_5 : f32 to vector<1024x128xf32>
    %10 = arith.mulf %9, %6 : vector<1024x128xf32>
    %11 = arith.select %8, %6, %10 : vector<1024x128xi1>, vector<1024x128xf32>
    %c0_6 = arith.constant 0 : index
    %c0_7 = arith.constant 0 : index
    %12 = vector.load %arg4[%c0_6, %c0_7] : memref<128x128xf32, #tpu.memory_space<vmem>>, vector<128x128xf32>
    %cst_8 = arith.constant dense<0.000000e+00> : vector<1024x128xf32>
    %13 = tpu.matmul %11, %12, %cst_8 {dimension_numbers = #tpu.dot_dimension_numbers<[1], [0], [0], [1], [0, 0, 1, 1], [], []>} : vector<1024x128xf32>, vector<128x128xf32>, vector<1024x128xf32> -> vector<1024x128xf32>
    %14 = math.tanh %13 : vector<1024x128xf32>
    %c0_9 = arith.constant 0 : index
    %c0_10 = arith.constant 0 : index
    %15 = vector.load %arg5[%c0_9, %c0_10] : memref<1024x128xf32, #tpu.memory_space<vmem>>, vector<1024x128xf32>
    tpu.vector_store %arg5[%c0_9, %c0_10], %14 {strides = array<i32>} : memref<1024x128xf32, #tpu.memory_space<vmem>>, vector<1024x128xf32>,
    return
  }
  func.func @transform_0(%arg0: i32) -> (i32, i32) {
    %c0_i32 = arith.constant 0 : i32
    %c0_i32_0 = arith.constant 0 : i32
    return %arg0, %c0_i32 : i32, i32
  }
  func.func @transform_1(%arg0: i32) -> (i32, i32) {
    %c0_i32 = arith.constant 0 : i32
    %c0_i32_0 = arith.constant 0 : i32
    %c0_i32_1 = arith.constant 0 : i32
    return %c0_i32, %c0_i32_0 : i32, i32
  }
  func.func @transform_2(%arg0: i32) -> (i32, i32) {
    %c0_i32 = arith.constant 0 : i32
    %c0_i32_0 = arith.constant 0 : i32
    %c0_i32_1 = arith.constant 0 : i32
    return %c0_i32, %c0_i32_0 : i32, i32
  }
  func.func @transform_3(%arg0: i32) -> (i32, i32) {
    %c0_i32 = arith.constant 0 : i32
    %c0_i32_0 = arith.constant 0 : i32
    %c0_i32_1 = arith.constant 0 : i32
    return %c0_i32, %c0_i32_0 : i32, i32
  }
  func.func @transform_4(%arg0: i32) -> (i32, i32) {
    %c0_i32 = arith.constant 0 : i32
    %c0_i32_0 = arith.constant 0 : i32
    return %arg0, %c0_i32 : i32, i32
  }
}

</mosaic_0001>

<llo_original>
// kernel: decoder_forward_pallas.5
$region0: #{decoder_forward_pallas.5}
  #allocation0 [shape = 'u32[]', space=smem, size = 0x4, offset = 0x4, fixed_abs, tag = 'smem constant byte address 0x4 - core index']
  #allocation1 [shape = 'u32[72,128]{1,0:T(1,128)}', space=vmem, size = 0x9000, scoped, tag = 'internal scratch']
  %s0 = inlined_call_operand.vmem [shape: f32[64,108], index: 0, kind: input, shape index: {}]
  %s1 = inlined_call_operand.vmem [shape: f32[108,256], index: 1, kind: input, shape index: {}]
  %s2 = inlined_call_operand.vmem [shape: f32[64,256], index: 2, kind: output, shape index: {0}]
  %s3 = inlined_call_operand.vmem [shape: f32[16,256], index: 3, kind: output, shape index: {1}]
  %4 = xla_tuple %s2, %s3
  %s5 = sld [smem:[#allocation0]]
  $region49: #{decoder_forward_pallas.5} parent=0
    _
  %s7 = ssub.s32 1, %s5
  %s8 = scalar_select 0, %s7, %s5
  loop: start=0, step=1, limit=4
  $region2: #{decoder_forward_pallas.5} parent=0 // loop_pre_header
    _
  $region3: #{decoder_forward_pallas.5} parent=0 // loop_header
    %s10 = sphi 0, %s14
    %p11 = scmp.ge.s32.totalorder %s10, 4
    %s20 = sphi 0, %s22
    %s23 = sphi 0, %s20
    %s24 = sphi 0, %s23
    %s40 = sphi 0, %s24
    %s44 = sphi 0, %s44
    %s46 = sphi 0, %s44
    %s47 = sphi 0, %s46
    %s61 = sphi 0, %s47
    %s67 = sphi 0, %s69
    %s70 = sphi 0, %s67
    %s71 = sphi 0, %s70
    %s87 = sphi 0, %s71
    %s93 = sphi 0, %s95
    %s96 = sphi 0, %s93
    %s97 = sphi 0, %s96
    %s113 = sphi 0, %s97
  $region4: #{decoder_forward_pallas.5} parent=0 // loop_header_branch
    %13 = sbr.rel (%p11) target = $region8
  $region5: #{decoder_forward_pallas.5} parent=0 // loop_body
    %s15 = ssub.s32 %s10, 1
    %s16 = ssub.s32 %s10, 2
    %s17 = sadd.s32 %s10, 1
    %s18 = ssub.s32 %s10, %s17
    %p19 = scmp.eq.s32.totalorder %s18, 0
    %s21 = sadd.s32 %s20, 1
    %s22 = scalar_select %p19, %s20, %s21
    %p25 = pneg %p19
    %p26 = scmp.eq.s32.totalorder %s10, 1
    %p27 = por %p25, %p26
    %p28 = scmp.ne.s32.totalorder %s20, %s23
    %p29 = scmp.eq.s32.totalorder %s10, 0
    %p30 = por %p28, %p29
    %p31 = scmp.ne.s32.totalorder %s20, %s23
    %p32 = scmp.eq.s32.totalorder %s15, 1
    %p33 = por %p31, %p32
    %p34 = scmp.ne.s32.totalorder %s23, %s24
    %p35 = scmp.eq.s32.totalorder %s15, 0
    %p36 = por %p34, %p35
    %p37 = scmp.ne.s32.totalorder %s23, %s24
    %p38 = scmp.eq.s32.totalorder %s16, 1
    %p39 = por %p37, %p38
    %p41 = scmp.ne.s32.totalorder %s24, %s40
    %p42 = scmp.eq.s32.totalorder %s16, 0
    %p43 = por %p41, %p42
    %s45 = sadd.s32 %s44, 1
    %p48 = scmp.eq.s32.totalorder %s10, 1
    %p49 = scmp.ne.s32.totalorder %s44, %s46
    %p50 = scmp.eq.s32.totalorder %s10, 0
    %p51 = por %p49, %p50
    %p52 = scmp.ne.s32.totalorder %s44, %s46
    %p53 = scmp.eq.s32.totalorder %s15, 1
    %p54 = por %p52, %p53
    %p55 = scmp.ne.s32.totalorder %s46, %s47
    %p56 = scmp.eq.s32.totalorder %s15, 0
    %p57 = por %p55, %p56
    %p58 = scmp.ne.s32.totalorder %s46, %s47
    %p59 = scmp.eq.s32.totalorder %s16, 1
    %p60 = por %p58, %p59
    %p62 = scmp.ne.s32.totalorder %s47, %s61
    %p63 = scmp.eq.s32.totalorder %s16, 0
    %p64 = por %p62, %p63
    %s65 = ssub.s32 %s10, %s17
    %p66 = scmp.eq.s32.totalorder %s65, 0
    %s68 = sadd.s32 %s67, 1
    %s69 = scalar_select %p66, %s67, %s68
    %p72 = pneg %p66
    %p73 = scmp.eq.s32.totalorder %s10, 1
    %p74 = por %p72, %p73
    %p75 = scmp.ne.s32.totalorder %s67, %s70
    %p76 = scmp.eq.s32.totalorder %s10, 0
    %p77 = por %p75, %p76
    %p78 = scmp.ne.s32.totalorder %s67, %s70
    %p79 = scmp.eq.s32.totalorder %s15, 1
    %p80 = por %p78, %p79
    %p81 = scmp.ne.s32.totalorder %s70, %s71
    %p82 = scmp.eq.s32.totalorder %s15, 0
    %p83 = por %p81, %p82
    %p84 = scmp.ne.s32.totalorder %s70, %s71
    %p85 = scmp.eq.s32.totalorder %s16, 1
    %p86 = por %p84, %p85
    %p88 = scmp.ne.s32.totalorder %s71, %s87
    %p89 = scmp.eq.s32.totalorder %s16, 0
    %p90 = por %p88, %p89
    %s91 = ssub.s32 %s10, %s17
    %p92 = scmp.eq.s32.totalorder %s91, 0
    %s94 = sadd.s32 %s93, 1
    %s95 = scalar_select %p92, %s93, %s94
    %p98 = pneg %p92
    %p99 = scmp.eq.s32.totalorder %s10, 1
    %p100 = por %p98, %p99
    %p101 = scmp.ne.s32.totalorder %s93, %s96
    %p102 = scmp.eq.s32.totalorder %s10, 0
    %p103 = por %p101, %p102
    %p104 = scmp.ne.s32.totalorder %s93, %s96
    %p105 = scmp.eq.s32.totalorder %s15, 1
    %p106 = por %p104, %p105
    %p107 = scmp.ne.s32.totalorder %s96, %s97
    %p108 = scmp.eq.s32.totalorder %s15, 0
    %p109 = por %p107, %p108
    %p110 = scmp.ne.s32.totalorder %s96, %s97
    %p111 = scmp.eq.s32.totalorder %s16, 1
    %p112 = por %p110, %p111
    %p114 = scmp.ne.s32.totalorder %s97, %s113
    %p115 = scmp.eq.s32.totalorder %s16, 0
    %p116 = por %p114, %p115
    %p117 = scmp.le.s32.totalorder 1, %s10
    %p118 = scmp.lt.s32.totalorder %s10, 3
    %p119 = pnand %p117, %p118
    %p120 = pneg %p119
    // Predicated region
    $region9: #{decoder_forward_pallas.5} parent=5 // pred_check
      _
    $region10: #{decoder_forward_pallas.5} parent=5 // pred_check_branch
      %122 = sbr.rel (%p119) target = $region12
    $region11: #{decoder_forward_pallas.5} parent=5 // pred_region
      %s123 = ssub.s32 %s10, 1
      // Predicated region
      $region13: #{decoder_forward_pallas.5} parent=11 // pred_check
        %p124 = pneg %p57
      $region14: #{decoder_forward_pallas.5} parent=11 // pred_check_branch
        %126 = sbr.rel (%p124) target = $region16
      $region15: #{decoder_forward_pallas.5} parent=11 // pred_region
        _
      $region16: #{decoder_forward_pallas.5} parent=11 // pred_fallthru
        _
    $region12: #{decoder_forward_pallas.5} parent=5 // pred_fallthru
      _
    %p127 = scmp.lt.s32.totalorder %s10, 2
    // Predicated region
    $region17: #{decoder_forward_pallas.5} parent=5 // pred_check
      %p128 = pneg %p127
    $region18: #{decoder_forward_pallas.5} parent=5 // pred_check_branch
      %130 = sbr.rel (%p128) target = $region20
    $region19: #{decoder_forward_pallas.5} parent=5 // pred_region
      // Predicated region
      $region21: #{decoder_forward_pallas.5} parent=19 // pred_check
        %p131 = pneg %p30
      $region22: #{decoder_forward_pallas.5} parent=19 // pred_check_branch
        %133 = sbr.rel (%p131) target = $region24
      $region23: #{decoder_forward_pallas.5} parent=19 // pred_region
        %s134 = smul.u32 4, %s10
        %p135 = scmp.lt.s32.totalorder %s134, 7
        %s136 = scalar_select %p135, %s134, 7
        %s137 = smul.addr %s136, 8
        %s138 = scalar_lea.vmem %s0, %s137
        %s139 = smul.u32 4, %s10
      $region24: #{decoder_forward_pallas.5} parent=19 // pred_fallthru
        _
    $region20: #{decoder_forward_pallas.5} parent=5 // pred_fallthru
      _
    %p140 = scmp.le.s32.totalorder 1, %s10
    %p141 = scmp.lt.s32.totalorder %s10, 3
    %p142 = pnand %p140, %p141
    %p143 = pneg %p142
    // Predicated region
    $region25: #{decoder_forward_pallas.5} parent=5 // pred_check
      _
    $region26: #{decoder_forward_pallas.5} parent=5 // pred_check_branch
      %145 = sbr.rel (%p142) target = $region28
    $region27: #{decoder_forward_pallas.5} parent=5 // pred_region
      %s146 = ssub.s32 %s10, 1
      %s147 = smul.u32 4, %s15
      %p148 = scmp.lt.s32.totalorder %s147, 7
      %s149 = scalar_select %p148, %s147, 7
      %s150 = smul.addr %s149, 8
      %s151 = scalar_lea.vmem %s0, %s150
      %p152 = pneg %p36
      %p153 = pneg %p33
      %p154 = pneg %p57
      %p155 = pneg %p54
      %p156 = pneg %p83
      %p157 = pneg %p80
      %s158 = smul.u32 4, %s15
      %p159 = scmp.lt.s32.totalorder %s158, 7
      %s160 = scalar_select %p159, %s158, 7
      %s161 = smul.addr %s160, 2
      %s162 = smul.addr %s161, 8
      %s163 = scalar_lea.vmem %s2, %s162
      %p164 = pneg %p109
      %p165 = pneg %p106
      %p166 = scmp.lt.s32.totalorder %s15, 1
      %s167 = scalar_select %p166, %s15, 1
      %s168 = smul.addr %s167, 2
      %s169 = smul.addr %s168, 8
      %s170 = scalar_lea.vmem %s3, %s169
      %s171 = smul.u32 4, %s15
      %p172 = scmp.lt.s32.totalorder %s171, 7
      %s173 = scalar_select %p172, %s171, 7
      %s174 = smul.addr %s173, 8
      %s175 = scalar_lea.vmem %s0, %s174
      %s176 = smul.u32 4, %s15
      %s177 = smul.u32 4, %s15
      %p178 = scmp.lt.s32.totalorder %s177, 7
      %s179 = scalar_select %p178, %s177, 7
      %s180 = smul.addr %s179, 2
      %s181 = smul.addr %s180, 8
      %s182 = scalar_lea.vmem %s2, %s181
      %s183 = smul.u32 4, %s15
      %p184 = scmp.lt.s32.totalorder %s15, 1
      %s185 = scalar_select %p184, %s15, 1
      %s186 = smul.addr %s185, 2
      %s187 = smul.addr %s186, 8
      %s188 = scalar_lea.vmem %s3, %s187
      %v189 = vld [vmem:[%s175] sm:$0xff]
      %v190 = vld [vmem:[%s175 + $0x8] sm:$0xff]
      %v191 = vld [vmem:[%s175 + $0x10] sm:$0xff]
      %v192 = vld [vmem:[%s175 + $0x18] sm:$0xff]
      %v193 = vld [vmem:[%s1] sm:$0xff]
      %v194 = vld [vmem:[%s1 + $0x8] sm:$0xff]
      %v195 = vld [vmem:[%s1 + $0x10] sm:$0xff]
      %v196 = vld [vmem:[%s1 + $0x18] sm:$0xff]
      %v197 = vld [vmem:[%s1 + $0x20] sm:$0xff]
      %v198 = vld [vmem:[%s1 + $0x28] sm:$0xff]
      %v199 = vld [vmem:[%s1 + $0x30] sm:$0xff]
      %v200 = vld [vmem:[%s1 + $0x38] sm:$0xff]
      %v201 = vld [vmem:[%s1 + $0x40] sm:$0xff]
      %v202 = vld [vmem:[%s1 + $0x48] sm:$0xff]
      %v203 = vld [vmem:[%s1 + $0x50] sm:$0xff]
      %v204 = vld [vmem:[%s1 + $0x58] sm:$0xff]
      %v205 = vld [vmem:[%s1 + $0x60] sm:$0xff]
      %v206 = vld [vmem:[%s1 + $0x68] sm:$0xff]
      %v207 = vld [vmem:[%s1 + $0x70] sm:$0xff]
      %v208 = vld [vmem:[%s1 + $0x78] sm:$0xff]
      %v209 = vld [vmem:[%s1 + $0x80] sm:$0xff]
      %v210 = vld [vmem:[%s1 + $0x88] sm:$0xff]
      %v211 = vld [vmem:[%s1 + $0x90] sm:$0xff]
      %v212 = vld [vmem:[%s1 + $0x98] sm:$0xff]
      %v213 = vld [vmem:[%s1 + $0xa0] sm:$0xff]
      %v214 = vld [vmem:[%s1 + $0xa8] sm:$0xff]
      %v215 = vld [vmem:[%s1 + $0xb0] sm:$0xff]
      %v216 = vld [vmem:[%s1 + $0xb8] sm:$0xff]
      %v217 = vld [vmem:[%s1 + $0xc0] sm:$0xff]
      %v218 = vld [vmem:[%s1 + $0xc8] sm:$0xff]
      %v219 = vld [vmem:[%s1 + $0xd0] sm:$0xf]
      %v220 = vld [vmem:[%s1 + $0xd8] sm:$0xf]
      %vm221 = vcmask 883712
      %v223 = vsel %vm221, %v189, 0
      %v226 = vsel %vm221, %v190, 0
      %v229 = vsel %vm221, %v191, 0
      %v232 = vsel %vm221, %v192, 0
      %vm234 = vcmask 1043456
      %v236 = vsel %vm234, %v219, 0
      %v239 = vsel %vm234, %v220, 0
      %241 = vmatpush.msra.mxu0 0.0
      %242 = vmatpush.msra.mxu0 0.0
      %243 = vmatpush.msra.mxu0 %v236
      %244 = vmatpush.msra.mxu0 %v217
      %245 = vmatpush.msra.mxu0 %v215
      %246 = vmatpush.msra.mxu0 %v213
      %247 = vmatpush.msra.mxu0 %v211
      %248 = vmatpush.msra.mxu0 %v209
      %249 = vmatpush.msra.mxu0 %v207
      %250 = vmatpush.msra.mxu0 %v205
      %251 = vmatpush.msra.mxu0 %v203
      %252 = vmatpush.msra.mxu0 %v201
      %253 = vmatpush.msra.mxu0 %v199
      %254 = vmatpush.msra.mxu0 %v197
      %255 = vmatpush.msra.mxu0 %v195
      %256 = vmatpush.msra.mxu0 %v193
      %257 = vmatmul.f32.gmra.mxu0 %v223
      %v258 = vpop.f32.mrf.mxu0
      %v259 = vadd.f32 0.0, %v258
      %260 = vmatmul.f32.gmra.mxu0 %v226
      %v261 = vpop.f32.mrf.mxu0
      %v262 = vadd.f32 0.0, %v261
      %263 = vmatmul.f32.gmra.mxu0 %v229
      %v264 = vpop.f32.mrf.mxu0
      %v265 = vadd.f32 0.0, %v264
      %266 = vmatmul.f32.gmra.mxu0 %v232
      %v267 = vpop.f32.mrf.mxu0
      %v268 = vadd.f32 0.0, %v267
      %269 = vdwg.mxu0
      %270 = vmatpush.msra.mxu0 0.0
      %271 = vmatpush.msra.mxu0 0.0
      %272 = vmatpush.msra.mxu0 %v239
      %273 = vmatpush.msra.mxu0 %v218
      %274 = vmatpush.msra.mxu0 %v216
      %275 = vmatpush.msra.mxu0 %v214
      %276 = vmatpush.msra.mxu0 %v212
      %277 = vmatpush.msra.mxu0 %v210
      %278 = vmatpush.msra.mxu0 %v208
      %279 = vmatpush.msra.mxu0 %v206
      %280 = vmatpush.msra.mxu0 %v204
      %281 = vmatpush.msra.mxu0 %v202
      %282 = vmatpush.msra.mxu0 %v200
      %283 = vmatpush.msra.mxu0 %v198
      %284 = vmatpush.msra.mxu0 %v196
      %285 = vmatpush.msra.mxu0 %v194
      %286 = vmatmul.f32.gmra.mxu0 %v223
      %v287 = vpop.f32.mrf.mxu0
      %v288 = vadd.f32 0.0, %v287
      %289 = vmatmul.f32.gmra.mxu0 %v226
      %v290 = vpop.f32.mrf.mxu0
      %v291 = vadd.f32 0.0, %v290
      %292 = vmatmul.f32.gmra.mxu0 %v229
      %v293 = vpop.f32.mrf.mxu0
      %v294 = vadd.f32 0.0, %v293
      %295 = vmatmul.f32.gmra.mxu0 %v232
      %v296 = vpop.f32.mrf.mxu0
      %v297 = vadd.f32 0.0, %v296
      %298 = vdwg.mxu0
      %299 = vst [vmem:[%s182] sm:$0xff] %v259
      %300 = vst [vmem:[%s182 + $0x8] sm:$0xff] %v288
      %301 = vst [vmem:[%s182 + $0x10] sm:$0xff] %v262
      %302 = vst [vmem:[%s182 + $0x18] sm:$0xff] %v291
      %303 = vst [vmem:[%s182 + $0x20] sm:$0xff] %v265
      %304 = vst [vmem:[%s182 + $0x28] sm:$0xff] %v294
      %305 = vst [vmem:[%s182 + $0x30] sm:$0xff] %v268
      %306 = vst [vmem:[%s182 + $0x38] sm:$0xff] %v297
      %v307 = vlaneseq
      %v308 = vshrl.u32 %v307, 7
      %v309 = vadd.f32 %v259, %v262
      %v310 = vadd.f32 %v309, %v265
      %v311 = vadd.f32 %v310, %v268
      %v312 = vrot.slane %v311, 4
      %v313 = vadd.f32 %v311, %v312
      %v314 = vrot.slane %v313, 2
      %v315 = vadd.f32 %v313, %v314
      %v316 = vrot.slane %v315, 1
      %v317 = vadd.f32 %v315, %v316
      %v318 = vadd.f32 %v288, %v291
      %v319 = vadd.f32 %v318, %v294
      %v320 = vadd.f32 %v319, %v297
      %v321 = vrot.slane %v320, 4
      %v322 = vadd.f32 %v320, %v321
      %v323 = vrot.slane %v322, 2
      %v324 = vadd.f32 %v322, %v323
      %v325 = vrot.slane %v324, 1
      %v326 = vadd.f32 %v324, %v325
      %v327 = vmul.f32 %v259, %v259
      %v328 = vmul.f32 %v288, %v288
      %v329 = vmul.f32 %v262, %v262
      %v330 = vmul.f32 %v291, %v291
      %v331 = vmul.f32 %v265, %v265
      %v332 = vmul.f32 %v294, %v294
      %v333 = vmul.f32 %v268, %v268
      %v334 = vmul.f32 %v297, %v297
      %v335 = vadd.f32 %v327, %v329
      %v336 = vadd.f32 %v335, %v331
      %v337 = vadd.f32 %v336, %v333
      %v338 = vrot.slane %v337, 4
      %v339 = vadd.f32 %v337, %v338
      %v340 = vrot.slane %v339, 2
      %v341 = vadd.f32 %v339, %v340
      %v342 = vrot.slane %v341, 1
      %v343 = vadd.f32 %v341, %v342
      %v344 = vadd.f32 %v328, %v330
      %v345 = vadd.f32 %v344, %v332
      %v346 = vadd.f32 %v345, %v334
      %v347 = vrot.slane %v346, 4
      %v348 = vadd.f32 %v346, %v347
      %v349 = vrot.slane %v348, 2
      %v350 = vadd.f32 %v348, %v349
      %v351 = vrot.slane %v350, 1
      %v352 = vadd.f32 %v350, %v351
      %vm353 = vcmp.eq.s32.totalorder %v308, 0
      %vm354 = vcmp.eq.s32.totalorder %v308, 1
      %v355 = vsel %vm354, %v343, 0.0
      %v356 = vsel %vm354, %v352, 0.0
      %v357 = vsel %vm353, %v317, %v355
      %v358 = vsel %vm353, %v326, %v356
      %359 = vst [vmem:[%s188] sm:$0xff] %v357
      %360 = vst [vmem:[%s188 + $0x8] sm:$0xff] %v358
      %s361 = smul.u32 4, %s15
      %p362 = scmp.lt.s32.totalorder %s361, 7
      %s363 = scalar_select %p362, %s361, 7
      %s364 = smul.addr %s363, 2
      %s365 = smul.addr %s364, 8
      %s366 = scalar_lea.vmem %s2, %s365
      %p367 = scmp.lt.s32.totalorder %s15, 1
      %s368 = scalar_select %p367, %s15, 1
      %s369 = smul.addr %s368, 2
      %s370 = smul.addr %s369, 8
      %s371 = scalar_lea.vmem %s3, %s370
      // Predicated region
      $region29: #{decoder_forward_pallas.5} parent=27 // pred_check
        %p372 = pneg %p80
      $region30: #{decoder_forward_pallas.5} parent=27 // pred_check_branch
        %374 = sbr.rel (%p372) target = $region32
      $region31: #{decoder_forward_pallas.5} parent=27 // pred_region
        %s375 = smul.u32 4, %s15
      $region32: #{decoder_forward_pallas.5} parent=27 // pred_fallthru
        _
      // Predicated region
      $region33: #{decoder_forward_pallas.5} parent=27 // pred_check
        %p376 = pneg %p106
      $region34: #{decoder_forward_pallas.5} parent=27 // pred_check_branch
        %378 = sbr.rel (%p376) target = $region36
      $region35: #{decoder_forward_pallas.5} parent=27 // pred_region
        _
      $region36: #{decoder_forward_pallas.5} parent=27 // pred_fallthru
        _
    $region28: #{decoder_forward_pallas.5} parent=5 // pred_fallthru
      _
    %p379 = scmp.le.s32.totalorder 2, %s10
    // Predicated region
    $region37: #{decoder_forward_pallas.5} parent=5 // pred_check
      %p380 = pneg %p379
    $region38: #{decoder_forward_pallas.5} parent=5 // pred_check_branch
      %382 = sbr.rel (%p380) target = $region40
    $region39: #{decoder_forward_pallas.5} parent=5 // pred_region
      %s383 = ssub.s32 %s10, 2
      // Predicated region
      $region41: #{decoder_forward_pallas.5} parent=39 // pred_check
        %p384 = pneg %p86
      $region42: #{decoder_forward_pallas.5} parent=39 // pred_check_branch
        %386 = sbr.rel (%p384) target = $region44
      $region43: #{decoder_forward_pallas.5} parent=39 // pred_region
        %s387 = smul.u32 4, %s16
        %p388 = scmp.lt.s32.totalorder %s387, 7
        %s389 = scalar_select %p388, %s387, 7
        %s390 = smul.addr %s389, 2
        %s391 = smul.addr %s390, 8
        %s392 = scalar_lea.vmem %s2, %s391
      $region44: #{decoder_forward_pallas.5} parent=39 // pred_fallthru
        _
      // Predicated region
      $region45: #{decoder_forward_pallas.5} parent=39 // pred_check
        %p393 = pneg %p112
      $region46: #{decoder_forward_pallas.5} parent=39 // pred_check_branch
        %395 = sbr.rel (%p393) target = $region48
      $region47: #{decoder_forward_pallas.5} parent=39 // pred_region
        %p396 = scmp.lt.s32.totalorder %s16, 1
        %s397 = scalar_select %p396, %s16, 1
        %s398 = smul.addr %s397, 2
        %s399 = smul.addr %s398, 8
        %s400 = scalar_lea.vmem %s3, %s399
      $region48: #{decoder_forward_pallas.5} parent=39 // pred_fallthru
        _
    $region40: #{decoder_forward_pallas.5} parent=5 // pred_fallthru
      _
  $region6: #{decoder_forward_pallas.5} parent=0 // loop_footer
    %s14 = sadd.s32 1, %s10
  $region7: #{decoder_forward_pallas.5} parent=0 // loop_footer_branch
    %9 = sbr.rel target = $region3
  $region8: #{decoder_forward_pallas.5} parent=0 // loop_exit
    _

// kernel: tile.43
$region0: #{tile.43}
  #allocation0 [shape = 's32[1]{0}', space=sflag, size = 0x4, scoped, tag = 'scoped memory for tile.43']
  %s0 = inlined_call_operand.vmem [shape: f32[32], index: 0, kind: input, shape index: {}]
  %s1 = inlined_call_operand.vmem [shape: f32[9,32], index: 1, kind: output, shape index: {}]
  // Predicated region
  $region2: #{tile.43} parent=0 // pred_check
    _
  $region3: #{tile.43} parent=0 // pred_check_branch
    %3 = sbr.rel (0) target = $region5
  $region4: #{tile.43} parent=0 // pred_region
    _
  $region5: #{tile.43} parent=0 // pred_fallthru
    _
  %v4 = vld [vmem:[%s0] ss:$0 sm:$0xff]
  %5 = vst [vmem:[%s1] sm:$0xff] %v4
  %s6 = scalar_lea.vmem %s1, 8
  %7 = vst [vmem:[%s6] sm:$0xff] %v4

// kernel: tile.48
$region0: #{tile.48}
  %s0 = inlined_call_operand.vmem [shape: f32[9,32], index: 0, kind: input, shape index: {}]
  %s1 = inlined_call_operand.vmem [shape: f32[1,288], index: 1, kind: output, shape index: {}]
  $region1: #{tile.48} parent=0
    #allocation0 [shape = 'u8[12288]{0}', space=vmem, size = 0x3000, scoped, tag = 'scoped mem for output reshape']
    %v2 = vld [vmem:[%s0] ss:$4 sm:$0x7]
    %vm3 = vcmask 261120
    %4 = vst.msk [vmem:[#allocation0] ss:$8 sm:$0x7] %vm3, %v2
    %s5 = scalar_lea.vmem %s0, 3
    %s6 = smov 3
    %v7 = vld [vmem:[%s5] ss:$4 sm:%s6]
    %8 = vrot.lane.b32.xlu0 %v7, 96
    %v9 = vpop.permute.xlu0 %8
    %vm10 = vcmask 1048320
    %11 = vst.msk [vmem:[#allocation0] ss:$8 sm:$0x3] %vm10, %v9
    %s12 = scalar_lea.vmem %s0, 2
    %s13 = smov 3
    %v14 = vld [vmem:[%s12] ss:$4 sm:%s13]
    %15 = vrot.lane.b32.xlu0 %v14, 64
    %v16 = vpop.permute.xlu0 %15
    %vm17 = vcmask 785920
    %18 = vst.msk [vmem:[#allocation0] ss:$8 sm:$0x3] %vm17, %v16
    %s19 = scalar_lea.vmem %s0, 1
    %s20 = smov 3
    %v21 = vld [vmem:[%s19] ss:$4 sm:%s20]
    %22 = vrot.lane.b32.xlu0 %v21, 32
    %v23 = vpop.permute.xlu0 %22
    %vm24 = vcmask 523520
    %25 = vst.msk [vmem:[#allocation0] ss:$8 sm:$0x3] %vm24, %v23
    %s27 = ssub.s32 2, 1
    %v28 = vld [vmem:[#allocation0] sm:%s27]
    %s30 = ssub.s32 2, 1
    %31 = vst [vmem:[%s1] sm:%s30] %v28
    %s32 = scalar_lea.vmem [#allocation0], 8
    %v33 = vld [vmem:[%s32] sm:%s27]
    %s35 = ssub.s32 2, 1
    %s36 = scalar_lea.vmem %s1, 1
    %37 = vst [vmem:[%s36] sm:%s35] %v33
    %s38 = scalar_lea.vmem [#allocation0], 16
    %v39 = vld [vmem:[%s38] sm:%s27]
    %s41 = ssub.s32 2, 1
    %s42 = scalar_lea.vmem %s1, 2
    %43 = vst [vmem:[%s42] sm:%s41] %v39

// kernel: decoder_forward_pallas.6
$region0: #{decoder_forward_pallas.6}
  #allocation0 [shape = 'u32[]', space=smem, size = 0x4, offset = 0x4, fixed_abs, tag = 'smem constant byte address 0x4 - core index']
  #allocation1 [shape = 'u32[72,128]{1,0:T(1,128)}', space=vmem, size = 0x9000, scoped, tag = 'internal scratch']
  %s0 = inlined_call_operand.vmem [shape: f32[512,288], index: 0, kind: input, shape index: {}]
  %s1 = inlined_call_operand.vmem [shape: f32[1,288], index: 1, kind: input, shape index: {}]
  %s2 = inlined_call_operand.vmem [shape: f32[1,288], index: 2, kind: input, shape index: {}]
  %s3 = inlined_call_operand.vmem [shape: f32[288,128], index: 3, kind: input, shape index: {}]
  %s4 = inlined_call_operand.vmem [shape: f32[512,128], index: 4, kind: output, shape index: {0}]
  %s5 = inlined_call_operand.vmem [shape: f32[16,128], index: 5, kind: output, shape index: {1}]
  %6 = xla_tuple %s4, %s5
  %s7 = sld [smem:[#allocation0]]
  $region57: #{decoder_forward_pallas.6} parent=0
    _
  %s9 = ssub.s32 1, %s7
  %s10 = scalar_select 0, %s9, %s7
  loop: start=0, step=1, limit=4
  $region2: #{decoder_forward_pallas.6} parent=0 // loop_pre_header
    _
  $region3: #{decoder_forward_pallas.6} parent=0 // loop_header
    %s12 = sphi 0, %s16
    %p13 = scmp.ge.s32.totalorder %s12, 4
    %s22 = sphi 0, %s24
    %s25 = sphi 0, %s22
    %s26 = sphi 0, %s25
    %s42 = sphi 0, %s26
    %s46 = sphi 0, %s46
    %s48 = sphi 0, %s46
    %s49 = sphi 0, %s48
    %s63 = sphi 0, %s49
    %s67 = sphi 0, %s67
    %s69 = sphi 0, %s67
    %s70 = sphi 0, %s69
    %s84 = sphi 0, %s70
    %s88 = sphi 0, %s88
    %s90 = sphi 0, %s88
    %s91 = sphi 0, %s90
    %s105 = sphi 0, %s91
    %s111 = sphi 0, %s113
    %s114 = sphi 0, %s111
    %s115 = sphi 0, %s114
    %s131 = sphi 0, %s115
    %s137 = sphi 0, %s139
    %s140 = sphi 0, %s137
    %s141 = sphi 0, %s140
    %s157 = sphi 0, %s141
  $region4: #{decoder_forward_pallas.6} parent=0 // loop_header_branch
    %15 = sbr.rel (%p13) target = $region8
  $region5: #{decoder_forward_pallas.6} parent=0 // loop_body
    %s17 = ssub.s32 %s12, 1
    %s18 = ssub.s32 %s12, 2
    %s19 = sadd.s32 %s12, 1
    %s20 = ssub.s32 %s12, %s19
    %p21 = scmp.eq.s32.totalorder %s20, 0
    %s23 = sadd.s32 %s22, 1
    %s24 = scalar_select %p21, %s22, %s23
    %p27 = pneg %p21
    %p28 = scmp.eq.s32.totalorder %s12, 1
    %p29 = por %p27, %p28
    %p30 = scmp.ne.s32.totalorder %s22, %s25
    %p31 = scmp.eq.s32.totalorder %s12, 0
    %p32 = por %p30, %p31
    %p33 = scmp.ne.s32.totalorder %s22, %s25
    %p34 = scmp.eq.s32.totalorder %s17, 1
    %p35 = por %p33, %p34
    %p36 = scmp.ne.s32.totalorder %s25, %s26
    %p37 = scmp.eq.s32.totalorder %s17, 0
    %p38 = por %p36, %p37
    %p39 = scmp.ne.s32.totalorder %s25, %s26
    %p40 = scmp.eq.s32.totalorder %s18, 1
    %p41 = por %p39, %p40
    %p43 = scmp.ne.s32.totalorder %s26, %s42
    %p44 = scmp.eq.s32.totalorder %s18, 0
    %p45 = por %p43, %p44
    %s47 = sadd.s32 %s46, 1
    %p50 = scmp.eq.s32.totalorder %s12, 1
    %p51 = scmp.ne.s32.totalorder %s46, %s48
    %p52 = scmp.eq.s32.totalorder %s12, 0
    %p53 = por %p51, %p52
    %p54 = scmp.ne.s32.totalorder %s46, %s48
    %p55 = scmp.eq.s32.totalorder %s17, 1
    %p56 = por %p54, %p55
    %p57 = scmp.ne.s32.totalorder %s48, %s49
    %p58 = scmp.eq.s32.totalorder %s17, 0
    %p59 = por %p57, %p58
    %p60 = scmp.ne.s32.totalorder %s48, %s49
    %p61 = scmp.eq.s32.totalorder %s18, 1
    %p62 = por %p60, %p61
    %p64 = scmp.ne.s32.totalorder %s49, %s63
    %p65 = scmp.eq.s32.totalorder %s18, 0
    %p66 = por %p64, %p65
    %s68 = sadd.s32 %s67, 1
    %p71 = scmp.eq.s32.totalorder %s12, 1
    %p72 = scmp.ne.s32.totalorder %s67, %s69
    %p73 = scmp.eq.s32.totalorder %s12, 0
    %p74 = por %p72, %p73
    %p75 = scmp.ne.s32.totalorder %s67, %s69
    %p76 = scmp.eq.s32.totalorder %s17, 1
    %p77 = por %p75, %p76
    %p78 = scmp.ne.s32.totalorder %s69, %s70
    %p79 = scmp.eq.s32.totalorder %s17, 0
    %p80 = por %p78, %p79
    %p81 = scmp.ne.s32.totalorder %s69, %s70
    %p82 = scmp.eq.s32.totalorder %s18, 1
    %p83 = por %p81, %p82
    %p85 = scmp.ne.s32.totalorder %s70, %s84
    %p86 = scmp.eq.s32.totalorder %s18, 0
    %p87 = por %p85, %p86
    %s89 = sadd.s32 %s88, 1
    %p92 = scmp.eq.s32.totalorder %s12, 1
    %p93 = scmp.ne.s32.totalorder %s88, %s90
    %p94 = scmp.eq.s32.totalorder %s12, 0
    %p95 = por %p93, %p94
    %p96 = scmp.ne.s32.totalorder %s88, %s90
    %p97 = scmp.eq.s32.totalorder %s17, 1
    %p98 = por %p96, %p97
    %p99 = scmp.ne.s32.totalorder %s90, %s91
    %p100 = scmp.eq.s32.totalorder %s17, 0
    %p101 = por %p99, %p100
    %p102 = scmp.ne.s32.totalorder %s90, %s91
    %p103 = scmp.eq.s32.totalorder %s18, 1
    %p104 = por %p102, %p103
    %p106 = scmp.ne.s32.totalorder %s91, %s105
    %p107 = scmp.eq.s32.totalorder %s18, 0
    %p108 = por %p106, %p107
    %s109 = ssub.s32 %s12, %s19
    %p110 = scmp.eq.s32.totalorder %s109, 0
    %s112 = sadd.s32 %s111, 1
    %s113 = scalar_select %p110, %s111, %s112
    %p116 = pneg %p110
    %p117 = scmp.eq.s32.totalorder %s12, 1
    %p118 = por %p116, %p117
    %p119 = scmp.ne.s32.totalorder %s111, %s114
    %p120 = scmp.eq.s32.totalorder %s12, 0
    %p121 = por %p119, %p120
    %p122 = scmp.ne.s32.totalorder %s111, %s114
    %p123 = scmp.eq.s32.totalorder %s17, 1
    %p124 = por %p122, %p123
    %p125 = scmp.ne.s32.totalorder %s114, %s115
    %p126 = scmp.eq.s32.totalorder %s17, 0
    %p127 = por %p125, %p126
    %p128 = scmp.ne.s32.totalorder %s114, %s115
    %p129 = scmp.eq.s32.totalorder %s18, 1
    %p130 = por %p128, %p129
    %p132 = scmp.ne.s32.totalorder %s115, %s131
    %p133 = scmp.eq.s32.totalorder %s18, 0
    %p134 = por %p132, %p133
    %s135 = ssub.s32 %s12, %s19
    %p136 = scmp.eq.s32.totalorder %s135, 0
    %s138 = sadd.s32 %s137, 1
    %s139 = scalar_select %p136, %s137, %s138
    %p142 = pneg %p136
    %p143 = scmp.eq.s32.totalorder %s12, 1
    %p144 = por %p142, %p143
    %p145 = scmp.ne.s32.totalorder %s137, %s140
    %p146 = scmp.eq.s32.totalorder %s12, 0
    %p147 = por %p145, %p146
    %p148 = scmp.ne.s32.totalorder %s137, %s140
    %p149 = scmp.eq.s32.totalorder %s17, 1
    %p150 = por %p148, %p149
    %p151 = scmp.ne.s32.totalorder %s140, %s141
    %p152 = scmp.eq.s32.totalorder %s17, 0
    %p153 = por %p151, %p152
    %p154 = scmp.ne.s32.totalorder %s140, %s141
    %p155 = scmp.eq.s32.totalorder %s18, 1
    %p156 = por %p154, %p155
    %p158 = scmp.ne.s32.totalorder %s141, %s157
    %p159 = scmp.eq.s32.totalorder %s18, 0
    %p160 = por %p158, %p159
    %p161 = scmp.le.s32.totalorder 1, %s12
    %p162 = scmp.lt.s32.totalorder %s12, 3
    %p163 = pnand %p161, %p162
    %p164 = pneg %p163
    // Predicated region
    $region9: #{decoder_forward_pallas.6} parent=5 // pred_check
      _
    $region10: #{decoder_forward_pallas.6} parent=5 // pred_check_branch
      %166 = sbr.rel (%p163) target = $region12
    $region11: #{decoder_forward_pallas.6} parent=5 // pred_region
      %s167 = ssub.s32 %s12, 1
      // Predicated region
      $region13: #{decoder_forward_pallas.6} parent=11 // pred_check
        %p168 = pneg %p59
      $region14: #{decoder_forward_pallas.6} parent=11 // pred_check_branch
        %170 = sbr.rel (%p168) target = $region16
      $region15: #{decoder_forward_pallas.6} parent=11 // pred_region
        _
      $region16: #{decoder_forward_pallas.6} parent=11 // pred_fallthru
        _
      // Predicated region
      $region17: #{decoder_forward_pallas.6} parent=11 // pred_check
        %p171 = pneg %p80
      $region18: #{decoder_forward_pallas.6} parent=11 // pred_check_branch
        %173 = sbr.rel (%p171) target = $region20
      $region19: #{decoder_forward_pallas.6} parent=11 // pred_region
        _
      $region20: #{decoder_forward_pallas.6} parent=11 // pred_fallthru
        _
      // Predicated region
      $region21: #{decoder_forward_pallas.6} parent=11 // pred_check
        %p174 = pneg %p101
      $region22: #{decoder_forward_pallas.6} parent=11 // pred_check_branch
        %176 = sbr.rel (%p174) target = $region24
      $region23: #{decoder_forward_pallas.6} parent=11 // pred_region
        _
      $region24: #{decoder_forward_pallas.6} parent=11 // pred_fallthru
        _
    $region12: #{decoder_forward_pallas.6} parent=5 // pred_fallthru
      _
    %p177 = scmp.lt.s32.totalorder %s12, 2
    // Predicated region
    $region25: #{decoder_forward_pallas.6} parent=5 // pred_check
      %p178 = pneg %p177
    $region26: #{decoder_forward_pallas.6} parent=5 // pred_check_branch
      %180 = sbr.rel (%p178) target = $region28
    $region27: #{decoder_forward_pallas.6} parent=5 // pred_region
      // Predicated region
      $region29: #{decoder_forward_pallas.6} parent=27 // pred_check
        %p181 = pneg %p32
      $region30: #{decoder_forward_pallas.6} parent=27 // pred_check_branch
        %183 = sbr.rel (%p181) target = $region32
      $region31: #{decoder_forward_pallas.6} parent=27 // pred_region
        %s184 = smul.u32 32, %s12
        %p185 = scmp.lt.s32.totalorder %s184, 63
        %s186 = scalar_select %p185, %s184, 63
        %s187 = smul.addr %s186, 3
        %s188 = smul.addr %s187, 8
        %s189 = scalar_lea.vmem %s0, %s188
        %s190 = smul.u32 32, %s12
      $region32: #{decoder_forward_pallas.6} parent=27 // pred_fallthru
        _
    $region28: #{decoder_forward_pallas.6} parent=5 // pred_fallthru
      _
    %p191 = scmp.le.s32.totalorder 1, %s12
    %p192 = scmp.lt.s32.totalorder %s12, 3
    %p193 = pnand %p191, %p192
    %p194 = pneg %p193
    // Predicated region
    $region33: #{decoder_forward_pallas.6} parent=5 // pred_check
      _
    $region34: #{decoder_forward_pallas.6} parent=5 // pred_check_branch
      %196 = sbr.rel (%p193) target = $region36
    $region35: #{decoder_forward_pallas.6} parent=5 // pred_region
      %s197 = ssub.s32 %s12, 1
      %s198 = smul.u32 32, %s17
      %p199 = scmp.lt.s32.totalorder %s198, 63
      %s200 = scalar_select %p199, %s198, 63
      %s201 = smul.addr %s200, 3
      %s202 = smul.addr %s201, 8
      %s203 = scalar_lea.vmem %s0, %s202
      %p204 = pneg %p38
      %p205 = pneg %p35
      %p206 = pneg %p59
      %p207 = pneg %p56
      %p208 = pneg %p80
      %p209 = pneg %p77
      %p210 = pneg %p101
      %p211 = pneg %p98
      %p212 = pneg %p127
      %p213 = pneg %p124
      %s214 = smul.u32 32, %s17
      %p215 = scmp.lt.s32.totalorder %s214, 63
      %s216 = scalar_select %p215, %s214, 63
      %s217 = smul.addr %s216, 8
      %s218 = scalar_lea.vmem %s4, %s217
      %p219 = pneg %p153
      %p220 = pneg %p150
      %p221 = scmp.lt.s32.totalorder %s17, 1
      %s222 = scalar_select %p221, %s17, 1
      %s223 = smul.addr %s222, 8
      %s224 = scalar_lea.vmem %s5, %s223
      %s225 = smul.u32 32, %s17
      %p226 = scmp.lt.s32.totalorder %s225, 63
      %s227 = scalar_select %p226, %s225, 63
      %s228 = smul.addr %s227, 3
      %s229 = smul.addr %s228, 8
      %s230 = scalar_lea.vmem %s0, %s229
      %s231 = smul.u32 32, %s17
      %s232 = smul.u32 32, %s17
      %p233 = scmp.lt.s32.totalorder %s232, 63
      %s234 = scalar_select %p233, %s232, 63
      %s235 = smul.addr %s234, 8
      %s236 = scalar_lea.vmem %s4, %s235
      %s237 = smul.u32 32, %s17
      %p238 = scmp.lt.s32.totalorder %s17, 1
      %s239 = scalar_select %p238, %s17, 1
      %s240 = smul.addr %s239, 8
      %s241 = scalar_lea.vmem %s5, %s240
      %v242 = vld [vmem:[%s230] sm:$0xff]
      %v243 = vld [vmem:[%s230 + $0x8] sm:$0xff]
      %v244 = vld [vmem:[%s230 + $0x10] sm:$0xff]
      %v245 = vld [vmem:[%s230 + $0x18] sm:$0xff]
      %v246 = vld [vmem:[%s230 + $0x20] sm:$0xff]
      %v247 = vld [vmem:[%s230 + $0x28] sm:$0xff]
      %v248 = vld [vmem:[%s230 + $0x30] sm:$0xff]
      %v249 = vld [vmem:[%s230 + $0x38] sm:$0xff]
      %v250 = vld [vmem:[%s230 + $0x40] sm:$0xff]
      %v251 = vld [vmem:[%s230 + $0x48] sm:$0xff]
      %v252 = vld [vmem:[%s230 + $0x50] sm:$0xff]
      %v253 = vld [vmem:[%s230 + $0x58] sm:$0xff]
      %v254 = vld [vmem:[%s230 + $0x60] sm:$0xff]
      %v255 = vld [vmem:[%s230 + $0x68] sm:$0xff]
      %v256 = vld [vmem:[%s230 + $0x70] sm:$0xff]
      %v257 = vld [vmem:[%s230 + $0x78] sm:$0xff]
      %v258 = vld [vmem:[%s230 + $0x80] sm:$0xff]
      %v259 = vld [vmem:[%s230 + $0x88] sm:$0xff]
      %v260 = vld [vmem:[%s230 + $0x90] sm:$0xff]
      %v261 = vld [vmem:[%s230 + $0x98] sm:$0xff]
      %v262 = vld [vmem:[%s230 + $0xa0] sm:$0xff]
      %v263 = vld [vmem:[%s230 + $0xa8] sm:$0xff]
      %v264 = vld [vmem:[%s230 + $0xb0] sm:$0xff]
      %v265 = vld [vmem:[%s230 + $0xb8] sm:$0xff]
      %v266 = vld [vmem:[%s230 + $0xc0] sm:$0xff]
      %v267 = vld [vmem:[%s230 + $0xc8] sm:$0xff]
      %v268 = vld [vmem:[%s230 + $0xd0] sm:$0xff]
      %v269 = vld [vmem:[%s230 + $0xd8] sm:$0xff]
      %v270 = vld [vmem:[%s230 + $0xe0] sm:$0xff]
      %v271 = vld [vmem:[%s230 + $0xe8] sm:$0xff]
      %v272 = vld [vmem:[%s230 + $0xf0] sm:$0xff]
      %v273 = vld [vmem:[%s230 + $0xf8] sm:$0xff]
      %v274 = vld [vmem:[%s230 + $0x100] sm:$0xff]
      %v275 = vld [vmem:[%s230 + $0x108] sm:$0xff]
      %v276 = vld [vmem:[%s230 + $0x110] sm:$0xff]
      %v277 = vld [vmem:[%s230 + $0x118] sm:$0xff]
      %v278 = vld [vmem:[%s230 + $0x120] sm:$0xff]
      %v279 = vld [vmem:[%s230 + $0x128] sm:$0xff]
      %v280 = vld [vmem:[%s230 + $0x130] sm:$0xff]
      %v281 = vld [vmem:[%s230 + $0x138] sm:$0xff]
      %v282 = vld [vmem:[%s230 + $0x140] sm:$0xff]
      %v283 = vld [vmem:[%s230 + $0x148] sm:$0xff]
      %v284 = vld [vmem:[%s230 + $0x150] sm:$0xff]
      %v285 = vld [vmem:[%s230 + $0x158] sm:$0xff]
      %v286 = vld [vmem:[%s230 + $0x160] sm:$0xff]
      %v287 = vld [vmem:[%s230 + $0x168] sm:$0xff]
      %v288 = vld [vmem:[%s230 + $0x170] sm:$0xff]
      %v289 = vld [vmem:[%s230 + $0x178] sm:$0xff]
      %v290 = vld [vmem:[%s230 + $0x180] sm:$0xff]
      %v291 = vld [vmem:[%s230 + $0x188] sm:$0xff]
      %v292 = vld [vmem:[%s230 + $0x190] sm:$0xff]
      %v293 = vld [vmem:[%s230 + $0x198] sm:$0xff]
      %v294 = vld [vmem:[%s230 + $0x1a0] sm:$0xff]
      %v295 = vld [vmem:[%s230 + $0x1a8] sm:$0xff]
      %v296 = vld [vmem:[%s230 + $0x1b0] sm:$0xff]
      %v297 = vld [vmem:[%s230 + $0x1b8] sm:$0xff]
      %v298 = vld [vmem:[%s230 + $0x1c0] sm:$0xff]
      %v299 = vld [vmem:[%s230 + $0x1c8] sm:$0xff]
      %v300 = vld [vmem:[%s230 + $0x1d0] sm:$0xff]
      %v301 = vld [vmem:[%s230 + $0x1d8] sm:$0xff]
      %v302 = vld [vmem:[%s230 + $0x1e0] sm:$0xff]
      %v303 = vld [vmem:[%s230 + $0x1e8] sm:$0xff]
      %v304 = vld [vmem:[%s230 + $0x1f0] sm:$0xff]
      %v305 = vld [vmem:[%s230 + $0x1f8] sm:$0xff]
      %v306 = vld [vmem:[%s230 + $0x200] sm:$0xff]
      %v307 = vld [vmem:[%s230 + $0x208] sm:$0xff]
      %v308 = vld [vmem:[%s230 + $0x210] sm:$0xff]
      %v309 = vld [vmem:[%s230 + $0x218] sm:$0xff]
      %v310 = vld [vmem:[%s230 + $0x220] sm:$0xff]
      %v311 = vld [vmem:[%s230 + $0x228] sm:$0xff]
      %v312 = vld [vmem:[%s230 + $0x230] sm:$0xff]
      %v313 = vld [vmem:[%s230 + $0x238] sm:$0xff]
      %v314 = vld [vmem:[%s230 + $0x240] sm:$0xff]
      %v315 = vld [vmem:[%s230 + $0x248] sm:$0xff]
      %v316 = vld [vmem:[%s230 + $0x250] sm:$0xff]
      %v317 = vld [vmem:[%s230 + $0x258] sm:$0xff]
      %v318 = vld [vmem:[%s230 + $0x260] sm:$0xff]
      %v319 = vld [vmem:[%s230 + $0x268] sm:$0xff]
      %v320 = vld [vmem:[%s230 + $0x270] sm:$0xff]
      %v321 = vld [vmem:[%s230 + $0x278] sm:$0xff]
      %v322 = vld [vmem:[%s230 + $0x280] sm:$0xff]
      %v323 = vld [vmem:[%s230 + $0x288] sm:$0xff]
      %v324 = vld [vmem:[%s230 + $0x290] sm:$0xff]
      %v325 = vld [vmem:[%s230 + $0x298] sm:$0xff]
      %v326 = vld [vmem:[%s230 + $0x2a0] sm:$0xff]
      %v327 = vld [vmem:[%s230 + $0x2a8] sm:$0xff]
      %v328 = vld [vmem:[%s230 + $0x2b0] sm:$0xff]
      %v329 = vld [vmem:[%s230 + $0x2b8] sm:$0xff]
      %v330 = vld [vmem:[%s230 + $0x2c0] sm:$0xff]
      %v331 = vld [vmem:[%s230 + $0x2c8] sm:$0xff]
      %v332 = vld [vmem:[%s230 + $0x2d0] sm:$0xff]
      %v333 = vld [vmem:[%s230 + $0x2d8] sm:$0xff]
      %v334 = vld [vmem:[%s230 + $0x2e0] sm:$0xff]
      %v335 = vld [vmem:[%s230 + $0x2e8] sm:$0xff]
      %v336 = vld [vmem:[%s230 + $0x2f0] sm:$0xff]
      %v337 = vld [vmem:[%s230 + $0x2f8] sm:$0xff]
      %v338 = vld [vmem:[%s1] sm:$0x7]
      %v340 = vperm.slane %v338, 0
      %v341 = vperm.slane %v338, 1
      %v342 = vperm.slane %v338, 2
      %v346 = vmul.f32 %v242, %v340
      %v347 = vmul.f32 %v243, %v341
      %v348 = vmul.f32 %v244, %v342
      %v349 = vmul.f32 %v245, %v340
      %v350 = vmul.f32 %v246, %v341
      %v351 = vmul.f32 %v247, %v342
      %v352 = vmul.f32 %v248, %v340
      %v353 = vmul.f32 %v249, %v341
      %v354 = vmul.f32 %v250, %v342
      %v355 = vmul.f32 %v251, %v340
      %v356 = vmul.f32 %v252, %v341
      %v357 = vmul.f32 %v253, %v342
      %v358 = vmul.f32 %v254, %v340
      %v359 = vmul.f32 %v255, %v341
      %v360 = vmul.f32 %v256, %v342
      %v361 = vmul.f32 %v257, %v340
      %v362 = vmul.f32 %v258, %v341
      %v363 = vmul.f32 %v259, %v342
      %v364 = vmul.f32 %v260, %v340
      %v365 = vmul.f32 %v261, %v341
      %v366 = vmul.f32 %v262, %v342
      %v367 = vmul.f32 %v263, %v340
      %v368 = vmul.f32 %v264, %v341
      %v369 = vmul.f32 %v265, %v342
      %v370 = vmul.f32 %v266, %v340
      %v371 = vmul.f32 %v267, %v341
      %v372 = vmul.f32 %v268, %v342
      %v373 = vmul.f32 %v269, %v340
      %v374 = vmul.f32 %v270, %v341
      %v375 = vmul.f32 %v271, %v342
      %v376 = vmul.f32 %v272, %v340
      %v377 = vmul.f32 %v273, %v341
      %v378 = vmul.f32 %v274, %v342
      %v379 = vmul.f32 %v275, %v340
      %v380 = vmul.f32 %v276, %v341
      %v381 = vmul.f32 %v277, %v342
      %v382 = vmul.f32 %v278, %v340
      %v383 = vmul.f32 %v279, %v341
      %v384 = vmul.f32 %v280, %v342
      %v385 = vmul.f32 %v281, %v340
      %v386 = vmul.f32 %v282, %v341
      %v387 = vmul.f32 %v283, %v342
      %v388 = vmul.f32 %v284, %v340
      %v389 = vmul.f32 %v285, %v341
      %v390 = vmul.f32 %v286, %v342
      %v391 = vmul.f32 %v287, %v340
      %v392 = vmul.f32 %v288, %v341
      %v393 = vmul.f32 %v289, %v342
      %v394 = vmul.f32 %v290, %v340
      %v395 = vmul.f32 %v291, %v341
      %v396 = vmul.f32 %v292, %v342
      %v397 = vmul.f32 %v293, %v340
      %v398 = vmul.f32 %v294, %v341
      %v399 = vmul.f32 %v295, %v342
      %v400 = vmul.f32 %v296, %v340
      %v401 = vmul.f32 %v297, %v341
      %v402 = vmul.f32 %v298, %v342
      %v403 = vmul.f32 %v299, %v340
      %v404 = vmul.f32 %v300, %v341
      %v405 = vmul.f32 %v301, %v342
      %v406 = vmul.f32 %v302, %v340
      %v407 = vmul.f32 %v303, %v341
      %v408 = vmul.f32 %v304, %v342
      %v409 = vmul.f32 %v305, %v340
      %v410 = vmul.f32 %v306, %v341
      %v411 = vmul.f32 %v307, %v342
      %v412 = vmul.f32 %v308, %v340
      %v413 = vmul.f32 %v309, %v341
      %v414 = vmul.f32 %v310, %v342
      %v415 = vmul.f32 %v311, %v340
      %v416 = vmul.f32 %v312, %v341
      %v417 = vmul.f32 %v313, %v342
      %v418 = vmul.f32 %v314, %v340
      %v419 = vmul.f32 %v315, %v341
      %v420 = vmul.f32 %v316, %v342
      %v421 = vmul.f32 %v317, %v340
      %v422 = vmul.f32 %v318, %v341
      %v423 = vmul.f32 %v319, %v342
      %v424 = vmul.f32 %v320, %v340
      %v425 = vmul.f32 %v321, %v341
      %v426 = vmul.f32 %v322, %v342
      %v427 = vmul.f32 %v323, %v340
      %v428 = vmul.f32 %v324, %v341
      %v429 = vmul.f32 %v325, %v342
      %v430 = vmul.f32 %v326, %v340
      %v431 = vmul.f32 %v327, %v341
      %v432 = vmul.f32 %v328, %v342
      %v433 = vmul.f32 %v329, %v340
      %v434 = vmul.f32 %v330, %v341
      %v435 = vmul.f32 %v331, %v342
      %v436 = vmul.f32 %v332, %v340
      %v437 = vmul.f32 %v333, %v341
      %v438 = vmul.f32 %v334, %v342
      %v439 = vmul.f32 %v335, %v340
      %v440 = vmul.f32 %v336, %v341
      %v441 = vmul.f32 %v337, %v342
      %v442 = vld [vmem:[%s2] sm:$0x7]
      %v444 = vperm.slane %v442, 0
      %v445 = vperm.slane %v442, 1
      %v446 = vperm.slane %v442, 2
      %v450 = vadd.f32 %v346, %v444
      %v451 = vadd.f32 %v347, %v445
      %v452 = vadd.f32 %v348, %v446
      %v453 = vadd.f32 %v349, %v444
      %v454 = vadd.f32 %v350, %v445
      %v455 = vadd.f32 %v351, %v446
      %v456 = vadd.f32 %v352, %v444
      %v457 = vadd.f32 %v353, %v445
      %v458 = vadd.f32 %v354, %v446
      %v459 = vadd.f32 %v355, %v444
      %v460 = vadd.f32 %v356, %v445
      %v461 = vadd.f32 %v357, %v446
      %v462 = vadd.f32 %v358, %v444
      %v463 = vadd.f32 %v359, %v445
      %v464 = vadd.f32 %v360, %v446
      %v465 = vadd.f32 %v361, %v444
      %v466 = vadd.f32 %v362, %v445
      %v467 = vadd.f32 %v363, %v446
      %v468 = vadd.f32 %v364, %v444
      %v469 = vadd.f32 %v365, %v445
      %v470 = vadd.f32 %v366, %v446
      %v471 = vadd.f32 %v367, %v444
      %v472 = vadd.f32 %v368, %v445
      %v473 = vadd.f32 %v369, %v446
      %v474 = vadd.f32 %v370, %v444
      %v475 = vadd.f32 %v371, %v445
      %v476 = vadd.f32 %v372, %v446
      %v477 = vadd.f32 %v373, %v444
      %v478 = vadd.f32 %v374, %v445
      %v479 = vadd.f32 %v375, %v446
      %v480 = vadd.f32 %v376, %v444
      %v481 = vadd.f32 %v377, %v445
      %v482 = vadd.f32 %v378, %v446
      %v483 = vadd.f32 %v379, %v444
      %v484 = vadd.f32 %v380, %v445
      %v485 = vadd.f32 %v381, %v446
      %v486 = vadd.f32 %v382, %v444
      %v487 = vadd.f32 %v383, %v445
      %v488 = vadd.f32 %v384, %v446
      %v489 = vadd.f32 %v385, %v444
      %v490 = vadd.f32 %v386, %v445
      %v491 = vadd.f32 %v387, %v446
      %v492 = vadd.f32 %v388, %v444
      %v493 = vadd.f32 %v389, %v445
      %v494 = vadd.f32 %v390, %v446
      %v495 = vadd.f32 %v391, %v444
      %v496 = vadd.f32 %v392, %v445
      %v497 = vadd.f32 %v393, %v446
      %v498 = vadd.f32 %v394, %v444
      %v499 = vadd.f32 %v395, %v445
      %v500 = vadd.f32 %v396, %v446
      %v501 = vadd.f32 %v397, %v444
      %v502 = vadd.f32 %v398, %v445
      %v503 = vadd.f32 %v399, %v446
      %v504 = vadd.f32 %v400, %v444
      %v505 = vadd.f32 %v401, %v445
      %v506 = vadd.f32 %v402, %v446
      %v507 = vadd.f32 %v403, %v444
      %v508 = vadd.f32 %v404, %v445
      %v509 = vadd.f32 %v405, %v446
      %v510 = vadd.f32 %v406, %v444
      %v511 = vadd.f32 %v407, %v445
      %v512 = vadd.f32 %v408, %v446
      %v513 = vadd.f32 %v409, %v444
      %v514 = vadd.f32 %v410, %v445
      %v515 = vadd.f32 %v411, %v446
      %v516 = vadd.f32 %v412, %v444
      %v517 = vadd.f32 %v413, %v445
      %v518 = vadd.f32 %v414, %v446
      %v519 = vadd.f32 %v415, %v444
      %v520 = vadd.f32 %v416, %v445
      %v521 = vadd.f32 %v417, %v446
      %v522 = vadd.f32 %v418, %v444
      %v523 = vadd.f32 %v419, %v445
      %v524 = vadd.f32 %v420, %v446
      %v525 = vadd.f32 %v421, %v444
      %v526 = vadd.f32 %v422, %v445
      %v527 = vadd.f32 %v423, %v446
      %v528 = vadd.f32 %v424, %v444
      %v529 = vadd.f32 %v425, %v445
      %v530 = vadd.f32 %v426, %v446
      %v531 = vadd.f32 %v427, %v444
      %v532 = vadd.f32 %v428, %v445
      %v533 = vadd.f32 %v429, %v446
      %v534 = vadd.f32 %v430, %v444
      %v535 = vadd.f32 %v431, %v445
      %v536 = vadd.f32 %v432, %v446
      %v537 = vadd.f32 %v433, %v444
      %v538 = vadd.f32 %v434, %v445
      %v539 = vadd.f32 %v435, %v446
      %v540 = vadd.f32 %v436, %v444
      %v541 = vadd.f32 %v437, %v445
      %v542 = vadd.f32 %v438, %v446
      %v543 = vadd.f32 %v439, %v444
      %v544 = vadd.f32 %v440, %v445
      %v545 = vadd.f32 %v441, %v446
      %vm546 = vcmp.ge.f32.partialorder %v450, 0.0
      %vm547 = vcmp.ge.f32.partialorder %v451, 0.0
      %vm548 = vcmp.ge.f32.partialorder %v452, 0.0
      %vm549 = vcmp.ge.f32.partialorder %v453, 0.0
      %vm550 = vcmp.ge.f32.partialorder %v454, 0.0
      %vm551 = vcmp.ge.f32.partialorder %v455, 0.0
      %vm552 = vcmp.ge.f32.partialorder %v456, 0.0
      %vm553 = vcmp.ge.f32.partialorder %v457, 0.0
      %vm554 = vcmp.ge.f32.partialorder %v458, 0.0
      %vm555 = vcmp.ge.f32.partialorder %v459, 0.0
      %vm556 = vcmp.ge.f32.partialorder %v460, 0.0
      %vm557 = vcmp.ge.f32.partialorder %v461, 0.0
      %vm558 = vcmp.ge.f32.partialorder %v462, 0.0
      %vm559 = vcmp.ge.f32.partialorder %v463, 0.0
      %vm560 = vcmp.ge.f32.partialorder %v464, 0.0
      %vm561 = vcmp.ge.f32.partialorder %v465, 0.0
      %vm562 = vcmp.ge.f32.partialorder %v466, 0.0
      %vm563 = vcmp.ge.f32.partialorder %v467, 0.0
      %vm564 = vcmp.ge.f32.partialorder %v468, 0.0
      %vm565 = vcmp.ge.f32.partialorder %v469, 0.0
      %vm566 = vcmp.ge.f32.partialorder %v470, 0.0
      %vm567 = vcmp.ge.f32.partialorder %v471, 0.0
      %vm568 = vcmp.ge.f32.partialorder %v472, 0.0
      %vm569 = vcmp.ge.f32.partialorder %v473, 0.0
      %vm570 = vcmp.ge.f32.partialorder %v474, 0.0
      %vm571 = vcmp.ge.f32.partialorder %v475, 0.0
      %vm572 = vcmp.ge.f32.partialorder %v476, 0.0
      %vm573 = vcmp.ge.f32.partialorder %v477, 0.0
      %vm574 = vcmp.ge.f32.partialorder %v478, 0.0
      %vm575 = vcmp.ge.f32.partialorder %v479, 0.0
      %vm576 = vcmp.ge.f32.partialorder %v480, 0.0
      %vm577 = vcmp.ge.f32.partialorder %v481, 0.0
      %vm578 = vcmp.ge.f32.partialorder %v482, 0.0
      %vm579 = vcmp.ge.f32.partialorder %v483, 0.0
      %vm580 = vcmp.ge.f32.partialorder %v484, 0.0
      %vm581 = vcmp.ge.f32.partialorder %v485, 0.0
      %vm582 = vcmp.ge.f32.partialorder %v486, 0.0
      %vm583 = vcmp.ge.f32.partialorder %v487, 0.0
      %vm584 = vcmp.ge.f32.partialorder %v488, 0.0
      %vm585 = vcmp.ge.f32.partialorder %v489, 0.0
      %vm586 = vcmp.ge.f32.partialorder %v490, 0.0
      %vm587 = vcmp.ge.f32.partialorder %v491, 0.0
      %vm588 = vcmp.ge.f32.partialorder %v492, 0.0
      %vm589 = vcmp.ge.f32.partialorder %v493, 0.0
      %vm590 = vcmp.ge.f32.partialorder %v494, 0.0
      %vm591 = vcmp.ge.f32.partialorder %v495, 0.0
      %vm592 = vcmp.ge.f32.partialorder %v496, 0.0
      %vm593 = vcmp.ge.f32.partialorder %v497, 0.0
      %vm594 = vcmp.ge.f32.partialorder %v498, 0.0
      %vm595 = vcmp.ge.f32.partialorder %v499, 0.0
      %vm596 = vcmp.ge.f32.partialorder %v500, 0.0
      %vm597 = vcmp.ge.f32.partialorder %v501, 0.0
      %vm598 = vcmp.ge.f32.partialorder %v502, 0.0
      %vm599 = vcmp.ge.f32.partialorder %v503, 0.0
      %vm600 = vcmp.ge.f32.partialorder %v504, 0.0
      %vm601 = vcmp.ge.f32.partialorder %v505, 0.0
      %vm602 = vcmp.ge.f32.partialorder %v506, 0.0
      %vm603 = vcmp.ge.f32.partialorder %v507, 0.0
      %vm604 = vcmp.ge.f32.partialorder %v508, 0.0
      %vm605 = vcmp.ge.f32.partialorder %v509, 0.0
      %vm606 = vcmp.ge.f32.partialorder %v510, 0.0
      %vm607 = vcmp.ge.f32.partialorder %v511, 0.0
      %vm608 = vcmp.ge.f32.partialorder %v512, 0.0
      %vm609 = vcmp.ge.f32.partialorder %v513, 0.0
      %vm610 = vcmp.ge.f32.partialorder %v514, 0.0
      %vm611 = vcmp.ge.f32.partialorder %v515, 0.0
      %vm612 = vcmp.ge.f32.partialorder %v516, 0.0
      %vm613 = vcmp.ge.f32.partialorder %v517, 0.0
      %vm614 = vcmp.ge.f32.partialorder %v518, 0.0
      %vm615 = vcmp.ge.f32.partialorder %v519, 0.0
      %vm616 = vcmp.ge.f32.partialorder %v520, 0.0
      %vm617 = vcmp.ge.f32.partialorder %v521, 0.0
      %vm618 = vcmp.ge.f32.partialorder %v522, 0.0
      %vm619 = vcmp.ge.f32.partialorder %v523, 0.0
      %vm620 = vcmp.ge.f32.partialorder %v524, 0.0
      %vm621 = vcmp.ge.f32.partialorder %v525, 0.0
      %vm622 = vcmp.ge.f32.partialorder %v526, 0.0
      %vm623 = vcmp.ge.f32.partialorder %v527, 0.0
      %vm624 = vcmp.ge.f32.partialorder %v528, 0.0
      %vm625 = vcmp.ge.f32.partialorder %v529, 0.0
      %vm626 = vcmp.ge.f32.partialorder %v530, 0.0
      %vm627 = vcmp.ge.f32.partialorder %v531, 0.0
      %vm628 = vcmp.ge.f32.partialorder %v532, 0.0
      %vm629 = vcmp.ge.f32.partialorder %v533, 0.0
      %vm630 = vcmp.ge.f32.partialorder %v534, 0.0
      %vm631 = vcmp.ge.f32.partialorder %v535, 0.0
      %vm632 = vcmp.ge.f32.partialorder %v536, 0.0
      %vm633 = vcmp.ge.f32.partialorder %v537, 0.0
      %vm634 = vcmp.ge.f32.partialorder %v538, 0.0
      %vm635 = vcmp.ge.f32.partialorder %v539, 0.0
      %vm636 = vcmp.ge.f32.partialorder %v540, 0.0
      %vm637 = vcmp.ge.f32.partialorder %v541, 0.0
      %vm638 = vcmp.ge.f32.partialorder %v542, 0.0
      %vm639 = vcmp.ge.f32.partialorder %v543, 0.0
      %vm640 = vcmp.ge.f32.partialorder %v544, 0.0
      %vm641 = vcmp.ge.f32.partialorder %v545, 0.0
      %v642 = vmul.f32 %v450, 0.1
      %v643 = vmul.f32 %v451, 0.1
      %v644 = vmul.f32 %v452, 0.1
      %v645 = vmul.f32 %v453, 0.1
      %v646 = vmul.f32 %v454, 0.1
      %v647 = vmul.f32 %v455, 0.1
      %v648 = vmul.f32 %v456, 0.1
      %v649 = vmul.f32 %v457, 0.1
      %v650 = vmul.f32 %v458, 0.1
      %v651 = vmul.f32 %v459, 0.1
      %v652 = vmul.f32 %v460, 0.1
      %v653 = vmul.f32 %v461, 0.1
      %v654 = vmul.f32 %v462, 0.1
      %v655 = vmul.f32 %v463, 0.1
      %v656 = vmul.f32 %v464, 0.1
      %v657 = vmul.f32 %v465, 0.1
      %v658 = vmul.f32 %v466, 0.1
      %v659 = vmul.f32 %v467, 0.1
      %v660 = vmul.f32 %v468, 0.1
      %v661 = vmul.f32 %v469, 0.1
      %v662 = vmul.f32 %v470, 0.1
      %v663 = vmul.f32 %v471, 0.1
      %v664 = vmul.f32 %v472, 0.1
      %v665 = vmul.f32 %v473, 0.1
      %v666 = vmul.f32 %v474, 0.1
      %v667 = vmul.f32 %v475, 0.1
      %v668 = vmul.f32 %v476, 0.1
      %v669 = vmul.f32 %v477, 0.1
      %v670 = vmul.f32 %v478, 0.1
      %v671 = vmul.f32 %v479, 0.1
      %v672 = vmul.f32 %v480, 0.1
      %v673 = vmul.f32 %v481, 0.1
      %v674 = vmul.f32 %v482, 0.1
      %v675 = vmul.f32 %v483, 0.1
      %v676 = vmul.f32 %v484, 0.1
      %v677 = vmul.f32 %v485, 0.1
      %v678 = vmul.f32 %v486, 0.1
      %v679 = vmul.f32 %v487, 0.1
      %v680 = vmul.f32 %v488, 0.1
      %v681 = vmul.f32 %v489, 0.1
      %v682 = vmul.f32 %v490, 0.1
      %v683 = vmul.f32 %v491, 0.1
      %v684 = vmul.f32 %v492, 0.1
      %v685 = vmul.f32 %v493, 0.1
      %v686 = vmul.f32 %v494, 0.1
      %v687 = vmul.f32 %v495, 0.1
      %v688 = vmul.f32 %v496, 0.1
      %v689 = vmul.f32 %v497, 0.1
      %v690 = vmul.f32 %v498, 0.1
      %v691 = vmul.f32 %v499, 0.1
      %v692 = vmul.f32 %v500, 0.1
      %v693 = vmul.f32 %v501, 0.1
      %v694 = vmul.f32 %v502, 0.1
      %v695 = vmul.f32 %v503, 0.1
      %v696 = vmul.f32 %v504, 0.1
      %v697 = vmul.f32 %v505, 0.1
      %v698 = vmul.f32 %v506, 0.1
      %v699 = vmul.f32 %v507, 0.1
      %v700 = vmul.f32 %v508, 0.1
      %v701 = vmul.f32 %v509, 0.1
      %v702 = vmul.f32 %v510, 0.1
      %v703 = vmul.f32 %v511, 0.1
      %v704 = vmul.f32 %v512, 0.1
      %v705 = vmul.f32 %v513, 0.1
      %v706 = vmul.f32 %v514, 0.1
      %v707 = vmul.f32 %v515, 0.1
      %v708 = vmul.f32 %v516, 0.1
      %v709 = vmul.f32 %v517, 0.1
      %v710 = vmul.f32 %v518, 0.1
      %v711 = vmul.f32 %v519, 0.1
      %v712 = vmul.f32 %v520, 0.1
      %v713 = vmul.f32 %v521, 0.1
      %v714 = vmul.f32 %v522, 0.1
      %v715 = vmul.f32 %v523, 0.1
      %v716 = vmul.f32 %v524, 0.1
      %v717 = vmul.f32 %v525, 0.1
      %v718 = vmul.f32 %v526, 0.1
      %v719 = vmul.f32 %v527, 0.1
      %v720 = vmul.f32 %v528, 0.1
      %v721 = vmul.f32 %v529, 0.1
      %v722 = vmul.f32 %v530, 0.1
      %v723 = vmul.f32 %v531, 0.1
      %v724 = vmul.f32 %v532, 0.1
      %v725 = vmul.f32 %v533, 0.1
      %v726 = vmul.f32 %v534, 0.1
      %v727 = vmul.f32 %v535, 0.1
      %v728 = vmul.f32 %v536, 0.1
      %v729 = vmul.f32 %v537, 0.1
      %v730 = vmul.f32 %v538, 0.1
      %v731 = vmul.f32 %v539, 0.1
      %v732 = vmul.f32 %v540, 0.1
      %v733 = vmul.f32 %v541, 0.1
      %v734 = vmul.f32 %v542, 0.1
      %v735 = vmul.f32 %v543, 0.1
      %v736 = vmul.f32 %v544, 0.1
      %v737 = vmul.f32 %v545, 0.1
      %v738 = vsel %vm546, %v450, %v642
      %v739 = vsel %vm547, %v451, %v643
      %v740 = vsel %vm548, %v452, %v644
      %v741 = vsel %vm549, %v453, %v645
      %v742 = vsel %vm550, %v454, %v646
      %v743 = vsel %vm551, %v455, %v647
      %v744 = vsel %vm552, %v456, %v648
      %v745 = vsel %vm553, %v457, %v649
      %v746 = vsel %vm554, %v458, %v650
      %v747 = vsel %vm555, %v459, %v651
      %v748 = vsel %vm556, %v460, %v652
      %v749 = vsel %vm557, %v461, %v653
      %v750 = vsel %vm558, %v462, %v654
      %v751 = vsel %vm559, %v463, %v655
      %v752 = vsel %vm560, %v464, %v656
      %v753 = vsel %vm561, %v465, %v657
      %v754 = vsel %vm562, %v466, %v658
      %v755 = vsel %vm563, %v467, %v659
      %v756 = vsel %vm564, %v468, %v660
      %v757 = vsel %vm565, %v469, %v661
      %v758 = vsel %vm566, %v470, %v662
      %v759 = vsel %vm567, %v471, %v663
      %v760 = vsel %vm568, %v472, %v664
      %v761 = vsel %vm569, %v473, %v665
      %v762 = vsel %vm570, %v474, %v666
      %v763 = vsel %vm571, %v475, %v667
      %v764 = vsel %vm572, %v476, %v668
      %v765 = vsel %vm573, %v477, %v669
      %v766 = vsel %vm574, %v478, %v670
      %v767 = vsel %vm575, %v479, %v671
      %v768 = vsel %vm576, %v480, %v672
      %v769 = vsel %vm577, %v481, %v673
      %v770 = vsel %vm578, %v482, %v674
      %v771 = vsel %vm579, %v483, %v675
      %v772 = vsel %vm580, %v484, %v676
      %v773 = vsel %vm581, %v485, %v677
      %v774 = vsel %vm582, %v486, %v678
      %v775 = vsel %vm583, %v487, %v679
      %v776 = vsel %vm584, %v488, %v680
      %v777 = vsel %vm585, %v489, %v681
      %v778 = vsel %vm586, %v490, %v682
      %v779 = vsel %vm587, %v491, %v683
      %v780 = vsel %vm588, %v492, %v684
      %v781 = vsel %vm589, %v493, %v685
      %v782 = vsel %vm590, %v494, %v686
      %v783 = vsel %vm591, %v495, %v687
      %v784 = vsel %vm592, %v496, %v688
      %v785 = vsel %vm593, %v497, %v689
      %v786 = vsel %vm594, %v498, %v690
      %v787 = vsel %vm595, %v499, %v691
      %v788 = vsel %vm596, %v500, %v692
      %v789 = vsel %vm597, %v501, %v693
      %v790 = vsel %vm598, %v502, %v694
      %v791 = vsel %vm599, %v503, %v695
      %v792 = vsel %vm600, %v504, %v696
      %v793 = vsel %vm601, %v505, %v697
      %v794 = vsel %vm602, %v506, %v698
      %v795 = vsel %vm603, %v507, %v699
      %v796 = vsel %vm604, %v508, %v700
      %v797 = vsel %vm605, %v509, %v701
      %v798 = vsel %vm606, %v510, %v702
      %v799 = vsel %vm607, %v511, %v703
      %v800 = vsel %vm608, %v512, %v704
      %v801 = vsel %vm609, %v513, %v705
      %v802 = vsel %vm610, %v514, %v706
      %v803 = vsel %vm611, %v515, %v707
      %v804 = vsel %vm612, %v516, %v708
      %v805 = vsel %vm613, %v517, %v709
      %v806 = vsel %vm614, %v518, %v710
      %v807 = vsel %vm615, %v519, %v711
      %v808 = vsel %vm616, %v520, %v712
      %v809 = vsel %vm617, %v521, %v713
      %v810 = vsel %vm618, %v522, %v714
      %v811 = vsel %vm619, %v523, %v715
      %v812 = vsel %vm620, %v524, %v716
      %v813 = vsel %vm621, %v525, %v717
      %v814 = vsel %vm622, %v526, %v718
      %v815 = vsel %vm623, %v527, %v719
      %v816 = vsel %vm624, %v528, %v720
      %v817 = vsel %vm625, %v529, %v721
      %v818 = vsel %vm626, %v530, %v722
      %v819 = vsel %vm627, %v531, %v723
      %v820 = vsel %vm628, %v532, %v724
      %v821 = vsel %vm629, %v533, %v725
      %v822 = vsel %vm630, %v534, %v726
      %v823 = vsel %vm631, %v535, %v727
      %v824 = vsel %vm632, %v536, %v728
      %v825 = vsel %vm633, %v537, %v729
      %v826 = vsel %vm634, %v538, %v730
      %v827 = vsel %vm635, %v539, %v731
      %v828 = vsel %vm636, %v540, %v732
      %v829 = vsel %vm637, %v541, %v733
      %v830 = vsel %vm638, %v542, %v734
      %v831 = vsel %vm639, %v543, %v735
      %v832 = vsel %vm640, %v544, %v736
      %v833 = vsel %vm641, %v545, %v737
      %v834 = vld [vmem:[%s3] sm:$0xff]
      %v835 = vld [vmem:[%s3 + $0x8] sm:$0xff]
      %v836 = vld [vmem:[%s3 + $0x10] sm:$0xff]
      %v837 = vld [vmem:[%s3 + $0x18] sm:$0xff]
      %v838 = vld [vmem:[%s3 + $0x20] sm:$0xff]
      %v839 = vld [vmem:[%s3 + $0x28] sm:$0xff]
      %v840 = vld [vmem:[%s3 + $0x30] sm:$0xff]
      %v841 = vld [vmem:[%s3 + $0x38] sm:$0xff]
      %v842 = vld [vmem:[%s3 + $0x40] sm:$0xff]
      %v843 = vld [vmem:[%s3 + $0x48] sm:$0xff]
      %v844 = vld [vmem:[%s3 + $0x50] sm:$0xff]
      %v845 = vld [vmem:[%s3 + $0x58] sm:$0xff]
      %v846 = vld [vmem:[%s3 + $0x60] sm:$0xff]
      %v847 = vld [vmem:[%s3 + $0x68] sm:$0xff]
      %v848 = vld [vmem:[%s3 + $0x70] sm:$0xff]
      %v849 = vld [vmem:[%s3 + $0x78] sm:$0xff]
      %v850 = vld [vmem:[%s3 + $0x80] sm:$0xff]
      %v851 = vld [vmem:[%s3 + $0x88] sm:$0xff]
      %v852 = vld [vmem:[%s3 + $0x90] sm:$0xff]
      %v853 = vld [vmem:[%s3 + $0x98] sm:$0xff]
      %v854 = vld [vmem:[%s3 + $0xa0] sm:$0xff]
      %v855 = vld [vmem:[%s3 + $0xa8] sm:$0xff]
      %v856 = vld [vmem:[%s3 + $0xb0] sm:$0xff]
      %v857 = vld [vmem:[%s3 + $0xb8] sm:$0xff]
      %v858 = vld [vmem:[%s3 + $0xc0] sm:$0xff]
      %v859 = vld [vmem:[%s3 + $0xc8] sm:$0xff]
      %v860 = vld [vmem:[%s3 + $0xd0] sm:$0xff]
      %v861 = vld [vmem:[%s3 + $0xd8] sm:$0xff]
      %v862 = vld [vmem:[%s3 + $0xe0] sm:$0xff]
      %v863 = vld [vmem:[%s3 + $0xe8] sm:$0xff]
      %v864 = vld [vmem:[%s3 + $0xf0] sm:$0xff]
      %v865 = vld [vmem:[%s3 + $0xf8] sm:$0xff]
      %v866 = vld [vmem:[%s3 + $0x100] sm:$0xff]
      %v867 = vld [vmem:[%s3 + $0x108] sm:$0xff]
      %v868 = vld [vmem:[%s3 + $0x110] sm:$0xff]
      %v869 = vld [vmem:[%s3 + $0x118] sm:$0xff]
      %vm870 = vcmask 261120
      %v872 = vsel %vm870, %v740, 0
      %v875 = vsel %vm870, %v743, 0
      %v878 = vsel %vm870, %v746, 0
      %v881 = vsel %vm870, %v749, 0
      %v884 = vsel %vm870, %v752, 0
      %v887 = vsel %vm870, %v755, 0
      %v890 = vsel %vm870, %v758, 0
      %v893 = vsel %vm870, %v761, 0
      %v896 = vsel %vm870, %v764, 0
      %v899 = vsel %vm870, %v767, 0
      %v902 = vsel %vm870, %v770, 0
      %v905 = vsel %vm870, %v773, 0
      %v908 = vsel %vm870, %v776, 0
      %v911 = vsel %vm870, %v779, 0
      %v914 = vsel %vm870, %v782, 0
      %v917 = vsel %vm870, %v785, 0
      %v920 = vsel %vm870, %v788, 0
      %v923 = vsel %vm870, %v791, 0
      %v926 = vsel %vm870, %v794, 0
      %v929 = vsel %vm870, %v797, 0
      %v932 = vsel %vm870, %v800, 0
      %v935 = vsel %vm870, %v803, 0
      %v938 = vsel %vm870, %v806, 0
      %v941 = vsel %vm870, %v809, 0
      %v944 = vsel %vm870, %v812, 0
      %v947 = vsel %vm870, %v815, 0
      %v950 = vsel %vm870, %v818, 0
      %v953 = vsel %vm870, %v821, 0
      %v956 = vsel %vm870, %v824, 0
      %v959 = vsel %vm870, %v827, 0
      %v962 = vsel %vm870, %v830, 0
      %v965 = vsel %vm870, %v833, 0
      %967 = vmatpush.msra.mxu0 %v849
      %968 = vmatpush.msra.mxu0 %v848
      %969 = vmatpush.msra.mxu0 %v847
      %970 = vmatpush.msra.mxu0 %v846
      %971 = vmatpush.msra.mxu0 %v845
      %972 = vmatpush.msra.mxu0 %v844
      %973 = vmatpush.msra.mxu0 %v843
      %974 = vmatpush.msra.mxu0 %v842
      %975 = vmatpush.msra.mxu0 %v841
      %976 = vmatpush.msra.mxu0 %v840
      %977 = vmatpush.msra.mxu0 %v839
      %978 = vmatpush.msra.mxu0 %v838
      %979 = vmatpush.msra.mxu0 %v837
      %980 = vmatpush.msra.mxu0 %v836
      %981 = vmatpush.msra.mxu0 %v835
      %982 = vmatpush.msra.mxu0 %v834
      %983 = vmatmul.f32.gmra.mxu0 %v738
      %v984 = vpop.f32.mrf.mxu0
      %v985 = vadd.f32 0.0, %v984
      %986 = vmatmul.f32.gmra.mxu0 %v741
      %v987 = vpop.f32.mrf.mxu0
      %v988 = vadd.f32 0.0, %v987
      %989 = vmatmul.f32.gmra.mxu0 %v744
      %v990 = vpop.f32.mrf.mxu0
      %v991 = vadd.f32 0.0, %v990
      %992 = vmatmul.f32.gmra.mxu0 %v747
      %v993 = vpop.f32.mrf.mxu0
      %v994 = vadd.f32 0.0, %v993
      %995 = vmatmul.f32.gmra.mxu0 %v750
      %v996 = vpop.f32.mrf.mxu0
      %v997 = vadd.f32 0.0, %v996
      %998 = vmatmul.f32.gmra.mxu0 %v753
      %v999 = vpop.f32.mrf.mxu0
      %v1000 = vadd.f32 0.0, %v999
      %1001 = vmatmul.f32.gmra.mxu0 %v756
      %v1002 = vpop.f32.mrf.mxu0
      %v1003 = vadd.f32 0.0, %v1002
      %1004 = vmatmul.f32.gmra.mxu0 %v759
      %v1005 = vpop.f32.mrf.mxu0
      %v1006 = vadd.f32 0.0, %v1005
      %1007 = vmatmul.f32.gmra.mxu0 %v762
      %v1008 = vpop.f32.mrf.mxu0
      %v1009 = vadd.f32 0.0, %v1008
      %1010 = vmatmul.f32.gmra.mxu0 %v765
      %v1011 = vpop.f32.mrf.mxu0
      %v1012 = vadd.f32 0.0, %v1011
      %1013 = vmatmul.f32.gmra.mxu0 %v768
      %v1014 = vpop.f32.mrf.mxu0
      %v1015 = vadd.f32 0.0, %v1014
      %1016 = vmatmul.f32.gmra.mxu0 %v771
      %v1017 = vpop.f32.mrf.mxu0
      %v1018 = vadd.f32 0.0, %v1017
      %1019 = vmatmul.f32.gmra.mxu0 %v774
      %v1020 = vpop.f32.mrf.mxu0
      %v1021 = vadd.f32 0.0, %v1020
      %1022 = vmatmul.f32.gmra.mxu0 %v777
      %v1023 = vpop.f32.mrf.mxu0
      %v1024 = vadd.f32 0.0, %v1023
      %1025 = vmatmul.f32.gmra.mxu0 %v780
      %v1026 = vpop.f32.mrf.mxu0
      %v1027 = vadd.f32 0.0, %v1026
      %1028 = vmatmul.f32.gmra.mxu0 %v783
      %v1029 = vpop.f32.mrf.mxu0
      %v1030 = vadd.f32 0.0, %v1029
      %1031 = vmatmul.f32.gmra.mxu0 %v786
      %v1032 = vpop.f32.mrf.mxu0
      %v1033 = vadd.f32 0.0, %v1032
      %1034 = vmatmul.f32.gmra.mxu0 %v789
      %v1035 = vpop.f32.mrf.mxu0
      %v1036 = vadd.f32 0.0, %v1035
      %1037 = vmatmul.f32.gmra.mxu0 %v792
      %v1038 = vpop.f32.mrf.mxu0
      %v1039 = vadd.f32 0.0, %v1038
      %1040 = vmatmul.f32.gmra.mxu0 %v795
      %v1041 = vpop.f32.mrf.mxu0
      %v1042 = vadd.f32 0.0, %v1041
      %1043 = vmatmul.f32.gmra.mxu0 %v798
      %v1044 = vpop.f32.mrf.mxu0
      %v1045 = vadd.f32 0.0, %v1044
      %1046 = vmatmul.f32.gmra.mxu0 %v801
      %v1047 = vpop.f32.mrf.mxu0
      %v1048 = vadd.f32 0.0, %v1047
      %1049 = vmatmul.f32.gmra.mxu0 %v804
      %v1050 = vpop.f32.mrf.mxu0
      %v1051 = vadd.f32 0.0, %v1050
      %1052 = vmatmul.f32.gmra.mxu0 %v807
      %v1053 = vpop.f32.mrf.mxu0
      %v1054 = vadd.f32 0.0, %v1053
      %1055 = vmatmul.f32.gmra.mxu0 %v810
      %v1056 = vpop.f32.mrf.mxu0
      %v1057 = vadd.f32 0.0, %v1056
      %1058 = vmatmul.f32.gmra.mxu0 %v813
      %v1059 = vpop.f32.mrf.mxu0
      %v1060 = vadd.f32 0.0, %v1059
      %1061 = vmatmul.f32.gmra.mxu0 %v816
      %v1062 = vpop.f32.mrf.mxu0
      %v1063 = vadd.f32 0.0, %v1062
      %1064 = vmatmul.f32.gmra.mxu0 %v819
      %v1065 = vpop.f32.mrf.mxu0
      %v1066 = vadd.f32 0.0, %v1065
      %1067 = vmatmul.f32.gmra.mxu0 %v822
      %v1068 = vpop.f32.mrf.mxu0
      %v1069 = vadd.f32 0.0, %v1068
      %1070 = vmatmul.f32.gmra.mxu0 %v825
      %v1071 = vpop.f32.mrf.mxu0
      %v1072 = vadd.f32 0.0, %v1071
      %1073 = vmatmul.f32.gmra.mxu0 %v828
      %v1074 = vpop.f32.mrf.mxu0
      %v1075 = vadd.f32 0.0, %v1074
      %1076 = vmatmul.f32.gmra.mxu0 %v831
      %v1077 = vpop.f32.mrf.mxu0
      %v1078 = vadd.f32 0.0, %v1077
      %1079 = vdwg.mxu0
      %1080 = vmatpush.msra.mxu0 %v865
      %1081 = vmatpush.msra.mxu0 %v864
      %1082 = vmatpush.msra.mxu0 %v863
      %1083 = vmatpush.msra.mxu0 %v862
      %1084 = vmatpush.msra.mxu0 %v861
      %1085 = vmatpush.msra.mxu0 %v860
      %1086 = vmatpush.msra.mxu0 %v859
      %1087 = vmatpush.msra.mxu0 %v858
      %1088 = vmatpush.msra.mxu0 %v857
      %1089 = vmatpush.msra.mxu0 %v856
      %1090 = vmatpush.msra.mxu0 %v855
      %1091 = vmatpush.msra.mxu0 %v854
      %1092 = vmatpush.msra.mxu0 %v853
      %1093 = vmatpush.msra.mxu0 %v852
      %1094 = vmatpush.msra.mxu0 %v851
      %1095 = vmatpush.msra.mxu0 %v850
      %1096 = vmatmul.f32.gmra.mxu0 %v739
      %v1097 = vpop.f32.mrf.mxu0
      %v1098 = vadd.f32 %v985, %v1097
      %1099 = vmatmul.f32.gmra.mxu0 %v742
      %v1100 = vpop.f32.mrf.mxu0
      %v1101 = vadd.f32 %v988, %v1100
      %1102 = vmatmul.f32.gmra.mxu0 %v745
      %v1103 = vpop.f32.mrf.mxu0
      %v1104 = vadd.f32 %v991, %v1103
      %1105 = vmatmul.f32.gmra.mxu0 %v748
      %v1106 = vpop.f32.mrf.mxu0
      %v1107 = vadd.f32 %v994, %v1106
      %1108 = vmatmul.f32.gmra.mxu0 %v751
      %v1109 = vpop.f32.mrf.mxu0
      %v1110 = vadd.f32 %v997, %v1109
      %1111 = vmatmul.f32.gmra.mxu0 %v754
      %v1112 = vpop.f32.mrf.mxu0
      %v1113 = vadd.f32 %v1000, %v1112
      %1114 = vmatmul.f32.gmra.mxu0 %v757
      %v1115 = vpop.f32.mrf.mxu0
      %v1116 = vadd.f32 %v1003, %v1115
      %1117 = vmatmul.f32.gmra.mxu0 %v760
      %v1118 = vpop.f32.mrf.mxu0
      %v1119 = vadd.f32 %v1006, %v1118
      %1120 = vmatmul.f32.gmra.mxu0 %v763
      %v1121 = vpop.f32.mrf.mxu0
      %v1122 = vadd.f32 %v1009, %v1121
      %1123 = vmatmul.f32.gmra.mxu0 %v766
      %v1124 = vpop.f32.mrf.mxu0
      %v1125 = vadd.f32 %v1012, %v1124
      %1126 = vmatmul.f32.gmra.mxu0 %v769
      %v1127 = vpop.f32.mrf.mxu0
      %v1128 = vadd.f32 %v1015, %v1127
      %1129 = vmatmul.f32.gmra.mxu0 %v772
      %v1130 = vpop.f32.mrf.mxu0
      %v1131 = vadd.f32 %v1018, %v1130
      %1132 = vmatmul.f32.gmra.mxu0 %v775
      %v1133 = vpop.f32.mrf.mxu0
      %v1134 = vadd.f32 %v1021, %v1133
      %1135 = vmatmul.f32.gmra.mxu0 %v778
      %v1136 = vpop.f32.mrf.mxu0
      %v1137 = vadd.f32 %v1024, %v1136
      %1138 = vmatmul.f32.gmra.mxu0 %v781
      %v1139 = vpop.f32.mrf.mxu0
      %v1140 = vadd.f32 %v1027, %v1139
      %1141 = vmatmul.f32.gmra.mxu0 %v784
      %v1142 = vpop.f32.mrf.mxu0
      %v1143 = vadd.f32 %v1030, %v1142
      %1144 = vmatmul.f32.gmra.mxu0 %v787
      %v1145 = vpop.f32.mrf.mxu0
      %v1146 = vadd.f32 %v1033, %v1145
      %1147 = vmatmul.f32.gmra.mxu0 %v790
      %v1148 = vpop.f32.mrf.mxu0
      %v1149 = vadd.f32 %v1036, %v1148
      %1150 = vmatmul.f32.gmra.mxu0 %v793
      %v1151 = vpop.f32.mrf.mxu0
      %v1152 = vadd.f32 %v1039, %v1151
      %1153 = vmatmul.f32.gmra.mxu0 %v796
      %v1154 = vpop.f32.mrf.mxu0
      %v1155 = vadd.f32 %v1042, %v1154
      %1156 = vmatmul.f32.gmra.mxu0 %v799
      %v1157 = vpop.f32.mrf.mxu0
      %v1158 = vadd.f32 %v1045, %v1157
      %1159 = vmatmul.f32.gmra.mxu0 %v802
      %v1160 = vpop.f32.mrf.mxu0
      %v1161 = vadd.f32 %v1048, %v1160
      %1162 = vmatmul.f32.gmra.mxu0 %v805
      %v1163 = vpop.f32.mrf.mxu0
      %v1164 = vadd.f32 %v1051, %v1163
      %1165 = vmatmul.f32.gmra.mxu0 %v808
      %v1166 = vpop.f32.mrf.mxu0
      %v1167 = vadd.f32 %v1054, %v1166
      %1168 = vmatmul.f32.gmra.mxu0 %v811
      %v1169 = vpop.f32.mrf.mxu0
      %v1170 = vadd.f32 %v1057, %v1169
      %1171 = vmatmul.f32.gmra.mxu0 %v814
      %v1172 = vpop.f32.mrf.mxu0
      %v1173 = vadd.f32 %v1060, %v1172
      %1174 = vmatmul.f32.gmra.mxu0 %v817
      %v1175 = vpop.f32.mrf.mxu0
      %v1176 = vadd.f32 %v1063, %v1175
      %1177 = vmatmul.f32.gmra.mxu0 %v820
      %v1178 = vpop.f32.mrf.mxu0
      %v1179 = vadd.f32 %v1066, %v1178
      %1180 = vmatmul.f32.gmra.mxu0 %v823
      %v1181 = vpop.f32.mrf.mxu0
      %v1182 = vadd.f32 %v1069, %v1181
      %1183 = vmatmul.f32.gmra.mxu0 %v826
      %v1184 = vpop.f32.mrf.mxu0
      %v1185 = vadd.f32 %v1072, %v1184
      %1186 = vmatmul.f32.gmra.mxu0 %v829
      %v1187 = vpop.f32.mrf.mxu0
      %v1188 = vadd.f32 %v1075, %v1187
      %1189 = vmatmul.f32.gmra.mxu0 %v832
      %v1190 = vpop.f32.mrf.mxu0
      %v1191 = vadd.f32 %v1078, %v1190
      %1192 = vdwg.mxu0
      %1193 = vmatpush.msra.mxu0 0.0
      %1194 = vmatpush.msra.mxu0 0.0
      %1195 = vmatpush.msra.mxu0 0.0
      %1196 = vmatpush.msra.mxu0 0.0
      %1197 = vmatpush.msra.mxu0 0.0
      %1198 = vmatpush.msra.mxu0 0.0
      %1199 = vmatpush.msra.mxu0 0.0
      %1200 = vmatpush.msra.mxu0 0.0
      %1201 = vmatpush.msra.mxu0 0.0
      %1202 = vmatpush.msra.mxu0 0.0
      %1203 = vmatpush.msra.mxu0 0.0
      %1204 = vmatpush.msra.mxu0 0.0
      %1205 = vmatpush.msra.mxu0 %v869
      %1206 = vmatpush.msra.mxu0 %v868
      %1207 = vmatpush.msra.mxu0 %v867
      %1208 = vmatpush.msra.mxu0 %v866
      %1209 = vmatmul.f32.gmra.mxu0 %v872
      %v1210 = vpop.f32.mrf.mxu0
      %v1211 = vadd.f32 %v1098, %v1210
      %1212 = vmatmul.f32.gmra.mxu0 %v875
      %v1213 = vpop.f32.mrf.mxu0
      %v1214 = vadd.f32 %v1101, %v1213
      %1215 = vmatmul.f32.gmra.mxu0 %v878
      %v1216 = vpop.f32.mrf.mxu0
      %v1217 = vadd.f32 %v1104, %v1216
      %1218 = vmatmul.f32.gmra.mxu0 %v881
      %v1219 = vpop.f32.mrf.mxu0
      %v1220 = vadd.f32 %v1107, %v1219
      %1221 = vmatmul.f32.gmra.mxu0 %v884
      %v1222 = vpop.f32.mrf.mxu0
      %v1223 = vadd.f32 %v1110, %v1222
      %1224 = vmatmul.f32.gmra.mxu0 %v887
      %v1225 = vpop.f32.mrf.mxu0
      %v1226 = vadd.f32 %v1113, %v1225
      %1227 = vmatmul.f32.gmra.mxu0 %v890
      %v1228 = vpop.f32.mrf.mxu0
      %v1229 = vadd.f32 %v1116, %v1228
      %1230 = vmatmul.f32.gmra.mxu0 %v893
      %v1231 = vpop.f32.mrf.mxu0
      %v1232 = vadd.f32 %v1119, %v1231
      %1233 = vmatmul.f32.gmra.mxu0 %v896
      %v1234 = vpop.f32.mrf.mxu0
      %v1235 = vadd.f32 %v1122, %v1234
      %1236 = vmatmul.f32.gmra.mxu0 %v899
      %v1237 = vpop.f32.mrf.mxu0
      %v1238 = vadd.f32 %v1125, %v1237
      %1239 = vmatmul.f32.gmra.mxu0 %v902
      %v1240 = vpop.f32.mrf.mxu0
      %v1241 = vadd.f32 %v1128, %v1240
      %1242 = vmatmul.f32.gmra.mxu0 %v905
      %v1243 = vpop.f32.mrf.mxu0
      %v1244 = vadd.f32 %v1131, %v1243
      %1245 = vmatmul.f32.gmra.mxu0 %v908
      %v1246 = vpop.f32.mrf.mxu0
      %v1247 = vadd.f32 %v1134, %v1246
      %1248 = vmatmul.f32.gmra.mxu0 %v911
      %v1249 = vpop.f32.mrf.mxu0
      %v1250 = vadd.f32 %v1137, %v1249
      %1251 = vmatmul.f32.gmra.mxu0 %v914
      %v1252 = vpop.f32.mrf.mxu0
      %v1253 = vadd.f32 %v1140, %v1252
      %1254 = vmatmul.f32.gmra.mxu0 %v917
      %v1255 = vpop.f32.mrf.mxu0
      %v1256 = vadd.f32 %v1143, %v1255
      %1257 = vmatmul.f32.gmra.mxu0 %v920
      %v1258 = vpop.f32.mrf.mxu0
      %v1259 = vadd.f32 %v1146, %v1258
      %1260 = vmatmul.f32.gmra.mxu0 %v923
      %v1261 = vpop.f32.mrf.mxu0
      %v1262 = vadd.f32 %v1149, %v1261
      %1263 = vmatmul.f32.gmra.mxu0 %v926
      %v1264 = vpop.f32.mrf.mxu0
      %v1265 = vadd.f32 %v1152, %v1264
      %1266 = vmatmul.f32.gmra.mxu0 %v929
      %v1267 = vpop.f32.mrf.mxu0
      %v1268 = vadd.f32 %v1155, %v1267
      %1269 = vmatmul.f32.gmra.mxu0 %v932
      %v1270 = vpop.f32.mrf.mxu0
      %v1271 = vadd.f32 %v1158, %v1270
      %1272 = vmatmul.f32.gmra.mxu0 %v935
      %v1273 = vpop.f32.mrf.mxu0
      %v1274 = vadd.f32 %v1161, %v1273
      %1275 = vmatmul.f32.gmra.mxu0 %v938
      %v1276 = vpop.f32.mrf.mxu0
      %v1277 = vadd.f32 %v1164, %v1276
      %1278 = vmatmul.f32.gmra.mxu0 %v941
      %v1279 = vpop.f32.mrf.mxu0
      %v1280 = vadd.f32 %v1167, %v1279
      %1281 = vmatmul.f32.gmra.mxu0 %v944
      %v1282 = vpop.f32.mrf.mxu0
      %v1283 = vadd.f32 %v1170, %v1282
      %1284 = vmatmul.f32.gmra.mxu0 %v947
      %v1285 = vpop.f32.mrf.mxu0
      %v1286 = vadd.f32 %v1173, %v1285
      %1287 = vmatmul.f32.gmra.mxu0 %v950
      %v1288 = vpop.f32.mrf.mxu0
      %v1289 = vadd.f32 %v1176, %v1288
      %1290 = vmatmul.f32.gmra.mxu0 %v953
      %v1291 = vpop.f32.mrf.mxu0
      %v1292 = vadd.f32 %v1179, %v1291
      %1293 = vmatmul.f32.gmra.mxu0 %v956
      %v1294 = vpop.f32.mrf.mxu0
      %v1295 = vadd.f32 %v1182, %v1294
      %1296 = vmatmul.f32.gmra.mxu0 %v959
      %v1297 = vpop.f32.mrf.mxu0
      %v1298 = vadd.f32 %v1185, %v1297
      %1299 = vmatmul.f32.gmra.mxu0 %v962
      %v1300 = vpop.f32.mrf.mxu0
      %v1301 = vadd.f32 %v1188, %v1300
      %1302 = vmatmul.f32.gmra.mxu0 %v965
      %v1303 = vpop.f32.mrf.mxu0
      %v1304 = vadd.f32 %v1191, %v1303
      %1305 = vdwg.mxu0
      %1306 = vst [vmem:[%s236] sm:$0xff] %v1211
      %1307 = vst [vmem:[%s236 + $0x8] sm:$0xff] %v1214
      %1308 = vst [vmem:[%s236 + $0x10] sm:$0xff] %v1217
      %1309 = vst [vmem:[%s236 + $0x18] sm:$0xff] %v1220
      %1310 = vst [vmem:[%s236 + $0x20] sm:$0xff] %v1223
      %1311 = vst [vmem:[%s236 + $0x28] sm:$0xff] %v1226
      %1312 = vst [vmem:[%s236 + $0x30] sm:$0xff] %v1229
      %1313 = vst [vmem:[%s236 + $0x38] sm:$0xff] %v1232
      %1314 = vst [vmem:[%s236 + $0x40] sm:$0xff] %v1235
      %1315 = vst [vmem:[%s236 + $0x48] sm:$0xff] %v1238
      %1316 = vst [vmem:[%s236 + $0x50] sm:$0xff] %v1241
      %1317 = vst [vmem:[%s236 + $0x58] sm:$0xff] %v1244
      %1318 = vst [vmem:[%s236 + $0x60] sm:$0xff] %v1247
      %1319 = vst [vmem:[%s236 + $0x68] sm:$0xff] %v1250
      %1320 = vst [vmem:[%s236 + $0x70] sm:$0xff] %v1253
      %1321 = vst [vmem:[%s236 + $0x78] sm:$0xff] %v1256
      %1322 = vst [vmem:[%s236 + $0x80] sm:$0xff] %v1259
      %1323 = vst [vmem:[%s236 + $0x88] sm:$0xff] %v1262
      %1324 = vst [vmem:[%s236 + $0x90] sm:$0xff] %v1265
      %1325 = vst [vmem:[%s236 + $0x98] sm:$0xff] %v1268
      %1326 = vst [vmem:[%s236 + $0xa0] sm:$0xff] %v1271
      %1327 = vst [vmem:[%s236 + $0xa8] sm:$0xff] %v1274
      %1328 = vst [vmem:[%s236 + $0xb0] sm:$0xff] %v1277
      %1329 = vst [vmem:[%s236 + $0xb8] sm:$0xff] %v1280
      %1330 = vst [vmem:[%s236 + $0xc0] sm:$0xff] %v1283
      %1331 = vst [vmem:[%s236 + $0xc8] sm:$0xff] %v1286
      %1332 = vst [vmem:[%s236 + $0xd0] sm:$0xff] %v1289
      %1333 = vst [vmem:[%s236 + $0xd8] sm:$0xff] %v1292
      %1334 = vst [vmem:[%s236 + $0xe0] sm:$0xff] %v1295
      %1335 = vst [vmem:[%s236 + $0xe8] sm:$0xff] %v1298
      %1336 = vst [vmem:[%s236 + $0xf0] sm:$0xff] %v1301
      %1337 = vst [vmem:[%s236 + $0xf8] sm:$0xff] %v1304
      %v1338 = vlaneseq
      %v1339 = vshrl.u32 %v1338, 7
      %v1340 = vadd.f32 %v1211, %v1214
      %v1341 = vadd.f32 %v1340, %v1217
      %v1342 = vadd.f32 %v1341, %v1220
      %v1343 = vadd.f32 %v1342, %v1223
      %v1344 = vadd.f32 %v1343, %v1226
      %v1345 = vadd.f32 %v1344, %v1229
      %v1346 = vadd.f32 %v1345, %v1232
      %v1347 = vadd.f32 %v1346, %v1235
      %v1348 = vadd.f32 %v1347, %v1238
      %v1349 = vadd.f32 %v1348, %v1241
      %v1350 = vadd.f32 %v1349, %v1244
      %v1351 = vadd.f32 %v1350, %v1247
      %v1352 = vadd.f32 %v1351, %v1250
      %v1353 = vadd.f32 %v1352, %v1253
      %v1354 = vadd.f32 %v1353, %v1256
      %v1355 = vadd.f32 %v1354, %v1259
      %v1356 = vadd.f32 %v1355, %v1262
      %v1357 = vadd.f32 %v1356, %v1265
      %v1358 = vadd.f32 %v1357, %v1268
      %v1359 = vadd.f32 %v1358, %v1271
      %v1360 = vadd.f32 %v1359, %v1274
      %v1361 = vadd.f32 %v1360, %v1277
      %v1362 = vadd.f32 %v1361, %v1280
      %v1363 = vadd.f32 %v1362, %v1283
      %v1364 = vadd.f32 %v1363, %v1286
      %v1365 = vadd.f32 %v1364, %v1289
      %v1366 = vadd.f32 %v1365, %v1292
      %v1367 = vadd.f32 %v1366, %v1295
      %v1368 = vadd.f32 %v1367, %v1298
      %v1369 = vadd.f32 %v1368, %v1301
      %v1370 = vadd.f32 %v1369, %v1304
      %v1371 = vrot.slane %v1370, 4
      %v1372 = vadd.f32 %v1370, %v1371
      %v1373 = vrot.slane %v1372, 2
      %v1374 = vadd.f32 %v1372, %v1373
      %v1375 = vrot.slane %v1374, 1
      %v1376 = vadd.f32 %v1374, %v1375
      %v1377 = vmul.f32 %v1211, %v1211
      %v1378 = vmul.f32 %v1214, %v1214
      %v1379 = vmul.f32 %v1217, %v1217
      %v1380 = vmul.f32 %v1220, %v1220
      %v1381 = vmul.f32 %v1223, %v1223
      %v1382 = vmul.f32 %v1226, %v1226
      %v1383 = vmul.f32 %v1229, %v1229
      %v1384 = vmul.f32 %v1232, %v1232
      %v1385 = vmul.f32 %v1235, %v1235
      %v1386 = vmul.f32 %v1238, %v1238
      %v1387 = vmul.f32 %v1241, %v1241
      %v1388 = vmul.f32 %v1244, %v1244
      %v1389 = vmul.f32 %v1247, %v1247
      %v1390 = vmul.f32 %v1250, %v1250
      %v1391 = vmul.f32 %v1253, %v1253
      %v1392 = vmul.f32 %v1256, %v1256
      %v1393 = vmul.f32 %v1259, %v1259
      %v1394 = vmul.f32 %v1262, %v1262
      %v1395 = vmul.f32 %v1265, %v1265
      %v1396 = vmul.f32 %v1268, %v1268
      %v1397 = vmul.f32 %v1271, %v1271
      %v1398 = vmul.f32 %v1274, %v1274
      %v1399 = vmul.f32 %v1277, %v1277
      %v1400 = vmul.f32 %v1280, %v1280
      %v1401 = vmul.f32 %v1283, %v1283
      %v1402 = vmul.f32 %v1286, %v1286
      %v1403 = vmul.f32 %v1289, %v1289
      %v1404 = vmul.f32 %v1292, %v1292
      %v1405 = vmul.f32 %v1295, %v1295
      %v1406 = vmul.f32 %v1298, %v1298
      %v1407 = vmul.f32 %v1301, %v1301
      %v1408 = vmul.f32 %v1304, %v1304
      %v1409 = vadd.f32 %v1377, %v1378
      %v1410 = vadd.f32 %v1409, %v1379
      %v1411 = vadd.f32 %v1410, %v1380
      %v1412 = vadd.f32 %v1411, %v1381
      %v1413 = vadd.f32 %v1412, %v1382
      %v1414 = vadd.f32 %v1413, %v1383
      %v1415 = vadd.f32 %v1414, %v1384
      %v1416 = vadd.f32 %v1415, %v1385
      %v1417 = vadd.f32 %v1416, %v1386
      %v1418 = vadd.f32 %v1417, %v1387
      %v1419 = vadd.f32 %v1418, %v1388
      %v1420 = vadd.f32 %v1419, %v1389
      %v1421 = vadd.f32 %v1420, %v1390
      %v1422 = vadd.f32 %v1421, %v1391
      %v1423 = vadd.f32 %v1422, %v1392
      %v1424 = vadd.f32 %v1423, %v1393
      %v1425 = vadd.f32 %v1424, %v1394
      %v1426 = vadd.f32 %v1425, %v1395
      %v1427 = vadd.f32 %v1426, %v1396
      %v1428 = vadd.f32 %v1427, %v1397
      %v1429 = vadd.f32 %v1428, %v1398
      %v1430 = vadd.f32 %v1429, %v1399
      %v1431 = vadd.f32 %v1430, %v1400
      %v1432 = vadd.f32 %v1431, %v1401
      %v1433 = vadd.f32 %v1432, %v1402
      %v1434 = vadd.f32 %v1433, %v1403
      %v1435 = vadd.f32 %v1434, %v1404
      %v1436 = vadd.f32 %v1435, %v1405
      %v1437 = vadd.f32 %v1436, %v1406
      %v1438 = vadd.f32 %v1437, %v1407
      %v1439 = vadd.f32 %v1438, %v1408
      %v1440 = vrot.slane %v1439, 4
      %v1441 = vadd.f32 %v1439, %v1440
      %v1442 = vrot.slane %v1441, 2
      %v1443 = vadd.f32 %v1441, %v1442
      %v1444 = vrot.slane %v1443, 1
      %v1445 = vadd.f32 %v1443, %v1444
      %vm1446 = vcmp.eq.s32.totalorder %v1339, 0
      %vm1447 = vcmp.eq.s32.totalorder %v1339, 1
      %v1448 = vsel %vm1447, %v1445, 0.0
      %v1449 = vsel %vm1446, %v1376, %v1448
      %1450 = vst [vmem:[%s241] sm:$0xff] %v1449
      %s1451 = smul.u32 32, %s17
      %p1452 = scmp.lt.s32.totalorder %s1451, 63
      %s1453 = scalar_select %p1452, %s1451, 63
      %s1454 = smul.addr %s1453, 8
      %s1455 = scalar_lea.vmem %s4, %s1454
      %p1456 = scmp.lt.s32.totalorder %s17, 1
      %s1457 = scalar_select %p1456, %s17, 1
      %s1458 = smul.addr %s1457, 8
      %s1459 = scalar_lea.vmem %s5, %s1458
      // Predicated region
      $region37: #{decoder_forward_pallas.6} parent=35 // pred_check
        %p1460 = pneg %p124
      $region38: #{decoder_forward_pallas.6} parent=35 // pred_check_branch
        %1462 = sbr.rel (%p1460) target = $region40
      $region39: #{decoder_forward_pallas.6} parent=35 // pred_region
        %s1463 = smul.u32 32, %s17
      $region40: #{decoder_forward_pallas.6} parent=35 // pred_fallthru
        _
      // Predicated region
      $region41: #{decoder_forward_pallas.6} parent=35 // pred_check
        %p1464 = pneg %p150
      $region42: #{decoder_forward_pallas.6} parent=35 // pred_check_branch
        %1466 = sbr.rel (%p1464) target = $region44
      $region43: #{decoder_forward_pallas.6} parent=35 // pred_region
        _
      $region44: #{decoder_forward_pallas.6} parent=35 // pred_fallthru
        _
    $region36: #{decoder_forward_pallas.6} parent=5 // pred_fallthru
      _
    %p1467 = scmp.le.s32.totalorder 2, %s12
    // Predicated region
    $region45: #{decoder_forward_pallas.6} parent=5 // pred_check
      %p1468 = pneg %p1467
    $region46: #{decoder_forward_pallas.6} parent=5 // pred_check_branch
      %1470 = sbr.rel (%p1468) target = $region48
    $region47: #{decoder_forward_pallas.6} parent=5 // pred_region
      %s1471 = ssub.s32 %s12, 2
      // Predicated region
      $region49: #{decoder_forward_pallas.6} parent=47 // pred_check
        %p1472 = pneg %p130
      $region50: #{decoder_forward_pallas.6} parent=47 // pred_check_branch
        %1474 = sbr.rel (%p1472) target = $region52
      $region51: #{decoder_forward_pallas.6} parent=47 // pred_region
        %s1475 = smul.u32 32, %s18
        %p1476 = scmp.lt.s32.totalorder %s1475, 63
        %s1477 = scalar_select %p1476, %s1475, 63
        %s1478 = smul.addr %s1477, 8
        %s1479 = scalar_lea.vmem %s4, %s1478
      $region52: #{decoder_forward_pallas.6} parent=47 // pred_fallthru
        _
      // Predicated region
      $region53: #{decoder_forward_pallas.6} parent=47 // pred_check
        %p1480 = pneg %p156
      $region54: #{decoder_forward_pallas.6} parent=47 // pred_check_branch
        %1482 = sbr.rel (%p1480) target = $region56
      $region55: #{decoder_forward_pallas.6} parent=47 // pred_region
        %p1483 = scmp.lt.s32.totalorder %s18, 1
        %s1484 = scalar_select %p1483, %s18, 1
        %s1485 = smul.addr %s1484, 8
        %s1486 = scalar_lea.vmem %s5, %s1485
      $region56: #{decoder_forward_pallas.6} parent=47 // pred_fallthru
        _
    $region48: #{decoder_forward_pallas.6} parent=5 // pred_fallthru
      _
  $region6: #{decoder_forward_pallas.6} parent=0 // loop_footer
    %s16 = sadd.s32 1, %s12
  $region7: #{decoder_forward_pallas.6} parent=0 // loop_footer_branch
    %11 = sbr.rel target = $region3
  $region8: #{decoder_forward_pallas.6} parent=0 // loop_exit
    _

// kernel: tile.53
$region0: #{tile.53}
  #allocation0 [shape = 's32[1]{0}', space=sflag, size = 0x4, scoped, tag = 'scoped memory for tile.53']
  %s0 = inlined_call_operand.vmem [shape: f32[16], index: 0, kind: input, shape index: {}]
  %s1 = inlined_call_operand.vmem [shape: f32[9,16], index: 1, kind: output, shape index: {}]
  // Predicated region
  $region2: #{tile.53} parent=0 // pred_check
    _
  $region3: #{tile.53} parent=0 // pred_check_branch
    %3 = sbr.rel (0) target = $region5
  $region4: #{tile.53} parent=0 // pred_region
    _
  $region5: #{tile.53} parent=0 // pred_fallthru
    _
  %v4 = vld [vmem:[%s0] ss:$0 sm:$0xff]
  %5 = vst [vmem:[%s1] sm:$0xff] %v4
  %s6 = scalar_lea.vmem %s1, 8
  %7 = vst [vmem:[%s6] sm:$0xff] %v4

// kernel: tile.58
$region0: #{tile.58}
  %s0 = inlined_call_operand.vmem [shape: f32[9,16], index: 0, kind: input, shape index: {}]
  %s1 = inlined_call_operand.vmem [shape: f32[1,144], index: 1, kind: output, shape index: {}]
  $region1: #{tile.58} parent=0
    #allocation0 [shape = 'u8[8192]{0}', space=vmem, size = 0x2000, scoped, tag = 'scoped mem for output reshape']
    %s2 = smov 3
    %v3 = vld [vmem:[%s0] ss:$8 sm:%s2]
    %vm4 = vcmask 130048
    %5 = vst.msk [vmem:[#allocation0] ss:$8 sm:$0x3] %vm4, %v3
    %s6 = scalar_lea.vmem %s0, 7
    %v7 = vld [vmem:[%s6] sm:$0x1]
    %8 = vrot.lane.b32.xlu0 %v7, 112
    %v9 = vpop.permute.xlu0 %8
    %vm10 = vcmask 1048448
    %11 = vst.msk [vmem:[#allocation0] sm:$0x1] %vm10, %v9
    %s12 = scalar_lea.vmem %s0, 6
    %v13 = vld [vmem:[%s12] sm:$0x1]
    %14 = vrot.lane.b32.xlu0 %v13, 96
    %v15 = vpop.permute.xlu0 %14
    %vm16 = vcmask 917248
    %17 = vst.msk [vmem:[#allocation0] sm:$0x1] %vm16, %v15
    %s18 = scalar_lea.vmem %s0, 5
    %v19 = vld [vmem:[%s18] sm:$0x1]
    %20 = vrot.lane.b32.xlu0 %v19, 80
    %v21 = vpop.permute.xlu0 %20
    %vm22 = vcmask 786048
    %23 = vst.msk [vmem:[#allocation0] sm:$0x1] %vm22, %v21
    %s24 = scalar_lea.vmem %s0, 4
    %v25 = vld [vmem:[%s24] sm:$0x1]
    %26 = vrot.lane.b32.xlu0 %v25, 64
    %v27 = vpop.permute.xlu0 %26
    %vm28 = vcmask 654848
    %29 = vst.msk [vmem:[#allocation0] sm:$0x1] %vm28, %v27
    %s30 = scalar_lea.vmem %s0, 3
    %v31 = vld [vmem:[%s30] sm:$0x1]
    %32 = vrot.lane.b32.xlu0 %v31, 48
    %v33 = vpop.permute.xlu0 %32
    %vm34 = vcmask 523648
    %35 = vst.msk [vmem:[#allocation0] sm:$0x1] %vm34, %v33
    %s36 = scalar_lea.vmem %s0, 2
    %v37 = vld [vmem:[%s36] sm:$0x1]
    %38 = vrot.lane.b32.xlu0 %v37, 32
    %v39 = vpop.permute.xlu0 %38
    %vm40 = vcmask 392448
    %41 = vst.msk [vmem:[#allocation0] sm:$0x1] %vm40, %v39
    %s42 = scalar_lea.vmem %s0, 1
    %v43 = vld [vmem:[%s42] sm:$0x1]
    %44 = vrot.lane.b32.xlu0 %v43, 16
    %v45 = vpop.permute.xlu0 %44
    %vm46 = vcmask 261248
    %47 = vst.msk [vmem:[#allocation0] sm:$0x1] %vm46, %v45
    %s49 = ssub.s32 2, 1
    %v50 = vld [vmem:[#allocation0] sm:%s49]
    %s52 = ssub.s32 2, 1
    %53 = vst [vmem:[%s1] sm:%s52] %v50
    %s54 = scalar_lea.vmem [#allocation0], 8
    %v55 = vld [vmem:[%s54] sm:%s49]
    %s57 = ssub.s32 2, 1
    %s58 = scalar_lea.vmem %s1, 1
    %59 = vst [vmem:[%s58] sm:%s57] %v55

// kernel: tile.68
$region0: #{tile.68}
  #allocation0 [shape = 's32[1]{0}', space=sflag, size = 0x4, scoped, tag = 'scoped memory for tile.68']
  %s0 = inlined_call_operand.vmem [shape: f32[8], index: 0, kind: input, shape index: {}]
  %s1 = inlined_call_operand.vmem [shape: f32[4,8], index: 1, kind: output, shape index: {}]
  // Predicated region
  $region2: #{tile.68} parent=0 // pred_check
    _
  $region3: #{tile.68} parent=0 // pred_check_branch
    %3 = sbr.rel (0) target = $region5
  $region4: #{tile.68} parent=0 // pred_region
    _
  $region5: #{tile.68} parent=0 // pred_fallthru
    _
  %v4 = vld [vmem:[%s0] ss:$0 sm:$0xff]
  %5 = vst [vmem:[%s1] sm:$0xf] %v4

// kernel: tile.69
$region0: #{tile.69}
  %s0 = inlined_call_operand.vmem [shape: f32[4,8], index: 0, kind: input, shape index: {}]
  %s1 = inlined_call_operand.vmem [shape: f32[32], index: 1, kind: output, shape index: {}]
  $region1: #{tile.69} parent=0
    #allocation0 [shape = 'u8[4096]{0}', space=vmem, size = 0x1000, scoped, tag = 'scoped mem for output reshape']
    #allocation1 [shape = 'u8[4096]{0}', space=vmem, size = 0x1000, scoped, tag = 'scoped mem for input reshape']
    %s3 = ssub.s32 16, 1
    %v4 = vld [vmem:[%s0] sm:%s3]
    %5 = vst [vmem:[#allocation1] sm:%s3] %v4
    %v6 = vld [vmem:[#allocation1] sm:$0x1]
    %vm7 = vcmask 64512
    %8 = vst.msk [vmem:[#allocation0] sm:$0x1] %vm7, %v6
    %s9 = scalar_lea.vmem [#allocation1], 3
    %v10 = vld [vmem:[%s9] sm:$0x1]
    %11 = vrot.lane.b32.xlu0 %v10, 24
    %v12 = vpop.permute.xlu0 %11
    %vm13 = vcmask 261312
    %14 = vst.msk [vmem:[#allocation0] sm:$0x1] %vm13, %v12
    %s15 = scalar_lea.vmem [#allocation1], 2
    %v16 = vld [vmem:[%s15] sm:$0x1]
    %17 = vrot.lane.b32.xlu0 %v16, 16
    %v18 = vpop.permute.xlu0 %17
    %vm19 = vcmask 195712
    %20 = vst.msk [vmem:[#allocation0] sm:$0x1] %vm19, %v18
    %s21 = scalar_lea.vmem [#allocation1], 1
    %v22 = vld [vmem:[%s21] sm:$0x1]
    %23 = vrot.lane.b32.xlu0 %v22, 8
    %v24 = vpop.permute.xlu0 %23
    %vm25 = vcmask 130112
    %26 = vst.msk [vmem:[#allocation0] sm:$0x1] %vm25, %v24
    %s28 = ssub.s32 2, 1
    %v29 = vld [vmem:[#allocation0] sm:%s28]
    %s31 = ssub.s32 2, 1
    %32 = vst [vmem:[%s1] sm:%s31] %v29

// kernel: decoder_forward_pallas.8
$region0: #{decoder_forward_pallas.8}
  #allocation0 [shape = 'u32[]', space=smem, size = 0x4, offset = 0x4, fixed_abs, tag = 'smem constant byte address 0x4 - core index']
  #allocation1 [shape = 'u32[72,128]{1,0:T(1,128)}', space=vmem, size = 0x9000, scoped, tag = 'internal scratch']
  %s0 = inlined_call_operand.vmem [shape: f32[2048,128], index: 0, kind: input, shape index: {}]
  %s1 = inlined_call_operand.vmem [shape: f32[1,128], index: 1, kind: input, shape index: {}]
  %s2 = inlined_call_operand.vmem [shape: f32[1,128], index: 2, kind: input, shape index: {}]
  %s3 = inlined_call_operand.vmem [shape: f32[128,128], index: 3, kind: input, shape index: {}]
  %s4 = inlined_call_operand.vmem [shape: f32[2048,128], index: 4, kind: output, shape index: {0}]
  %s5 = inlined_call_operand.vmem [shape: f32[16,128], index: 5, kind: output, shape index: {1}]
  %6 = xla_tuple %s4, %s5
  %s7 = sld [smem:[#allocation0]]
  $region57: #{decoder_forward_pallas.8} parent=0
    _
  %s9 = ssub.s32 1, %s7
  %s10 = scalar_select 0, %s9, %s7
  loop: start=0, step=1, limit=4
  $region2: #{decoder_forward_pallas.8} parent=0 // loop_pre_header
    _
  $region3: #{decoder_forward_pallas.8} parent=0 // loop_header
    %s12 = sphi 0, %s16
    %p13 = scmp.ge.s32.totalorder %s12, 4
    %s22 = sphi 0, %s24
    %s25 = sphi 0, %s22
    %s26 = sphi 0, %s25
    %s42 = sphi 0, %s26
    %s46 = sphi 0, %s46
    %s48 = sphi 0, %s46
    %s49 = sphi 0, %s48
    %s63 = sphi 0, %s49
    %s67 = sphi 0, %s67
    %s69 = sphi 0, %s67
    %s70 = sphi 0, %s69
    %s84 = sphi 0, %s70
    %s88 = sphi 0, %s88
    %s90 = sphi 0, %s88
    %s91 = sphi 0, %s90
    %s105 = sphi 0, %s91
    %s111 = sphi 0, %s113
    %s114 = sphi 0, %s111
    %s115 = sphi 0, %s114
    %s131 = sphi 0, %s115
    %s137 = sphi 0, %s139
    %s140 = sphi 0, %s137
    %s141 = sphi 0, %s140
    %s157 = sphi 0, %s141
  $region4: #{decoder_forward_pallas.8} parent=0 // loop_header_branch
    %15 = sbr.rel (%p13) target = $region8
  $region5: #{decoder_forward_pallas.8} parent=0 // loop_body
    %s17 = ssub.s32 %s12, 1
    %s18 = ssub.s32 %s12, 2
    %s19 = sadd.s32 %s12, 1
    %s20 = ssub.s32 %s12, %s19
    %p21 = scmp.eq.s32.totalorder %s20, 0
    %s23 = sadd.s32 %s22, 1
    %s24 = scalar_select %p21, %s22, %s23
    %p27 = pneg %p21
    %p28 = scmp.eq.s32.totalorder %s12, 1
    %p29 = por %p27, %p28
    %p30 = scmp.ne.s32.totalorder %s22, %s25
    %p31 = scmp.eq.s32.totalorder %s12, 0
    %p32 = por %p30, %p31
    %p33 = scmp.ne.s32.totalorder %s22, %s25
    %p34 = scmp.eq.s32.totalorder %s17, 1
    %p35 = por %p33, %p34
    %p36 = scmp.ne.s32.totalorder %s25, %s26
    %p37 = scmp.eq.s32.totalorder %s17, 0
    %p38 = por %p36, %p37
    %p39 = scmp.ne.s32.totalorder %s25, %s26
    %p40 = scmp.eq.s32.totalorder %s18, 1
    %p41 = por %p39, %p40
    %p43 = scmp.ne.s32.totalorder %s26, %s42
    %p44 = scmp.eq.s32.totalorder %s18, 0
    %p45 = por %p43, %p44
    %s47 = sadd.s32 %s46, 1
    %p50 = scmp.eq.s32.totalorder %s12, 1
    %p51 = scmp.ne.s32.totalorder %s46, %s48
    %p52 = scmp.eq.s32.totalorder %s12, 0
    %p53 = por %p51, %p52
    %p54 = scmp.ne.s32.totalorder %s46, %s48
    %p55 = scmp.eq.s32.totalorder %s17, 1
    %p56 = por %p54, %p55
    %p57 = scmp.ne.s32.totalorder %s48, %s49
    %p58 = scmp.eq.s32.totalorder %s17, 0
    %p59 = por %p57, %p58
    %p60 = scmp.ne.s32.totalorder %s48, %s49
    %p61 = scmp.eq.s32.totalorder %s18, 1
    %p62 = por %p60, %p61
    %p64 = scmp.ne.s32.totalorder %s49, %s63
    %p65 = scmp.eq.s32.totalorder %s18, 0
    %p66 = por %p64, %p65
    %s68 = sadd.s32 %s67, 1
    %p71 = scmp.eq.s32.totalorder %s12, 1
    %p72 = scmp.ne.s32.totalorder %s67, %s69
    %p73 = scmp.eq.s32.totalorder %s12, 0
    %p74 = por %p72, %p73
    %p75 = scmp.ne.s32.totalorder %s67, %s69
    %p76 = scmp.eq.s32.totalorder %s17, 1
    %p77 = por %p75, %p76
    %p78 = scmp.ne.s32.totalorder %s69, %s70
    %p79 = scmp.eq.s32.totalorder %s17, 0
    %p80 = por %p78, %p79
    %p81 = scmp.ne.s32.totalorder %s69, %s70
    %p82 = scmp.eq.s32.totalorder %s18, 1
    %p83 = por %p81, %p82
    %p85 = scmp.ne.s32.totalorder %s70, %s84
    %p86 = scmp.eq.s32.totalorder %s18, 0
    %p87 = por %p85, %p86
    %s89 = sadd.s32 %s88, 1
    %p92 = scmp.eq.s32.totalorder %s12, 1
    %p93 = scmp.ne.s32.totalorder %s88, %s90
    %p94 = scmp.eq.s32.totalorder %s12, 0
    %p95 = por %p93, %p94
    %p96 = scmp.ne.s32.totalorder %s88, %s90
    %p97 = scmp.eq.s32.totalorder %s17, 1
    %p98 = por %p96, %p97
    %p99 = scmp.ne.s32.totalorder %s90, %s91
    %p100 = scmp.eq.s32.totalorder %s17, 0
    %p101 = por %p99, %p100
    %p102 = scmp.ne.s32.totalorder %s90, %s91
    %p103 = scmp.eq.s32.totalorder %s18, 1
    %p104 = por %p102, %p103
    %p106 = scmp.ne.s32.totalorder %s91, %s105
    %p107 = scmp.eq.s32.totalorder %s18, 0
    %p108 = por %p106, %p107
    %s109 = ssub.s32 %s12, %s19
    %p110 = scmp.eq.s32.totalorder %s109, 0
    %s112 = sadd.s32 %s111, 1
    %s113 = scalar_select %p110, %s111, %s112
    %p116 = pneg %p110
    %p117 = scmp.eq.s32.totalorder %s12, 1
    %p118 = por %p116, %p117
    %p119 = scmp.ne.s32.totalorder %s111, %s114
    %p120 = scmp.eq.s32.totalorder %s12, 0
    %p121 = por %p119, %p120
    %p122 = scmp.ne.s32.totalorder %s111, %s114
    %p123 = scmp.eq.s32.totalorder %s17, 1
    %p124 = por %p122, %p123
    %p125 = scmp.ne.s32.totalorder %s114, %s115
    %p126 = scmp.eq.s32.totalorder %s17, 0
    %p127 = por %p125, %p126
    %p128 = scmp.ne.s32.totalorder %s114, %s115
    %p129 = scmp.eq.s32.totalorder %s18, 1
    %p130 = por %p128, %p129
    %p132 = scmp.ne.s32.totalorder %s115, %s131
    %p133 = scmp.eq.s32.totalorder %s18, 0
    %p134 = por %p132, %p133
    %s135 = ssub.s32 %s12, %s19
    %p136 = scmp.eq.s32.totalorder %s135, 0
    %s138 = sadd.s32 %s137, 1
    %s139 = scalar_select %p136, %s137, %s138
    %p142 = pneg %p136
    %p143 = scmp.eq.s32.totalorder %s12, 1
    %p144 = por %p142, %p143
    %p145 = scmp.ne.s32.totalorder %s137, %s140
    %p146 = scmp.eq.s32.totalorder %s12, 0
    %p147 = por %p145, %p146
    %p148 = scmp.ne.s32.totalorder %s137, %s140
    %p149 = scmp.eq.s32.totalorder %s17, 1
    %p150 = por %p148, %p149
    %p151 = scmp.ne.s32.totalorder %s140, %s141
    %p152 = scmp.eq.s32.totalorder %s17, 0
    %p153 = por %p151, %p152
    %p154 = scmp.ne.s32.totalorder %s140, %s141
    %p155 = scmp.eq.s32.totalorder %s18, 1
    %p156 = por %p154, %p155
    %p158 = scmp.ne.s32.totalorder %s141, %s157
    %p159 = scmp.eq.s32.totalorder %s18, 0
    %p160 = por %p158, %p159
    %p161 = scmp.le.s32.totalorder 1, %s12
    %p162 = scmp.lt.s32.totalorder %s12, 3
    %p163 = pnand %p161, %p162
    %p164 = pneg %p163
    // Predicated region
    $region9: #{decoder_forward_pallas.8} parent=5 // pred_check
      _
    $region10: #{decoder_forward_pallas.8} parent=5 // pred_check_branch
      %166 = sbr.rel (%p163) target = $region12
    $region11: #{decoder_forward_pallas.8} parent=5 // pred_region
      %s167 = ssub.s32 %s12, 1
      // Predicated region
      $region13: #{decoder_forward_pallas.8} parent=11 // pred_check
        %p168 = pneg %p59
      $region14: #{decoder_forward_pallas.8} parent=11 // pred_check_branch
        %170 = sbr.rel (%p168) target = $region16
      $region15: #{decoder_forward_pallas.8} parent=11 // pred_region
        _
      $region16: #{decoder_forward_pallas.8} parent=11 // pred_fallthru
        _
      // Predicated region
      $region17: #{decoder_forward_pallas.8} parent=11 // pred_check
        %p171 = pneg %p80
      $region18: #{decoder_forward_pallas.8} parent=11 // pred_check_branch
        %173 = sbr.rel (%p171) target = $region20
      $region19: #{decoder_forward_pallas.8} parent=11 // pred_region
        _
      $region20: #{decoder_forward_pallas.8} parent=11 // pred_fallthru
        _
      // Predicated region
      $region21: #{decoder_forward_pallas.8} parent=11 // pred_check
        %p174 = pneg %p101
      $region22: #{decoder_forward_pallas.8} parent=11 // pred_check_branch
        %176 = sbr.rel (%p174) target = $region24
      $region23: #{decoder_forward_pallas.8} parent=11 // pred_region
        _
      $region24: #{decoder_forward_pallas.8} parent=11 // pred_fallthru
        _
    $region12: #{decoder_forward_pallas.8} parent=5 // pred_fallthru
      _
    %p177 = scmp.lt.s32.totalorder %s12, 2
    // Predicated region
    $region25: #{decoder_forward_pallas.8} parent=5 // pred_check
      %p178 = pneg %p177
    $region26: #{decoder_forward_pallas.8} parent=5 // pred_check_branch
      %180 = sbr.rel (%p178) target = $region28
    $region27: #{decoder_forward_pallas.8} parent=5 // pred_region
      // Predicated region
      $region29: #{decoder_forward_pallas.8} parent=27 // pred_check
        %p181 = pneg %p32
      $region30: #{decoder_forward_pallas.8} parent=27 // pred_check_branch
        %183 = sbr.rel (%p181) target = $region32
      $region31: #{decoder_forward_pallas.8} parent=27 // pred_region
        %s184 = smul.u32 128, %s12
        %p185 = scmp.lt.s32.totalorder %s184, 255
        %s186 = scalar_select %p185, %s184, 255
        %s187 = smul.addr %s186, 8
        %s188 = scalar_lea.vmem %s0, %s187
        %s189 = smul.u32 128, %s12
      $region32: #{decoder_forward_pallas.8} parent=27 // pred_fallthru
        _
    $region28: #{decoder_forward_pallas.8} parent=5 // pred_fallthru
      _
    %p190 = scmp.le.s32.totalorder 1, %s12
    %p191 = scmp.lt.s32.totalorder %s12, 3
    %p192 = pnand %p190, %p191
    %p193 = pneg %p192
    // Predicated region
    $region33: #{decoder_forward_pallas.8} parent=5 // pred_check
      _
    $region34: #{decoder_forward_pallas.8} parent=5 // pred_check_branch
      %195 = sbr.rel (%p192) target = $region36
    $region35: #{decoder_forward_pallas.8} parent=5 // pred_region
      %s196 = ssub.s32 %s12, 1
      %s197 = smul.u32 128, %s17
      %p198 = scmp.lt.s32.totalorder %s197, 255
      %s199 = scalar_select %p198, %s197, 255
      %s200 = smul.addr %s199, 8
      %s201 = scalar_lea.vmem %s0, %s200
      %p202 = pneg %p38
      %p203 = pneg %p35
      %p204 = pneg %p59
      %p205 = pneg %p56
      %p206 = pneg %p80
      %p207 = pneg %p77
      %p208 = pneg %p101
      %p209 = pneg %p98
      %p210 = pneg %p127
      %p211 = pneg %p124
      %s212 = smul.u32 128, %s17
      %p213 = scmp.lt.s32.totalorder %s212, 255
      %s214 = scalar_select %p213, %s212, 255
      %s215 = smul.addr %s214, 8
      %s216 = scalar_lea.vmem %s4, %s215
      %p217 = pneg %p153
      %p218 = pneg %p150
      %p219 = scmp.lt.s32.totalorder %s17, 1
      %s220 = scalar_select %p219, %s17, 1
      %s221 = smul.addr %s220, 8
      %s222 = scalar_lea.vmem %s5, %s221
      %s223 = smul.u32 128, %s17
      %p224 = scmp.lt.s32.totalorder %s223, 255
      %s225 = scalar_select %p224, %s223, 255
      %s226 = smul.addr %s225, 8
      %s227 = scalar_lea.vmem %s0, %s226
      %s228 = smul.u32 128, %s17
      %s229 = smul.u32 128, %s17
      %p230 = scmp.lt.s32.totalorder %s229, 255
      %s231 = scalar_select %p230, %s229, 255
      %s232 = smul.addr %s231, 8
      %s233 = scalar_lea.vmem %s4, %s232
      %s234 = smul.u32 128, %s17
      %p235 = scmp.lt.s32.totalorder %s17, 1
      %s236 = scalar_select %p235, %s17, 1
      %s237 = smul.addr %s236, 8
      %s238 = scalar_lea.vmem %s5, %s237
      %v239 = vld [vmem:[%s227] sm:$0xff]
      %v240 = vld [vmem:[%s227 + $0x8] sm:$0xff]
      %v241 = vld [vmem:[%s227 + $0x10] sm:$0xff]
      %v242 = vld [vmem:[%s227 + $0x18] sm:$0xff]
      %v243 = vld [vmem:[%s227 + $0x20] sm:$0xff]
      %v244 = vld [vmem:[%s227 + $0x28] sm:$0xff]
      %v245 = vld [vmem:[%s227 + $0x30] sm:$0xff]
      %v246 = vld [vmem:[%s227 + $0x38] sm:$0xff]
      %v247 = vld [vmem:[%s227 + $0x40] sm:$0xff]
      %v248 = vld [vmem:[%s227 + $0x48] sm:$0xff]
      %v249 = vld [vmem:[%s227 + $0x50] sm:$0xff]
      %v250 = vld [vmem:[%s227 + $0x58] sm:$0xff]
      %v251 = vld [vmem:[%s227 + $0x60] sm:$0xff]
      %v252 = vld [vmem:[%s227 + $0x68] sm:$0xff]
      %v253 = vld [vmem:[%s227 + $0x70] sm:$0xff]
      %v254 = vld [vmem:[%s227 + $0x78] sm:$0xff]
      %v255 = vld [vmem:[%s227 + $0x80] sm:$0xff]
      %v256 = vld [vmem:[%s227 + $0x88] sm:$0xff]
      %v257 = vld [vmem:[%s227 + $0x90] sm:$0xff]
      %v258 = vld [vmem:[%s227 + $0x98] sm:$0xff]
      %v259 = vld [vmem:[%s227 + $0xa0] sm:$0xff]
      %v260 = vld [vmem:[%s227 + $0xa8] sm:$0xff]
      %v261 = vld [vmem:[%s227 + $0xb0] sm:$0xff]
      %v262 = vld [vmem:[%s227 + $0xb8] sm:$0xff]
      %v263 = vld [vmem:[%s227 + $0xc0] sm:$0xff]
      %v264 = vld [vmem:[%s227 + $0xc8] sm:$0xff]
      %v265 = vld [vmem:[%s227 + $0xd0] sm:$0xff]
      %v266 = vld [vmem:[%s227 + $0xd8] sm:$0xff]
      %v267 = vld [vmem:[%s227 + $0xe0] sm:$0xff]
      %v268 = vld [vmem:[%s227 + $0xe8] sm:$0xff]
      %v269 = vld [vmem:[%s227 + $0xf0] sm:$0xff]
      %v270 = vld [vmem:[%s227 + $0xf8] sm:$0xff]
      %v271 = vld [vmem:[%s227 + $0x100] sm:$0xff]
      %v272 = vld [vmem:[%s227 + $0x108] sm:$0xff]
      %v273 = vld [vmem:[%s227 + $0x110] sm:$0xff]
      %v274 = vld [vmem:[%s227 + $0x118] sm:$0xff]
      %v275 = vld [vmem:[%s227 + $0x120] sm:$0xff]
      %v276 = vld [vmem:[%s227 + $0x128] sm:$0xff]
      %v277 = vld [vmem:[%s227 + $0x130] sm:$0xff]
      %v278 = vld [vmem:[%s227 + $0x138] sm:$0xff]
      %v279 = vld [vmem:[%s227 + $0x140] sm:$0xff]
      %v280 = vld [vmem:[%s227 + $0x148] sm:$0xff]
      %v281 = vld [vmem:[%s227 + $0x150] sm:$0xff]
      %v282 = vld [vmem:[%s227 + $0x158] sm:$0xff]
      %v283 = vld [vmem:[%s227 + $0x160] sm:$0xff]
      %v284 = vld [vmem:[%s227 + $0x168] sm:$0xff]
      %v285 = vld [vmem:[%s227 + $0x170] sm:$0xff]
      %v286 = vld [vmem:[%s227 + $0x178] sm:$0xff]
      %v287 = vld [vmem:[%s227 + $0x180] sm:$0xff]
      %v288 = vld [vmem:[%s227 + $0x188] sm:$0xff]
      %v289 = vld [vmem:[%s227 + $0x190] sm:$0xff]
      %v290 = vld [vmem:[%s227 + $0x198] sm:$0xff]
      %v291 = vld [vmem:[%s227 + $0x1a0] sm:$0xff]
      %v292 = vld [vmem:[%s227 + $0x1a8] sm:$0xff]
      %v293 = vld [vmem:[%s227 + $0x1b0] sm:$0xff]
      %v294 = vld [vmem:[%s227 + $0x1b8] sm:$0xff]
      %v295 = vld [vmem:[%s227 + $0x1c0] sm:$0xff]
      %v296 = vld [vmem:[%s227 + $0x1c8] sm:$0xff]
      %v297 = vld [vmem:[%s227 + $0x1d0] sm:$0xff]
      %v298 = vld [vmem:[%s227 + $0x1d8] sm:$0xff]
      %v299 = vld [vmem:[%s227 + $0x1e0] sm:$0xff]
      %v300 = vld [vmem:[%s227 + $0x1e8] sm:$0xff]
      %v301 = vld [vmem:[%s227 + $0x1f0] sm:$0xff]
      %v302 = vld [vmem:[%s227 + $0x1f8] sm:$0xff]
      %v303 = vld [vmem:[%s227 + $0x200] sm:$0xff]
      %v304 = vld [vmem:[%s227 + $0x208] sm:$0xff]
      %v305 = vld [vmem:[%s227 + $0x210] sm:$0xff]
      %v306 = vld [vmem:[%s227 + $0x218] sm:$0xff]
      %v307 = vld [vmem:[%s227 + $0x220] sm:$0xff]
      %v308 = vld [vmem:[%s227 + $0x228] sm:$0xff]
      %v309 = vld [vmem:[%s227 + $0x230] sm:$0xff]
      %v310 = vld [vmem:[%s227 + $0x238] sm:$0xff]
      %v311 = vld [vmem:[%s227 + $0x240] sm:$0xff]
      %v312 = vld [vmem:[%s227 + $0x248] sm:$0xff]
      %v313 = vld [vmem:[%s227 + $0x250] sm:$0xff]
      %v314 = vld [vmem:[%s227 + $0x258] sm:$0xff]
      %v315 = vld [vmem:[%s227 + $0x260] sm:$0xff]
      %v316 = vld [vmem:[%s227 + $0x268] sm:$0xff]
      %v317 = vld [vmem:[%s227 + $0x270] sm:$0xff]
      %v318 = vld [vmem:[%s227 + $0x278] sm:$0xff]
      %v319 = vld [vmem:[%s227 + $0x280] sm:$0xff]
      %v320 = vld [vmem:[%s227 + $0x288] sm:$0xff]
      %v321 = vld [vmem:[%s227 + $0x290] sm:$0xff]
      %v322 = vld [vmem:[%s227 + $0x298] sm:$0xff]
      %v323 = vld [vmem:[%s227 + $0x2a0] sm:$0xff]
      %v324 = vld [vmem:[%s227 + $0x2a8] sm:$0xff]
      %v325 = vld [vmem:[%s227 + $0x2b0] sm:$0xff]
      %v326 = vld [vmem:[%s227 + $0x2b8] sm:$0xff]
      %v327 = vld [vmem:[%s227 + $0x2c0] sm:$0xff]
      %v328 = vld [vmem:[%s227 + $0x2c8] sm:$0xff]
      %v329 = vld [vmem:[%s227 + $0x2d0] sm:$0xff]
      %v330 = vld [vmem:[%s227 + $0x2d8] sm:$0xff]
      %v331 = vld [vmem:[%s227 + $0x2e0] sm:$0xff]
      %v332 = vld [vmem:[%s227 + $0x2e8] sm:$0xff]
      %v333 = vld [vmem:[%s227 + $0x2f0] sm:$0xff]
      %v334 = vld [vmem:[%s227 + $0x2f8] sm:$0xff]
      %v335 = vld [vmem:[%s227 + $0x300] sm:$0xff]
      %v336 = vld [vmem:[%s227 + $0x308] sm:$0xff]
      %v337 = vld [vmem:[%s227 + $0x310] sm:$0xff]
      %v338 = vld [vmem:[%s227 + $0x318] sm:$0xff]
      %v339 = vld [vmem:[%s227 + $0x320] sm:$0xff]
      %v340 = vld [vmem:[%s227 + $0x328] sm:$0xff]
      %v341 = vld [vmem:[%s227 + $0x330] sm:$0xff]
      %v342 = vld [vmem:[%s227 + $0x338] sm:$0xff]
      %v343 = vld [vmem:[%s227 + $0x340] sm:$0xff]
      %v344 = vld [vmem:[%s227 + $0x348] sm:$0xff]
      %v345 = vld [vmem:[%s227 + $0x350] sm:$0xff]
      %v346 = vld [vmem:[%s227 + $0x358] sm:$0xff]
      %v347 = vld [vmem:[%s227 + $0x360] sm:$0xff]
      %v348 = vld [vmem:[%s227 + $0x368] sm:$0xff]
      %v349 = vld [vmem:[%s227 + $0x370] sm:$0xff]
      %v350 = vld [vmem:[%s227 + $0x378] sm:$0xff]
      %v351 = vld [vmem:[%s227 + $0x380] sm:$0xff]
      %v352 = vld [vmem:[%s227 + $0x388] sm:$0xff]
      %v353 = vld [vmem:[%s227 + $0x390] sm:$0xff]
      %v354 = vld [vmem:[%s227 + $0x398] sm:$0xff]
      %v355 = vld [vmem:[%s227 + $0x3a0] sm:$0xff]
      %v356 = vld [vmem:[%s227 + $0x3a8] sm:$0xff]
      %v357 = vld [vmem:[%s227 + $0x3b0] sm:$0xff]
      %v358 = vld [vmem:[%s227 + $0x3b8] sm:$0xff]
      %v359 = vld [vmem:[%s227 + $0x3c0] sm:$0xff]
      %v360 = vld [vmem:[%s227 + $0x3c8] sm:$0xff]
      %v361 = vld [vmem:[%s227 + $0x3d0] sm:$0xff]
      %v362 = vld [vmem:[%s227 + $0x3d8] sm:$0xff]
      %v363 = vld [vmem:[%s227 + $0x3e0] sm:$0xff]
      %v364 = vld [vmem:[%s227 + $0x3e8] sm:$0xff]
      %v365 = vld [vmem:[%s227 + $0x3f0] sm:$0xff]
      %v366 = vld [vmem:[%s227 + $0x3f8] sm:$0xff]
      %v367 = vld [vmem:[%s1] sm:$0x1]
      %v369 = vperm.slane %v367, 0
      %v371 = vmul.f32 %v239, %v369
      %v372 = vmul.f32 %v240, %v369
      %v373 = vmul.f32 %v241, %v369
      %v374 = vmul.f32 %v242, %v369
      %v375 = vmul.f32 %v243, %v369
      %v376 = vmul.f32 %v244, %v369
      %v377 = vmul.f32 %v245, %v369
      %v378 = vmul.f32 %v246, %v369
      %v379 = vmul.f32 %v247, %v369
      %v380 = vmul.f32 %v248, %v369
      %v381 = vmul.f32 %v249, %v369
      %v382 = vmul.f32 %v250, %v369
      %v383 = vmul.f32 %v251, %v369
      %v384 = vmul.f32 %v252, %v369
      %v385 = vmul.f32 %v253, %v369
      %v386 = vmul.f32 %v254, %v369
      %v387 = vmul.f32 %v255, %v369
      %v388 = vmul.f32 %v256, %v369
      %v389 = vmul.f32 %v257, %v369
      %v390 = vmul.f32 %v258, %v369
      %v391 = vmul.f32 %v259, %v369
      %v392 = vmul.f32 %v260, %v369
      %v393 = vmul.f32 %v261, %v369
      %v394 = vmul.f32 %v262, %v369
      %v395 = vmul.f32 %v263, %v369
      %v396 = vmul.f32 %v264, %v369
      %v397 = vmul.f32 %v265, %v369
      %v398 = vmul.f32 %v266, %v369
      %v399 = vmul.f32 %v267, %v369
      %v400 = vmul.f32 %v268, %v369
      %v401 = vmul.f32 %v269, %v369
      %v402 = vmul.f32 %v270, %v369
      %v403 = vmul.f32 %v271, %v369
      %v404 = vmul.f32 %v272, %v369
      %v405 = vmul.f32 %v273, %v369
      %v406 = vmul.f32 %v274, %v369
      %v407 = vmul.f32 %v275, %v369
      %v408 = vmul.f32 %v276, %v369
      %v409 = vmul.f32 %v277, %v369
      %v410 = vmul.f32 %v278, %v369
      %v411 = vmul.f32 %v279, %v369
      %v412 = vmul.f32 %v280, %v369
      %v413 = vmul.f32 %v281, %v369
      %v414 = vmul.f32 %v282, %v369
      %v415 = vmul.f32 %v283, %v369
      %v416 = vmul.f32 %v284, %v369
      %v417 = vmul.f32 %v285, %v369
      %v418 = vmul.f32 %v286, %v369
      %v419 = vmul.f32 %v287, %v369
      %v420 = vmul.f32 %v288, %v369
      %v421 = vmul.f32 %v289, %v369
      %v422 = vmul.f32 %v290, %v369
      %v423 = vmul.f32 %v291, %v369
      %v424 = vmul.f32 %v292, %v369
      %v425 = vmul.f32 %v293, %v369
      %v426 = vmul.f32 %v294, %v369
      %v427 = vmul.f32 %v295, %v369
      %v428 = vmul.f32 %v296, %v369
      %v429 = vmul.f32 %v297, %v369
      %v430 = vmul.f32 %v298, %v369
      %v431 = vmul.f32 %v299, %v369
      %v432 = vmul.f32 %v300, %v369
      %v433 = vmul.f32 %v301, %v369
      %v434 = vmul.f32 %v302, %v369
      %v435 = vmul.f32 %v303, %v369
      %v436 = vmul.f32 %v304, %v369
      %v437 = vmul.f32 %v305, %v369
      %v438 = vmul.f32 %v306, %v369
      %v439 = vmul.f32 %v307, %v369
      %v440 = vmul.f32 %v308, %v369
      %v441 = vmul.f32 %v309, %v369
      %v442 = vmul.f32 %v310, %v369
      %v443 = vmul.f32 %v311, %v369
      %v444 = vmul.f32 %v312, %v369
      %v445 = vmul.f32 %v313, %v369
      %v446 = vmul.f32 %v314, %v369
      %v447 = vmul.f32 %v315, %v369
      %v448 = vmul.f32 %v316, %v369
      %v449 = vmul.f32 %v317, %v369
      %v450 = vmul.f32 %v318, %v369
      %v451 = vmul.f32 %v319, %v369
      %v452 = vmul.f32 %v320, %v369
      %v453 = vmul.f32 %v321, %v369
      %v454 = vmul.f32 %v322, %v369
      %v455 = vmul.f32 %v323, %v369
      %v456 = vmul.f32 %v324, %v369
      %v457 = vmul.f32 %v325, %v369
      %v458 = vmul.f32 %v326, %v369
      %v459 = vmul.f32 %v327, %v369
      %v460 = vmul.f32 %v328, %v369
      %v461 = vmul.f32 %v329, %v369
      %v462 = vmul.f32 %v330, %v369
      %v463 = vmul.f32 %v331, %v369
      %v464 = vmul.f32 %v332, %v369
      %v465 = vmul.f32 %v333, %v369
      %v466 = vmul.f32 %v334, %v369
      %v467 = vmul.f32 %v335, %v369
      %v468 = vmul.f32 %v336, %v369
      %v469 = vmul.f32 %v337, %v369
      %v470 = vmul.f32 %v338, %v369
      %v471 = vmul.f32 %v339, %v369
      %v472 = vmul.f32 %v340, %v369
      %v473 = vmul.f32 %v341, %v369
      %v474 = vmul.f32 %v342, %v369
      %v475 = vmul.f32 %v343, %v369
      %v476 = vmul.f32 %v344, %v369
      %v477 = vmul.f32 %v345, %v369
      %v478 = vmul.f32 %v346, %v369
      %v479 = vmul.f32 %v347, %v369
      %v480 = vmul.f32 %v348, %v369
      %v481 = vmul.f32 %v349, %v369
      %v482 = vmul.f32 %v350, %v369
      %v483 = vmul.f32 %v351, %v369
      %v484 = vmul.f32 %v352, %v369
      %v485 = vmul.f32 %v353, %v369
      %v486 = vmul.f32 %v354, %v369
      %v487 = vmul.f32 %v355, %v369
      %v488 = vmul.f32 %v356, %v369
      %v489 = vmul.f32 %v357, %v369
      %v490 = vmul.f32 %v358, %v369
      %v491 = vmul.f32 %v359, %v369
      %v492 = vmul.f32 %v360, %v369
      %v493 = vmul.f32 %v361, %v369
      %v494 = vmul.f32 %v362, %v369
      %v495 = vmul.f32 %v363, %v369
      %v496 = vmul.f32 %v364, %v369
      %v497 = vmul.f32 %v365, %v369
      %v498 = vmul.f32 %v366, %v369
      %v499 = vld [vmem:[%s2] sm:$0x1]
      %v501 = vperm.slane %v499, 0
      %v503 = vadd.f32 %v371, %v501
      %v504 = vadd.f32 %v372, %v501
      %v505 = vadd.f32 %v373, %v501
      %v506 = vadd.f32 %v374, %v501
      %v507 = vadd.f32 %v375, %v501
      %v508 = vadd.f32 %v376, %v501
      %v509 = vadd.f32 %v377, %v501
      %v510 = vadd.f32 %v378, %v501
      %v511 = vadd.f32 %v379, %v501
      %v512 = vadd.f32 %v380, %v501
      %v513 = vadd.f32 %v381, %v501
      %v514 = vadd.f32 %v382, %v501
      %v515 = vadd.f32 %v383, %v501
      %v516 = vadd.f32 %v384, %v501
      %v517 = vadd.f32 %v385, %v501
      %v518 = vadd.f32 %v386, %v501
      %v519 = vadd.f32 %v387, %v501
      %v520 = vadd.f32 %v388, %v501
      %v521 = vadd.f32 %v389, %v501
      %v522 = vadd.f32 %v390, %v501
      %v523 = vadd.f32 %v391, %v501
      %v524 = vadd.f32 %v392, %v501
      %v525 = vadd.f32 %v393, %v501
      %v526 = vadd.f32 %v394, %v501
      %v527 = vadd.f32 %v395, %v501
      %v528 = vadd.f32 %v396, %v501
      %v529 = vadd.f32 %v397, %v501
      %v530 = vadd.f32 %v398, %v501
      %v531 = vadd.f32 %v399, %v501
      %v532 = vadd.f32 %v400, %v501
      %v533 = vadd.f32 %v401, %v501
      %v534 = vadd.f32 %v402, %v501
      %v535 = vadd.f32 %v403, %v501
      %v536 = vadd.f32 %v404, %v501
      %v537 = vadd.f32 %v405, %v501
      %v538 = vadd.f32 %v406, %v501
      %v539 = vadd.f32 %v407, %v501
      %v540 = vadd.f32 %v408, %v501
      %v541 = vadd.f32 %v409, %v501
      %v542 = vadd.f32 %v410, %v501
      %v543 = vadd.f32 %v411, %v501
      %v544 = vadd.f32 %v412, %v501
      %v545 = vadd.f32 %v413, %v501
      %v546 = vadd.f32 %v414, %v501
      %v547 = vadd.f32 %v415, %v501
      %v548 = vadd.f32 %v416, %v501
      %v549 = vadd.f32 %v417, %v501
      %v550 = vadd.f32 %v418, %v501
      %v551 = vadd.f32 %v419, %v501
      %v552 = vadd.f32 %v420, %v501
      %v553 = vadd.f32 %v421, %v501
      %v554 = vadd.f32 %v422, %v501
      %v555 = vadd.f32 %v423, %v501
      %v556 = vadd.f32 %v424, %v501
      %v557 = vadd.f32 %v425, %v501
      %v558 = vadd.f32 %v426, %v501
      %v559 = vadd.f32 %v427, %v501
      %v560 = vadd.f32 %v428, %v501
      %v561 = vadd.f32 %v429, %v501
      %v562 = vadd.f32 %v430, %v501
      %v563 = vadd.f32 %v431, %v501
      %v564 = vadd.f32 %v432, %v501
      %v565 = vadd.f32 %v433, %v501
      %v566 = vadd.f32 %v434, %v501
      %v567 = vadd.f32 %v435, %v501
      %v568 = vadd.f32 %v436, %v501
      %v569 = vadd.f32 %v437, %v501
      %v570 = vadd.f32 %v438, %v501
      %v571 = vadd.f32 %v439, %v501
      %v572 = vadd.f32 %v440, %v501
      %v573 = vadd.f32 %v441, %v501
      %v574 = vadd.f32 %v442, %v501
      %v575 = vadd.f32 %v443, %v501
      %v576 = vadd.f32 %v444, %v501
      %v577 = vadd.f32 %v445, %v501
      %v578 = vadd.f32 %v446, %v501
      %v579 = vadd.f32 %v447, %v501
      %v580 = vadd.f32 %v448, %v501
      %v581 = vadd.f32 %v449, %v501
      %v582 = vadd.f32 %v450, %v501
      %v583 = vadd.f32 %v451, %v501
      %v584 = vadd.f32 %v452, %v501
      %v585 = vadd.f32 %v453, %v501
      %v586 = vadd.f32 %v454, %v501
      %v587 = vadd.f32 %v455, %v501
      %v588 = vadd.f32 %v456, %v501
      %v589 = vadd.f32 %v457, %v501
      %v590 = vadd.f32 %v458, %v501
      %v591 = vadd.f32 %v459, %v501
      %v592 = vadd.f32 %v460, %v501
      %v593 = vadd.f32 %v461, %v501
      %v594 = vadd.f32 %v462, %v501
      %v595 = vadd.f32 %v463, %v501
      %v596 = vadd.f32 %v464, %v501
      %v597 = vadd.f32 %v465, %v501
      %v598 = vadd.f32 %v466, %v501
      %v599 = vadd.f32 %v467, %v501
      %v600 = vadd.f32 %v468, %v501
      %v601 = vadd.f32 %v469, %v501
      %v602 = vadd.f32 %v470, %v501
      %v603 = vadd.f32 %v471, %v501
      %v604 = vadd.f32 %v472, %v501
      %v605 = vadd.f32 %v473, %v501
      %v606 = vadd.f32 %v474, %v501
      %v607 = vadd.f32 %v475, %v501
      %v608 = vadd.f32 %v476, %v501
      %v609 = vadd.f32 %v477, %v501
      %v610 = vadd.f32 %v478, %v501
      %v611 = vadd.f32 %v479, %v501
      %v612 = vadd.f32 %v480, %v501
      %v613 = vadd.f32 %v481, %v501
      %v614 = vadd.f32 %v482, %v501
      %v615 = vadd.f32 %v483, %v501
      %v616 = vadd.f32 %v484, %v501
      %v617 = vadd.f32 %v485, %v501
      %v618 = vadd.f32 %v486, %v501
      %v619 = vadd.f32 %v487, %v501
      %v620 = vadd.f32 %v488, %v501
      %v621 = vadd.f32 %v489, %v501
      %v622 = vadd.f32 %v490, %v501
      %v623 = vadd.f32 %v491, %v501
      %v624 = vadd.f32 %v492, %v501
      %v625 = vadd.f32 %v493, %v501
      %v626 = vadd.f32 %v494, %v501
      %v627 = vadd.f32 %v495, %v501
      %v628 = vadd.f32 %v496, %v501
      %v629 = vadd.f32 %v497, %v501
      %v630 = vadd.f32 %v498, %v501
      %vm631 = vcmp.ge.f32.partialorder %v503, 0.0
      %vm632 = vcmp.ge.f32.partialorder %v504, 0.0
      %vm633 = vcmp.ge.f32.partialorder %v505, 0.0
      %vm634 = vcmp.ge.f32.partialorder %v506, 0.0
      %vm635 = vcmp.ge.f32.partialorder %v507, 0.0
      %vm636 = vcmp.ge.f32.partialorder %v508, 0.0
      %vm637 = vcmp.ge.f32.partialorder %v509, 0.0
      %vm638 = vcmp.ge.f32.partialorder %v510, 0.0
      %vm639 = vcmp.ge.f32.partialorder %v511, 0.0
      %vm640 = vcmp.ge.f32.partialorder %v512, 0.0
      %vm641 = vcmp.ge.f32.partialorder %v513, 0.0
      %vm642 = vcmp.ge.f32.partialorder %v514, 0.0
      %vm643 = vcmp.ge.f32.partialorder %v515, 0.0
      %vm644 = vcmp.ge.f32.partialorder %v516, 0.0
      %vm645 = vcmp.ge.f32.partialorder %v517, 0.0
      %vm646 = vcmp.ge.f32.partialorder %v518, 0.0
      %vm647 = vcmp.ge.f32.partialorder %v519, 0.0
      %vm648 = vcmp.ge.f32.partialorder %v520, 0.0
      %vm649 = vcmp.ge.f32.partialorder %v521, 0.0
      %vm650 = vcmp.ge.f32.partialorder %v522, 0.0
      %vm651 = vcmp.ge.f32.partialorder %v523, 0.0
      %vm652 = vcmp.ge.f32.partialorder %v524, 0.0
      %vm653 = vcmp.ge.f32.partialorder %v525, 0.0
      %vm654 = vcmp.ge.f32.partialorder %v526, 0.0
      %vm655 = vcmp.ge.f32.partialorder %v527, 0.0
      %vm656 = vcmp.ge.f32.partialorder %v528, 0.0
      %vm657 = vcmp.ge.f32.partialorder %v529, 0.0
      %vm658 = vcmp.ge.f32.partialorder %v530, 0.0
      %vm659 = vcmp.ge.f32.partialorder %v531, 0.0
      %vm660 = vcmp.ge.f32.partialorder %v532, 0.0
      %vm661 = vcmp.ge.f32.partialorder %v533, 0.0
      %vm662 = vcmp.ge.f32.partialorder %v534, 0.0
      %vm663 = vcmp.ge.f32.partialorder %v535, 0.0
      %vm664 = vcmp.ge.f32.partialorder %v536, 0.0
      %vm665 = vcmp.ge.f32.partialorder %v537, 0.0
      %vm666 = vcmp.ge.f32.partialorder %v538, 0.0
      %vm667 = vcmp.ge.f32.partialorder %v539, 0.0
      %vm668 = vcmp.ge.f32.partialorder %v540, 0.0
      %vm669 = vcmp.ge.f32.partialorder %v541, 0.0
      %vm670 = vcmp.ge.f32.partialorder %v542, 0.0
      %vm671 = vcmp.ge.f32.partialorder %v543, 0.0
      %vm672 = vcmp.ge.f32.partialorder %v544, 0.0
      %vm673 = vcmp.ge.f32.partialorder %v545, 0.0
      %vm674 = vcmp.ge.f32.partialorder %v546, 0.0
      %vm675 = vcmp.ge.f32.partialorder %v547, 0.0
      %vm676 = vcmp.ge.f32.partialorder %v548, 0.0
      %vm677 = vcmp.ge.f32.partialorder %v549, 0.0
      %vm678 = vcmp.ge.f32.partialorder %v550, 0.0
      %vm679 = vcmp.ge.f32.partialorder %v551, 0.0
      %vm680 = vcmp.ge.f32.partialorder %v552, 0.0
      %vm681 = vcmp.ge.f32.partialorder %v553, 0.0
      %vm682 = vcmp.ge.f32.partialorder %v554, 0.0
      %vm683 = vcmp.ge.f32.partialorder %v555, 0.0
      %vm684 = vcmp.ge.f32.partialorder %v556, 0.0
      %vm685 = vcmp.ge.f32.partialorder %v557, 0.0
      %vm686 = vcmp.ge.f32.partialorder %v558, 0.0
      %vm687 = vcmp.ge.f32.partialorder %v559, 0.0
      %vm688 = vcmp.ge.f32.partialorder %v560, 0.0
      %vm689 = vcmp.ge.f32.partialorder %v561, 0.0
      %vm690 = vcmp.ge.f32.partialorder %v562, 0.0
      %vm691 = vcmp.ge.f32.partialorder %v563, 0.0
      %vm692 = vcmp.ge.f32.partialorder %v564, 0.0
      %vm693 = vcmp.ge.f32.partialorder %v565, 0.0
      %vm694 = vcmp.ge.f32.partialorder %v566, 0.0
      %vm695 = vcmp.ge.f32.partialorder %v567, 0.0
      %vm696 = vcmp.ge.f32.partialorder %v568, 0.0
      %vm697 = vcmp.ge.f32.partialorder %v569, 0.0
      %vm698 = vcmp.ge.f32.partialorder %v570, 0.0
      %vm699 = vcmp.ge.f32.partialorder %v571, 0.0
      %vm700 = vcmp.ge.f32.partialorder %v572, 0.0
      %vm701 = vcmp.ge.f32.partialorder %v573, 0.0
      %vm702 = vcmp.ge.f32.partialorder %v574, 0.0
      %vm703 = vcmp.ge.f32.partialorder %v575, 0.0
      %vm704 = vcmp.ge.f32.partialorder %v576, 0.0
      %vm705 = vcmp.ge.f32.partialorder %v577, 0.0
      %vm706 = vcmp.ge.f32.partialorder %v578, 0.0
      %vm707 = vcmp.ge.f32.partialorder %v579, 0.0
      %vm708 = vcmp.ge.f32.partialorder %v580, 0.0
      %vm709 = vcmp.ge.f32.partialorder %v581, 0.0
      %vm710 = vcmp.ge.f32.partialorder %v582, 0.0
      %vm711 = vcmp.ge.f32.partialorder %v583, 0.0
      %vm712 = vcmp.ge.f32.partialorder %v584, 0.0
      %vm713 = vcmp.ge.f32.partialorder %v585, 0.0
      %vm714 = vcmp.ge.f32.partialorder %v586, 0.0
      %vm715 = vcmp.ge.f32.partialorder %v587, 0.0
      %vm716 = vcmp.ge.f32.partialorder %v588, 0.0
      %vm717 = vcmp.ge.f32.partialorder %v589, 0.0
      %vm718 = vcmp.ge.f32.partialorder %v590, 0.0
      %vm719 = vcmp.ge.f32.partialorder %v591, 0.0
      %vm720 = vcmp.ge.f32.partialorder %v592, 0.0
      %vm721 = vcmp.ge.f32.partialorder %v593, 0.0
      %vm722 = vcmp.ge.f32.partialorder %v594, 0.0
      %vm723 = vcmp.ge.f32.partialorder %v595, 0.0
      %vm724 = vcmp.ge.f32.partialorder %v596, 0.0
      %vm725 = vcmp.ge.f32.partialorder %v597, 0.0
      %vm726 = vcmp.ge.f32.partialorder %v598, 0.0
      %vm727 = vcmp.ge.f32.partialorder %v599, 0.0
      %vm728 = vcmp.ge.f32.partialorder %v600, 0.0
      %vm729 = vcmp.ge.f32.partialorder %v601, 0.0
      %vm730 = vcmp.ge.f32.partialorder %v602, 0.0
      %vm731 = vcmp.ge.f32.partialorder %v603, 0.0
      %vm732 = vcmp.ge.f32.partialorder %v604, 0.0
      %vm733 = vcmp.ge.f32.partialorder %v605, 0.0
      %vm734 = vcmp.ge.f32.partialorder %v606, 0.0
      %vm735 = vcmp.ge.f32.partialorder %v607, 0.0
      %vm736 = vcmp.ge.f32.partialorder %v608, 0.0
      %vm737 = vcmp.ge.f32.partialorder %v609, 0.0
      %vm738 = vcmp.ge.f32.partialorder %v610, 0.0
      %vm739 = vcmp.ge.f32.partialorder %v611, 0.0
      %vm740 = vcmp.ge.f32.partialorder %v612, 0.0
      %vm741 = vcmp.ge.f32.partialorder %v613, 0.0
      %vm742 = vcmp.ge.f32.partialorder %v614, 0.0
      %vm743 = vcmp.ge.f32.partialorder %v615, 0.0
      %vm744 = vcmp.ge.f32.partialorder %v616, 0.0
      %vm745 = vcmp.ge.f32.partialorder %v617, 0.0
      %vm746 = vcmp.ge.f32.partialorder %v618, 0.0
      %vm747 = vcmp.ge.f32.partialorder %v619, 0.0
      %vm748 = vcmp.ge.f32.partialorder %v620, 0.0
      %vm749 = vcmp.ge.f32.partialorder %v621, 0.0
      %vm750 = vcmp.ge.f32.partialorder %v622, 0.0
      %vm751 = vcmp.ge.f32.partialorder %v623, 0.0
      %vm752 = vcmp.ge.f32.partialorder %v624, 0.0
      %vm753 = vcmp.ge.f32.partialorder %v625, 0.0
      %vm754 = vcmp.ge.f32.partialorder %v626, 0.0
      %vm755 = vcmp.ge.f32.partialorder %v627, 0.0
      %vm756 = vcmp.ge.f32.partialorder %v628, 0.0
      %vm757 = vcmp.ge.f32.partialorder %v629, 0.0
      %vm758 = vcmp.ge.f32.partialorder %v630, 0.0
      %v759 = vmul.f32 %v503, 0.1
      %v760 = vmul.f32 %v504, 0.1
      %v761 = vmul.f32 %v505, 0.1
      %v762 = vmul.f32 %v506, 0.1
      %v763 = vmul.f32 %v507, 0.1
      %v764 = vmul.f32 %v508, 0.1
      %v765 = vmul.f32 %v509, 0.1
      %v766 = vmul.f32 %v510, 0.1
      %v767 = vmul.f32 %v511, 0.1
      %v768 = vmul.f32 %v512, 0.1
      %v769 = vmul.f32 %v513, 0.1
      %v770 = vmul.f32 %v514, 0.1
      %v771 = vmul.f32 %v515, 0.1
      %v772 = vmul.f32 %v516, 0.1
      %v773 = vmul.f32 %v517, 0.1
      %v774 = vmul.f32 %v518, 0.1
      %v775 = vmul.f32 %v519, 0.1
      %v776 = vmul.f32 %v520, 0.1
      %v777 = vmul.f32 %v521, 0.1
      %v778 = vmul.f32 %v522, 0.1
      %v779 = vmul.f32 %v523, 0.1
      %v780 = vmul.f32 %v524, 0.1
      %v781 = vmul.f32 %v525, 0.1
      %v782 = vmul.f32 %v526, 0.1
      %v783 = vmul.f32 %v527, 0.1
      %v784 = vmul.f32 %v528, 0.1
      %v785 = vmul.f32 %v529, 0.1
      %v786 = vmul.f32 %v530, 0.1
      %v787 = vmul.f32 %v531, 0.1
      %v788 = vmul.f32 %v532, 0.1
      %v789 = vmul.f32 %v533, 0.1
      %v790 = vmul.f32 %v534, 0.1
      %v791 = vmul.f32 %v535, 0.1
      %v792 = vmul.f32 %v536, 0.1
      %v793 = vmul.f32 %v537, 0.1
      %v794 = vmul.f32 %v538, 0.1
      %v795 = vmul.f32 %v539, 0.1
      %v796 = vmul.f32 %v540, 0.1
      %v797 = vmul.f32 %v541, 0.1
      %v798 = vmul.f32 %v542, 0.1
      %v799 = vmul.f32 %v543, 0.1
      %v800 = vmul.f32 %v544, 0.1
      %v801 = vmul.f32 %v545, 0.1
      %v802 = vmul.f32 %v546, 0.1
      %v803 = vmul.f32 %v547, 0.1
      %v804 = vmul.f32 %v548, 0.1
      %v805 = vmul.f32 %v549, 0.1
      %v806 = vmul.f32 %v550, 0.1
      %v807 = vmul.f32 %v551, 0.1
      %v808 = vmul.f32 %v552, 0.1
      %v809 = vmul.f32 %v553, 0.1
      %v810 = vmul.f32 %v554, 0.1
      %v811 = vmul.f32 %v555, 0.1
      %v812 = vmul.f32 %v556, 0.1
      %v813 = vmul.f32 %v557, 0.1
      %v814 = vmul.f32 %v558, 0.1
      %v815 = vmul.f32 %v559, 0.1
      %v816 = vmul.f32 %v560, 0.1
      %v817 = vmul.f32 %v561, 0.1
      %v818 = vmul.f32 %v562, 0.1
      %v819 = vmul.f32 %v563, 0.1
      %v820 = vmul.f32 %v564, 0.1
      %v821 = vmul.f32 %v565, 0.1
      %v822 = vmul.f32 %v566, 0.1
      %v823 = vmul.f32 %v567, 0.1
      %v824 = vmul.f32 %v568, 0.1
      %v825 = vmul.f32 %v569, 0.1
      %v826 = vmul.f32 %v570, 0.1
      %v827 = vmul.f32 %v571, 0.1
      %v828 = vmul.f32 %v572, 0.1
      %v829 = vmul.f32 %v573, 0.1
      %v830 = vmul.f32 %v574, 0.1
      %v831 = vmul.f32 %v575, 0.1
      %v832 = vmul.f32 %v576, 0.1
      %v833 = vmul.f32 %v577, 0.1
      %v834 = vmul.f32 %v578, 0.1
      %v835 = vmul.f32 %v579, 0.1
      %v836 = vmul.f32 %v580, 0.1
      %v837 = vmul.f32 %v581, 0.1
      %v838 = vmul.f32 %v582, 0.1
      %v839 = vmul.f32 %v583, 0.1
      %v840 = vmul.f32 %v584, 0.1
      %v841 = vmul.f32 %v585, 0.1
      %v842 = vmul.f32 %v586, 0.1
      %v843 = vmul.f32 %v587, 0.1
      %v844 = vmul.f32 %v588, 0.1
      %v845 = vmul.f32 %v589, 0.1
      %v846 = vmul.f32 %v590, 0.1
      %v847 = vmul.f32 %v591, 0.1
      %v848 = vmul.f32 %v592, 0.1
      %v849 = vmul.f32 %v593, 0.1
      %v850 = vmul.f32 %v594, 0.1
      %v851 = vmul.f32 %v595, 0.1
      %v852 = vmul.f32 %v596, 0.1
      %v853 = vmul.f32 %v597, 0.1
      %v854 = vmul.f32 %v598, 0.1
      %v855 = vmul.f32 %v599, 0.1
      %v856 = vmul.f32 %v600, 0.1
      %v857 = vmul.f32 %v601, 0.1
      %v858 = vmul.f32 %v602, 0.1
      %v859 = vmul.f32 %v603, 0.1
      %v860 = vmul.f32 %v604, 0.1
      %v861 = vmul.f32 %v605, 0.1
      %v862 = vmul.f32 %v606, 0.1
      %v863 = vmul.f32 %v607, 0.1
      %v864 = vmul.f32 %v608, 0.1
      %v865 = vmul.f32 %v609, 0.1
      %v866 = vmul.f32 %v610, 0.1
      %v867 = vmul.f32 %v611, 0.1
      %v868 = vmul.f32 %v612, 0.1
      %v869 = vmul.f32 %v613, 0.1
      %v870 = vmul.f32 %v614, 0.1
      %v871 = vmul.f32 %v615, 0.1
      %v872 = vmul.f32 %v616, 0.1
      %v873 = vmul.f32 %v617, 0.1
      %v874 = vmul.f32 %v618, 0.1
      %v875 = vmul.f32 %v619, 0.1
      %v876 = vmul.f32 %v620, 0.1
      %v877 = vmul.f32 %v621, 0.1
      %v878 = vmul.f32 %v622, 0.1
      %v879 = vmul.f32 %v623, 0.1
      %v880 = vmul.f32 %v624, 0.1
      %v881 = vmul.f32 %v625, 0.1
      %v882 = vmul.f32 %v626, 0.1
      %v883 = vmul.f32 %v627, 0.1
      %v884 = vmul.f32 %v628, 0.1
      %v885 = vmul.f32 %v629, 0.1
      %v886 = vmul.f32 %v630, 0.1
      %v887 = vsel %vm631, %v503, %v759
      %v888 = vsel %vm632, %v504, %v760
      %v889 = vsel %vm633, %v505, %v761
      %v890 = vsel %vm634, %v506, %v762
      %v891 = vsel %vm635, %v507, %v763
      %v892 = vsel %vm636, %v508, %v764
      %v893 = vsel %vm637, %v509, %v765
      %v894 = vsel %vm638, %v510, %v766
      %v895 = vsel %vm639, %v511, %v767
      %v896 = vsel %vm640, %v512, %v768
      %v897 = vsel %vm641, %v513, %v769
      %v898 = vsel %vm642, %v514, %v770
      %v899 = vsel %vm643, %v515, %v771
      %v900 = vsel %vm644, %v516, %v772
      %v901 = vsel %vm645, %v517, %v773
      %v902 = vsel %vm646, %v518, %v774
      %v903 = vsel %vm647, %v519, %v775
      %v904 = vsel %vm648, %v520, %v776
      %v905 = vsel %vm649, %v521, %v777
      %v906 = vsel %vm650, %v522, %v778
      %v907 = vsel %vm651, %v523, %v779
      %v908 = vsel %vm652, %v524, %v780
      %v909 = vsel %vm653, %v525, %v781
      %v910 = vsel %vm654, %v526, %v782
      %v911 = vsel %vm655, %v527, %v783
      %v912 = vsel %vm656, %v528, %v784
      %v913 = vsel %vm657, %v529, %v785
      %v914 = vsel %vm658, %v530, %v786
      %v915 = vsel %vm659, %v531, %v787
      %v916 = vsel %vm660, %v532, %v788
      %v917 = vsel %vm661, %v533, %v789
      %v918 = vsel %vm662, %v534, %v790
      %v919 = vsel %vm663, %v535, %v791
      %v920 = vsel %vm664, %v536, %v792
      %v921 = vsel %vm665, %v537, %v793
      %v922 = vsel %vm666, %v538, %v794
      %v923 = vsel %vm667, %v539, %v795
      %v924 = vsel %vm668, %v540, %v796
      %v925 = vsel %vm669, %v541, %v797
      %v926 = vsel %vm670, %v542, %v798
      %v927 = vsel %vm671, %v543, %v799
      %v928 = vsel %vm672, %v544, %v800
      %v929 = vsel %vm673, %v545, %v801
      %v930 = vsel %vm674, %v546, %v802
      %v931 = vsel %vm675, %v547, %v803
      %v932 = vsel %vm676, %v548, %v804
      %v933 = vsel %vm677, %v549, %v805
      %v934 = vsel %vm678, %v550, %v806
      %v935 = vsel %vm679, %v551, %v807
      %v936 = vsel %vm680, %v552, %v808
      %v937 = vsel %vm681, %v553, %v809
      %v938 = vsel %vm682, %v554, %v810
      %v939 = vsel %vm683, %v555, %v811
      %v940 = vsel %vm684, %v556, %v812
      %v941 = vsel %vm685, %v557, %v813
      %v942 = vsel %vm686, %v558, %v814
      %v943 = vsel %vm687, %v559, %v815
      %v944 = vsel %vm688, %v560, %v816
      %v945 = vsel %vm689, %v561, %v817
      %v946 = vsel %vm690, %v562, %v818
      %v947 = vsel %vm691, %v563, %v819
      %v948 = vsel %vm692, %v564, %v820
      %v949 = vsel %vm693, %v565, %v821
      %v950 = vsel %vm694, %v566, %v822
      %v951 = vsel %vm695, %v567, %v823
      %v952 = vsel %vm696, %v568, %v824
      %v953 = vsel %vm697, %v569, %v825
      %v954 = vsel %vm698, %v570, %v826
      %v955 = vsel %vm699, %v571, %v827
      %v956 = vsel %vm700, %v572, %v828
      %v957 = vsel %vm701, %v573, %v829
      %v958 = vsel %vm702, %v574, %v830
      %v959 = vsel %vm703, %v575, %v831
      %v960 = vsel %vm704, %v576, %v832
      %v961 = vsel %vm705, %v577, %v833
      %v962 = vsel %vm706, %v578, %v834
      %v963 = vsel %vm707, %v579, %v835
      %v964 = vsel %vm708, %v580, %v836
      %v965 = vsel %vm709, %v581, %v837
      %v966 = vsel %vm710, %v582, %v838
      %v967 = vsel %vm711, %v583, %v839
      %v968 = vsel %vm712, %v584, %v840
      %v969 = vsel %vm713, %v585, %v841
      %v970 = vsel %vm714, %v586, %v842
      %v971 = vsel %vm715, %v587, %v843
      %v972 = vsel %vm716, %v588, %v844
      %v973 = vsel %vm717, %v589, %v845
      %v974 = vsel %vm718, %v590, %v846
      %v975 = vsel %vm719, %v591, %v847
      %v976 = vsel %vm720, %v592, %v848
      %v977 = vsel %vm721, %v593, %v849
      %v978 = vsel %vm722, %v594, %v850
      %v979 = vsel %vm723, %v595, %v851
      %v980 = vsel %vm724, %v596, %v852
      %v981 = vsel %vm725, %v597, %v853
      %v982 = vsel %vm726, %v598, %v854
      %v983 = vsel %vm727, %v599, %v855
      %v984 = vsel %vm728, %v600, %v856
      %v985 = vsel %vm729, %v601, %v857
      %v986 = vsel %vm730, %v602, %v858
      %v987 = vsel %vm731, %v603, %v859
      %v988 = vsel %vm732, %v604, %v860
      %v989 = vsel %vm733, %v605, %v861
      %v990 = vsel %vm734, %v606, %v862
      %v991 = vsel %vm735, %v607, %v863
      %v992 = vsel %vm736, %v608, %v864
      %v993 = vsel %vm737, %v609, %v865
      %v994 = vsel %vm738, %v610, %v866
      %v995 = vsel %vm739, %v611, %v867
      %v996 = vsel %vm740, %v612, %v868
      %v997 = vsel %vm741, %v613, %v869
      %v998 = vsel %vm742, %v614, %v870
      %v999 = vsel %vm743, %v615, %v871
      %v1000 = vsel %vm744, %v616, %v872
      %v1001 = vsel %vm745, %v617, %v873
      %v1002 = vsel %vm746, %v618, %v874
      %v1003 = vsel %vm747, %v619, %v875
      %v1004 = vsel %vm748, %v620, %v876
      %v1005 = vsel %vm749, %v621, %v877
      %v1006 = vsel %vm750, %v622, %v878
      %v1007 = vsel %vm751, %v623, %v879
      %v1008 = vsel %vm752, %v624, %v880
      %v1009 = vsel %vm753, %v625, %v881
      %v1010 = vsel %vm754, %v626, %v882
      %v1011 = vsel %vm755, %v627, %v883
      %v1012 = vsel %vm756, %v628, %v884
      %v1013 = vsel %vm757, %v629, %v885
      %v1014 = vsel %vm758, %v630, %v886
      %v1015 = vld [vmem:[%s3] sm:$0xff]
      %v1016 = vld [vmem:[%s3 + $0x8] sm:$0xff]
      %v1017 = vld [vmem:[%s3 + $0x10] sm:$0xff]
      %v1018 = vld [vmem:[%s3 + $0x18] sm:$0xff]
      %v1019 = vld [vmem:[%s3 + $0x20] sm:$0xff]
      %v1020 = vld [vmem:[%s3 + $0x28] sm:$0xff]
      %v1021 = vld [vmem:[%s3 + $0x30] sm:$0xff]
      %v1022 = vld [vmem:[%s3 + $0x38] sm:$0xff]
      %v1023 = vld [vmem:[%s3 + $0x40] sm:$0xff]
      %v1024 = vld [vmem:[%s3 + $0x48] sm:$0xff]
      %v1025 = vld [vmem:[%s3 + $0x50] sm:$0xff]
      %v1026 = vld [vmem:[%s3 + $0x58] sm:$0xff]
      %v1027 = vld [vmem:[%s3 + $0x60] sm:$0xff]
      %v1028 = vld [vmem:[%s3 + $0x68] sm:$0xff]
      %v1029 = vld [vmem:[%s3 + $0x70] sm:$0xff]
      %v1030 = vld [vmem:[%s3 + $0x78] sm:$0xff]
      %1031 = vmatpush.msra.mxu0 %v1030
      %1032 = vmatpush.msra.mxu0 %v1029
      %1033 = vmatpush.msra.mxu0 %v1028
      %1034 = vmatpush.msra.mxu0 %v1027
      %1035 = vmatpush.msra.mxu0 %v1026
      %1036 = vmatpush.msra.mxu0 %v1025
      %1037 = vmatpush.msra.mxu0 %v1024
      %1038 = vmatpush.msra.mxu0 %v1023
      %1039 = vmatpush.msra.mxu0 %v1022
      %1040 = vmatpush.msra.mxu0 %v1021
      %1041 = vmatpush.msra.mxu0 %v1020
      %1042 = vmatpush.msra.mxu0 %v1019
      %1043 = vmatpush.msra.mxu0 %v1018
      %1044 = vmatpush.msra.mxu0 %v1017
      %1045 = vmatpush.msra.mxu0 %v1016
      %1046 = vmatpush.msra.mxu0 %v1015
      %1047 = vmatmul.f32.gmra.mxu0 %v887
      %v1048 = vpop.f32.mrf.mxu0
      %v1049 = vadd.f32 0.0, %v1048
      %1050 = vmatmul.f32.gmra.mxu0 %v888
      %v1051 = vpop.f32.mrf.mxu0
      %v1052 = vadd.f32 0.0, %v1051
      %1053 = vmatmul.f32.gmra.mxu0 %v889
      %v1054 = vpop.f32.mrf.mxu0
      %v1055 = vadd.f32 0.0, %v1054
      %1056 = vmatmul.f32.gmra.mxu0 %v890
      %v1057 = vpop.f32.mrf.mxu0
      %v1058 = vadd.f32 0.0, %v1057
      %1059 = vmatmul.f32.gmra.mxu0 %v891
      %v1060 = vpop.f32.mrf.mxu0
      %v1061 = vadd.f32 0.0, %v1060
      %1062 = vmatmul.f32.gmra.mxu0 %v892
      %v1063 = vpop.f32.mrf.mxu0
      %v1064 = vadd.f32 0.0, %v1063
      %1065 = vmatmul.f32.gmra.mxu0 %v893
      %v1066 = vpop.f32.mrf.mxu0
      %v1067 = vadd.f32 0.0, %v1066
      %1068 = vmatmul.f32.gmra.mxu0 %v894
      %v1069 = vpop.f32.mrf.mxu0
      %v1070 = vadd.f32 0.0, %v1069
      %1071 = vmatmul.f32.gmra.mxu0 %v895
      %v1072 = vpop.f32.mrf.mxu0
      %v1073 = vadd.f32 0.0, %v1072
      %1074 = vmatmul.f32.gmra.mxu0 %v896
      %v1075 = vpop.f32.mrf.mxu0
      %v1076 = vadd.f32 0.0, %v1075
      %1077 = vmatmul.f32.gmra.mxu0 %v897
      %v1078 = vpop.f32.mrf.mxu0
      %v1079 = vadd.f32 0.0, %v1078
      %1080 = vmatmul.f32.gmra.mxu0 %v898
      %v1081 = vpop.f32.mrf.mxu0
      %v1082 = vadd.f32 0.0, %v1081
      %1083 = vmatmul.f32.gmra.mxu0 %v899
      %v1084 = vpop.f32.mrf.mxu0
      %v1085 = vadd.f32 0.0, %v1084
      %1086 = vmatmul.f32.gmra.mxu0 %v900
      %v1087 = vpop.f32.mrf.mxu0
      %v1088 = vadd.f32 0.0, %v1087
      %1089 = vmatmul.f32.gmra.mxu0 %v901
      %v1090 = vpop.f32.mrf.mxu0
      %v1091 = vadd.f32 0.0, %v1090
      %1092 = vmatmul.f32.gmra.mxu0 %v902
      %v1093 = vpop.f32.mrf.mxu0
      %v1094 = vadd.f32 0.0, %v1093
      %1095 = vmatmul.f32.gmra.mxu0 %v903
      %v1096 = vpop.f32.mrf.mxu0
      %v1097 = vadd.f32 0.0, %v1096
      %1098 = vmatmul.f32.gmra.mxu0 %v904
      %v1099 = vpop.f32.mrf.mxu0
      %v1100 = vadd.f32 0.0, %v1099
      %1101 = vmatmul.f32.gmra.mxu0 %v905
      %v1102 = vpop.f32.mrf.mxu0
      %v1103 = vadd.f32 0.0, %v1102
      %1104 = vmatmul.f32.gmra.mxu0 %v906
      %v1105 = vpop.f32.mrf.mxu0
      %v1106 = vadd.f32 0.0, %v1105
      %1107 = vmatmul.f32.gmra.mxu0 %v907
      %v1108 = vpop.f32.mrf.mxu0
      %v1109 = vadd.f32 0.0, %v1108
      %1110 = vmatmul.f32.gmra.mxu0 %v908
      %v1111 = vpop.f32.mrf.mxu0
      %v1112 = vadd.f32 0.0, %v1111
      %1113 = vmatmul.f32.gmra.mxu0 %v909
      %v1114 = vpop.f32.mrf.mxu0
      %v1115 = vadd.f32 0.0, %v1114
      %1116 = vmatmul.f32.gmra.mxu0 %v910
      %v1117 = vpop.f32.mrf.mxu0
      %v1118 = vadd.f32 0.0, %v1117
      %1119 = vmatmul.f32.gmra.mxu0 %v911
      %v1120 = vpop.f32.mrf.mxu0
      %v1121 = vadd.f32 0.0, %v1120
      %1122 = vmatmul.f32.gmra.mxu0 %v912
      %v1123 = vpop.f32.mrf.mxu0
      %v1124 = vadd.f32 0.0, %v1123
      %1125 = vmatmul.f32.gmra.mxu0 %v913
      %v1126 = vpop.f32.mrf.mxu0
      %v1127 = vadd.f32 0.0, %v1126
      %1128 = vmatmul.f32.gmra.mxu0 %v914
      %v1129 = vpop.f32.mrf.mxu0
      %v1130 = vadd.f32 0.0, %v1129
      %1131 = vmatmul.f32.gmra.mxu0 %v915
      %v1132 = vpop.f32.mrf.mxu0
      %v1133 = vadd.f32 0.0, %v1132
      %1134 = vmatmul.f32.gmra.mxu0 %v916
      %v1135 = vpop.f32.mrf.mxu0
      %v1136 = vadd.f32 0.0, %v1135
      %1137 = vmatmul.f32.gmra.mxu0 %v917
      %v1138 = vpop.f32.mrf.mxu0
      %v1139 = vadd.f32 0.0, %v1138
      %1140 = vmatmul.f32.gmra.mxu0 %v918
      %v1141 = vpop.f32.mrf.mxu0
      %v1142 = vadd.f32 0.0, %v1141
      %1143 = vmatmul.f32.gmra.mxu0 %v919
      %v1144 = vpop.f32.mrf.mxu0
      %v1145 = vadd.f32 0.0, %v1144
      %1146 = vmatmul.f32.gmra.mxu0 %v920
      %v1147 = vpop.f32.mrf.mxu0
      %v1148 = vadd.f32 0.0, %v1147
      %1149 = vmatmul.f32.gmra.mxu0 %v921
      %v1150 = vpop.f32.mrf.mxu0
      %v1151 = vadd.f32 0.0, %v1150
      %1152 = vmatmul.f32.gmra.mxu0 %v922
      %v1153 = vpop.f32.mrf.mxu0
      %v1154 = vadd.f32 0.0, %v1153
      %1155 = vmatmul.f32.gmra.mxu0 %v923
      %v1156 = vpop.f32.mrf.mxu0
      %v1157 = vadd.f32 0.0, %v1156
      %1158 = vmatmul.f32.gmra.mxu0 %v924
      %v1159 = vpop.f32.mrf.mxu0
      %v1160 = vadd.f32 0.0, %v1159
      %1161 = vmatmul.f32.gmra.mxu0 %v925
      %v1162 = vpop.f32.mrf.mxu0
      %v1163 = vadd.f32 0.0, %v1162
      %1164 = vmatmul.f32.gmra.mxu0 %v926
      %v1165 = vpop.f32.mrf.mxu0
      %v1166 = vadd.f32 0.0, %v1165
      %1167 = vmatmul.f32.gmra.mxu0 %v927
      %v1168 = vpop.f32.mrf.mxu0
      %v1169 = vadd.f32 0.0, %v1168
      %1170 = vmatmul.f32.gmra.mxu0 %v928
      %v1171 = vpop.f32.mrf.mxu0
      %v1172 = vadd.f32 0.0, %v1171
      %1173 = vmatmul.f32.gmra.mxu0 %v929
      %v1174 = vpop.f32.mrf.mxu0
      %v1175 = vadd.f32 0.0, %v1174
      %1176 = vmatmul.f32.gmra.mxu0 %v930
      %v1177 = vpop.f32.mrf.mxu0
      %v1178 = vadd.f32 0.0, %v1177
      %1179 = vmatmul.f32.gmra.mxu0 %v931
      %v1180 = vpop.f32.mrf.mxu0
      %v1181 = vadd.f32 0.0, %v1180
      %1182 = vmatmul.f32.gmra.mxu0 %v932
      %v1183 = vpop.f32.mrf.mxu0
      %v1184 = vadd.f32 0.0, %v1183
      %1185 = vmatmul.f32.gmra.mxu0 %v933
      %v1186 = vpop.f32.mrf.mxu0
      %v1187 = vadd.f32 0.0, %v1186
      %1188 = vmatmul.f32.gmra.mxu0 %v934
      %v1189 = vpop.f32.mrf.mxu0
      %v1190 = vadd.f32 0.0, %v1189
      %1191 = vmatmul.f32.gmra.mxu0 %v935
      %v1192 = vpop.f32.mrf.mxu0
      %v1193 = vadd.f32 0.0, %v1192
      %1194 = vmatmul.f32.gmra.mxu0 %v936
      %v1195 = vpop.f32.mrf.mxu0
      %v1196 = vadd.f32 0.0, %v1195
      %1197 = vmatmul.f32.gmra.mxu0 %v937
      %v1198 = vpop.f32.mrf.mxu0
      %v1199 = vadd.f32 0.0, %v1198
      %1200 = vmatmul.f32.gmra.mxu0 %v938
      %v1201 = vpop.f32.mrf.mxu0
      %v1202 = vadd.f32 0.0, %v1201
      %1203 = vmatmul.f32.gmra.mxu0 %v939
      %v1204 = vpop.f32.mrf.mxu0
      %v1205 = vadd.f32 0.0, %v1204
      %1206 = vmatmul.f32.gmra.mxu0 %v940
      %v1207 = vpop.f32.mrf.mxu0
      %v1208 = vadd.f32 0.0, %v1207
      %1209 = vmatmul.f32.gmra.mxu0 %v941
      %v1210 = vpop.f32.mrf.mxu0
      %v1211 = vadd.f32 0.0, %v1210
      %1212 = vmatmul.f32.gmra.mxu0 %v942
      %v1213 = vpop.f32.mrf.mxu0
      %v1214 = vadd.f32 0.0, %v1213
      %1215 = vmatmul.f32.gmra.mxu0 %v943
      %v1216 = vpop.f32.mrf.mxu0
      %v1217 = vadd.f32 0.0, %v1216
      %1218 = vmatmul.f32.gmra.mxu0 %v944
      %v1219 = vpop.f32.mrf.mxu0
      %v1220 = vadd.f32 0.0, %v1219
      %1221 = vmatmul.f32.gmra.mxu0 %v945
      %v1222 = vpop.f32.mrf.mxu0
      %v1223 = vadd.f32 0.0, %v1222
      %1224 = vmatmul.f32.gmra.mxu0 %v946
      %v1225 = vpop.f32.mrf.mxu0
      %v1226 = vadd.f32 0.0, %v1225
      %1227 = vmatmul.f32.gmra.mxu0 %v947
      %v1228 = vpop.f32.mrf.mxu0
      %v1229 = vadd.f32 0.0, %v1228
      %1230 = vmatmul.f32.gmra.mxu0 %v948
      %v1231 = vpop.f32.mrf.mxu0
      %v1232 = vadd.f32 0.0, %v1231
      %1233 = vmatmul.f32.gmra.mxu0 %v949
      %v1234 = vpop.f32.mrf.mxu0
      %v1235 = vadd.f32 0.0, %v1234
      %1236 = vmatmul.f32.gmra.mxu0 %v950
      %v1237 = vpop.f32.mrf.mxu0
      %v1238 = vadd.f32 0.0, %v1237
      %1239 = vmatmul.f32.gmra.mxu0 %v951
      %v1240 = vpop.f32.mrf.mxu0
      %v1241 = vadd.f32 0.0, %v1240
      %1242 = vmatmul.f32.gmra.mxu0 %v952
      %v1243 = vpop.f32.mrf.mxu0
      %v1244 = vadd.f32 0.0, %v1243
      %1245 = vmatmul.f32.gmra.mxu0 %v953
      %v1246 = vpop.f32.mrf.mxu0
      %v1247 = vadd.f32 0.0, %v1246
      %1248 = vmatmul.f32.gmra.mxu0 %v954
      %v1249 = vpop.f32.mrf.mxu0
      %v1250 = vadd.f32 0.0, %v1249
      %1251 = vmatmul.f32.gmra.mxu0 %v955
      %v1252 = vpop.f32.mrf.mxu0
      %v1253 = vadd.f32 0.0, %v1252
      %1254 = vmatmul.f32.gmra.mxu0 %v956
      %v1255 = vpop.f32.mrf.mxu0
      %v1256 = vadd.f32 0.0, %v1255
      %1257 = vmatmul.f32.gmra.mxu0 %v957
      %v1258 = vpop.f32.mrf.mxu0
      %v1259 = vadd.f32 0.0, %v1258
      %1260 = vmatmul.f32.gmra.mxu0 %v958
      %v1261 = vpop.f32.mrf.mxu0
      %v1262 = vadd.f32 0.0, %v1261
      %1263 = vmatmul.f32.gmra.mxu0 %v959
      %v1264 = vpop.f32.mrf.mxu0
      %v1265 = vadd.f32 0.0, %v1264
      %1266 = vmatmul.f32.gmra.mxu0 %v960
      %v1267 = vpop.f32.mrf.mxu0
      %v1268 = vadd.f32 0.0, %v1267
      %1269 = vmatmul.f32.gmra.mxu0 %v961
      %v1270 = vpop.f32.mrf.mxu0
      %v1271 = vadd.f32 0.0, %v1270
      %1272 = vmatmul.f32.gmra.mxu0 %v962
      %v1273 = vpop.f32.mrf.mxu0
      %v1274 = vadd.f32 0.0, %v1273
      %1275 = vmatmul.f32.gmra.mxu0 %v963
      %v1276 = vpop.f32.mrf.mxu0
      %v1277 = vadd.f32 0.0, %v1276
      %1278 = vmatmul.f32.gmra.mxu0 %v964
      %v1279 = vpop.f32.mrf.mxu0
      %v1280 = vadd.f32 0.0, %v1279
      %1281 = vmatmul.f32.gmra.mxu0 %v965
      %v1282 = vpop.f32.mrf.mxu0
      %v1283 = vadd.f32 0.0, %v1282
      %1284 = vmatmul.f32.gmra.mxu0 %v966
      %v1285 = vpop.f32.mrf.mxu0
      %v1286 = vadd.f32 0.0, %v1285
      %1287 = vmatmul.f32.gmra.mxu0 %v967
      %v1288 = vpop.f32.mrf.mxu0
      %v1289 = vadd.f32 0.0, %v1288
      %1290 = vmatmul.f32.gmra.mxu0 %v968
      %v1291 = vpop.f32.mrf.mxu0
      %v1292 = vadd.f32 0.0, %v1291
      %1293 = vmatmul.f32.gmra.mxu0 %v969
      %v1294 = vpop.f32.mrf.mxu0
      %v1295 = vadd.f32 0.0, %v1294
      %1296 = vmatmul.f32.gmra.mxu0 %v970
      %v1297 = vpop.f32.mrf.mxu0
      %v1298 = vadd.f32 0.0, %v1297
      %1299 = vmatmul.f32.gmra.mxu0 %v971
      %v1300 = vpop.f32.mrf.mxu0
      %v1301 = vadd.f32 0.0, %v1300
      %1302 = vmatmul.f32.gmra.mxu0 %v972
      %v1303 = vpop.f32.mrf.mxu0
      %v1304 = vadd.f32 0.0, %v1303
      %1305 = vmatmul.f32.gmra.mxu0 %v973
      %v1306 = vpop.f32.mrf.mxu0
      %v1307 = vadd.f32 0.0, %v1306
      %1308 = vmatmul.f32.gmra.mxu0 %v974
      %v1309 = vpop.f32.mrf.mxu0
      %v1310 = vadd.f32 0.0, %v1309
      %1311 = vmatmul.f32.gmra.mxu0 %v975
      %v1312 = vpop.f32.mrf.mxu0
      %v1313 = vadd.f32 0.0, %v1312
      %1314 = vmatmul.f32.gmra.mxu0 %v976
      %v1315 = vpop.f32.mrf.mxu0
      %v1316 = vadd.f32 0.0, %v1315
      %1317 = vmatmul.f32.gmra.mxu0 %v977
      %v1318 = vpop.f32.mrf.mxu0
      %v1319 = vadd.f32 0.0, %v1318
      %1320 = vmatmul.f32.gmra.mxu0 %v978
      %v1321 = vpop.f32.mrf.mxu0
      %v1322 = vadd.f32 0.0, %v1321
      %1323 = vmatmul.f32.gmra.mxu0 %v979
      %v1324 = vpop.f32.mrf.mxu0
      %v1325 = vadd.f32 0.0, %v1324
      %1326 = vmatmul.f32.gmra.mxu0 %v980
      %v1327 = vpop.f32.mrf.mxu0
      %v1328 = vadd.f32 0.0, %v1327
      %1329 = vmatmul.f32.gmra.mxu0 %v981
      %v1330 = vpop.f32.mrf.mxu0
      %v1331 = vadd.f32 0.0, %v1330
      %1332 = vmatmul.f32.gmra.mxu0 %v982
      %v1333 = vpop.f32.mrf.mxu0
      %v1334 = vadd.f32 0.0, %v1333
      %1335 = vmatmul.f32.gmra.mxu0 %v983
      %v1336 = vpop.f32.mrf.mxu0
      %v1337 = vadd.f32 0.0, %v1336
      %1338 = vmatmul.f32.gmra.mxu0 %v984
      %v1339 = vpop.f32.mrf.mxu0
      %v1340 = vadd.f32 0.0, %v1339
      %1341 = vmatmul.f32.gmra.mxu0 %v985
      %v1342 = vpop.f32.mrf.mxu0
      %v1343 = vadd.f32 0.0, %v1342
      %1344 = vmatmul.f32.gmra.mxu0 %v986
      %v1345 = vpop.f32.mrf.mxu0
      %v1346 = vadd.f32 0.0, %v1345
      %1347 = vmatmul.f32.gmra.mxu0 %v987
      %v1348 = vpop.f32.mrf.mxu0
      %v1349 = vadd.f32 0.0, %v1348
      %1350 = vmatmul.f32.gmra.mxu0 %v988
      %v1351 = vpop.f32.mrf.mxu0
      %v1352 = vadd.f32 0.0, %v1351
      %1353 = vmatmul.f32.gmra.mxu0 %v989
      %v1354 = vpop.f32.mrf.mxu0
      %v1355 = vadd.f32 0.0, %v1354
      %1356 = vmatmul.f32.gmra.mxu0 %v990
      %v1357 = vpop.f32.mrf.mxu0
      %v1358 = vadd.f32 0.0, %v1357
      %1359 = vmatmul.f32.gmra.mxu0 %v991
      %v1360 = vpop.f32.mrf.mxu0
      %v1361 = vadd.f32 0.0, %v1360
      %1362 = vmatmul.f32.gmra.mxu0 %v992
      %v1363 = vpop.f32.mrf.mxu0
      %v1364 = vadd.f32 0.0, %v1363
      %1365 = vmatmul.f32.gmra.mxu0 %v993
      %v1366 = vpop.f32.mrf.mxu0
      %v1367 = vadd.f32 0.0, %v1366
      %1368 = vmatmul.f32.gmra.mxu0 %v994
      %v1369 = vpop.f32.mrf.mxu0
      %v1370 = vadd.f32 0.0, %v1369
      %1371 = vmatmul.f32.gmra.mxu0 %v995
      %v1372 = vpop.f32.mrf.mxu0
      %v1373 = vadd.f32 0.0, %v1372
      %1374 = vmatmul.f32.gmra.mxu0 %v996
      %v1375 = vpop.f32.mrf.mxu0
      %v1376 = vadd.f32 0.0, %v1375
      %1377 = vmatmul.f32.gmra.mxu0 %v997
      %v1378 = vpop.f32.mrf.mxu0
      %v1379 = vadd.f32 0.0, %v1378
      %1380 = vmatmul.f32.gmra.mxu0 %v998
      %v1381 = vpop.f32.mrf.mxu0
      %v1382 = vadd.f32 0.0, %v1381
      %1383 = vmatmul.f32.gmra.mxu0 %v999
      %v1384 = vpop.f32.mrf.mxu0
      %v1385 = vadd.f32 0.0, %v1384
      %1386 = vmatmul.f32.gmra.mxu0 %v1000
      %v1387 = vpop.f32.mrf.mxu0
      %v1388 = vadd.f32 0.0, %v1387
      %1389 = vmatmul.f32.gmra.mxu0 %v1001
      %v1390 = vpop.f32.mrf.mxu0
      %v1391 = vadd.f32 0.0, %v1390
      %1392 = vmatmul.f32.gmra.mxu0 %v1002
      %v1393 = vpop.f32.mrf.mxu0
      %v1394 = vadd.f32 0.0, %v1393
      %1395 = vmatmul.f32.gmra.mxu0 %v1003
      %v1396 = vpop.f32.mrf.mxu0
      %v1397 = vadd.f32 0.0, %v1396
      %1398 = vmatmul.f32.gmra.mxu0 %v1004
      %v1399 = vpop.f32.mrf.mxu0
      %v1400 = vadd.f32 0.0, %v1399
      %1401 = vmatmul.f32.gmra.mxu0 %v1005
      %v1402 = vpop.f32.mrf.mxu0
      %v1403 = vadd.f32 0.0, %v1402
      %1404 = vmatmul.f32.gmra.mxu0 %v1006
      %v1405 = vpop.f32.mrf.mxu0
      %v1406 = vadd.f32 0.0, %v1405
      %1407 = vmatmul.f32.gmra.mxu0 %v1007
      %v1408 = vpop.f32.mrf.mxu0
      %v1409 = vadd.f32 0.0, %v1408
      %1410 = vmatmul.f32.gmra.mxu0 %v1008
      %v1411 = vpop.f32.mrf.mxu0
      %v1412 = vadd.f32 0.0, %v1411
      %1413 = vmatmul.f32.gmra.mxu0 %v1009
      %v1414 = vpop.f32.mrf.mxu0
      %v1415 = vadd.f32 0.0, %v1414
      %1416 = vmatmul.f32.gmra.mxu0 %v1010
      %v1417 = vpop.f32.mrf.mxu0
      %v1418 = vadd.f32 0.0, %v1417
      %1419 = vmatmul.f32.gmra.mxu0 %v1011
      %v1420 = vpop.f32.mrf.mxu0
      %v1421 = vadd.f32 0.0, %v1420
      %1422 = vmatmul.f32.gmra.mxu0 %v1012
      %v1423 = vpop.f32.mrf.mxu0
      %v1424 = vadd.f32 0.0, %v1423
      %1425 = vmatmul.f32.gmra.mxu0 %v1013
      %v1426 = vpop.f32.mrf.mxu0
      %v1427 = vadd.f32 0.0, %v1426
      %1428 = vmatmul.f32.gmra.mxu0 %v1014
      %v1429 = vpop.f32.mrf.mxu0
      %v1430 = vadd.f32 0.0, %v1429
      %1431 = vdwg.mxu0
      %1432 = vst [vmem:[%s233] sm:$0xff] %v1049
      %1433 = vst [vmem:[%s233 + $0x8] sm:$0xff] %v1052
      %1434 = vst [vmem:[%s233 + $0x10] sm:$0xff] %v1055
      %1435 = vst [vmem:[%s233 + $0x18] sm:$0xff] %v1058
      %1436 = vst [vmem:[%s233 + $0x20] sm:$0xff] %v1061
      %1437 = vst [vmem:[%s233 + $0x28] sm:$0xff] %v1064
      %1438 = vst [vmem:[%s233 + $0x30] sm:$0xff] %v1067
      %1439 = vst [vmem:[%s233 + $0x38] sm:$0xff] %v1070
      %1440 = vst [vmem:[%s233 + $0x40] sm:$0xff] %v1073
      %1441 = vst [vmem:[%s233 + $0x48] sm:$0xff] %v1076
      %1442 = vst [vmem:[%s233 + $0x50] sm:$0xff] %v1079
      %1443 = vst [vmem:[%s233 + $0x58] sm:$0xff] %v1082
      %1444 = vst [vmem:[%s233 + $0x60] sm:$0xff] %v1085
      %1445 = vst [vmem:[%s233 + $0x68] sm:$0xff] %v1088
      %1446 = vst [vmem:[%s233 + $0x70] sm:$0xff] %v1091
      %1447 = vst [vmem:[%s233 + $0x78] sm:$0xff] %v1094
      %1448 = vst [vmem:[%s233 + $0x80] sm:$0xff] %v1097
      %1449 = vst [vmem:[%s233 + $0x88] sm:$0xff] %v1100
      %1450 = vst [vmem:[%s233 + $0x90] sm:$0xff] %v1103
      %1451 = vst [vmem:[%s233 + $0x98] sm:$0xff] %v1106
      %1452 = vst [vmem:[%s233 + $0xa0] sm:$0xff] %v1109
      %1453 = vst [vmem:[%s233 + $0xa8] sm:$0xff] %v1112
      %1454 = vst [vmem:[%s233 + $0xb0] sm:$0xff] %v1115
      %1455 = vst [vmem:[%s233 + $0xb8] sm:$0xff] %v1118
      %1456 = vst [vmem:[%s233 + $0xc0] sm:$0xff] %v1121
      %1457 = vst [vmem:[%s233 + $0xc8] sm:$0xff] %v1124
      %1458 = vst [vmem:[%s233 + $0xd0] sm:$0xff] %v1127
      %1459 = vst [vmem:[%s233 + $0xd8] sm:$0xff] %v1130
      %1460 = vst [vmem:[%s233 + $0xe0] sm:$0xff] %v1133
      %1461 = vst [vmem:[%s233 + $0xe8] sm:$0xff] %v1136
      %1462 = vst [vmem:[%s233 + $0xf0] sm:$0xff] %v1139
      %1463 = vst [vmem:[%s233 + $0xf8] sm:$0xff] %v1142
      %1464 = vst [vmem:[%s233 + $0x100] sm:$0xff] %v1145
      %1465 = vst [vmem:[%s233 + $0x108] sm:$0xff] %v1148
      %1466 = vst [vmem:[%s233 + $0x110] sm:$0xff] %v1151
      %1467 = vst [vmem:[%s233 + $0x118] sm:$0xff] %v1154
      %1468 = vst [vmem:[%s233 + $0x120] sm:$0xff] %v1157
      %1469 = vst [vmem:[%s233 + $0x128] sm:$0xff] %v1160
      %1470 = vst [vmem:[%s233 + $0x130] sm:$0xff] %v1163
      %1471 = vst [vmem:[%s233 + $0x138] sm:$0xff] %v1166
      %1472 = vst [vmem:[%s233 + $0x140] sm:$0xff] %v1169
      %1473 = vst [vmem:[%s233 + $0x148] sm:$0xff] %v1172
      %1474 = vst [vmem:[%s233 + $0x150] sm:$0xff] %v1175
      %1475 = vst [vmem:[%s233 + $0x158] sm:$0xff] %v1178
      %1476 = vst [vmem:[%s233 + $0x160] sm:$0xff] %v1181
      %1477 = vst [vmem:[%s233 + $0x168] sm:$0xff] %v1184
      %1478 = vst [vmem:[%s233 + $0x170] sm:$0xff] %v1187
      %1479 = vst [vmem:[%s233 + $0x178] sm:$0xff] %v1190
      %1480 = vst [vmem:[%s233 + $0x180] sm:$0xff] %v1193
      %1481 = vst [vmem:[%s233 + $0x188] sm:$0xff] %v1196
      %1482 = vst [vmem:[%s233 + $0x190] sm:$0xff] %v1199
      %1483 = vst [vmem:[%s233 + $0x198] sm:$0xff] %v1202
      %1484 = vst [vmem:[%s233 + $0x1a0] sm:$0xff] %v1205
      %1485 = vst [vmem:[%s233 + $0x1a8] sm:$0xff] %v1208
      %1486 = vst [vmem:[%s233 + $0x1b0] sm:$0xff] %v1211
      %1487 = vst [vmem:[%s233 + $0x1b8] sm:$0xff] %v1214
      %1488 = vst [vmem:[%s233 + $0x1c0] sm:$0xff] %v1217
      %1489 = vst [vmem:[%s233 + $0x1c8] sm:$0xff] %v1220
      %1490 = vst [vmem:[%s233 + $0x1d0] sm:$0xff] %v1223
      %1491 = vst [vmem:[%s233 + $0x1d8] sm:$0xff] %v1226
      %1492 = vst [vmem:[%s233 + $0x1e0] sm:$0xff] %v1229
      %1493 = vst [vmem:[%s233 + $0x1e8] sm:$0xff] %v1232
      %1494 = vst [vmem:[%s233 + $0x1f0] sm:$0xff] %v1235
      %1495 = vst [vmem:[%s233 + $0x1f8] sm:$0xff] %v1238
      %1496 = vst [vmem:[%s233 + $0x200] sm:$0xff] %v1241
      %1497 = vst [vmem:[%s233 + $0x208] sm:$0xff] %v1244
      %1498 = vst [vmem:[%s233 + $0x210] sm:$0xff] %v1247
      %1499 = vst [vmem:[%s233 + $0x218] sm:$0xff] %v1250
      %1500 = vst [vmem:[%s233 + $0x220] sm:$0xff] %v1253
      %1501 = vst [vmem:[%s233 + $0x228] sm:$0xff] %v1256
      %1502 = vst [vmem:[%s233 + $0x230] sm:$0xff] %v1259
      %1503 = vst [vmem:[%s233 + $0x238] sm:$0xff] %v1262
      %1504 = vst [vmem:[%s233 + $0x240] sm:$0xff] %v1265
      %1505 = vst [vmem:[%s233 + $0x248] sm:$0xff] %v1268
      %1506 = vst [vmem:[%s233 + $0x250] sm:$0xff] %v1271
      %1507 = vst [vmem:[%s233 + $0x258] sm:$0xff] %v1274
      %1508 = vst [vmem:[%s233 + $0x260] sm:$0xff] %v1277
      %1509 = vst [vmem:[%s233 + $0x268] sm:$0xff] %v1280
      %1510 = vst [vmem:[%s233 + $0x270] sm:$0xff] %v1283
      %1511 = vst [vmem:[%s233 + $0x278] sm:$0xff] %v1286
      %1512 = vst [vmem:[%s233 + $0x280] sm:$0xff] %v1289
      %1513 = vst [vmem:[%s233 + $0x288] sm:$0xff] %v1292
      %1514 = vst [vmem:[%s233 + $0x290] sm:$0xff] %v1295
      %1515 = vst [vmem:[%s233 + $0x298] sm:$0xff] %v1298
      %1516 = vst [vmem:[%s233 + $0x2a0] sm:$0xff] %v1301
      %1517 = vst [vmem:[%s233 + $0x2a8] sm:$0xff] %v1304
      %1518 = vst [vmem:[%s233 + $0x2b0] sm:$0xff] %v1307
      %1519 = vst [vmem:[%s233 + $0x2b8] sm:$0xff] %v1310
      %1520 = vst [vmem:[%s233 + $0x2c0] sm:$0xff] %v1313
      %1521 = vst [vmem:[%s233 + $0x2c8] sm:$0xff] %v1316
      %1522 = vst [vmem:[%s233 + $0x2d0] sm:$0xff] %v1319
      %1523 = vst [vmem:[%s233 + $0x2d8] sm:$0xff] %v1322
      %1524 = vst [vmem:[%s233 + $0x2e0] sm:$0xff] %v1325
      %1525 = vst [vmem:[%s233 + $0x2e8] sm:$0xff] %v1328
      %1526 = vst [vmem:[%s233 + $0x2f0] sm:$0xff] %v1331
      %1527 = vst [vmem:[%s233 + $0x2f8] sm:$0xff] %v1334
      %1528 = vst [vmem:[%s233 + $0x300] sm:$0xff] %v1337
      %1529 = vst [vmem:[%s233 + $0x308] sm:$0xff] %v1340
      %1530 = vst [vmem:[%s233 + $0x310] sm:$0xff] %v1343
      %1531 = vst [vmem:[%s233 + $0x318] sm:$0xff] %v1346
      %1532 = vst [vmem:[%s233 + $0x320] sm:$0xff] %v1349
      %1533 = vst [vmem:[%s233 + $0x328] sm:$0xff] %v1352
      %1534 = vst [vmem:[%s233 + $0x330] sm:$0xff] %v1355
      %1535 = vst [vmem:[%s233 + $0x338] sm:$0xff] %v1358
      %1536 = vst [vmem:[%s233 + $0x340] sm:$0xff] %v1361
      %1537 = vst [vmem:[%s233 + $0x348] sm:$0xff] %v1364
      %1538 = vst [vmem:[%s233 + $0x350] sm:$0xff] %v1367
      %1539 = vst [vmem:[%s233 + $0x358] sm:$0xff] %v1370
      %1540 = vst [vmem:[%s233 + $0x360] sm:$0xff] %v1373
      %1541 = vst [vmem:[%s233 + $0x368] sm:$0xff] %v1376
      %1542 = vst [vmem:[%s233 + $0x370] sm:$0xff] %v1379
      %1543 = vst [vmem:[%s233 + $0x378] sm:$0xff] %v1382
      %1544 = vst [vmem:[%s233 + $0x380] sm:$0xff] %v1385
      %1545 = vst [vmem:[%s233 + $0x388] sm:$0xff] %v1388
      %1546 = vst [vmem:[%s233 + $0x390] sm:$0xff] %v1391
      %1547 = vst [vmem:[%s233 + $0x398] sm:$0xff] %v1394
      %1548 = vst [vmem:[%s233 + $0x3a0] sm:$0xff] %v1397
      %1549 = vst [vmem:[%s233 + $0x3a8] sm:$0xff] %v1400
      %1550 = vst [vmem:[%s233 + $0x3b0] sm:$0xff] %v1403
      %1551 = vst [vmem:[%s233 + $0x3b8] sm:$0xff] %v1406
      %1552 = vst [vmem:[%s233 + $0x3c0] sm:$0xff] %v1409
      %1553 = vst [vmem:[%s233 + $0x3c8] sm:$0xff] %v1412
      %1554 = vst [vmem:[%s233 + $0x3d0] sm:$0xff] %v1415
      %1555 = vst [vmem:[%s233 + $0x3d8] sm:$0xff] %v1418
      %1556 = vst [vmem:[%s233 + $0x3e0] sm:$0xff] %v1421
      %1557 = vst [vmem:[%s233 + $0x3e8] sm:$0xff] %v1424
      %1558 = vst [vmem:[%s233 + $0x3f0] sm:$0xff] %v1427
      %1559 = vst [vmem:[%s233 + $0x3f8] sm:$0xff] %v1430
      %v1560 = vlaneseq
      %v1561 = vshrl.u32 %v1560, 7
      %v1562 = vadd.f32 %v1049, %v1052
      %v1563 = vadd.f32 %v1562, %v1055
      %v1564 = vadd.f32 %v1563, %v1058
      %v1565 = vadd.f32 %v1564, %v1061
      %v1566 = vadd.f32 %v1565, %v1064
      %v1567 = vadd.f32 %v1566, %v1067
      %v1568 = vadd.f32 %v1567, %v1070
      %v1569 = vadd.f32 %v1568, %v1073
      %v1570 = vadd.f32 %v1569, %v1076
      %v1571 = vadd.f32 %v1570, %v1079
      %v1572 = vadd.f32 %v1571, %v1082
      %v1573 = vadd.f32 %v1572, %v1085
      %v1574 = vadd.f32 %v1573, %v1088
      %v1575 = vadd.f32 %v1574, %v1091
      %v1576 = vadd.f32 %v1575, %v1094
      %v1577 = vadd.f32 %v1576, %v1097
      %v1578 = vadd.f32 %v1577, %v1100
      %v1579 = vadd.f32 %v1578, %v1103
      %v1580 = vadd.f32 %v1579, %v1106
      %v1581 = vadd.f32 %v1580, %v1109
      %v1582 = vadd.f32 %v1581, %v1112
      %v1583 = vadd.f32 %v1582, %v1115
      %v1584 = vadd.f32 %v1583, %v1118
      %v1585 = vadd.f32 %v1584, %v1121
      %v1586 = vadd.f32 %v1585, %v1124
      %v1587 = vadd.f32 %v1586, %v1127
      %v1588 = vadd.f32 %v1587, %v1130
      %v1589 = vadd.f32 %v1588, %v1133
      %v1590 = vadd.f32 %v1589, %v1136
      %v1591 = vadd.f32 %v1590, %v1139
      %v1592 = vadd.f32 %v1591, %v1142
      %v1593 = vadd.f32 %v1592, %v1145
      %v1594 = vadd.f32 %v1593, %v1148
      %v1595 = vadd.f32 %v1594, %v1151
      %v1596 = vadd.f32 %v1595, %v1154
      %v1597 = vadd.f32 %v1596, %v1157
      %v1598 = vadd.f32 %v1597, %v1160
      %v1599 = vadd.f32 %v1598, %v1163
      %v1600 = vadd.f32 %v1599, %v1166
      %v1601 = vadd.f32 %v1600, %v1169
      %v1602 = vadd.f32 %v1601, %v1172
      %v1603 = vadd.f32 %v1602, %v1175
      %v1604 = vadd.f32 %v1603, %v1178
      %v1605 = vadd.f32 %v1604, %v1181
      %v1606 = vadd.f32 %v1605, %v1184
      %v1607 = vadd.f32 %v1606, %v1187
      %v1608 = vadd.f32 %v1607, %v1190
      %v1609 = vadd.f32 %v1608, %v1193
      %v1610 = vadd.f32 %v1609, %v1196
      %v1611 = vadd.f32 %v1610, %v1199
      %v1612 = vadd.f32 %v1611, %v1202
      %v1613 = vadd.f32 %v1612, %v1205
      %v1614 = vadd.f32 %v1613, %v1208
      %v1615 = vadd.f32 %v1614, %v1211
      %v1616 = vadd.f32 %v1615, %v1214
      %v1617 = vadd.f32 %v1616, %v1217
      %v1618 = vadd.f32 %v1617, %v1220
      %v1619 = vadd.f32 %v1618, %v1223
      %v1620 = vadd.f32 %v1619, %v1226
      %v1621 = vadd.f32 %v1620, %v1229
      %v1622 = vadd.f32 %v1621, %v1232
      %v1623 = vadd.f32 %v1622, %v1235
      %v1624 = vadd.f32 %v1623, %v1238
      %v1625 = vadd.f32 %v1624, %v1241
      %v1626 = vadd.f32 %v1625, %v1244
      %v1627 = vadd.f32 %v1626, %v1247
      %v1628 = vadd.f32 %v1627, %v1250
      %v1629 = vadd.f32 %v1628, %v1253
      %v1630 = vadd.f32 %v1629, %v1256
      %v1631 = vadd.f32 %v1630, %v1259
      %v1632 = vadd.f32 %v1631, %v1262
      %v1633 = vadd.f32 %v1632, %v1265
      %v1634 = vadd.f32 %v1633, %v1268
      %v1635 = vadd.f32 %v1634, %v1271
      %v1636 = vadd.f32 %v1635, %v1274
      %v1637 = vadd.f32 %v1636, %v1277
      %v1638 = vadd.f32 %v1637, %v1280
      %v1639 = vadd.f32 %v1638, %v1283
      %v1640 = vadd.f32 %v1639, %v1286
      %v1641 = vadd.f32 %v1640, %v1289
      %v1642 = vadd.f32 %v1641, %v1292
      %v1643 = vadd.f32 %v1642, %v1295
      %v1644 = vadd.f32 %v1643, %v1298
      %v1645 = vadd.f32 %v1644, %v1301
      %v1646 = vadd.f32 %v1645, %v1304
      %v1647 = vadd.f32 %v1646, %v1307
      %v1648 = vadd.f32 %v1647, %v1310
      %v1649 = vadd.f32 %v1648, %v1313
      %v1650 = vadd.f32 %v1649, %v1316
      %v1651 = vadd.f32 %v1650, %v1319
      %v1652 = vadd.f32 %v1651, %v1322
      %v1653 = vadd.f32 %v1652, %v1325
      %v1654 = vadd.f32 %v1653, %v1328
      %v1655 = vadd.f32 %v1654, %v1331
      %v1656 = vadd.f32 %v1655, %v1334
      %v1657 = vadd.f32 %v1656, %v1337
      %v1658 = vadd.f32 %v1657, %v1340
      %v1659 = vadd.f32 %v1658, %v1343
      %v1660 = vadd.f32 %v1659, %v1346
      %v1661 = vadd.f32 %v1660, %v1349
      %v1662 = vadd.f32 %v1661, %v1352
      %v1663 = vadd.f32 %v1662, %v1355
      %v1664 = vadd.f32 %v1663, %v1358
      %v1665 = vadd.f32 %v1664, %v1361
      %v1666 = vadd.f32 %v1665, %v1364
      %v1667 = vadd.f32 %v1666, %v1367
      %v1668 = vadd.f32 %v1667, %v1370
      %v1669 = vadd.f32 %v1668, %v1373
      %v1670 = vadd.f32 %v1669, %v1376
      %v1671 = vadd.f32 %v1670, %v1379
      %v1672 = vadd.f32 %v1671, %v1382
      %v1673 = vadd.f32 %v1672, %v1385
      %v1674 = vadd.f32 %v1673, %v1388
      %v1675 = vadd.f32 %v1674, %v1391
      %v1676 = vadd.f32 %v1675, %v1394
      %v1677 = vadd.f32 %v1676, %v1397
      %v1678 = vadd.f32 %v1677, %v1400
      %v1679 = vadd.f32 %v1678, %v1403
      %v1680 = vadd.f32 %v1679, %v1406
      %v1681 = vadd.f32 %v1680, %v1409
      %v1682 = vadd.f32 %v1681, %v1412
      %v1683 = vadd.f32 %v1682, %v1415
      %v1684 = vadd.f32 %v1683, %v1418
      %v1685 = vadd.f32 %v1684, %v1421
      %v1686 = vadd.f32 %v1685, %v1424
      %v1687 = vadd.f32 %v1686, %v1427
      %v1688 = vadd.f32 %v1687, %v1430
      %v1689 = vrot.slane %v1688, 4
      %v1690 = vadd.f32 %v1688, %v1689
      %v1691 = vrot.slane %v1690, 2
      %v1692 = vadd.f32 %v1690, %v1691
      %v1693 = vrot.slane %v1692, 1
      %v1694 = vadd.f32 %v1692, %v1693
      %v1695 = vmul.f32 %v1049, %v1049
      %v1696 = vmul.f32 %v1052, %v1052
      %v1697 = vmul.f32 %v1055, %v1055
      %v1698 = vmul.f32 %v1058, %v1058
      %v1699 = vmul.f32 %v1061, %v1061
      %v1700 = vmul.f32 %v1064, %v1064
      %v1701 = vmul.f32 %v1067, %v1067
      %v1702 = vmul.f32 %v1070, %v1070
      %v1703 = vmul.f32 %v1073, %v1073
      %v1704 = vmul.f32 %v1076, %v1076
      %v1705 = vmul.f32 %v1079, %v1079
      %v1706 = vmul.f32 %v1082, %v1082
      %v1707 = vmul.f32 %v1085, %v1085
      %v1708 = vmul.f32 %v1088, %v1088
      %v1709 = vmul.f32 %v1091, %v1091
      %v1710 = vmul.f32 %v1094, %v1094
      %v1711 = vmul.f32 %v1097, %v1097
      %v1712 = vmul.f32 %v1100, %v1100
      %v1713 = vmul.f32 %v1103, %v1103
      %v1714 = vmul.f32 %v1106, %v1106
      %v1715 = vmul.f32 %v1109, %v1109
      %v1716 = vmul.f32 %v1112, %v1112
      %v1717 = vmul.f32 %v1115, %v1115
      %v1718 = vmul.f32 %v1118, %v1118
      %v1719 = vmul.f32 %v1121, %v1121
      %v1720 = vmul.f32 %v1124, %v1124
      %v1721 = vmul.f32 %v1127, %v1127
      %v1722 = vmul.f32 %v1130, %v1130
      %v1723 = vmul.f32 %v1133, %v1133
      %v1724 = vmul.f32 %v1136, %v1136
      %v1725 = vmul.f32 %v1139, %v1139
      %v1726 = vmul.f32 %v1142, %v1142
      %v1727 = vmul.f32 %v1145, %v1145
      %v1728 = vmul.f32 %v1148, %v1148
      %v1729 = vmul.f32 %v1151, %v1151
      %v1730 = vmul.f32 %v1154, %v1154
      %v1731 = vmul.f32 %v1157, %v1157
      %v1732 = vmul.f32 %v1160, %v1160
      %v1733 = vmul.f32 %v1163, %v1163
      %v1734 = vmul.f32 %v1166, %v1166
      %v1735 = vmul.f32 %v1169, %v1169
      %v1736 = vmul.f32 %v1172, %v1172
      %v1737 = vmul.f32 %v1175, %v1175
      %v1738 = vmul.f32 %v1178, %v1178
      %v1739 = vmul.f32 %v1181, %v1181
      %v1740 = vmul.f32 %v1184, %v1184
      %v1741 = vmul.f32 %v1187, %v1187
      %v1742 = vmul.f32 %v1190, %v1190
      %v1743 = vmul.f32 %v1193, %v1193
      %v1744 = vmul.f32 %v1196, %v1196
      %v1745 = vmul.f32 %v1199, %v1199
      %v1746 = vmul.f32 %v1202, %v1202
      %v1747 = vmul.f32 %v1205, %v1205
      %v1748 = vmul.f32 %v1208, %v1208
      %v1749 = vmul.f32 %v1211, %v1211
      %v1750 = vmul.f32 %v1214, %v1214
      %v1751 = vmul.f32 %v1217, %v1217
      %v1752 = vmul.f32 %v1220, %v1220
      %v1753 = vmul.f32 %v1223, %v1223
      %v1754 = vmul.f32 %v1226, %v1226
      %v1755 = vmul.f32 %v1229, %v1229
      %v1756 = vmul.f32 %v1232, %v1232
      %v1757 = vmul.f32 %v1235, %v1235
      %v1758 = vmul.f32 %v1238, %v1238
      %v1759 = vmul.f32 %v1241, %v1241
      %v1760 = vmul.f32 %v1244, %v1244
      %v1761 = vmul.f32 %v1247, %v1247
      %v1762 = vmul.f32 %v1250, %v1250
      %v1763 = vmul.f32 %v1253, %v1253
      %v1764 = vmul.f32 %v1256, %v1256
      %v1765 = vmul.f32 %v1259, %v1259
      %v1766 = vmul.f32 %v1262, %v1262
      %v1767 = vmul.f32 %v1265, %v1265
      %v1768 = vmul.f32 %v1268, %v1268
      %v1769 = vmul.f32 %v1271, %v1271
      %v1770 = vmul.f32 %v1274, %v1274
      %v1771 = vmul.f32 %v1277, %v1277
      %v1772 = vmul.f32 %v1280, %v1280
      %v1773 = vmul.f32 %v1283, %v1283
      %v1774 = vmul.f32 %v1286, %v1286
      %v1775 = vmul.f32 %v1289, %v1289
      %v1776 = vmul.f32 %v1292, %v1292
      %v1777 = vmul.f32 %v1295, %v1295
      %v1778 = vmul.f32 %v1298, %v1298
      %v1779 = vmul.f32 %v1301, %v1301
      %v1780 = vmul.f32 %v1304, %v1304
      %v1781 = vmul.f32 %v1307, %v1307
      %v1782 = vmul.f32 %v1310, %v1310
      %v1783 = vmul.f32 %v1313, %v1313
      %v1784 = vmul.f32 %v1316, %v1316
      %v1785 = vmul.f32 %v1319, %v1319
      %v1786 = vmul.f32 %v1322, %v1322
      %v1787 = vmul.f32 %v1325, %v1325
      %v1788 = vmul.f32 %v1328, %v1328
      %v1789 = vmul.f32 %v1331, %v1331
      %v1790 = vmul.f32 %v1334, %v1334
      %v1791 = vmul.f32 %v1337, %v1337
      %v1792 = vmul.f32 %v1340, %v1340
      %v1793 = vmul.f32 %v1343, %v1343
      %v1794 = vmul.f32 %v1346, %v1346
      %v1795 = vmul.f32 %v1349, %v1349
      %v1796 = vmul.f32 %v1352, %v1352
      %v1797 = vmul.f32 %v1355, %v1355
      %v1798 = vmul.f32 %v1358, %v1358
      %v1799 = vmul.f32 %v1361, %v1361
      %v1800 = vmul.f32 %v1364, %v1364
      %v1801 = vmul.f32 %v1367, %v1367
      %v1802 = vmul.f32 %v1370, %v1370
      %v1803 = vmul.f32 %v1373, %v1373
      %v1804 = vmul.f32 %v1376, %v1376
      %v1805 = vmul.f32 %v1379, %v1379
      %v1806 = vmul.f32 %v1382, %v1382
      %v1807 = vmul.f32 %v1385, %v1385
      %v1808 = vmul.f32 %v1388, %v1388
      %v1809 = vmul.f32 %v1391, %v1391
      %v1810 = vmul.f32 %v1394, %v1394
      %v1811 = vmul.f32 %v1397, %v1397
      %v1812 = vmul.f32 %v1400, %v1400
      %v1813 = vmul.f32 %v1403, %v1403
      %v1814 = vmul.f32 %v1406, %v1406
      %v1815 = vmul.f32 %v1409, %v1409
      %v1816 = vmul.f32 %v1412, %v1412
      %v1817 = vmul.f32 %v1415, %v1415
      %v1818 = vmul.f32 %v1418, %v1418
      %v1819 = vmul.f32 %v1421, %v1421
      %v1820 = vmul.f32 %v1424, %v1424
      %v1821 = vmul.f32 %v1427, %v1427
      %v1822 = vmul.f32 %v1430, %v1430
      %v1823 = vadd.f32 %v1695, %v1696
      %v1824 = vadd.f32 %v1823, %v1697
      %v1825 = vadd.f32 %v1824, %v1698
      %v1826 = vadd.f32 %v1825, %v1699
      %v1827 = vadd.f32 %v1826, %v1700
      %v1828 = vadd.f32 %v1827, %v1701
      %v1829 = vadd.f32 %v1828, %v1702
      %v1830 = vadd.f32 %v1829, %v1703
      %v1831 = vadd.f32 %v1830, %v1704
      %v1832 = vadd.f32 %v1831, %v1705
      %v1833 = vadd.f32 %v1832, %v1706
      %v1834 = vadd.f32 %v1833, %v1707
      %v1835 = vadd.f32 %v1834, %v1708
      %v1836 = vadd.f32 %v1835, %v1709
      %v1837 = vadd.f32 %v1836, %v1710
      %v1838 = vadd.f32 %v1837, %v1711
      %v1839 = vadd.f32 %v1838, %v1712
      %v1840 = vadd.f32 %v1839, %v1713
      %v1841 = vadd.f32 %v1840, %v1714
      %v1842 = vadd.f32 %v1841, %v1715
      %v1843 = vadd.f32 %v1842, %v1716
      %v1844 = vadd.f32 %v1843, %v1717
      %v1845 = vadd.f32 %v1844, %v1718
      %v1846 = vadd.f32 %v1845, %v1719
      %v1847 = vadd.f32 %v1846, %v1720
      %v1848 = vadd.f32 %v1847, %v1721
      %v1849 = vadd.f32 %v1848, %v1722
      %v1850 = vadd.f32 %v1849, %v1723
      %v1851 = vadd.f32 %v1850, %v1724
      %v1852 = vadd.f32 %v1851, %v1725
      %v1853 = vadd.f32 %v1852, %v1726
      %v1854 = vadd.f32 %v1853, %v1727
      %v1855 = vadd.f32 %v1854, %v1728
      %v1856 = vadd.f32 %v1855, %v1729
      %v1857 = vadd.f32 %v1856, %v1730
      %v1858 = vadd.f32 %v1857, %v1731
      %v1859 = vadd.f32 %v1858, %v1732
      %v1860 = vadd.f32 %v1859, %v1733
      %v1861 = vadd.f32 %v1860, %v1734
      %v1862 = vadd.f32 %v1861, %v1735
      %v1863 = vadd.f32 %v1862, %v1736
      %v1864 = vadd.f32 %v1863, %v1737
      %v1865 = vadd.f32 %v1864, %v1738
      %v1866 = vadd.f32 %v1865, %v1739
      %v1867 = vadd.f32 %v1866, %v1740
      %v1868 = vadd.f32 %v1867, %v1741
      %v1869 = vadd.f32 %v1868, %v1742
      %v1870 = vadd.f32 %v1869, %v1743
      %v1871 = vadd.f32 %v1870, %v1744
      %v1872 = vadd.f32 %v1871, %v1745
      %v1873 = vadd.f32 %v1872, %v1746
      %v1874 = vadd.f32 %v1873, %v1747
      %v1875 = vadd.f32 %v1874, %v1748
      %v1876 = vadd.f32 %v1875, %v1749
      %v1877 = vadd.f32 %v1876, %v1750
      %v1878 = vadd.f32 %v1877, %v1751
      %v1879 = vadd.f32 %v1878, %v1752
      %v1880 = vadd.f32 %v1879, %v1753
      %v1881 = vadd.f32 %v1880, %v1754
      %v1882 = vadd.f32 %v1881, %v1755
      %v1883 = vadd.f32 %v1882, %v1756
      %v1884 = vadd.f32 %v1883, %v1757
      %v1885 = vadd.f32 %v1884, %v1758
      %v1886 = vadd.f32 %v1885, %v1759
      %v1887 = vadd.f32 %v1886, %v1760
      %v1888 = vadd.f32 %v1887, %v1761
      %v1889 = vadd.f32 %v1888, %v1762
      %v1890 = vadd.f32 %v1889, %v1763
      %v1891 = vadd.f32 %v1890, %v1764
      %v1892 = vadd.f32 %v1891, %v1765
      %v1893 = vadd.f32 %v1892, %v1766
      %v1894 = vadd.f32 %v1893, %v1767
      %v1895 = vadd.f32 %v1894, %v1768
      %v1896 = vadd.f32 %v1895, %v1769
      %v1897 = vadd.f32 %v1896, %v1770
      %v1898 = vadd.f32 %v1897, %v1771
      %v1899 = vadd.f32 %v1898, %v1772
      %v1900 = vadd.f32 %v1899, %v1773
      %v1901 = vadd.f32 %v1900, %v1774
      %v1902 = vadd.f32 %v1901, %v1775
      %v1903 = vadd.f32 %v1902, %v1776
      %v1904 = vadd.f32 %v1903, %v1777
      %v1905 = vadd.f32 %v1904, %v1778
      %v1906 = vadd.f32 %v1905, %v1779
      %v1907 = vadd.f32 %v1906, %v1780
      %v1908 = vadd.f32 %v1907, %v1781
      %v1909 = vadd.f32 %v1908, %v1782
      %v1910 = vadd.f32 %v1909, %v1783
      %v1911 = vadd.f32 %v1910, %v1784
      %v1912 = vadd.f32 %v1911, %v1785
      %v1913 = vadd.f32 %v1912, %v1786
      %v1914 = vadd.f32 %v1913, %v1787
      %v1915 = vadd.f32 %v1914, %v1788
      %v1916 = vadd.f32 %v1915, %v1789
      %v1917 = vadd.f32 %v1916, %v1790
      %v1918 = vadd.f32 %v1917, %v1791
      %v1919 = vadd.f32 %v1918, %v1792
      %v1920 = vadd.f32 %v1919, %v1793
      %v1921 = vadd.f32 %v1920, %v1794
      %v1922 = vadd.f32 %v1921, %v1795
      %v1923 = vadd.f32 %v1922, %v1796
      %v1924 = vadd.f32 %v1923, %v1797
      %v1925 = vadd.f32 %v1924, %v1798
      %v1926 = vadd.f32 %v1925, %v1799
      %v1927 = vadd.f32 %v1926, %v1800
      %v1928 = vadd.f32 %v1927, %v1801
      %v1929 = vadd.f32 %v1928, %v1802
      %v1930 = vadd.f32 %v1929, %v1803
      %v1931 = vadd.f32 %v1930, %v1804
      %v1932 = vadd.f32 %v1931, %v1805
      %v1933 = vadd.f32 %v1932, %v1806
      %v1934 = vadd.f32 %v1933, %v1807
      %v1935 = vadd.f32 %v1934, %v1808
      %v1936 = vadd.f32 %v1935, %v1809
      %v1937 = vadd.f32 %v1936, %v1810
      %v1938 = vadd.f32 %v1937, %v1811
      %v1939 = vadd.f32 %v1938, %v1812
      %v1940 = vadd.f32 %v1939, %v1813
      %v1941 = vadd.f32 %v1940, %v1814
      %v1942 = vadd.f32 %v1941, %v1815
      %v1943 = vadd.f32 %v1942, %v1816
      %v1944 = vadd.f32 %v1943, %v1817
      %v1945 = vadd.f32 %v1944, %v1818
      %v1946 = vadd.f32 %v1945, %v1819
      %v1947 = vadd.f32 %v1946, %v1820
      %v1948 = vadd.f32 %v1947, %v1821
      %v1949 = vadd.f32 %v1948, %v1822
      %v1950 = vrot.slane %v1949, 4
      %v1951 = vadd.f32 %v1949, %v1950
      %v1952 = vrot.slane %v1951, 2
      %v1953 = vadd.f32 %v1951, %v1952
      %v1954 = vrot.slane %v1953, 1
      %v1955 = vadd.f32 %v1953, %v1954
      %vm1956 = vcmp.eq.s32.totalorder %v1561, 0
      %vm1957 = vcmp.eq.s32.totalorder %v1561, 1
      %v1958 = vsel %vm1957, %v1955, 0.0
      %v1959 = vsel %vm1956, %v1694, %v1958
      %1960 = vst [vmem:[%s238] sm:$0xff] %v1959
      %s1961 = smul.u32 128, %s17
      %p1962 = scmp.lt.s32.totalorder %s1961, 255
      %s1963 = scalar_select %p1962, %s1961, 255
      %s1964 = smul.addr %s1963, 8
      %s1965 = scalar_lea.vmem %s4, %s1964
      %p1966 = scmp.lt.s32.totalorder %s17, 1
      %s1967 = scalar_select %p1966, %s17, 1
      %s1968 = smul.addr %s1967, 8
      %s1969 = scalar_lea.vmem %s5, %s1968
      // Predicated region
      $region37: #{decoder_forward_pallas.8} parent=35 // pred_check
        %p1970 = pneg %p124
      $region38: #{decoder_forward_pallas.8} parent=35 // pred_check_branch
        %1972 = sbr.rel (%p1970) target = $region40
      $region39: #{decoder_forward_pallas.8} parent=35 // pred_region
        %s1973 = smul.u32 128, %s17
      $region40: #{decoder_forward_pallas.8} parent=35 // pred_fallthru
        _
      // Predicated region
      $region41: #{decoder_forward_pallas.8} parent=35 // pred_check
        %p1974 = pneg %p150
      $region42: #{decoder_forward_pallas.8} parent=35 // pred_check_branch
        %1976 = sbr.rel (%p1974) target = $region44
      $region43: #{decoder_forward_pallas.8} parent=35 // pred_region
        _
      $region44: #{decoder_forward_pallas.8} parent=35 // pred_fallthru
        _
    $region36: #{decoder_forward_pallas.8} parent=5 // pred_fallthru
      _
    %p1977 = scmp.le.s32.totalorder 2, %s12
    // Predicated region
    $region45: #{decoder_forward_pallas.8} parent=5 // pred_check
      %p1978 = pneg %p1977
    $region46: #{decoder_forward_pallas.8} parent=5 // pred_check_branch
      %1980 = sbr.rel (%p1978) target = $region48
    $region47: #{decoder_forward_pallas.8} parent=5 // pred_region
      %s1981 = ssub.s32 %s12, 2
      // Predicated region
      $region49: #{decoder_forward_pallas.8} parent=47 // pred_check
        %p1982 = pneg %p130
      $region50: #{decoder_forward_pallas.8} parent=47 // pred_check_branch
        %1984 = sbr.rel (%p1982) target = $region52
      $region51: #{decoder_forward_pallas.8} parent=47 // pred_region
        %s1985 = smul.u32 128, %s18
        %p1986 = scmp.lt.s32.totalorder %s1985, 255
        %s1987 = scalar_select %p1986, %s1985, 255
        %s1988 = smul.addr %s1987, 8
        %s1989 = scalar_lea.vmem %s4, %s1988
      $region52: #{decoder_forward_pallas.8} parent=47 // pred_fallthru
        _
      // Predicated region
      $region53: #{decoder_forward_pallas.8} parent=47 // pred_check
        %p1990 = pneg %p156
      $region54: #{decoder_forward_pallas.8} parent=47 // pred_check_branch
        %1992 = sbr.rel (%p1990) target = $region56
      $region55: #{decoder_forward_pallas.8} parent=47 // pred_region
        %p1993 = scmp.lt.s32.totalorder %s18, 1
        %s1994 = scalar_select %p1993, %s18, 1
        %s1995 = smul.addr %s1994, 8
        %s1996 = scalar_lea.vmem %s5, %s1995
      $region56: #{decoder_forward_pallas.8} parent=47 // pred_fallthru
        _
    $region48: #{decoder_forward_pallas.8} parent=5 // pred_fallthru
      _
  $region6: #{decoder_forward_pallas.8} parent=0 // loop_footer
    %s16 = sadd.s32 1, %s12
  $region7: #{decoder_forward_pallas.8} parent=0 // loop_footer_branch
    %11 = sbr.rel target = $region3
  $region8: #{decoder_forward_pallas.8} parent=0 // loop_exit
    _

// kernel: decoder_forward_pallas.7
$region0: #{decoder_forward_pallas.7}
  #allocation0 [shape = 'u32[]', space=smem, size = 0x4, offset = 0x4, fixed_abs, tag = 'smem constant byte address 0x4 - core index']
  #allocation1 [shape = 'u32[72,128]{1,0:T(1,128)}', space=vmem, size = 0x9000, scoped, tag = 'internal scratch']
  %s0 = inlined_call_operand.vmem [shape: f32[2048,144], index: 0, kind: input, shape index: {}]
  %s1 = inlined_call_operand.vmem [shape: f32[1,144], index: 1, kind: input, shape index: {}]
  %s2 = inlined_call_operand.vmem [shape: f32[1,144], index: 2, kind: input, shape index: {}]
  %s3 = inlined_call_operand.vmem [shape: f32[144,128], index: 3, kind: input, shape index: {}]
  %s4 = inlined_call_operand.vmem [shape: f32[2048,128], index: 4, kind: output, shape index: {0}]
  %s5 = inlined_call_operand.vmem [shape: f32[16,128], index: 5, kind: output, shape index: {1}]
  %6 = xla_tuple %s4, %s5
  %s7 = sld [smem:[#allocation0]]
  $region57: #{decoder_forward_pallas.7} parent=0
    _
  %s9 = ssub.s32 1, %s7
  %s10 = scalar_select 0, %s9, %s7
  loop: start=0, step=1, limit=4
  $region2: #{decoder_forward_pallas.7} parent=0 // loop_pre_header
    _
  $region3: #{decoder_forward_pallas.7} parent=0 // loop_header
    %s12 = sphi 0, %s16
    %p13 = scmp.ge.s32.totalorder %s12, 4
    %s22 = sphi 0, %s24
    %s25 = sphi 0, %s22
    %s26 = sphi 0, %s25
    %s42 = sphi 0, %s26
    %s46 = sphi 0, %s46
    %s48 = sphi 0, %s46
    %s49 = sphi 0, %s48
    %s63 = sphi 0, %s49
    %s67 = sphi 0, %s67
    %s69 = sphi 0, %s67
    %s70 = sphi 0, %s69
    %s84 = sphi 0, %s70
    %s88 = sphi 0, %s88
    %s90 = sphi 0, %s88
    %s91 = sphi 0, %s90
    %s105 = sphi 0, %s91
    %s111 = sphi 0, %s113
    %s114 = sphi 0, %s111
    %s115 = sphi 0, %s114
    %s131 = sphi 0, %s115
    %s137 = sphi 0, %s139
    %s140 = sphi 0, %s137
    %s141 = sphi 0, %s140
    %s157 = sphi 0, %s141
  $region4: #{decoder_forward_pallas.7} parent=0 // loop_header_branch
    %15 = sbr.rel (%p13) target = $region8
  $region5: #{decoder_forward_pallas.7} parent=0 // loop_body
    %s17 = ssub.s32 %s12, 1
    %s18 = ssub.s32 %s12, 2
    %s19 = sadd.s32 %s12, 1
    %s20 = ssub.s32 %s12, %s19
    %p21 = scmp.eq.s32.totalorder %s20, 0
    %s23 = sadd.s32 %s22, 1
    %s24 = scalar_select %p21, %s22, %s23
    %p27 = pneg %p21
    %p28 = scmp.eq.s32.totalorder %s12, 1
    %p29 = por %p27, %p28
    %p30 = scmp.ne.s32.totalorder %s22, %s25
    %p31 = scmp.eq.s32.totalorder %s12, 0
    %p32 = por %p30, %p31
    %p33 = scmp.ne.s32.totalorder %s22, %s25
    %p34 = scmp.eq.s32.totalorder %s17, 1
    %p35 = por %p33, %p34
    %p36 = scmp.ne.s32.totalorder %s25, %s26
    %p37 = scmp.eq.s32.totalorder %s17, 0
    %p38 = por %p36, %p37
    %p39 = scmp.ne.s32.totalorder %s25, %s26
    %p40 = scmp.eq.s32.totalorder %s18, 1
    %p41 = por %p39, %p40
    %p43 = scmp.ne.s32.totalorder %s26, %s42
    %p44 = scmp.eq.s32.totalorder %s18, 0
    %p45 = por %p43, %p44
    %s47 = sadd.s32 %s46, 1
    %p50 = scmp.eq.s32.totalorder %s12, 1
    %p51 = scmp.ne.s32.totalorder %s46, %s48
    %p52 = scmp.eq.s32.totalorder %s12, 0
    %p53 = por %p51, %p52
    %p54 = scmp.ne.s32.totalorder %s46, %s48
    %p55 = scmp.eq.s32.totalorder %s17, 1
    %p56 = por %p54, %p55
    %p57 = scmp.ne.s32.totalorder %s48, %s49
    %p58 = scmp.eq.s32.totalorder %s17, 0
    %p59 = por %p57, %p58
    %p60 = scmp.ne.s32.totalorder %s48, %s49
    %p61 = scmp.eq.s32.totalorder %s18, 1
    %p62 = por %p60, %p61
    %p64 = scmp.ne.s32.totalorder %s49, %s63
    %p65 = scmp.eq.s32.totalorder %s18, 0
    %p66 = por %p64, %p65
    %s68 = sadd.s32 %s67, 1
    %p71 = scmp.eq.s32.totalorder %s12, 1
    %p72 = scmp.ne.s32.totalorder %s67, %s69
    %p73 = scmp.eq.s32.totalorder %s12, 0
    %p74 = por %p72, %p73
    %p75 = scmp.ne.s32.totalorder %s67, %s69
    %p76 = scmp.eq.s32.totalorder %s17, 1
    %p77 = por %p75, %p76
    %p78 = scmp.ne.s32.totalorder %s69, %s70
    %p79 = scmp.eq.s32.totalorder %s17, 0
    %p80 = por %p78, %p79
    %p81 = scmp.ne.s32.totalorder %s69, %s70
    %p82 = scmp.eq.s32.totalorder %s18, 1
    %p83 = por %p81, %p82
    %p85 = scmp.ne.s32.totalorder %s70, %s84
    %p86 = scmp.eq.s32.totalorder %s18, 0
    %p87 = por %p85, %p86
    %s89 = sadd.s32 %s88, 1
    %p92 = scmp.eq.s32.totalorder %s12, 1
    %p93 = scmp.ne.s32.totalorder %s88, %s90
    %p94 = scmp.eq.s32.totalorder %s12, 0
    %p95 = por %p93, %p94
    %p96 = scmp.ne.s32.totalorder %s88, %s90
    %p97 = scmp.eq.s32.totalorder %s17, 1
    %p98 = por %p96, %p97
    %p99 = scmp.ne.s32.totalorder %s90, %s91
    %p100 = scmp.eq.s32.totalorder %s17, 0
    %p101 = por %p99, %p100
    %p102 = scmp.ne.s32.totalorder %s90, %s91
    %p103 = scmp.eq.s32.totalorder %s18, 1
    %p104 = por %p102, %p103
    %p106 = scmp.ne.s32.totalorder %s91, %s105
    %p107 = scmp.eq.s32.totalorder %s18, 0
    %p108 = por %p106, %p107
    %s109 = ssub.s32 %s12, %s19
    %p110 = scmp.eq.s32.totalorder %s109, 0
    %s112 = sadd.s32 %s111, 1
    %s113 = scalar_select %p110, %s111, %s112
    %p116 = pneg %p110
    %p117 = scmp.eq.s32.totalorder %s12, 1
    %p118 = por %p116, %p117
    %p119 = scmp.ne.s32.totalorder %s111, %s114
    %p120 = scmp.eq.s32.totalorder %s12, 0
    %p121 = por %p119, %p120
    %p122 = scmp.ne.s32.totalorder %s111, %s114
    %p123 = scmp.eq.s32.totalorder %s17, 1
    %p124 = por %p122, %p123
    %p125 = scmp.ne.s32.totalorder %s114, %s115
    %p126 = scmp.eq.s32.totalorder %s17, 0
    %p127 = por %p125, %p126
    %p128 = scmp.ne.s32.totalorder %s114, %s115
    %p129 = scmp.eq.s32.totalorder %s18, 1
    %p130 = por %p128, %p129
    %p132 = scmp.ne.s32.totalorder %s115, %s131
    %p133 = scmp.eq.s32.totalorder %s18, 0
    %p134 = por %p132, %p133
    %s135 = ssub.s32 %s12, %s19
    %p136 = scmp.eq.s32.totalorder %s135, 0
    %s138 = sadd.s32 %s137, 1
    %s139 = scalar_select %p136, %s137, %s138
    %p142 = pneg %p136
    %p143 = scmp.eq.s32.totalorder %s12, 1
    %p144 = por %p142, %p143
    %p145 = scmp.ne.s32.totalorder %s137, %s140
    %p146 = scmp.eq.s32.totalorder %s12, 0
    %p147 = por %p145, %p146
    %p148 = scmp.ne.s32.totalorder %s137, %s140
    %p149 = scmp.eq.s32.totalorder %s17, 1
    %p150 = por %p148, %p149
    %p151 = scmp.ne.s32.totalorder %s140, %s141
    %p152 = scmp.eq.s32.totalorder %s17, 0
    %p153 = por %p151, %p152
    %p154 = scmp.ne.s32.totalorder %s140, %s141
    %p155 = scmp.eq.s32.totalorder %s18, 1
    %p156 = por %p154, %p155
    %p158 = scmp.ne.s32.totalorder %s141, %s157
    %p159 = scmp.eq.s32.totalorder %s18, 0
    %p160 = por %p158, %p159
    %p161 = scmp.le.s32.totalorder 1, %s12
    %p162 = scmp.lt.s32.totalorder %s12, 3
    %p163 = pnand %p161, %p162
    %p164 = pneg %p163
    // Predicated region
    $region9: #{decoder_forward_pallas.7} parent=5 // pred_check
      _
    $region10: #{decoder_forward_pallas.7} parent=5 // pred_check_branch
      %166 = sbr.rel (%p163) target = $region12
    $region11: #{decoder_forward_pallas.7} parent=5 // pred_region
      %s167 = ssub.s32 %s12, 1
      // Predicated region
      $region13: #{decoder_forward_pallas.7} parent=11 // pred_check
        %p168 = pneg %p59
      $region14: #{decoder_forward_pallas.7} parent=11 // pred_check_branch
        %170 = sbr.rel (%p168) target = $region16
      $region15: #{decoder_forward_pallas.7} parent=11 // pred_region
        _
      $region16: #{decoder_forward_pallas.7} parent=11 // pred_fallthru
        _
      // Predicated region
      $region17: #{decoder_forward_pallas.7} parent=11 // pred_check
        %p171 = pneg %p80
      $region18: #{decoder_forward_pallas.7} parent=11 // pred_check_branch
        %173 = sbr.rel (%p171) target = $region20
      $region19: #{decoder_forward_pallas.7} parent=11 // pred_region
        _
      $region20: #{decoder_forward_pallas.7} parent=11 // pred_fallthru
        _
      // Predicated region
      $region21: #{decoder_forward_pallas.7} parent=11 // pred_check
        %p174 = pneg %p101
      $region22: #{decoder_forward_pallas.7} parent=11 // pred_check_branch
        %176 = sbr.rel (%p174) target = $region24
      $region23: #{decoder_forward_pallas.7} parent=11 // pred_region
        _
      $region24: #{decoder_forward_pallas.7} parent=11 // pred_fallthru
        _
    $region12: #{decoder_forward_pallas.7} parent=5 // pred_fallthru
      _
    %p177 = scmp.lt.s32.totalorder %s12, 2
    // Predicated region
    $region25: #{decoder_forward_pallas.7} parent=5 // pred_check
      %p178 = pneg %p177
    $region26: #{decoder_forward_pallas.7} parent=5 // pred_check_branch
      %180 = sbr.rel (%p178) target = $region28
    $region27: #{decoder_forward_pallas.7} parent=5 // pred_region
      // Predicated region
      $region29: #{decoder_forward_pallas.7} parent=27 // pred_check
        %p181 = pneg %p32
      $region30: #{decoder_forward_pallas.7} parent=27 // pred_check_branch
        %183 = sbr.rel (%p181) target = $region32
      $region31: #{decoder_forward_pallas.7} parent=27 // pred_region
        %s184 = smul.u32 128, %s12
        %p185 = scmp.lt.s32.totalorder %s184, 255
        %s186 = scalar_select %p185, %s184, 255
        %s187 = smul.addr %s186, 2
        %s188 = smul.addr %s187, 8
        %s189 = scalar_lea.vmem %s0, %s188
        %s190 = smul.u32 128, %s12
      $region32: #{decoder_forward_pallas.7} parent=27 // pred_fallthru
        _
    $region28: #{decoder_forward_pallas.7} parent=5 // pred_fallthru
      _
    %p191 = scmp.le.s32.totalorder 1, %s12
    %p192 = scmp.lt.s32.totalorder %s12, 3
    %p193 = pnand %p191, %p192
    %p194 = pneg %p193
    // Predicated region
    $region33: #{decoder_forward_pallas.7} parent=5 // pred_check
      _
    $region34: #{decoder_forward_pallas.7} parent=5 // pred_check_branch
      %196 = sbr.rel (%p193) target = $region36
    $region35: #{decoder_forward_pallas.7} parent=5 // pred_region
      %s197 = ssub.s32 %s12, 1
      %s198 = smul.u32 128, %s17
      %p199 = scmp.lt.s32.totalorder %s198, 255
      %s200 = scalar_select %p199, %s198, 255
      %s201 = smul.addr %s200, 2
      %s202 = smul.addr %s201, 8
      %s203 = scalar_lea.vmem %s0, %s202
      %p204 = pneg %p38
      %p205 = pneg %p35
      %p206 = pneg %p59
      %p207 = pneg %p56
      %p208 = pneg %p80
      %p209 = pneg %p77
      %p210 = pneg %p101
      %p211 = pneg %p98
      %p212 = pneg %p127
      %p213 = pneg %p124
      %s214 = smul.u32 128, %s17
      %p215 = scmp.lt.s32.totalorder %s214, 255
      %s216 = scalar_select %p215, %s214, 255
      %s217 = smul.addr %s216, 8
      %s218 = scalar_lea.vmem %s4, %s217
      %p219 = pneg %p153
      %p220 = pneg %p150
      %p221 = scmp.lt.s32.totalorder %s17, 1
      %s222 = scalar_select %p221, %s17, 1
      %s223 = smul.addr %s222, 8
      %s224 = scalar_lea.vmem %s5, %s223
      %s225 = smul.u32 128, %s17
      %p226 = scmp.lt.s32.totalorder %s225, 255
      %s227 = scalar_select %p226, %s225, 255
      %s228 = smul.addr %s227, 2
      %s229 = smul.addr %s228, 8
      %s230 = scalar_lea.vmem %s0, %s229
      %s231 = smul.u32 128, %s17
      %s232 = smul.u32 128, %s17
      %p233 = scmp.lt.s32.totalorder %s232, 255
      %s234 = scalar_select %p233, %s232, 255
      %s235 = smul.addr %s234, 8
      %s236 = scalar_lea.vmem %s4, %s235
      %s237 = smul.u32 128, %s17
      %p238 = scmp.lt.s32.totalorder %s17, 1
      %s239 = scalar_select %p238, %s17, 1
      %s240 = smul.addr %s239, 8
      %s241 = scalar_lea.vmem %s5, %s240
      %v242 = vld [vmem:[%s230] sm:$0xff]
      %v243 = vld [vmem:[%s230 + $0x8] sm:$0xff]
      %v244 = vld [vmem:[%s230 + $0x10] sm:$0xff]
      %v245 = vld [vmem:[%s230 + $0x18] sm:$0xff]
      %v246 = vld [vmem:[%s230 + $0x20] sm:$0xff]
      %v247 = vld [vmem:[%s230 + $0x28] sm:$0xff]
      %v248 = vld [vmem:[%s230 + $0x30] sm:$0xff]
      %v249 = vld [vmem:[%s230 + $0x38] sm:$0xff]
      %v250 = vld [vmem:[%s230 + $0x40] sm:$0xff]
      %v251 = vld [vmem:[%s230 + $0x48] sm:$0xff]
      %v252 = vld [vmem:[%s230 + $0x50] sm:$0xff]
      %v253 = vld [vmem:[%s230 + $0x58] sm:$0xff]
      %v254 = vld [vmem:[%s230 + $0x60] sm:$0xff]
      %v255 = vld [vmem:[%s230 + $0x68] sm:$0xff]
      %v256 = vld [vmem:[%s230 + $0x70] sm:$0xff]
      %v257 = vld [vmem:[%s230 + $0x78] sm:$0xff]
      %v258 = vld [vmem:[%s230 + $0x80] sm:$0xff]
      %v259 = vld [vmem:[%s230 + $0x88] sm:$0xff]
      %v260 = vld [vmem:[%s230 + $0x90] sm:$0xff]
      %v261 = vld [vmem:[%s230 + $0x98] sm:$0xff]
      %v262 = vld [vmem:[%s230 + $0xa0] sm:$0xff]
      %v263 = vld [vmem:[%s230 + $0xa8] sm:$0xff]
      %v264 = vld [vmem:[%s230 + $0xb0] sm:$0xff]
      %v265 = vld [vmem:[%s230 + $0xb8] sm:$0xff]
      %v266 = vld [vmem:[%s230 + $0xc0] sm:$0xff]
      %v267 = vld [vmem:[%s230 + $0xc8] sm:$0xff]
      %v268 = vld [vmem:[%s230 + $0xd0] sm:$0xff]
      %v269 = vld [vmem:[%s230 + $0xd8] sm:$0xff]
      %v270 = vld [vmem:[%s230 + $0xe0] sm:$0xff]
      %v271 = vld [vmem:[%s230 + $0xe8] sm:$0xff]
      %v272 = vld [vmem:[%s230 + $0xf0] sm:$0xff]
      %v273 = vld [vmem:[%s230 + $0xf8] sm:$0xff]
      %v274 = vld [vmem:[%s230 + $0x100] sm:$0xff]
      %v275 = vld [vmem:[%s230 + $0x108] sm:$0xff]
      %v276 = vld [vmem:[%s230 + $0x110] sm:$0xff]
      %v277 = vld [vmem:[%s230 + $0x118] sm:$0xff]
      %v278 = vld [vmem:[%s230 + $0x120] sm:$0xff]
      %v279 = vld [vmem:[%s230 + $0x128] sm:$0xff]
      %v280 = vld [vmem:[%s230 + $0x130] sm:$0xff]
      %v281 = vld [vmem:[%s230 + $0x138] sm:$0xff]
      %v282 = vld [vmem:[%s230 + $0x140] sm:$0xff]
      %v283 = vld [vmem:[%s230 + $0x148] sm:$0xff]
      %v284 = vld [vmem:[%s230 + $0x150] sm:$0xff]
      %v285 = vld [vmem:[%s230 + $0x158] sm:$0xff]
      %v286 = vld [vmem:[%s230 + $0x160] sm:$0xff]
      %v287 = vld [vmem:[%s230 + $0x168] sm:$0xff]
      %v288 = vld [vmem:[%s230 + $0x170] sm:$0xff]
      %v289 = vld [vmem:[%s230 + $0x178] sm:$0xff]
      %v290 = vld [vmem:[%s230 + $0x180] sm:$0xff]
      %v291 = vld [vmem:[%s230 + $0x188] sm:$0xff]
      %v292 = vld [vmem:[%s230 + $0x190] sm:$0xff]
      %v293 = vld [vmem:[%s230 + $0x198] sm:$0xff]
      %v294 = vld [vmem:[%s230 + $0x1a0] sm:$0xff]
      %v295 = vld [vmem:[%s230 + $0x1a8] sm:$0xff]
      %v296 = vld [vmem:[%s230 + $0x1b0] sm:$0xff]
      %v297 = vld [vmem:[%s230 + $0x1b8] sm:$0xff]
      %v298 = vld [vmem:[%s230 + $0x1c0] sm:$0xff]
      %v299 = vld [vmem:[%s230 + $0x1c8] sm:$0xff]
      %v300 = vld [vmem:[%s230 + $0x1d0] sm:$0xff]
      %v301 = vld [vmem:[%s230 + $0x1d8] sm:$0xff]
      %v302 = vld [vmem:[%s230 + $0x1e0] sm:$0xff]
      %v303 = vld [vmem:[%s230 + $0x1e8] sm:$0xff]
      %v304 = vld [vmem:[%s230 + $0x1f0] sm:$0xff]
      %v305 = vld [vmem:[%s230 + $0x1f8] sm:$0xff]
      %v306 = vld [vmem:[%s230 + $0x200] sm:$0xff]
      %v307 = vld [vmem:[%s230 + $0x208] sm:$0xff]
      %v308 = vld [vmem:[%s230 + $0x210] sm:$0xff]
      %v309 = vld [vmem:[%s230 + $0x218] sm:$0xff]
      %v310 = vld [vmem:[%s230 + $0x220] sm:$0xff]
      %v311 = vld [vmem:[%s230 + $0x228] sm:$0xff]
      %v312 = vld [vmem:[%s230 + $0x230] sm:$0xff]
      %v313 = vld [vmem:[%s230 + $0x238] sm:$0xff]
      %v314 = vld [vmem:[%s230 + $0x240] sm:$0xff]
      %v315 = vld [vmem:[%s230 + $0x248] sm:$0xff]
      %v316 = vld [vmem:[%s230 + $0x250] sm:$0xff]
      %v317 = vld [vmem:[%s230 + $0x258] sm:$0xff]
      %v318 = vld [vmem:[%s230 + $0x260] sm:$0xff]
      %v319 = vld [vmem:[%s230 + $0x268] sm:$0xff]
      %v320 = vld [vmem:[%s230 + $0x270] sm:$0xff]
      %v321 = vld [vmem:[%s230 + $0x278] sm:$0xff]
      %v322 = vld [vmem:[%s230 + $0x280] sm:$0xff]
      %v323 = vld [vmem:[%s230 + $0x288] sm:$0xff]
      %v324 = vld [vmem:[%s230 + $0x290] sm:$0xff]
      %v325 = vld [vmem:[%s230 + $0x298] sm:$0xff]
      %v326 = vld [vmem:[%s230 + $0x2a0] sm:$0xff]
      %v327 = vld [vmem:[%s230 + $0x2a8] sm:$0xff]
      %v328 = vld [vmem:[%s230 + $0x2b0] sm:$0xff]
      %v329 = vld [vmem:[%s230 + $0x2b8] sm:$0xff]
      %v330 = vld [vmem:[%s230 + $0x2c0] sm:$0xff]
      %v331 = vld [vmem:[%s230 + $0x2c8] sm:$0xff]
      %v332 = vld [vmem:[%s230 + $0x2d0] sm:$0xff]
      %v333 = vld [vmem:[%s230 + $0x2d8] sm:$0xff]
      %v334 = vld [vmem:[%s230 + $0x2e0] sm:$0xff]
      %v335 = vld [vmem:[%s230 + $0x2e8] sm:$0xff]
      %v336 = vld [vmem:[%s230 + $0x2f0] sm:$0xff]
      %v337 = vld [vmem:[%s230 + $0x2f8] sm:$0xff]
      %v338 = vld [vmem:[%s230 + $0x300] sm:$0xff]
      %v339 = vld [vmem:[%s230 + $0x308] sm:$0xff]
      %v340 = vld [vmem:[%s230 + $0x310] sm:$0xff]
      %v341 = vld [vmem:[%s230 + $0x318] sm:$0xff]
      %v342 = vld [vmem:[%s230 + $0x320] sm:$0xff]
      %v343 = vld [vmem:[%s230 + $0x328] sm:$0xff]
      %v344 = vld [vmem:[%s230 + $0x330] sm:$0xff]
      %v345 = vld [vmem:[%s230 + $0x338] sm:$0xff]
      %v346 = vld [vmem:[%s230 + $0x340] sm:$0xff]
      %v347 = vld [vmem:[%s230 + $0x348] sm:$0xff]
      %v348 = vld [vmem:[%s230 + $0x350] sm:$0xff]
      %v349 = vld [vmem:[%s230 + $0x358] sm:$0xff]
      %v350 = vld [vmem:[%s230 + $0x360] sm:$0xff]
      %v351 = vld [vmem:[%s230 + $0x368] sm:$0xff]
      %v352 = vld [vmem:[%s230 + $0x370] sm:$0xff]
      %v353 = vld [vmem:[%s230 + $0x378] sm:$0xff]
      %v354 = vld [vmem:[%s230 + $0x380] sm:$0xff]
      %v355 = vld [vmem:[%s230 + $0x388] sm:$0xff]
      %v356 = vld [vmem:[%s230 + $0x390] sm:$0xff]
      %v357 = vld [vmem:[%s230 + $0x398] sm:$0xff]
      %v358 = vld [vmem:[%s230 + $0x3a0] sm:$0xff]
      %v359 = vld [vmem:[%s230 + $0x3a8] sm:$0xff]
      %v360 = vld [vmem:[%s230 + $0x3b0] sm:$0xff]
      %v361 = vld [vmem:[%s230 + $0x3b8] sm:$0xff]
      %v362 = vld [vmem:[%s230 + $0x3c0] sm:$0xff]
      %v363 = vld [vmem:[%s230 + $0x3c8] sm:$0xff]
      %v364 = vld [vmem:[%s230 + $0x3d0] sm:$0xff]
      %v365 = vld [vmem:[%s230 + $0x3d8] sm:$0xff]
      %v366 = vld [vmem:[%s230 + $0x3e0] sm:$0xff]
      %v367 = vld [vmem:[%s230 + $0x3e8] sm:$0xff]
      %v368 = vld [vmem:[%s230 + $0x3f0] sm:$0xff]
      %v369 = vld [vmem:[%s230 + $0x3f8] sm:$0xff]
      %v370 = vld [vmem:[%s230 + $0x400] sm:$0xff]
      %v371 = vld [vmem:[%s230 + $0x408] sm:$0xff]
      %v372 = vld [vmem:[%s230 + $0x410] sm:$0xff]
      %v373 = vld [vmem:[%s230 + $0x418] sm:$0xff]
      %v374 = vld [vmem:[%s230 + $0x420] sm:$0xff]
      %v375 = vld [vmem:[%s230 + $0x428] sm:$0xff]
      %v376 = vld [vmem:[%s230 + $0x430] sm:$0xff]
      %v377 = vld [vmem:[%s230 + $0x438] sm:$0xff]
      %v378 = vld [vmem:[%s230 + $0x440] sm:$0xff]
      %v379 = vld [vmem:[%s230 + $0x448] sm:$0xff]
      %v380 = vld [vmem:[%s230 + $0x450] sm:$0xff]
      %v381 = vld [vmem:[%s230 + $0x458] sm:$0xff]
      %v382 = vld [vmem:[%s230 + $0x460] sm:$0xff]
      %v383 = vld [vmem:[%s230 + $0x468] sm:$0xff]
      %v384 = vld [vmem:[%s230 + $0x470] sm:$0xff]
      %v385 = vld [vmem:[%s230 + $0x478] sm:$0xff]
      %v386 = vld [vmem:[%s230 + $0x480] sm:$0xff]
      %v387 = vld [vmem:[%s230 + $0x488] sm:$0xff]
      %v388 = vld [vmem:[%s230 + $0x490] sm:$0xff]
      %v389 = vld [vmem:[%s230 + $0x498] sm:$0xff]
      %v390 = vld [vmem:[%s230 + $0x4a0] sm:$0xff]
      %v391 = vld [vmem:[%s230 + $0x4a8] sm:$0xff]
      %v392 = vld [vmem:[%s230 + $0x4b0] sm:$0xff]
      %v393 = vld [vmem:[%s230 + $0x4b8] sm:$0xff]
      %v394 = vld [vmem:[%s230 + $0x4c0] sm:$0xff]
      %v395 = vld [vmem:[%s230 + $0x4c8] sm:$0xff]
      %v396 = vld [vmem:[%s230 + $0x4d0] sm:$0xff]
      %v397 = vld [vmem:[%s230 + $0x4d8] sm:$0xff]
      %v398 = vld [vmem:[%s230 + $0x4e0] sm:$0xff]
      %v399 = vld [vmem:[%s230 + $0x4e8] sm:$0xff]
      %v400 = vld [vmem:[%s230 + $0x4f0] sm:$0xff]
      %v401 = vld [vmem:[%s230 + $0x4f8] sm:$0xff]
      %v402 = vld [vmem:[%s230 + $0x500] sm:$0xff]
      %v403 = vld [vmem:[%s230 + $0x508] sm:$0xff]
      %v404 = vld [vmem:[%s230 + $0x510] sm:$0xff]
      %v405 = vld [vmem:[%s230 + $0x518] sm:$0xff]
      %v406 = vld [vmem:[%s230 + $0x520] sm:$0xff]
      %v407 = vld [vmem:[%s230 + $0x528] sm:$0xff]
      %v408 = vld [vmem:[%s230 + $0x530] sm:$0xff]
      %v409 = vld [vmem:[%s230 + $0x538] sm:$0xff]
      %v410 = vld [vmem:[%s230 + $0x540] sm:$0xff]
      %v411 = vld [vmem:[%s230 + $0x548] sm:$0xff]
      %v412 = vld [vmem:[%s230 + $0x550] sm:$0xff]
      %v413 = vld [vmem:[%s230 + $0x558] sm:$0xff]
      %v414 = vld [vmem:[%s230 + $0x560] sm:$0xff]
      %v415 = vld [vmem:[%s230 + $0x568] sm:$0xff]
      %v416 = vld [vmem:[%s230 + $0x570] sm:$0xff]
      %v417 = vld [vmem:[%s230 + $0x578] sm:$0xff]
      %v418 = vld [vmem:[%s230 + $0x580] sm:$0xff]
      %v419 = vld [vmem:[%s230 + $0x588] sm:$0xff]
      %v420 = vld [vmem:[%s230 + $0x590] sm:$0xff]
      %v421 = vld [vmem:[%s230 + $0x598] sm:$0xff]
      %v422 = vld [vmem:[%s230 + $0x5a0] sm:$0xff]
      %v423 = vld [vmem:[%s230 + $0x5a8] sm:$0xff]
      %v424 = vld [vmem:[%s230 + $0x5b0] sm:$0xff]
      %v425 = vld [vmem:[%s230 + $0x5b8] sm:$0xff]
      %v426 = vld [vmem:[%s230 + $0x5c0] sm:$0xff]
      %v427 = vld [vmem:[%s230 + $0x5c8] sm:$0xff]
      %v428 = vld [vmem:[%s230 + $0x5d0] sm:$0xff]
      %v429 = vld [vmem:[%s230 + $0x5d8] sm:$0xff]
      %v430 = vld [vmem:[%s230 + $0x5e0] sm:$0xff]
      %v431 = vld [vmem:[%s230 + $0x5e8] sm:$0xff]
      %v432 = vld [vmem:[%s230 + $0x5f0] sm:$0xff]
      %v433 = vld [vmem:[%s230 + $0x5f8] sm:$0xff]
      %v434 = vld [vmem:[%s230 + $0x600] sm:$0xff]
      %v435 = vld [vmem:[%s230 + $0x608] sm:$0xff]
      %v436 = vld [vmem:[%s230 + $0x610] sm:$0xff]
      %v437 = vld [vmem:[%s230 + $0x618] sm:$0xff]
      %v438 = vld [vmem:[%s230 + $0x620] sm:$0xff]
      %v439 = vld [vmem:[%s230 + $0x628] sm:$0xff]
      %v440 = vld [vmem:[%s230 + $0x630] sm:$0xff]
      %v441 = vld [vmem:[%s230 + $0x638] sm:$0xff]
      %v442 = vld [vmem:[%s230 + $0x640] sm:$0xff]
      %v443 = vld [vmem:[%s230 + $0x648] sm:$0xff]
      %v444 = vld [vmem:[%s230 + $0x650] sm:$0xff]
      %v445 = vld [vmem:[%s230 + $0x658] sm:$0xff]
      %v446 = vld [vmem:[%s230 + $0x660] sm:$0xff]
      %v447 = vld [vmem:[%s230 + $0x668] sm:$0xff]
      %v448 = vld [vmem:[%s230 + $0x670] sm:$0xff]
      %v449 = vld [vmem:[%s230 + $0x678] sm:$0xff]
      %v450 = vld [vmem:[%s230 + $0x680] sm:$0xff]
      %v451 = vld [vmem:[%s230 + $0x688] sm:$0xff]
      %v452 = vld [vmem:[%s230 + $0x690] sm:$0xff]
      %v453 = vld [vmem:[%s230 + $0x698] sm:$0xff]
      %v454 = vld [vmem:[%s230 + $0x6a0] sm:$0xff]
      %v455 = vld [vmem:[%s230 + $0x6a8] sm:$0xff]
      %v456 = vld [vmem:[%s230 + $0x6b0] sm:$0xff]
      %v457 = vld [vmem:[%s230 + $0x6b8] sm:$0xff]
      %v458 = vld [vmem:[%s230 + $0x6c0] sm:$0xff]
      %v459 = vld [vmem:[%s230 + $0x6c8] sm:$0xff]
      %v460 = vld [vmem:[%s230 + $0x6d0] sm:$0xff]
      %v461 = vld [vmem:[%s230 + $0x6d8] sm:$0xff]
      %v462 = vld [vmem:[%s230 + $0x6e0] sm:$0xff]
      %v463 = vld [vmem:[%s230 + $0x6e8] sm:$0xff]
      %v464 = vld [vmem:[%s230 + $0x6f0] sm:$0xff]
      %v465 = vld [vmem:[%s230 + $0x6f8] sm:$0xff]
      %v466 = vld [vmem:[%s230 + $0x700] sm:$0xff]
      %v467 = vld [vmem:[%s230 + $0x708] sm:$0xff]
      %v468 = vld [vmem:[%s230 + $0x710] sm:$0xff]
      %v469 = vld [vmem:[%s230 + $0x718] sm:$0xff]
      %v470 = vld [vmem:[%s230 + $0x720] sm:$0xff]
      %v471 = vld [vmem:[%s230 + $0x728] sm:$0xff]
      %v472 = vld [vmem:[%s230 + $0x730] sm:$0xff]
      %v473 = vld [vmem:[%s230 + $0x738] sm:$0xff]
      %v474 = vld [vmem:[%s230 + $0x740] sm:$0xff]
      %v475 = vld [vmem:[%s230 + $0x748] sm:$0xff]
      %v476 = vld [vmem:[%s230 + $0x750] sm:$0xff]
      %v477 = vld [vmem:[%s230 + $0x758] sm:$0xff]
      %v478 = vld [vmem:[%s230 + $0x760] sm:$0xff]
      %v479 = vld [vmem:[%s230 + $0x768] sm:$0xff]
      %v480 = vld [vmem:[%s230 + $0x770] sm:$0xff]
      %v481 = vld [vmem:[%s230 + $0x778] sm:$0xff]
      %v482 = vld [vmem:[%s230 + $0x780] sm:$0xff]
      %v483 = vld [vmem:[%s230 + $0x788] sm:$0xff]
      %v484 = vld [vmem:[%s230 + $0x790] sm:$0xff]
      %v485 = vld [vmem:[%s230 + $0x798] sm:$0xff]
      %v486 = vld [vmem:[%s230 + $0x7a0] sm:$0xff]
      %v487 = vld [vmem:[%s230 + $0x7a8] sm:$0xff]
      %v488 = vld [vmem:[%s230 + $0x7b0] sm:$0xff]
      %v489 = vld [vmem:[%s230 + $0x7b8] sm:$0xff]
      %v490 = vld [vmem:[%s230 + $0x7c0] sm:$0xff]
      %v491 = vld [vmem:[%s230 + $0x7c8] sm:$0xff]
      %v492 = vld [vmem:[%s230 + $0x7d0] sm:$0xff]
      %v493 = vld [vmem:[%s230 + $0x7d8] sm:$0xff]
      %v494 = vld [vmem:[%s230 + $0x7e0] sm:$0xff]
      %v495 = vld [vmem:[%s230 + $0x7e8] sm:$0xff]
      %v496 = vld [vmem:[%s230 + $0x7f0] sm:$0xff]
      %v497 = vld [vmem:[%s230 + $0x7f8] sm:$0xff]
      %v498 = vld [vmem:[%s1] sm:$0x3]
      %v500 = vperm.slane %v498, 0
      %v501 = vperm.slane %v498, 1
      %v504 = vmul.f32 %v242, %v500
      %v505 = vmul.f32 %v243, %v501
      %v506 = vmul.f32 %v244, %v500
      %v507 = vmul.f32 %v245, %v501
      %v508 = vmul.f32 %v246, %v500
      %v509 = vmul.f32 %v247, %v501
      %v510 = vmul.f32 %v248, %v500
      %v511 = vmul.f32 %v249, %v501
      %v512 = vmul.f32 %v250, %v500
      %v513 = vmul.f32 %v251, %v501
      %v514 = vmul.f32 %v252, %v500
      %v515 = vmul.f32 %v253, %v501
      %v516 = vmul.f32 %v254, %v500
      %v517 = vmul.f32 %v255, %v501
      %v518 = vmul.f32 %v256, %v500
      %v519 = vmul.f32 %v257, %v501
      %v520 = vmul.f32 %v258, %v500
      %v521 = vmul.f32 %v259, %v501
      %v522 = vmul.f32 %v260, %v500
      %v523 = vmul.f32 %v261, %v501
      %v524 = vmul.f32 %v262, %v500
      %v525 = vmul.f32 %v263, %v501
      %v526 = vmul.f32 %v264, %v500
      %v527 = vmul.f32 %v265, %v501
      %v528 = vmul.f32 %v266, %v500
      %v529 = vmul.f32 %v267, %v501
      %v530 = vmul.f32 %v268, %v500
      %v531 = vmul.f32 %v269, %v501
      %v532 = vmul.f32 %v270, %v500
      %v533 = vmul.f32 %v271, %v501
      %v534 = vmul.f32 %v272, %v500
      %v535 = vmul.f32 %v273, %v501
      %v536 = vmul.f32 %v274, %v500
      %v537 = vmul.f32 %v275, %v501
      %v538 = vmul.f32 %v276, %v500
      %v539 = vmul.f32 %v277, %v501
      %v540 = vmul.f32 %v278, %v500
      %v541 = vmul.f32 %v279, %v501
      %v542 = vmul.f32 %v280, %v500
      %v543 = vmul.f32 %v281, %v501
      %v544 = vmul.f32 %v282, %v500
      %v545 = vmul.f32 %v283, %v501
      %v546 = vmul.f32 %v284, %v500
      %v547 = vmul.f32 %v285, %v501
      %v548 = vmul.f32 %v286, %v500
      %v549 = vmul.f32 %v287, %v501
      %v550 = vmul.f32 %v288, %v500
      %v551 = vmul.f32 %v289, %v501
      %v552 = vmul.f32 %v290, %v500
      %v553 = vmul.f32 %v291, %v501
      %v554 = vmul.f32 %v292, %v500
      %v555 = vmul.f32 %v293, %v501
      %v556 = vmul.f32 %v294, %v500
      %v557 = vmul.f32 %v295, %v501
      %v558 = vmul.f32 %v296, %v500
      %v559 = vmul.f32 %v297, %v501
      %v560 = vmul.f32 %v298, %v500
      %v561 = vmul.f32 %v299, %v501
      %v562 = vmul.f32 %v300, %v500
      %v563 = vmul.f32 %v301, %v501
      %v564 = vmul.f32 %v302, %v500
      %v565 = vmul.f32 %v303, %v501
      %v566 = vmul.f32 %v304, %v500
      %v567 = vmul.f32 %v305, %v501
      %v568 = vmul.f32 %v306, %v500
      %v569 = vmul.f32 %v307, %v501
      %v570 = vmul.f32 %v308, %v500
      %v571 = vmul.f32 %v309, %v501
      %v572 = vmul.f32 %v310, %v500
      %v573 = vmul.f32 %v311, %v501
      %v574 = vmul.f32 %v312, %v500
      %v575 = vmul.f32 %v313, %v501
      %v576 = vmul.f32 %v314, %v500
      %v577 = vmul.f32 %v315, %v501
      %v578 = vmul.f32 %v316, %v500
      %v579 = vmul.f32 %v317, %v501
      %v580 = vmul.f32 %v318, %v500
      %v581 = vmul.f32 %v319, %v501
      %v582 = vmul.f32 %v320, %v500
      %v583 = vmul.f32 %v321, %v501
      %v584 = vmul.f32 %v322, %v500
      %v585 = vmul.f32 %v323, %v501
      %v586 = vmul.f32 %v324, %v500
      %v587 = vmul.f32 %v325, %v501
      %v588 = vmul.f32 %v326, %v500
      %v589 = vmul.f32 %v327, %v501
      %v590 = vmul.f32 %v328, %v500
      %v591 = vmul.f32 %v329, %v501
      %v592 = vmul.f32 %v330, %v500
      %v593 = vmul.f32 %v331, %v501
      %v594 = vmul.f32 %v332, %v500
      %v595 = vmul.f32 %v333, %v501
      %v596 = vmul.f32 %v334, %v500
      %v597 = vmul.f32 %v335, %v501
      %v598 = vmul.f32 %v336, %v500
      %v599 = vmul.f32 %v337, %v501
      %v600 = vmul.f32 %v338, %v500
      %v601 = vmul.f32 %v339, %v501
      %v602 = vmul.f32 %v340, %v500
      %v603 = vmul.f32 %v341, %v501
      %v604 = vmul.f32 %v342, %v500
      %v605 = vmul.f32 %v343, %v501
      %v606 = vmul.f32 %v344, %v500
      %v607 = vmul.f32 %v345, %v501
      %v608 = vmul.f32 %v346, %v500
      %v609 = vmul.f32 %v347, %v501
      %v610 = vmul.f32 %v348, %v500
      %v611 = vmul.f32 %v349, %v501
      %v612 = vmul.f32 %v350, %v500
      %v613 = vmul.f32 %v351, %v501
      %v614 = vmul.f32 %v352, %v500
      %v615 = vmul.f32 %v353, %v501
      %v616 = vmul.f32 %v354, %v500
      %v617 = vmul.f32 %v355, %v501
      %v618 = vmul.f32 %v356, %v500
      %v619 = vmul.f32 %v357, %v501
      %v620 = vmul.f32 %v358, %v500
      %v621 = vmul.f32 %v359, %v501
      %v622 = vmul.f32 %v360, %v500
      %v623 = vmul.f32 %v361, %v501
      %v624 = vmul.f32 %v362, %v500
      %v625 = vmul.f32 %v363, %v501
      %v626 = vmul.f32 %v364, %v500
      %v627 = vmul.f32 %v365, %v501
      %v628 = vmul.f32 %v366, %v500
      %v629 = vmul.f32 %v367, %v501
      %v630 = vmul.f32 %v368, %v500
      %v631 = vmul.f32 %v369, %v501
      %v632 = vmul.f32 %v370, %v500
      %v633 = vmul.f32 %v371, %v501
      %v634 = vmul.f32 %v372, %v500
      %v635 = vmul.f32 %v373, %v501
      %v636 = vmul.f32 %v374, %v500
      %v637 = vmul.f32 %v375, %v501
      %v638 = vmul.f32 %v376, %v500
      %v639 = vmul.f32 %v377, %v501
      %v640 = vmul.f32 %v378, %v500
      %v641 = vmul.f32 %v379, %v501
      %v642 = vmul.f32 %v380, %v500
      %v643 = vmul.f32 %v381, %v501
      %v644 = vmul.f32 %v382, %v500
      %v645 = vmul.f32 %v383, %v501
      %v646 = vmul.f32 %v384, %v500
      %v647 = vmul.f32 %v385, %v501
      %v648 = vmul.f32 %v386, %v500
      %v649 = vmul.f32 %v387, %v501
      %v650 = vmul.f32 %v388, %v500
      %v651 = vmul.f32 %v389, %v501
      %v652 = vmul.f32 %v390, %v500
      %v653 = vmul.f32 %v391, %v501
      %v654 = vmul.f32 %v392, %v500
      %v655 = vmul.f32 %v393, %v501
      %v656 = vmul.f32 %v394, %v500
      %v657 = vmul.f32 %v395, %v501
      %v658 = vmul.f32 %v396, %v500
      %v659 = vmul.f32 %v397, %v501
      %v660 = vmul.f32 %v398, %v500
      %v661 = vmul.f32 %v399, %v501
      %v662 = vmul.f32 %v400, %v500
      %v663 = vmul.f32 %v401, %v501
      %v664 = vmul.f32 %v402, %v500
      %v665 = vmul.f32 %v403, %v501
      %v666 = vmul.f32 %v404, %v500
      %v667 = vmul.f32 %v405, %v501
      %v668 = vmul.f32 %v406, %v500
      %v669 = vmul.f32 %v407, %v501
      %v670 = vmul.f32 %v408, %v500
      %v671 = vmul.f32 %v409, %v501
      %v672 = vmul.f32 %v410, %v500
      %v673 = vmul.f32 %v411, %v501
      %v674 = vmul.f32 %v412, %v500
      %v675 = vmul.f32 %v413, %v501
      %v676 = vmul.f32 %v414, %v500
      %v677 = vmul.f32 %v415, %v501
      %v678 = vmul.f32 %v416, %v500
      %v679 = vmul.f32 %v417, %v501
      %v680 = vmul.f32 %v418, %v500
      %v681 = vmul.f32 %v419, %v501
      %v682 = vmul.f32 %v420, %v500
      %v683 = vmul.f32 %v421, %v501
      %v684 = vmul.f32 %v422, %v500
      %v685 = vmul.f32 %v423, %v501
      %v686 = vmul.f32 %v424, %v500
      %v687 = vmul.f32 %v425, %v501
      %v688 = vmul.f32 %v426, %v500
      %v689 = vmul.f32 %v427, %v501
      %v690 = vmul.f32 %v428, %v500
      %v691 = vmul.f32 %v429, %v501
      %v692 = vmul.f32 %v430, %v500
      %v693 = vmul.f32 %v431, %v501
      %v694 = vmul.f32 %v432, %v500
      %v695 = vmul.f32 %v433, %v501
      %v696 = vmul.f32 %v434, %v500
      %v697 = vmul.f32 %v435, %v501
      %v698 = vmul.f32 %v436, %v500
      %v699 = vmul.f32 %v437, %v501
      %v700 = vmul.f32 %v438, %v500
      %v701 = vmul.f32 %v439, %v501
      %v702 = vmul.f32 %v440, %v500
      %v703 = vmul.f32 %v441, %v501
      %v704 = vmul.f32 %v442, %v500
      %v705 = vmul.f32 %v443, %v501
      %v706 = vmul.f32 %v444, %v500
      %v707 = vmul.f32 %v445, %v501
      %v708 = vmul.f32 %v446, %v500
      %v709 = vmul.f32 %v447, %v501
      %v710 = vmul.f32 %v448, %v500
      %v711 = vmul.f32 %v449, %v501
      %v712 = vmul.f32 %v450, %v500
      %v713 = vmul.f32 %v451, %v501
      %v714 = vmul.f32 %v452, %v500
      %v715 = vmul.f32 %v453, %v501
      %v716 = vmul.f32 %v454, %v500
      %v717 = vmul.f32 %v455, %v501
      %v718 = vmul.f32 %v456, %v500
      %v719 = vmul.f32 %v457, %v501
      %v720 = vmul.f32 %v458, %v500
      %v721 = vmul.f32 %v459, %v501
      %v722 = vmul.f32 %v460, %v500
      %v723 = vmul.f32 %v461, %v501
      %v724 = vmul.f32 %v462, %v500
      %v725 = vmul.f32 %v463, %v501
      %v726 = vmul.f32 %v464, %v500
      %v727 = vmul.f32 %v465, %v501
      %v728 = vmul.f32 %v466, %v500
      %v729 = vmul.f32 %v467, %v501
      %v730 = vmul.f32 %v468, %v500
      %v731 = vmul.f32 %v469, %v501
      %v732 = vmul.f32 %v470, %v500
      %v733 = vmul.f32 %v471, %v501
      %v734 = vmul.f32 %v472, %v500
      %v735 = vmul.f32 %v473, %v501
      %v736 = vmul.f32 %v474, %v500
      %v737 = vmul.f32 %v475, %v501
      %v738 = vmul.f32 %v476, %v500
      %v739 = vmul.f32 %v477, %v501
      %v740 = vmul.f32 %v478, %v500
      %v741 = vmul.f32 %v479, %v501
      %v742 = vmul.f32 %v480, %v500
      %v743 = vmul.f32 %v481, %v501
      %v744 = vmul.f32 %v482, %v500
      %v745 = vmul.f32 %v483, %v501
      %v746 = vmul.f32 %v484, %v500
      %v747 = vmul.f32 %v485, %v501
      %v748 = vmul.f32 %v486, %v500
      %v749 = vmul.f32 %v487, %v501
      %v750 = vmul.f32 %v488, %v500
      %v751 = vmul.f32 %v489, %v501
      %v752 = vmul.f32 %v490, %v500
      %v753 = vmul.f32 %v491, %v501
      %v754 = vmul.f32 %v492, %v500
      %v755 = vmul.f32 %v493, %v501
      %v756 = vmul.f32 %v494, %v500
      %v757 = vmul.f32 %v495, %v501
      %v758 = vmul.f32 %v496, %v500
      %v759 = vmul.f32 %v497, %v501
      %v760 = vld [vmem:[%s2] sm:$0x3]
      %v762 = vperm.slane %v760, 0
      %v763 = vperm.slane %v760, 1
      %v766 = vadd.f32 %v504, %v762
      %v767 = vadd.f32 %v505, %v763
      %v768 = vadd.f32 %v506, %v762
      %v769 = vadd.f32 %v507, %v763
      %v770 = vadd.f32 %v508, %v762
      %v771 = vadd.f32 %v509, %v763
      %v772 = vadd.f32 %v510, %v762
      %v773 = vadd.f32 %v511, %v763
      %v774 = vadd.f32 %v512, %v762
      %v775 = vadd.f32 %v513, %v763
      %v776 = vadd.f32 %v514, %v762
      %v777 = vadd.f32 %v515, %v763
      %v778 = vadd.f32 %v516, %v762
      %v779 = vadd.f32 %v517, %v763
      %v780 = vadd.f32 %v518, %v762
      %v781 = vadd.f32 %v519, %v763
      %v782 = vadd.f32 %v520, %v762
      %v783 = vadd.f32 %v521, %v763
      %v784 = vadd.f32 %v522, %v762
      %v785 = vadd.f32 %v523, %v763
      %v786 = vadd.f32 %v524, %v762
      %v787 = vadd.f32 %v525, %v763
      %v788 = vadd.f32 %v526, %v762
      %v789 = vadd.f32 %v527, %v763
      %v790 = vadd.f32 %v528, %v762
      %v791 = vadd.f32 %v529, %v763
      %v792 = vadd.f32 %v530, %v762
      %v793 = vadd.f32 %v531, %v763
      %v794 = vadd.f32 %v532, %v762
      %v795 = vadd.f32 %v533, %v763
      %v796 = vadd.f32 %v534, %v762
      %v797 = vadd.f32 %v535, %v763
      %v798 = vadd.f32 %v536, %v762
      %v799 = vadd.f32 %v537, %v763
      %v800 = vadd.f32 %v538, %v762
      %v801 = vadd.f32 %v539, %v763
      %v802 = vadd.f32 %v540, %v762
      %v803 = vadd.f32 %v541, %v763
      %v804 = vadd.f32 %v542, %v762
      %v805 = vadd.f32 %v543, %v763
      %v806 = vadd.f32 %v544, %v762
      %v807 = vadd.f32 %v545, %v763
      %v808 = vadd.f32 %v546, %v762
      %v809 = vadd.f32 %v547, %v763
      %v810 = vadd.f32 %v548, %v762
      %v811 = vadd.f32 %v549, %v763
      %v812 = vadd.f32 %v550, %v762
      %v813 = vadd.f32 %v551, %v763
      %v814 = vadd.f32 %v552, %v762
      %v815 = vadd.f32 %v553, %v763
      %v816 = vadd.f32 %v554, %v762
      %v817 = vadd.f32 %v555, %v763
      %v818 = vadd.f32 %v556, %v762
      %v819 = vadd.f32 %v557, %v763
      %v820 = vadd.f32 %v558, %v762
      %v821 = vadd.f32 %v559, %v763
      %v822 = vadd.f32 %v560, %v762
      %v823 = vadd.f32 %v561, %v763
      %v824 = vadd.f32 %v562, %v762
      %v825 = vadd.f32 %v563, %v763
      %v826 = vadd.f32 %v564, %v762
      %v827 = vadd.f32 %v565, %v763
      %v828 = vadd.f32 %v566, %v762
      %v829 = vadd.f32 %v567, %v763
      %v830 = vadd.f32 %v568, %v762
      %v831 = vadd.f32 %v569, %v763
      %v832 = vadd.f32 %v570, %v762
      %v833 = vadd.f32 %v571, %v763
      %v834 = vadd.f32 %v572, %v762
      %v835 = vadd.f32 %v573, %v763
      %v836 = vadd.f32 %v574, %v762
      %v837 = vadd.f32 %v575, %v763
      %v838 = vadd.f32 %v576, %v762
      %v839 = vadd.f32 %v577, %v763
      %v840 = vadd.f32 %v578, %v762
      %v841 = vadd.f32 %v579, %v763
      %v842 = vadd.f32 %v580, %v762
      %v843 = vadd.f32 %v581, %v763
      %v844 = vadd.f32 %v582, %v762
      %v845 = vadd.f32 %v583, %v763
      %v846 = vadd.f32 %v584, %v762
      %v847 = vadd.f32 %v585, %v763
      %v848 = vadd.f32 %v586, %v762
      %v849 = vadd.f32 %v587, %v763
      %v850 = vadd.f32 %v588, %v762
      %v851 = vadd.f32 %v589, %v763
      %v852 = vadd.f32 %v590, %v762
      %v853 = vadd.f32 %v591, %v763
      %v854 = vadd.f32 %v592, %v762
      %v855 = vadd.f32 %v593, %v763
      %v856 = vadd.f32 %v594, %v762
      %v857 = vadd.f32 %v595, %v763
      %v858 = vadd.f32 %v596, %v762
      %v859 = vadd.f32 %v597, %v763
      %v860 = vadd.f32 %v598, %v762
      %v861 = vadd.f32 %v599, %v763
      %v862 = vadd.f32 %v600, %v762
      %v863 = vadd.f32 %v601, %v763
      %v864 = vadd.f32 %v602, %v762
      %v865 = vadd.f32 %v603, %v763
      %v866 = vadd.f32 %v604, %v762
      %v867 = vadd.f32 %v605, %v763
      %v868 = vadd.f32 %v606, %v762
      %v869 = vadd.f32 %v607, %v763
      %v870 = vadd.f32 %v608, %v762
      %v871 = vadd.f32 %v609, %v763
      %v872 = vadd.f32 %v610, %v762
      %v873 = vadd.f32 %v611, %v763
      %v874 = vadd.f32 %v612, %v762
      %v875 = vadd.f32 %v613, %v763
      %v876 = vadd.f32 %v614, %v762
      %v877 = vadd.f32 %v615, %v763
      %v878 = vadd.f32 %v616, %v762
      %v879 = vadd.f32 %v617, %v763
      %v880 = vadd.f32 %v618, %v762
      %v881 = vadd.f32 %v619, %v763
      %v882 = vadd.f32 %v620, %v762
      %v883 = vadd.f32 %v621, %v763
      %v884 = vadd.f32 %v622, %v762
      %v885 = vadd.f32 %v623, %v763
      %v886 = vadd.f32 %v624, %v762
      %v887 = vadd.f32 %v625, %v763
      %v888 = vadd.f32 %v626, %v762
      %v889 = vadd.f32 %v627, %v763
      %v890 = vadd.f32 %v628, %v762
      %v891 = vadd.f32 %v629, %v763
      %v892 = vadd.f32 %v630, %v762
      %v893 = vadd.f32 %v631, %v763
      %v894 = vadd.f32 %v632, %v762
      %v895 = vadd.f32 %v633, %v763
      %v896 = vadd.f32 %v634, %v762
      %v897 = vadd.f32 %v635, %v763
      %v898 = vadd.f32 %v636, %v762
      %v899 = vadd.f32 %v637, %v763
      %v900 = vadd.f32 %v638, %v762
      %v901 = vadd.f32 %v639, %v763
      %v902 = vadd.f32 %v640, %v762
      %v903 = vadd.f32 %v641, %v763
      %v904 = vadd.f32 %v642, %v762
      %v905 = vadd.f32 %v643, %v763
      %v906 = vadd.f32 %v644, %v762
      %v907 = vadd.f32 %v645, %v763
      %v908 = vadd.f32 %v646, %v762
      %v909 = vadd.f32 %v647, %v763
      %v910 = vadd.f32 %v648, %v762
      %v911 = vadd.f32 %v649, %v763
      %v912 = vadd.f32 %v650, %v762
      %v913 = vadd.f32 %v651, %v763
      %v914 = vadd.f32 %v652, %v762
      %v915 = vadd.f32 %v653, %v763
      %v916 = vadd.f32 %v654, %v762
      %v917 = vadd.f32 %v655, %v763
      %v918 = vadd.f32 %v656, %v762
      %v919 = vadd.f32 %v657, %v763
      %v920 = vadd.f32 %v658, %v762
      %v921 = vadd.f32 %v659, %v763
      %v922 = vadd.f32 %v660, %v762
      %v923 = vadd.f32 %v661, %v763
      %v924 = vadd.f32 %v662, %v762
      %v925 = vadd.f32 %v663, %v763
      %v926 = vadd.f32 %v664, %v762
      %v927 = vadd.f32 %v665, %v763
      %v928 = vadd.f32 %v666, %v762
      %v929 = vadd.f32 %v667, %v763
      %v930 = vadd.f32 %v668, %v762
      %v931 = vadd.f32 %v669, %v763
      %v932 = vadd.f32 %v670, %v762
      %v933 = vadd.f32 %v671, %v763
      %v934 = vadd.f32 %v672, %v762
      %v935 = vadd.f32 %v673, %v763
      %v936 = vadd.f32 %v674, %v762
      %v937 = vadd.f32 %v675, %v763
      %v938 = vadd.f32 %v676, %v762
      %v939 = vadd.f32 %v677, %v763
      %v940 = vadd.f32 %v678, %v762
      %v941 = vadd.f32 %v679, %v763
      %v942 = vadd.f32 %v680, %v762
      %v943 = vadd.f32 %v681, %v763
      %v944 = vadd.f32 %v682, %v762
      %v945 = vadd.f32 %v683, %v763
      %v946 = vadd.f32 %v684, %v762
      %v947 = vadd.f32 %v685, %v763
      %v948 = vadd.f32 %v686, %v762
      %v949 = vadd.f32 %v687, %v763
      %v950 = vadd.f32 %v688, %v762
      %v951 = vadd.f32 %v689, %v763
      %v952 = vadd.f32 %v690, %v762
      %v953 = vadd.f32 %v691, %v763
      %v954 = vadd.f32 %v692, %v762
      %v955 = vadd.f32 %v693, %v763
      %v956 = vadd.f32 %v694, %v762
      %v957 = vadd.f32 %v695, %v763
      %v958 = vadd.f32 %v696, %v762
      %v959 = vadd.f32 %v697, %v763
      %v960 = vadd.f32 %v698, %v762
      %v961 = vadd.f32 %v699, %v763
      %v962 = vadd.f32 %v700, %v762
      %v963 = vadd.f32 %v701, %v763
      %v964 = vadd.f32 %v702, %v762
      %v965 = vadd.f32 %v703, %v763
      %v966 = vadd.f32 %v704, %v762
      %v967 = vadd.f32 %v705, %v763
      %v968 = vadd.f32 %v706, %v762
      %v969 = vadd.f32 %v707, %v763
      %v970 = vadd.f32 %v708, %v762
      %v971 = vadd.f32 %v709, %v763
      %v972 = vadd.f32 %v710, %v762
      %v973 = vadd.f32 %v711, %v763
      %v974 = vadd.f32 %v712, %v762
      %v975 = vadd.f32 %v713, %v763
      %v976 = vadd.f32 %v714, %v762
      %v977 = vadd.f32 %v715, %v763
      %v978 = vadd.f32 %v716, %v762
      %v979 = vadd.f32 %v717, %v763
      %v980 = vadd.f32 %v718, %v762
      %v981 = vadd.f32 %v719, %v763
      %v982 = vadd.f32 %v720, %v762
      %v983 = vadd.f32 %v721, %v763
      %v984 = vadd.f32 %v722, %v762
      %v985 = vadd.f32 %v723, %v763
      %v986 = vadd.f32 %v724, %v762
      %v987 = vadd.f32 %v725, %v763
      %v988 = vadd.f32 %v726, %v762
      %v989 = vadd.f32 %v727, %v763
      %v990 = vadd.f32 %v728, %v762
      %v991 = vadd.f32 %v729, %v763
      %v992 = vadd.f32 %v730, %v762
      %v993 = vadd.f32 %v731, %v763
      %v994 = vadd.f32 %v732, %v762
      %v995 = vadd.f32 %v733, %v763
      %v996 = vadd.f32 %v734, %v762
      %v997 = vadd.f32 %v735, %v763
      %v998 = vadd.f32 %v736, %v762
      %v999 = vadd.f32 %v737, %v763
      %v1000 = vadd.f32 %v738, %v762
      %v1001 = vadd.f32 %v739, %v763
      %v1002 = vadd.f32 %v740, %v762
      %v1003 = vadd.f32 %v741, %v763
      %v1004 = vadd.f32 %v742, %v762
      %v1005 = vadd.f32 %v743, %v763
      %v1006 = vadd.f32 %v744, %v762
      %v1007 = vadd.f32 %v745, %v763
      %v1008 = vadd.f32 %v746, %v762
      %v1009 = vadd.f32 %v747, %v763
      %v1010 = vadd.f32 %v748, %v762
      %v1011 = vadd.f32 %v749, %v763
      %v1012 = vadd.f32 %v750, %v762
      %v1013 = vadd.f32 %v751, %v763
      %v1014 = vadd.f32 %v752, %v762
      %v1015 = vadd.f32 %v753, %v763
      %v1016 = vadd.f32 %v754, %v762
      %v1017 = vadd.f32 %v755, %v763
      %v1018 = vadd.f32 %v756, %v762
      %v1019 = vadd.f32 %v757, %v763
      %v1020 = vadd.f32 %v758, %v762
      %v1021 = vadd.f32 %v759, %v763
      %vm1022 = vcmp.ge.f32.partialorder %v766, 0.0
      %vm1023 = vcmp.ge.f32.partialorder %v767, 0.0
      %vm1024 = vcmp.ge.f32.partialorder %v768, 0.0
      %vm1025 = vcmp.ge.f32.partialorder %v769, 0.0
      %vm1026 = vcmp.ge.f32.partialorder %v770, 0.0
      %vm1027 = vcmp.ge.f32.partialorder %v771, 0.0
      %vm1028 = vcmp.ge.f32.partialorder %v772, 0.0
      %vm1029 = vcmp.ge.f32.partialorder %v773, 0.0
      %vm1030 = vcmp.ge.f32.partialorder %v774, 0.0
      %vm1031 = vcmp.ge.f32.partialorder %v775, 0.0
      %vm1032 = vcmp.ge.f32.partialorder %v776, 0.0
      %vm1033 = vcmp.ge.f32.partialorder %v777, 0.0
      %vm1034 = vcmp.ge.f32.partialorder %v778, 0.0
      %vm1035 = vcmp.ge.f32.partialorder %v779, 0.0
      %vm1036 = vcmp.ge.f32.partialorder %v780, 0.0
      %vm1037 = vcmp.ge.f32.partialorder %v781, 0.0
      %vm1038 = vcmp.ge.f32.partialorder %v782, 0.0
      %vm1039 = vcmp.ge.f32.partialorder %v783, 0.0
      %vm1040 = vcmp.ge.f32.partialorder %v784, 0.0
      %vm1041 = vcmp.ge.f32.partialorder %v785, 0.0
      %vm1042 = vcmp.ge.f32.partialorder %v786, 0.0
      %vm1043 = vcmp.ge.f32.partialorder %v787, 0.0
      %vm1044 = vcmp.ge.f32.partialorder %v788, 0.0
      %vm1045 = vcmp.ge.f32.partialorder %v789, 0.0
      %vm1046 = vcmp.ge.f32.partialorder %v790, 0.0
      %vm1047 = vcmp.ge.f32.partialorder %v791, 0.0
      %vm1048 = vcmp.ge.f32.partialorder %v792, 0.0
      %vm1049 = vcmp.ge.f32.partialorder %v793, 0.0
      %vm1050 = vcmp.ge.f32.partialorder %v794, 0.0
      %vm1051 = vcmp.ge.f32.partialorder %v795, 0.0
      %vm1052 = vcmp.ge.f32.partialorder %v796, 0.0
      %vm1053 = vcmp.ge.f32.partialorder %v797, 0.0
      %vm1054 = vcmp.ge.f32.partialorder %v798, 0.0
      %vm1055 = vcmp.ge.f32.partialorder %v799, 0.0
      %vm1056 = vcmp.ge.f32.partialorder %v800, 0.0
      %vm1057 = vcmp.ge.f32.partialorder %v801, 0.0
      %vm1058 = vcmp.ge.f32.partialorder %v802, 0.0
      %vm1059 = vcmp.ge.f32.partialorder %v803, 0.0
      %vm1060 = vcmp.ge.f32.partialorder %v804, 0.0
      %vm1061 = vcmp.ge.f32.partialorder %v805, 0.0
      %vm1062 = vcmp.ge.f32.partialorder %v806, 0.0
      %vm1063 = vcmp.ge.f32.partialorder %v807, 0.0
      %vm1064 = vcmp.ge.f32.partialorder %v808, 0.0
      %vm1065 = vcmp.ge.f32.partialorder %v809, 0.0
      %vm1066 = vcmp.ge.f32.partialorder %v810, 0.0
      %vm1067 = vcmp.ge.f32.partialorder %v811, 0.0
      %vm1068 = vcmp.ge.f32.partialorder %v812, 0.0
      %vm1069 = vcmp.ge.f32.partialorder %v813, 0.0
      %vm1070 = vcmp.ge.f32.partialorder %v814, 0.0
      %vm1071 = vcmp.ge.f32.partialorder %v815, 0.0
      %vm1072 = vcmp.ge.f32.partialorder %v816, 0.0
      %vm1073 = vcmp.ge.f32.partialorder %v817, 0.0
      %vm1074 = vcmp.ge.f32.partialorder %v818, 0.0
      %vm1075 = vcmp.ge.f32.partialorder %v819, 0.0
      %vm1076 = vcmp.ge.f32.partialorder %v820, 0.0
      %vm1077 = vcmp.ge.f32.partialorder %v821, 0.0
      %vm1078 = vcmp.ge.f32.partialorder %v822, 0.0
      %vm1079 = vcmp.ge.f32.partialorder %v823, 0.0
      %vm1080 = vcmp.ge.f32.partialorder %v824, 0.0
      %vm1081 = vcmp.ge.f32.partialorder %v825, 0.0
      %vm1082 = vcmp.ge.f32.partialorder %v826, 0.0
      %vm1083 = vcmp.ge.f32.partialorder %v827, 0.0
      %vm1084 = vcmp.ge.f32.partialorder %v828, 0.0
      %vm1085 = vcmp.ge.f32.partialorder %v829, 0.0
      %vm1086 = vcmp.ge.f32.partialorder %v830, 0.0
      %vm1087 = vcmp.ge.f32.partialorder %v831, 0.0
      %vm1088 = vcmp.ge.f32.partialorder %v832, 0.0
      %vm1089 = vcmp.ge.f32.partialorder %v833, 0.0
      %vm1090 = vcmp.ge.f32.partialorder %v834, 0.0
      %vm1091 = vcmp.ge.f32.partialorder %v835, 0.0
      %vm1092 = vcmp.ge.f32.partialorder %v836, 0.0
      %vm1093 = vcmp.ge.f32.partialorder %v837, 0.0
      %vm1094 = vcmp.ge.f32.partialorder %v838, 0.0
      %vm1095 = vcmp.ge.f32.partialorder %v839, 0.0
      %vm1096 = vcmp.ge.f32.partialorder %v840, 0.0
      %vm1097 = vcmp.ge.f32.partialorder %v841, 0.0
      %vm1098 = vcmp.ge.f32.partialorder %v842, 0.0
      %vm1099 = vcmp.ge.f32.partialorder %v843, 0.0
      %vm1100 = vcmp.ge.f32.partialorder %v844, 0.0
      %vm1101 = vcmp.ge.f32.partialorder %v845, 0.0
      %vm1102 = vcmp.ge.f32.partialorder %v846, 0.0
      %vm1103 = vcmp.ge.f32.partialorder %v847, 0.0
      %vm1104 = vcmp.ge.f32.partialorder %v848, 0.0
      %vm1105 = vcmp.ge.f32.partialorder %v849, 0.0
      %vm1106 = vcmp.ge.f32.partialorder %v850, 0.0
      %vm1107 = vcmp.ge.f32.partialorder %v851, 0.0
      %vm1108 = vcmp.ge.f32.partialorder %v852, 0.0
      %vm1109 = vcmp.ge.f32.partialorder %v853, 0.0
      %vm1110 = vcmp.ge.f32.partialorder %v854, 0.0
      %vm1111 = vcmp.ge.f32.partialorder %v855, 0.0
      %vm1112 = vcmp.ge.f32.partialorder %v856, 0.0
      %vm1113 = vcmp.ge.f32.partialorder %v857, 0.0
      %vm1114 = vcmp.ge.f32.partialorder %v858, 0.0
      %vm1115 = vcmp.ge.f32.partialorder %v859, 0.0
      %vm1116 = vcmp.ge.f32.partialorder %v860, 0.0
      %vm1117 = vcmp.ge.f32.partialorder %v861, 0.0
      %vm1118 = vcmp.ge.f32.partialorder %v862, 0.0
      %vm1119 = vcmp.ge.f32.partialorder %v863, 0.0
      %vm1120 = vcmp.ge.f32.partialorder %v864, 0.0
      %vm1121 = vcmp.ge.f32.partialorder %v865, 0.0
      %vm1122 = vcmp.ge.f32.partialorder %v866, 0.0
      %vm1123 = vcmp.ge.f32.partialorder %v867, 0.0
      %vm1124 = vcmp.ge.f32.partialorder %v868, 0.0
      %vm1125 = vcmp.ge.f32.partialorder %v869, 0.0
      %vm1126 = vcmp.ge.f32.partialorder %v870, 0.0
      %vm1127 = vcmp.ge.f32.partialorder %v871, 0.0
      %vm1128 = vcmp.ge.f32.partialorder %v872, 0.0
      %vm1129 = vcmp.ge.f32.partialorder %v873, 0.0
      %vm1130 = vcmp.ge.f32.partialorder %v874, 0.0
      %vm1131 = vcmp.ge.f32.partialorder %v875, 0.0
      %vm1132 = vcmp.ge.f32.partialorder %v876, 0.0
      %vm1133 = vcmp.ge.f32.partialorder %v877, 0.0
      %vm1134 = vcmp.ge.f32.partialorder %v878, 0.0
      %vm1135 = vcmp.ge.f32.partialorder %v879, 0.0
      %vm1136 = vcmp.ge.f32.partialorder %v880, 0.0
      %vm1137 = vcmp.ge.f32.partialorder %v881, 0.0
      %vm1138 = vcmp.ge.f32.partialorder %v882, 0.0
      %vm1139 = vcmp.ge.f32.partialorder %v883, 0.0
      %vm1140 = vcmp.ge.f32.partialorder %v884, 0.0
      %vm1141 = vcmp.ge.f32.partialorder %v885, 0.0
      %vm1142 = vcmp.ge.f32.partialorder %v886, 0.0
      %vm1143 = vcmp.ge.f32.partialorder %v887, 0.0
      %vm1144 = vcmp.ge.f32.partialorder %v888, 0.0
      %vm1145 = vcmp.ge.f32.partialorder %v889, 0.0
      %vm1146 = vcmp.ge.f32.partialorder %v890, 0.0
      %vm1147 = vcmp.ge.f32.partialorder %v891, 0.0
      %vm1148 = vcmp.ge.f32.partialorder %v892, 0.0
      %vm1149 = vcmp.ge.f32.partialorder %v893, 0.0
      %vm1150 = vcmp.ge.f32.partialorder %v894, 0.0
      %vm1151 = vcmp.ge.f32.partialorder %v895, 0.0
      %vm1152 = vcmp.ge.f32.partialorder %v896, 0.0
      %vm1153 = vcmp.ge.f32.partialorder %v897, 0.0
      %vm1154 = vcmp.ge.f32.partialorder %v898, 0.0
      %vm1155 = vcmp.ge.f32.partialorder %v899, 0.0
      %vm1156 = vcmp.ge.f32.partialorder %v900, 0.0
      %vm1157 = vcmp.ge.f32.partialorder %v901, 0.0
      %vm1158 = vcmp.ge.f32.partialorder %v902, 0.0
      %vm1159 = vcmp.ge.f32.partialorder %v903, 0.0
      %vm1160 = vcmp.ge.f32.partialorder %v904, 0.0
      %vm1161 = vcmp.ge.f32.partialorder %v905, 0.0
      %vm1162 = vcmp.ge.f32.partialorder %v906, 0.0
      %vm1163 = vcmp.ge.f32.partialorder %v907, 0.0
      %vm1164 = vcmp.ge.f32.partialorder %v908, 0.0
      %vm1165 = vcmp.ge.f32.partialorder %v909, 0.0
      %vm1166 = vcmp.ge.f32.partialorder %v910, 0.0
      %vm1167 = vcmp.ge.f32.partialorder %v911, 0.0
      %vm1168 = vcmp.ge.f32.partialorder %v912, 0.0
      %vm1169 = vcmp.ge.f32.partialorder %v913, 0.0
      %vm1170 = vcmp.ge.f32.partialorder %v914, 0.0
      %vm1171 = vcmp.ge.f32.partialorder %v915, 0.0
      %vm1172 = vcmp.ge.f32.partialorder %v916, 0.0
      %vm1173 = vcmp.ge.f32.partialorder %v917, 0.0
      %vm1174 = vcmp.ge.f32.partialorder %v918, 0.0
      %vm1175 = vcmp.ge.f32.partialorder %v919, 0.0
      %vm1176 = vcmp.ge.f32.partialorder %v920, 0.0
      %vm1177 = vcmp.ge.f32.partialorder %v921, 0.0
      %vm1178 = vcmp.ge.f32.partialorder %v922, 0.0
      %vm1179 = vcmp.ge.f32.partialorder %v923, 0.0
      %vm1180 = vcmp.ge.f32.partialorder %v924, 0.0
      %vm1181 = vcmp.ge.f32.partialorder %v925, 0.0
      %vm1182 = vcmp.ge.f32.partialorder %v926, 0.0
      %vm1183 = vcmp.ge.f32.partialorder %v927, 0.0
      %vm1184 = vcmp.ge.f32.partialorder %v928, 0.0
      %vm1185 = vcmp.ge.f32.partialorder %v929, 0.0
      %vm1186 = vcmp.ge.f32.partialorder %v930, 0.0
      %vm1187 = vcmp.ge.f32.partialorder %v931, 0.0
      %vm1188 = vcmp.ge.f32.partialorder %v932, 0.0
      %vm1189 = vcmp.ge.f32.partialorder %v933, 0.0
      %vm1190 = vcmp.ge.f32.partialorder %v934, 0.0
      %vm1191 = vcmp.ge.f32.partialorder %v935, 0.0
      %vm1192 = vcmp.ge.f32.partialorder %v936, 0.0
      %vm1193 = vcmp.ge.f32.partialorder %v937, 0.0
      %vm1194 = vcmp.ge.f32.partialorder %v938, 0.0
      %vm1195 = vcmp.ge.f32.partialorder %v939, 0.0
      %vm1196 = vcmp.ge.f32.partialorder %v940, 0.0
      %vm1197 = vcmp.ge.f32.partialorder %v941, 0.0
      %vm1198 = vcmp.ge.f32.partialorder %v942, 0.0
      %vm1199 = vcmp.ge.f32.partialorder %v943, 0.0
      %vm1200 = vcmp.ge.f32.partialorder %v944, 0.0
      %vm1201 = vcmp.ge.f32.partialorder %v945, 0.0
      %vm1202 = vcmp.ge.f32.partialorder %v946, 0.0
      %vm1203 = vcmp.ge.f32.partialorder %v947, 0.0
      %vm1204 = vcmp.ge.f32.partialorder %v948, 0.0
      %vm1205 = vcmp.ge.f32.partialorder %v949, 0.0
      %vm1206 = vcmp.ge.f32.partialorder %v950, 0.0
      %vm1207 = vcmp.ge.f32.partialorder %v951, 0.0
      %vm1208 = vcmp.ge.f32.partialorder %v952, 0.0
      %vm1209 = vcmp.ge.f32.partialorder %v953, 0.0
      %vm1210 = vcmp.ge.f32.partialorder %v954, 0.0
      %vm1211 = vcmp.ge.f32.partialorder %v955, 0.0
      %vm1212 = vcmp.ge.f32.partialorder %v956, 0.0
      %vm1213 = vcmp.ge.f32.partialorder %v957, 0.0
      %vm1214 = vcmp.ge.f32.partialorder %v958, 0.0
      %vm1215 = vcmp.ge.f32.partialorder %v959, 0.0
      %vm1216 = vcmp.ge.f32.partialorder %v960, 0.0
      %vm1217 = vcmp.ge.f32.partialorder %v961, 0.0
      %vm1218 = vcmp.ge.f32.partialorder %v962, 0.0
      %vm1219 = vcmp.ge.f32.partialorder %v963, 0.0
      %vm1220 = vcmp.ge.f32.partialorder %v964, 0.0
      %vm1221 = vcmp.ge.f32.partialorder %v965, 0.0
      %vm1222 = vcmp.ge.f32.partialorder %v966, 0.0
      %vm1223 = vcmp.ge.f32.partialorder %v967, 0.0
      %vm1224 = vcmp.ge.f32.partialorder %v968, 0.0
      %vm1225 = vcmp.ge.f32.partialorder %v969, 0.0
      %vm1226 = vcmp.ge.f32.partialorder %v970, 0.0
      %vm1227 = vcmp.ge.f32.partialorder %v971, 0.0
      %vm1228 = vcmp.ge.f32.partialorder %v972, 0.0
      %vm1229 = vcmp.ge.f32.partialorder %v973, 0.0
      %vm1230 = vcmp.ge.f32.partialorder %v974, 0.0
      %vm1231 = vcmp.ge.f32.partialorder %v975, 0.0
      %vm1232 = vcmp.ge.f32.partialorder %v976, 0.0
      %vm1233 = vcmp.ge.f32.partialorder %v977, 0.0
      %vm1234 = vcmp.ge.f32.partialorder %v978, 0.0
      %vm1235 = vcmp.ge.f32.partialorder %v979, 0.0
      %vm1236 = vcmp.ge.f32.partialorder %v980, 0.0
      %vm1237 = vcmp.ge.f32.partialorder %v981, 0.0
      %vm1238 = vcmp.ge.f32.partialorder %v982, 0.0
      %vm1239 = vcmp.ge.f32.partialorder %v983, 0.0
      %vm1240 = vcmp.ge.f32.partialorder %v984, 0.0
      %vm1241 = vcmp.ge.f32.partialorder %v985, 0.0
      %vm1242 = vcmp.ge.f32.partialorder %v986, 0.0
      %vm1243 = vcmp.ge.f32.partialorder %v987, 0.0
      %vm1244 = vcmp.ge.f32.partialorder %v988, 0.0
      %vm1245 = vcmp.ge.f32.partialorder %v989, 0.0
      %vm1246 = vcmp.ge.f32.partialorder %v990, 0.0
      %vm1247 = vcmp.ge.f32.partialorder %v991, 0.0
      %vm1248 = vcmp.ge.f32.partialorder %v992, 0.0
      %vm1249 = vcmp.ge.f32.partialorder %v993, 0.0
      %vm1250 = vcmp.ge.f32.partialorder %v994, 0.0
      %vm1251 = vcmp.ge.f32.partialorder %v995, 0.0
      %vm1252 = vcmp.ge.f32.partialorder %v996, 0.0
      %vm1253 = vcmp.ge.f32.partialorder %v997, 0.0
      %vm1254 = vcmp.ge.f32.partialorder %v998, 0.0
      %vm1255 = vcmp.ge.f32.partialorder %v999, 0.0
      %vm1256 = vcmp.ge.f32.partialorder %v1000, 0.0
      %vm1257 = vcmp.ge.f32.partialorder %v1001, 0.0
      %vm1258 = vcmp.ge.f32.partialorder %v1002, 0.0
      %vm1259 = vcmp.ge.f32.partialorder %v1003, 0.0
      %vm1260 = vcmp.ge.f32.partialorder %v1004, 0.0
      %vm1261 = vcmp.ge.f32.partialorder %v1005, 0.0
      %vm1262 = vcmp.ge.f32.partialorder %v1006, 0.0
      %vm1263 = vcmp.ge.f32.partialorder %v1007, 0.0
      %vm1264 = vcmp.ge.f32.partialorder %v1008, 0.0
      %vm1265 = vcmp.ge.f32.partialorder %v1009, 0.0
      %vm1266 = vcmp.ge.f32.partialorder %v1010, 0.0
      %vm1267 = vcmp.ge.f32.partialorder %v1011, 0.0
      %vm1268 = vcmp.ge.f32.partialorder %v1012, 0.0
      %vm1269 = vcmp.ge.f32.partialorder %v1013, 0.0
      %vm1270 = vcmp.ge.f32.partialorder %v1014, 0.0
      %vm1271 = vcmp.ge.f32.partialorder %v1015, 0.0
      %vm1272 = vcmp.ge.f32.partialorder %v1016, 0.0
      %vm1273 = vcmp.ge.f32.partialorder %v1017, 0.0
      %vm1274 = vcmp.ge.f32.partialorder %v1018, 0.0
      %vm1275 = vcmp.ge.f32.partialorder %v1019, 0.0
      %vm1276 = vcmp.ge.f32.partialorder %v1020, 0.0
      %vm1277 = vcmp.ge.f32.partialorder %v1021, 0.0
      %v1278 = vmul.f32 %v766, 0.1
      %v1279 = vmul.f32 %v767, 0.1
      %v1280 = vmul.f32 %v768, 0.1
      %v1281 = vmul.f32 %v769, 0.1
      %v1282 = vmul.f32 %v770, 0.1
      %v1283 = vmul.f32 %v771, 0.1
      %v1284 = vmul.f32 %v772, 0.1
      %v1285 = vmul.f32 %v773, 0.1
      %v1286 = vmul.f32 %v774, 0.1
      %v1287 = vmul.f32 %v775, 0.1
      %v1288 = vmul.f32 %v776, 0.1
      %v1289 = vmul.f32 %v777, 0.1
      %v1290 = vmul.f32 %v778, 0.1
      %v1291 = vmul.f32 %v779, 0.1
      %v1292 = vmul.f32 %v780, 0.1
      %v1293 = vmul.f32 %v781, 0.1
      %v1294 = vmul.f32 %v782, 0.1
      %v1295 = vmul.f32 %v783, 0.1
      %v1296 = vmul.f32 %v784, 0.1
      %v1297 = vmul.f32 %v785, 0.1
      %v1298 = vmul.f32 %v786, 0.1
      %v1299 = vmul.f32 %v787, 0.1
      %v1300 = vmul.f32 %v788, 0.1
      %v1301 = vmul.f32 %v789, 0.1
      %v1302 = vmul.f32 %v790, 0.1
      %v1303 = vmul.f32 %v791, 0.1
      %v1304 = vmul.f32 %v792, 0.1
      %v1305 = vmul.f32 %v793, 0.1
      %v1306 = vmul.f32 %v794, 0.1
      %v1307 = vmul.f32 %v795, 0.1
      %v1308 = vmul.f32 %v796, 0.1
      %v1309 = vmul.f32 %v797, 0.1
      %v1310 = vmul.f32 %v798, 0.1
      %v1311 = vmul.f32 %v799, 0.1
      %v1312 = vmul.f32 %v800, 0.1
      %v1313 = vmul.f32 %v801, 0.1
      %v1314 = vmul.f32 %v802, 0.1
      %v1315 = vmul.f32 %v803, 0.1
      %v1316 = vmul.f32 %v804, 0.1
      %v1317 = vmul.f32 %v805, 0.1
      %v1318 = vmul.f32 %v806, 0.1
      %v1319 = vmul.f32 %v807, 0.1
      %v1320 = vmul.f32 %v808, 0.1
      %v1321 = vmul.f32 %v809, 0.1
      %v1322 = vmul.f32 %v810, 0.1
      %v1323 = vmul.f32 %v811, 0.1
      %v1324 = vmul.f32 %v812, 0.1
      %v1325 = vmul.f32 %v813, 0.1
      %v1326 = vmul.f32 %v814, 0.1
      %v1327 = vmul.f32 %v815, 0.1
      %v1328 = vmul.f32 %v816, 0.1
      %v1329 = vmul.f32 %v817, 0.1
      %v1330 = vmul.f32 %v818, 0.1
      %v1331 = vmul.f32 %v819, 0.1
      %v1332 = vmul.f32 %v820, 0.1
      %v1333 = vmul.f32 %v821, 0.1
      %v1334 = vmul.f32 %v822, 0.1
      %v1335 = vmul.f32 %v823, 0.1
      %v1336 = vmul.f32 %v824, 0.1
      %v1337 = vmul.f32 %v825, 0.1
      %v1338 = vmul.f32 %v826, 0.1
      %v1339 = vmul.f32 %v827, 0.1
      %v1340 = vmul.f32 %v828, 0.1
      %v1341 = vmul.f32 %v829, 0.1
      %v1342 = vmul.f32 %v830, 0.1
      %v1343 = vmul.f32 %v831, 0.1
      %v1344 = vmul.f32 %v832, 0.1
      %v1345 = vmul.f32 %v833, 0.1
      %v1346 = vmul.f32 %v834, 0.1
      %v1347 = vmul.f32 %v835, 0.1
      %v1348 = vmul.f32 %v836, 0.1
      %v1349 = vmul.f32 %v837, 0.1
      %v1350 = vmul.f32 %v838, 0.1
      %v1351 = vmul.f32 %v839, 0.1
      %v1352 = vmul.f32 %v840, 0.1
      %v1353 = vmul.f32 %v841, 0.1
      %v1354 = vmul.f32 %v842, 0.1
      %v1355 = vmul.f32 %v843, 0.1
      %v1356 = vmul.f32 %v844, 0.1
      %v1357 = vmul.f32 %v845, 0.1
      %v1358 = vmul.f32 %v846, 0.1
      %v1359 = vmul.f32 %v847, 0.1
      %v1360 = vmul.f32 %v848, 0.1
      %v1361 = vmul.f32 %v849, 0.1
      %v1362 = vmul.f32 %v850, 0.1
      %v1363 = vmul.f32 %v851, 0.1
      %v1364 = vmul.f32 %v852, 0.1
      %v1365 = vmul.f32 %v853, 0.1
      %v1366 = vmul.f32 %v854, 0.1
      %v1367 = vmul.f32 %v855, 0.1
      %v1368 = vmul.f32 %v856, 0.1
      %v1369 = vmul.f32 %v857, 0.1
      %v1370 = vmul.f32 %v858, 0.1
      %v1371 = vmul.f32 %v859, 0.1
      %v1372 = vmul.f32 %v860, 0.1
      %v1373 = vmul.f32 %v861, 0.1
      %v1374 = vmul.f32 %v862, 0.1
      %v1375 = vmul.f32 %v863, 0.1
      %v1376 = vmul.f32 %v864, 0.1
      %v1377 = vmul.f32 %v865, 0.1
      %v1378 = vmul.f32 %v866, 0.1
      %v1379 = vmul.f32 %v867, 0.1
      %v1380 = vmul.f32 %v868, 0.1
      %v1381 = vmul.f32 %v869, 0.1
      %v1382 = vmul.f32 %v870, 0.1
      %v1383 = vmul.f32 %v871, 0.1
      %v1384 = vmul.f32 %v872, 0.1
      %v1385 = vmul.f32 %v873, 0.1
      %v1386 = vmul.f32 %v874, 0.1
      %v1387 = vmul.f32 %v875, 0.1
      %v1388 = vmul.f32 %v876, 0.1
      %v1389 = vmul.f32 %v877, 0.1
      %v1390 = vmul.f32 %v878, 0.1
      %v1391 = vmul.f32 %v879, 0.1
      %v1392 = vmul.f32 %v880, 0.1
      %v1393 = vmul.f32 %v881, 0.1
      %v1394 = vmul.f32 %v882, 0.1
      %v1395 = vmul.f32 %v883, 0.1
      %v1396 = vmul.f32 %v884, 0.1
      %v1397 = vmul.f32 %v885, 0.1
      %v1398 = vmul.f32 %v886, 0.1
      %v1399 = vmul.f32 %v887, 0.1
      %v1400 = vmul.f32 %v888, 0.1
      %v1401 = vmul.f32 %v889, 0.1
      %v1402 = vmul.f32 %v890, 0.1
      %v1403 = vmul.f32 %v891, 0.1
      %v1404 = vmul.f32 %v892, 0.1
      %v1405 = vmul.f32 %v893, 0.1
      %v1406 = vmul.f32 %v894, 0.1
      %v1407 = vmul.f32 %v895, 0.1
      %v1408 = vmul.f32 %v896, 0.1
      %v1409 = vmul.f32 %v897, 0.1
      %v1410 = vmul.f32 %v898, 0.1
      %v1411 = vmul.f32 %v899, 0.1
      %v1412 = vmul.f32 %v900, 0.1
      %v1413 = vmul.f32 %v901, 0.1
      %v1414 = vmul.f32 %v902, 0.1
      %v1415 = vmul.f32 %v903, 0.1
      %v1416 = vmul.f32 %v904, 0.1
      %v1417 = vmul.f32 %v905, 0.1
      %v1418 = vmul.f32 %v906, 0.1
      %v1419 = vmul.f32 %v907, 0.1
      %v1420 = vmul.f32 %v908, 0.1
      %v1421 = vmul.f32 %v909, 0.1
      %v1422 = vmul.f32 %v910, 0.1
      %v1423 = vmul.f32 %v911, 0.1
      %v1424 = vmul.f32 %v912, 0.1
      %v1425 = vmul.f32 %v913, 0.1
      %v1426 = vmul.f32 %v914, 0.1
      %v1427 = vmul.f32 %v915, 0.1
      %v1428 = vmul.f32 %v916, 0.1
      %v1429 = vmul.f32 %v917, 0.1
      %v1430 = vmul.f32 %v918, 0.1
      %v1431 = vmul.f32 %v919, 0.1
      %v1432 = vmul.f32 %v920, 0.1
      %v1433 = vmul.f32 %v921, 0.1
      %v1434 = vmul.f32 %v922, 0.1
      %v1435 = vmul.f32 %v923, 0.1
      %v1436 = vmul.f32 %v924, 0.1
      %v1437 = vmul.f32 %v925, 0.1
      %v1438 = vmul.f32 %v926, 0.1
      %v1439 = vmul.f32 %v927, 0.1
      %v1440 = vmul.f32 %v928, 0.1
      %v1441 = vmul.f32 %v929, 0.1
      %v1442 = vmul.f32 %v930, 0.1
      %v1443 = vmul.f32 %v931, 0.1
      %v1444 = vmul.f32 %v932, 0.1
      %v1445 = vmul.f32 %v933, 0.1
      %v1446 = vmul.f32 %v934, 0.1
      %v1447 = vmul.f32 %v935, 0.1
      %v1448 = vmul.f32 %v936, 0.1
      %v1449 = vmul.f32 %v937, 0.1
      %v1450 = vmul.f32 %v938, 0.1
      %v1451 = vmul.f32 %v939, 0.1
      %v1452 = vmul.f32 %v940, 0.1
      %v1453 = vmul.f32 %v941, 0.1
      %v1454 = vmul.f32 %v942, 0.1
      %v1455 = vmul.f32 %v943, 0.1
      %v1456 = vmul.f32 %v944, 0.1
      %v1457 = vmul.f32 %v945, 0.1
      %v1458 = vmul.f32 %v946, 0.1
      %v1459 = vmul.f32 %v947, 0.1
      %v1460 = vmul.f32 %v948, 0.1
      %v1461 = vmul.f32 %v949, 0.1
      %v1462 = vmul.f32 %v950, 0.1
      %v1463 = vmul.f32 %v951, 0.1
      %v1464 = vmul.f32 %v952, 0.1
      %v1465 = vmul.f32 %v953, 0.1
      %v1466 = vmul.f32 %v954, 0.1
      %v1467 = vmul.f32 %v955, 0.1
      %v1468 = vmul.f32 %v956, 0.1
      %v1469 = vmul.f32 %v957, 0.1
      %v1470 = vmul.f32 %v958, 0.1
      %v1471 = vmul.f32 %v959, 0.1
      %v1472 = vmul.f32 %v960, 0.1
      %v1473 = vmul.f32 %v961, 0.1
      %v1474 = vmul.f32 %v962, 0.1
      %v1475 = vmul.f32 %v963, 0.1
      %v1476 = vmul.f32 %v964, 0.1
      %v1477 = vmul.f32 %v965, 0.1
      %v1478 = vmul.f32 %v966, 0.1
      %v1479 = vmul.f32 %v967, 0.1
      %v1480 = vmul.f32 %v968, 0.1
      %v1481 = vmul.f32 %v969, 0.1
      %v1482 = vmul.f32 %v970, 0.1
      %v1483 = vmul.f32 %v971, 0.1
      %v1484 = vmul.f32 %v972, 0.1
      %v1485 = vmul.f32 %v973, 0.1
      %v1486 = vmul.f32 %v974, 0.1
      %v1487 = vmul.f32 %v975, 0.1
      %v1488 = vmul.f32 %v976, 0.1
      %v1489 = vmul.f32 %v977, 0.1
      %v1490 = vmul.f32 %v978, 0.1
      %v1491 = vmul.f32 %v979, 0.1
      %v1492 = vmul.f32 %v980, 0.1
      %v1493 = vmul.f32 %v981, 0.1
      %v1494 = vmul.f32 %v982, 0.1
      %v1495 = vmul.f32 %v983, 0.1
      %v1496 = vmul.f32 %v984, 0.1
      %v1497 = vmul.f32 %v985, 0.1
      %v1498 = vmul.f32 %v986, 0.1
      %v1499 = vmul.f32 %v987, 0.1
      %v1500 = vmul.f32 %v988, 0.1
      %v1501 = vmul.f32 %v989, 0.1
      %v1502 = vmul.f32 %v990, 0.1
      %v1503 = vmul.f32 %v991, 0.1
      %v1504 = vmul.f32 %v992, 0.1
      %v1505 = vmul.f32 %v993, 0.1
      %v1506 = vmul.f32 %v994, 0.1
      %v1507 = vmul.f32 %v995, 0.1
      %v1508 = vmul.f32 %v996, 0.1
      %v1509 = vmul.f32 %v997, 0.1
      %v1510 = vmul.f32 %v998, 0.1
      %v1511 = vmul.f32 %v999, 0.1
      %v1512 = vmul.f32 %v1000, 0.1
      %v1513 = vmul.f32 %v1001, 0.1
      %v1514 = vmul.f32 %v1002, 0.1
      %v1515 = vmul.f32 %v1003, 0.1
      %v1516 = vmul.f32 %v1004, 0.1
      %v1517 = vmul.f32 %v1005, 0.1
      %v1518 = vmul.f32 %v1006, 0.1
      %v1519 = vmul.f32 %v1007, 0.1
      %v1520 = vmul.f32 %v1008, 0.1
      %v1521 = vmul.f32 %v1009, 0.1
      %v1522 = vmul.f32 %v1010, 0.1
      %v1523 = vmul.f32 %v1011, 0.1
      %v1524 = vmul.f32 %v1012, 0.1
      %v1525 = vmul.f32 %v1013, 0.1
      %v1526 = vmul.f32 %v1014, 0.1
      %v1527 = vmul.f32 %v1015, 0.1
      %v1528 = vmul.f32 %v1016, 0.1
      %v1529 = vmul.f32 %v1017, 0.1
      %v1530 = vmul.f32 %v1018, 0.1
      %v1531 = vmul.f32 %v1019, 0.1
      %v1532 = vmul.f32 %v1020, 0.1
      %v1533 = vmul.f32 %v1021, 0.1
      %v1534 = vsel %vm1022, %v766, %v1278
      %v1535 = vsel %vm1023, %v767, %v1279
      %v1536 = vsel %vm1024, %v768, %v1280
      %v1537 = vsel %vm1025, %v769, %v1281
      %v1538 = vsel %vm1026, %v770, %v1282
      %v1539 = vsel %vm1027, %v771, %v1283
      %v1540 = vsel %vm1028, %v772, %v1284
      %v1541 = vsel %vm1029, %v773, %v1285
      %v1542 = vsel %vm1030, %v774, %v1286
      %v1543 = vsel %vm1031, %v775, %v1287
      %v1544 = vsel %vm1032, %v776, %v1288
      %v1545 = vsel %vm1033, %v777, %v1289
      %v1546 = vsel %vm1034, %v778, %v1290
      %v1547 = vsel %vm1035, %v779, %v1291
      %v1548 = vsel %vm1036, %v780, %v1292
      %v1549 = vsel %vm1037, %v781, %v1293
      %v1550 = vsel %vm1038, %v782, %v1294
      %v1551 = vsel %vm1039, %v783, %v1295
      %v1552 = vsel %vm1040, %v784, %v1296
      %v1553 = vsel %vm1041, %v785, %v1297
      %v1554 = vsel %vm1042, %v786, %v1298
      %v1555 = vsel %vm1043, %v787, %v1299
      %v1556 = vsel %vm1044, %v788, %v1300
      %v1557 = vsel %vm1045, %v789, %v1301
      %v1558 = vsel %vm1046, %v790, %v1302
      %v1559 = vsel %vm1047, %v791, %v1303
      %v1560 = vsel %vm1048, %v792, %v1304
      %v1561 = vsel %vm1049, %v793, %v1305
      %v1562 = vsel %vm1050, %v794, %v1306
      %v1563 = vsel %vm1051, %v795, %v1307
      %v1564 = vsel %vm1052, %v796, %v1308
      %v1565 = vsel %vm1053, %v797, %v1309
      %v1566 = vsel %vm1054, %v798, %v1310
      %v1567 = vsel %vm1055, %v799, %v1311
      %v1568 = vsel %vm1056, %v800, %v1312
      %v1569 = vsel %vm1057, %v801, %v1313
      %v1570 = vsel %vm1058, %v802, %v1314
      %v1571 = vsel %vm1059, %v803, %v1315
      %v1572 = vsel %vm1060, %v804, %v1316
      %v1573 = vsel %vm1061, %v805, %v1317
      %v1574 = vsel %vm1062, %v806, %v1318
      %v1575 = vsel %vm1063, %v807, %v1319
      %v1576 = vsel %vm1064, %v808, %v1320
      %v1577 = vsel %vm1065, %v809, %v1321
      %v1578 = vsel %vm1066, %v810, %v1322
      %v1579 = vsel %vm1067, %v811, %v1323
      %v1580 = vsel %vm1068, %v812, %v1324
      %v1581 = vsel %vm1069, %v813, %v1325
      %v1582 = vsel %vm1070, %v814, %v1326
      %v1583 = vsel %vm1071, %v815, %v1327
      %v1584 = vsel %vm1072, %v816, %v1328
      %v1585 = vsel %vm1073, %v817, %v1329
      %v1586 = vsel %vm1074, %v818, %v1330
      %v1587 = vsel %vm1075, %v819, %v1331
      %v1588 = vsel %vm1076, %v820, %v1332
      %v1589 = vsel %vm1077, %v821, %v1333
      %v1590 = vsel %vm1078, %v822, %v1334
      %v1591 = vsel %vm1079, %v823, %v1335
      %v1592 = vsel %vm1080, %v824, %v1336
      %v1593 = vsel %vm1081, %v825, %v1337
      %v1594 = vsel %vm1082, %v826, %v1338
      %v1595 = vsel %vm1083, %v827, %v1339
      %v1596 = vsel %vm1084, %v828, %v1340
      %v1597 = vsel %vm1085, %v829, %v1341
      %v1598 = vsel %vm1086, %v830, %v1342
      %v1599 = vsel %vm1087, %v831, %v1343
      %v1600 = vsel %vm1088, %v832, %v1344
      %v1601 = vsel %vm1089, %v833, %v1345
      %v1602 = vsel %vm1090, %v834, %v1346
      %v1603 = vsel %vm1091, %v835, %v1347
      %v1604 = vsel %vm1092, %v836, %v1348
      %v1605 = vsel %vm1093, %v837, %v1349
      %v1606 = vsel %vm1094, %v838, %v1350
      %v1607 = vsel %vm1095, %v839, %v1351
      %v1608 = vsel %vm1096, %v840, %v1352
      %v1609 = vsel %vm1097, %v841, %v1353
      %v1610 = vsel %vm1098, %v842, %v1354
      %v1611 = vsel %vm1099, %v843, %v1355
      %v1612 = vsel %vm1100, %v844, %v1356
      %v1613 = vsel %vm1101, %v845, %v1357
      %v1614 = vsel %vm1102, %v846, %v1358
      %v1615 = vsel %vm1103, %v847, %v1359
      %v1616 = vsel %vm1104, %v848, %v1360
      %v1617 = vsel %vm1105, %v849, %v1361
      %v1618 = vsel %vm1106, %v850, %v1362
      %v1619 = vsel %vm1107, %v851, %v1363
      %v1620 = vsel %vm1108, %v852, %v1364
      %v1621 = vsel %vm1109, %v853, %v1365
      %v1622 = vsel %vm1110, %v854, %v1366
      %v1623 = vsel %vm1111, %v855, %v1367
      %v1624 = vsel %vm1112, %v856, %v1368
      %v1625 = vsel %vm1113, %v857, %v1369
      %v1626 = vsel %vm1114, %v858, %v1370
      %v1627 = vsel %vm1115, %v859, %v1371
      %v1628 = vsel %vm1116, %v860, %v1372
      %v1629 = vsel %vm1117, %v861, %v1373
      %v1630 = vsel %vm1118, %v862, %v1374
      %v1631 = vsel %vm1119, %v863, %v1375
      %v1632 = vsel %vm1120, %v864, %v1376
      %v1633 = vsel %vm1121, %v865, %v1377
      %v1634 = vsel %vm1122, %v866, %v1378
      %v1635 = vsel %vm1123, %v867, %v1379
      %v1636 = vsel %vm1124, %v868, %v1380
      %v1637 = vsel %vm1125, %v869, %v1381
      %v1638 = vsel %vm1126, %v870, %v1382
      %v1639 = vsel %vm1127, %v871, %v1383
      %v1640 = vsel %vm1128, %v872, %v1384
      %v1641 = vsel %vm1129, %v873, %v1385
      %v1642 = vsel %vm1130, %v874, %v1386
      %v1643 = vsel %vm1131, %v875, %v1387
      %v1644 = vsel %vm1132, %v876, %v1388
      %v1645 = vsel %vm1133, %v877, %v1389
      %v1646 = vsel %vm1134, %v878, %v1390
      %v1647 = vsel %vm1135, %v879, %v1391
      %v1648 = vsel %vm1136, %v880, %v1392
      %v1649 = vsel %vm1137, %v881, %v1393
      %v1650 = vsel %vm1138, %v882, %v1394
      %v1651 = vsel %vm1139, %v883, %v1395
      %v1652 = vsel %vm1140, %v884, %v1396
      %v1653 = vsel %vm1141, %v885, %v1397
      %v1654 = vsel %vm1142, %v886, %v1398
      %v1655 = vsel %vm1143, %v887, %v1399
      %v1656 = vsel %vm1144, %v888, %v1400
      %v1657 = vsel %vm1145, %v889, %v1401
      %v1658 = vsel %vm1146, %v890, %v1402
      %v1659 = vsel %vm1147, %v891, %v1403
      %v1660 = vsel %vm1148, %v892, %v1404
      %v1661 = vsel %vm1149, %v893, %v1405
      %v1662 = vsel %vm1150, %v894, %v1406
      %v1663 = vsel %vm1151, %v895, %v1407
      %v1664 = vsel %vm1152, %v896, %v1408
      %v1665 = vsel %vm1153, %v897, %v1409
      %v1666 = vsel %vm1154, %v898, %v1410
      %v1667 = vsel %vm1155, %v899, %v1411
      %v1668 = vsel %vm1156, %v900, %v1412
      %v1669 = vsel %vm1157, %v901, %v1413
      %v1670 = vsel %vm1158, %v902, %v1414
      %v1671 = vsel %vm1159, %v903, %v1415
      %v1672 = vsel %vm1160, %v904, %v1416
      %v1673 = vsel %vm1161, %v905, %v1417
      %v1674 = vsel %vm1162, %v906, %v1418
      %v1675 = vsel %vm1163, %v907, %v1419
      %v1676 = vsel %vm1164, %v908, %v1420
      %v1677 = vsel %vm1165, %v909, %v1421
      %v1678 = vsel %vm1166, %v910, %v1422
      %v1679 = vsel %vm1167, %v911, %v1423
      %v1680 = vsel %vm1168, %v912, %v1424
      %v1681 = vsel %vm1169, %v913, %v1425
      %v1682 = vsel %vm1170, %v914, %v1426
      %v1683 = vsel %vm1171, %v915, %v1427
      %v1684 = vsel %vm1172, %v916, %v1428
      %v1685 = vsel %vm1173, %v917, %v1429
      %v1686 = vsel %vm1174, %v918, %v1430
      %v1687 = vsel %vm1175, %v919, %v1431
      %v1688 = vsel %vm1176, %v920, %v1432
      %v1689 = vsel %vm1177, %v921, %v1433
      %v1690 = vsel %vm1178, %v922, %v1434
      %v1691 = vsel %vm1179, %v923, %v1435
      %v1692 = vsel %vm1180, %v924, %v1436
      %v1693 = vsel %vm1181, %v925, %v1437
      %v1694 = vsel %vm1182, %v926, %v1438
      %v1695 = vsel %vm1183, %v927, %v1439
      %v1696 = vsel %vm1184, %v928, %v1440
      %v1697 = vsel %vm1185, %v929, %v1441
      %v1698 = vsel %vm1186, %v930, %v1442
      %v1699 = vsel %vm1187, %v931, %v1443
      %v1700 = vsel %vm1188, %v932, %v1444
      %v1701 = vsel %vm1189, %v933, %v1445
      %v1702 = vsel %vm1190, %v934, %v1446
      %v1703 = vsel %vm1191, %v935, %v1447
      %v1704 = vsel %vm1192, %v936, %v1448
      %v1705 = vsel %vm1193, %v937, %v1449
      %v1706 = vsel %vm1194, %v938, %v1450
      %v1707 = vsel %vm1195, %v939, %v1451
      %v1708 = vsel %vm1196, %v940, %v1452
      %v1709 = vsel %vm1197, %v941, %v1453
      %v1710 = vsel %vm1198, %v942, %v1454
      %v1711 = vsel %vm1199, %v943, %v1455
      %v1712 = vsel %vm1200, %v944, %v1456
      %v1713 = vsel %vm1201, %v945, %v1457
      %v1714 = vsel %vm1202, %v946, %v1458
      %v1715 = vsel %vm1203, %v947, %v1459
      %v1716 = vsel %vm1204, %v948, %v1460
      %v1717 = vsel %vm1205, %v949, %v1461
      %v1718 = vsel %vm1206, %v950, %v1462
      %v1719 = vsel %vm1207, %v951, %v1463
      %v1720 = vsel %vm1208, %v952, %v1464
      %v1721 = vsel %vm1209, %v953, %v1465
      %v1722 = vsel %vm1210, %v954, %v1466
      %v1723 = vsel %vm1211, %v955, %v1467
      %v1724 = vsel %vm1212, %v956, %v1468
      %v1725 = vsel %vm1213, %v957, %v1469
      %v1726 = vsel %vm1214, %v958, %v1470
      %v1727 = vsel %vm1215, %v959, %v1471
      %v1728 = vsel %vm1216, %v960, %v1472
      %v1729 = vsel %vm1217, %v961, %v1473
      %v1730 = vsel %vm1218, %v962, %v1474
      %v1731 = vsel %vm1219, %v963, %v1475
      %v1732 = vsel %vm1220, %v964, %v1476
      %v1733 = vsel %vm1221, %v965, %v1477
      %v1734 = vsel %vm1222, %v966, %v1478
      %v1735 = vsel %vm1223, %v967, %v1479
      %v1736 = vsel %vm1224, %v968, %v1480
      %v1737 = vsel %vm1225, %v969, %v1481
      %v1738 = vsel %vm1226, %v970, %v1482
      %v1739 = vsel %vm1227, %v971, %v1483
      %v1740 = vsel %vm1228, %v972, %v1484
      %v1741 = vsel %vm1229, %v973, %v1485
      %v1742 = vsel %vm1230, %v974, %v1486
      %v1743 = vsel %vm1231, %v975, %v1487
      %v1744 = vsel %vm1232, %v976, %v1488
      %v1745 = vsel %vm1233, %v977, %v1489
      %v1746 = vsel %vm1234, %v978, %v1490
      %v1747 = vsel %vm1235, %v979, %v1491
      %v1748 = vsel %vm1236, %v980, %v1492
      %v1749 = vsel %vm1237, %v981, %v1493
      %v1750 = vsel %vm1238, %v982, %v1494
      %v1751 = vsel %vm1239, %v983, %v1495
      %v1752 = vsel %vm1240, %v984, %v1496
      %v1753 = vsel %vm1241, %v985, %v1497
      %v1754 = vsel %vm1242, %v986, %v1498
      %v1755 = vsel %vm1243, %v987, %v1499
      %v1756 = vsel %vm1244, %v988, %v1500
      %v1757 = vsel %vm1245, %v989, %v1501
      %v1758 = vsel %vm1246, %v990, %v1502
      %v1759 = vsel %vm1247, %v991, %v1503
      %v1760 = vsel %vm1248, %v992, %v1504
      %v1761 = vsel %vm1249, %v993, %v1505
      %v1762 = vsel %vm1250, %v994, %v1506
      %v1763 = vsel %vm1251, %v995, %v1507
      %v1764 = vsel %vm1252, %v996, %v1508
      %v1765 = vsel %vm1253, %v997, %v1509
      %v1766 = vsel %vm1254, %v998, %v1510
      %v1767 = vsel %vm1255, %v999, %v1511
      %v1768 = vsel %vm1256, %v1000, %v1512
      %v1769 = vsel %vm1257, %v1001, %v1513
      %v1770 = vsel %vm1258, %v1002, %v1514
      %v1771 = vsel %vm1259, %v1003, %v1515
      %v1772 = vsel %vm1260, %v1004, %v1516
      %v1773 = vsel %vm1261, %v1005, %v1517
      %v1774 = vsel %vm1262, %v1006, %v1518
      %v1775 = vsel %vm1263, %v1007, %v1519
      %v1776 = vsel %vm1264, %v1008, %v1520
      %v1777 = vsel %vm1265, %v1009, %v1521
      %v1778 = vsel %vm1266, %v1010, %v1522
      %v1779 = vsel %vm1267, %v1011, %v1523
      %v1780 = vsel %vm1268, %v1012, %v1524
      %v1781 = vsel %vm1269, %v1013, %v1525
      %v1782 = vsel %vm1270, %v1014, %v1526
      %v1783 = vsel %vm1271, %v1015, %v1527
      %v1784 = vsel %vm1272, %v1016, %v1528
      %v1785 = vsel %vm1273, %v1017, %v1529
      %v1786 = vsel %vm1274, %v1018, %v1530
      %v1787 = vsel %vm1275, %v1019, %v1531
      %v1788 = vsel %vm1276, %v1020, %v1532
      %v1789 = vsel %vm1277, %v1021, %v1533
      %v1790 = vld [vmem:[%s3] sm:$0xff]
      %v1791 = vld [vmem:[%s3 + $0x8] sm:$0xff]
      %v1792 = vld [vmem:[%s3 + $0x10] sm:$0xff]
      %v1793 = vld [vmem:[%s3 + $0x18] sm:$0xff]
      %v1794 = vld [vmem:[%s3 + $0x20] sm:$0xff]
      %v1795 = vld [vmem:[%s3 + $0x28] sm:$0xff]
      %v1796 = vld [vmem:[%s3 + $0x30] sm:$0xff]
      %v1797 = vld [vmem:[%s3 + $0x38] sm:$0xff]
      %v1798 = vld [vmem:[%s3 + $0x40] sm:$0xff]
      %v1799 = vld [vmem:[%s3 + $0x48] sm:$0xff]
      %v1800 = vld [vmem:[%s3 + $0x50] sm:$0xff]
      %v1801 = vld [vmem:[%s3 + $0x58] sm:$0xff]
      %v1802 = vld [vmem:[%s3 + $0x60] sm:$0xff]
      %v1803 = vld [vmem:[%s3 + $0x68] sm:$0xff]
      %v1804 = vld [vmem:[%s3 + $0x70] sm:$0xff]
      %v1805 = vld [vmem:[%s3 + $0x78] sm:$0xff]
      %v1806 = vld [vmem:[%s3 + $0x80] sm:$0xff]
      %v1807 = vld [vmem:[%s3 + $0x88] sm:$0xff]
      %vm1808 = vcmask 130048
      %v1810 = vsel %vm1808, %v1535, 0
      %v1813 = vsel %vm1808, %v1537, 0
      %v1816 = vsel %vm1808, %v1539, 0
      %v1819 = vsel %vm1808, %v1541, 0
      %v1822 = vsel %vm1808, %v1543, 0
      %v1825 = vsel %vm1808, %v1545, 0
      %v1828 = vsel %vm1808, %v1547, 0
      %v1831 = vsel %vm1808, %v1549, 0
      %v1834 = vsel %vm1808, %v1551, 0
      %v1837 = vsel %vm1808, %v1553, 0
      %v1840 = vsel %vm1808, %v1555, 0
      %v1843 = vsel %vm1808, %v1557, 0
      %v1846 = vsel %vm1808, %v1559, 0
      %v1849 = vsel %vm1808, %v1561, 0
      %v1852 = vsel %vm1808, %v1563, 0
      %v1855 = vsel %vm1808, %v1565, 0
      %v1858 = vsel %vm1808, %v1567, 0
      %v1861 = vsel %vm1808, %v1569, 0
      %v1864 = vsel %vm1808, %v1571, 0
      %v1867 = vsel %vm1808, %v1573, 0
      %v1870 = vsel %vm1808, %v1575, 0
      %v1873 = vsel %vm1808, %v1577, 0
      %v1876 = vsel %vm1808, %v1579, 0
      %v1879 = vsel %vm1808, %v1581, 0
      %v1882 = vsel %vm1808, %v1583, 0
      %v1885 = vsel %vm1808, %v1585, 0
      %v1888 = vsel %vm1808, %v1587, 0
      %v1891 = vsel %vm1808, %v1589, 0
      %v1894 = vsel %vm1808, %v1591, 0
      %v1897 = vsel %vm1808, %v1593, 0
      %v1900 = vsel %vm1808, %v1595, 0
      %v1903 = vsel %vm1808, %v1597, 0
      %v1906 = vsel %vm1808, %v1599, 0
      %v1909 = vsel %vm1808, %v1601, 0
      %v1912 = vsel %vm1808, %v1603, 0
      %v1915 = vsel %vm1808, %v1605, 0
      %v1918 = vsel %vm1808, %v1607, 0
      %v1921 = vsel %vm1808, %v1609, 0
      %v1924 = vsel %vm1808, %v1611, 0
      %v1927 = vsel %vm1808, %v1613, 0
      %v1930 = vsel %vm1808, %v1615, 0
      %v1933 = vsel %vm1808, %v1617, 0
      %v1936 = vsel %vm1808, %v1619, 0
      %v1939 = vsel %vm1808, %v1621, 0
      %v1942 = vsel %vm1808, %v1623, 0
      %v1945 = vsel %vm1808, %v1625, 0
      %v1948 = vsel %vm1808, %v1627, 0
      %v1951 = vsel %vm1808, %v1629, 0
      %v1954 = vsel %vm1808, %v1631, 0
      %v1957 = vsel %vm1808, %v1633, 0
      %v1960 = vsel %vm1808, %v1635, 0
      %v1963 = vsel %vm1808, %v1637, 0
      %v1966 = vsel %vm1808, %v1639, 0
      %v1969 = vsel %vm1808, %v1641, 0
      %v1972 = vsel %vm1808, %v1643, 0
      %v1975 = vsel %vm1808, %v1645, 0
      %v1978 = vsel %vm1808, %v1647, 0
      %v1981 = vsel %vm1808, %v1649, 0
      %v1984 = vsel %vm1808, %v1651, 0
      %v1987 = vsel %vm1808, %v1653, 0
      %v1990 = vsel %vm1808, %v1655, 0
      %v1993 = vsel %vm1808, %v1657, 0
      %v1996 = vsel %vm1808, %v1659, 0
      %v1999 = vsel %vm1808, %v1661, 0
      %v2002 = vsel %vm1808, %v1663, 0
      %v2005 = vsel %vm1808, %v1665, 0
      %v2008 = vsel %vm1808, %v1667, 0
      %v2011 = vsel %vm1808, %v1669, 0
      %v2014 = vsel %vm1808, %v1671, 0
      %v2017 = vsel %vm1808, %v1673, 0
      %v2020 = vsel %vm1808, %v1675, 0
      %v2023 = vsel %vm1808, %v1677, 0
      %v2026 = vsel %vm1808, %v1679, 0
      %v2029 = vsel %vm1808, %v1681, 0
      %v2032 = vsel %vm1808, %v1683, 0
      %v2035 = vsel %vm1808, %v1685, 0
      %v2038 = vsel %vm1808, %v1687, 0
      %v2041 = vsel %vm1808, %v1689, 0
      %v2044 = vsel %vm1808, %v1691, 0
      %v2047 = vsel %vm1808, %v1693, 0
      %v2050 = vsel %vm1808, %v1695, 0
      %v2053 = vsel %vm1808, %v1697, 0
      %v2056 = vsel %vm1808, %v1699, 0
      %v2059 = vsel %vm1808, %v1701, 0
      %v2062 = vsel %vm1808, %v1703, 0
      %v2065 = vsel %vm1808, %v1705, 0
      %v2068 = vsel %vm1808, %v1707, 0
      %v2071 = vsel %vm1808, %v1709, 0
      %v2074 = vsel %vm1808, %v1711, 0
      %v2077 = vsel %vm1808, %v1713, 0
      %v2080 = vsel %vm1808, %v1715, 0
      %v2083 = vsel %vm1808, %v1717, 0
      %v2086 = vsel %vm1808, %v1719, 0
      %v2089 = vsel %vm1808, %v1721, 0
      %v2092 = vsel %vm1808, %v1723, 0
      %v2095 = vsel %vm1808, %v1725, 0
      %v2098 = vsel %vm1808, %v1727, 0
      %v2101 = vsel %vm1808, %v1729, 0
      %v2104 = vsel %vm1808, %v1731, 0
      %v2107 = vsel %vm1808, %v1733, 0
      %v2110 = vsel %vm1808, %v1735, 0
      %v2113 = vsel %vm1808, %v1737, 0
      %v2116 = vsel %vm1808, %v1739, 0
      %v2119 = vsel %vm1808, %v1741, 0
      %v2122 = vsel %vm1808, %v1743, 0
      %v2125 = vsel %vm1808, %v1745, 0
      %v2128 = vsel %vm1808, %v1747, 0
      %v2131 = vsel %vm1808, %v1749, 0
      %v2134 = vsel %vm1808, %v1751, 0
      %v2137 = vsel %vm1808, %v1753, 0
      %v2140 = vsel %vm1808, %v1755, 0
      %v2143 = vsel %vm1808, %v1757, 0
      %v2146 = vsel %vm1808, %v1759, 0
      %v2149 = vsel %vm1808, %v1761, 0
      %v2152 = vsel %vm1808, %v1763, 0
      %v2155 = vsel %vm1808, %v1765, 0
      %v2158 = vsel %vm1808, %v1767, 0
      %v2161 = vsel %vm1808, %v1769, 0
      %v2164 = vsel %vm1808, %v1771, 0
      %v2167 = vsel %vm1808, %v1773, 0
      %v2170 = vsel %vm1808, %v1775, 0
      %v2173 = vsel %vm1808, %v1777, 0
      %v2176 = vsel %vm1808, %v1779, 0
      %v2179 = vsel %vm1808, %v1781, 0
      %v2182 = vsel %vm1808, %v1783, 0
      %v2185 = vsel %vm1808, %v1785, 0
      %v2188 = vsel %vm1808, %v1787, 0
      %v2191 = vsel %vm1808, %v1789, 0
      %2193 = vmatpush.msra.mxu0 %v1805
      %2194 = vmatpush.msra.mxu0 %v1804
      %2195 = vmatpush.msra.mxu0 %v1803
      %2196 = vmatpush.msra.mxu0 %v1802
      %2197 = vmatpush.msra.mxu0 %v1801
      %2198 = vmatpush.msra.mxu0 %v1800
      %2199 = vmatpush.msra.mxu0 %v1799
      %2200 = vmatpush.msra.mxu0 %v1798
      %2201 = vmatpush.msra.mxu0 %v1797
      %2202 = vmatpush.msra.mxu0 %v1796
      %2203 = vmatpush.msra.mxu0 %v1795
      %2204 = vmatpush.msra.mxu0 %v1794
      %2205 = vmatpush.msra.mxu0 %v1793
      %2206 = vmatpush.msra.mxu0 %v1792
      %2207 = vmatpush.msra.mxu0 %v1791
      %2208 = vmatpush.msra.mxu0 %v1790
      %2209 = vmatmul.f32.gmra.mxu0 %v1534
      %v2210 = vpop.f32.mrf.mxu0
      %v2211 = vadd.f32 0.0, %v2210
      %2212 = vmatmul.f32.gmra.mxu0 %v1536
      %v2213 = vpop.f32.mrf.mxu0
      %v2214 = vadd.f32 0.0, %v2213
      %2215 = vmatmul.f32.gmra.mxu0 %v1538
      %v2216 = vpop.f32.mrf.mxu0
      %v2217 = vadd.f32 0.0, %v2216
      %2218 = vmatmul.f32.gmra.mxu0 %v1540
      %v2219 = vpop.f32.mrf.mxu0
      %v2220 = vadd.f32 0.0, %v2219
      %2221 = vmatmul.f32.gmra.mxu0 %v1542
      %v2222 = vpop.f32.mrf.mxu0
      %v2223 = vadd.f32 0.0, %v2222
      %2224 = vmatmul.f32.gmra.mxu0 %v1544
      %v2225 = vpop.f32.mrf.mxu0
      %v2226 = vadd.f32 0.0, %v2225
      %2227 = vmatmul.f32.gmra.mxu0 %v1546
      %v2228 = vpop.f32.mrf.mxu0
      %v2229 = vadd.f32 0.0, %v2228
      %2230 = vmatmul.f32.gmra.mxu0 %v1548
      %v2231 = vpop.f32.mrf.mxu0
      %v2232 = vadd.f32 0.0, %v2231
      %2233 = vmatmul.f32.gmra.mxu0 %v1550
      %v2234 = vpop.f32.mrf.mxu0
      %v2235 = vadd.f32 0.0, %v2234
      %2236 = vmatmul.f32.gmra.mxu0 %v1552
      %v2237 = vpop.f32.mrf.mxu0
      %v2238 = vadd.f32 0.0, %v2237
      %2239 = vmatmul.f32.gmra.mxu0 %v1554
      %v2240 = vpop.f32.mrf.mxu0
      %v2241 = vadd.f32 0.0, %v2240
      %2242 = vmatmul.f32.gmra.mxu0 %v1556
      %v2243 = vpop.f32.mrf.mxu0
      %v2244 = vadd.f32 0.0, %v2243
      %2245 = vmatmul.f32.gmra.mxu0 %v1558
      %v2246 = vpop.f32.mrf.mxu0
      %v2247 = vadd.f32 0.0, %v2246
      %2248 = vmatmul.f32.gmra.mxu0 %v1560
      %v2249 = vpop.f32.mrf.mxu0
      %v2250 = vadd.f32 0.0, %v2249
      %2251 = vmatmul.f32.gmra.mxu0 %v1562
      %v2252 = vpop.f32.mrf.mxu0
      %v2253 = vadd.f32 0.0, %v2252
      %2254 = vmatmul.f32.gmra.mxu0 %v1564
      %v2255 = vpop.f32.mrf.mxu0
      %v2256 = vadd.f32 0.0, %v2255
      %2257 = vmatmul.f32.gmra.mxu0 %v1566
      %v2258 = vpop.f32.mrf.mxu0
      %v2259 = vadd.f32 0.0, %v2258
      %2260 = vmatmul.f32.gmra.mxu0 %v1568
      %v2261 = vpop.f32.mrf.mxu0
      %v2262 = vadd.f32 0.0, %v2261
      %2263 = vmatmul.f32.gmra.mxu0 %v1570
      %v2264 = vpop.f32.mrf.mxu0
      %v2265 = vadd.f32 0.0, %v2264
      %2266 = vmatmul.f32.gmra.mxu0 %v1572
      %v2267 = vpop.f32.mrf.mxu0
      %v2268 = vadd.f32 0.0, %v2267
      %2269 = vmatmul.f32.gmra.mxu0 %v1574
      %v2270 = vpop.f32.mrf.mxu0
      %v2271 = vadd.f32 0.0, %v2270
      %2272 = vmatmul.f32.gmra.mxu0 %v1576
      %v2273 = vpop.f32.mrf.mxu0
      %v2274 = vadd.f32 0.0, %v2273
      %2275 = vmatmul.f32.gmra.mxu0 %v1578
      %v2276 = vpop.f32.mrf.mxu0
      %v2277 = vadd.f32 0.0, %v2276
      %2278 = vmatmul.f32.gmra.mxu0 %v1580
      %v2279 = vpop.f32.mrf.mxu0
      %v2280 = vadd.f32 0.0, %v2279
      %2281 = vmatmul.f32.gmra.mxu0 %v1582
      %v2282 = vpop.f32.mrf.mxu0
      %v2283 = vadd.f32 0.0, %v2282
      %2284 = vmatmul.f32.gmra.mxu0 %v1584
      %v2285 = vpop.f32.mrf.mxu0
      %v2286 = vadd.f32 0.0, %v2285
      %2287 = vmatmul.f32.gmra.mxu0 %v1586
      %v2288 = vpop.f32.mrf.mxu0
      %v2289 = vadd.f32 0.0, %v2288
      %2290 = vmatmul.f32.gmra.mxu0 %v1588
      %v2291 = vpop.f32.mrf.mxu0
      %v2292 = vadd.f32 0.0, %v2291
      %2293 = vmatmul.f32.gmra.mxu0 %v1590
      %v2294 = vpop.f32.mrf.mxu0
      %v2295 = vadd.f32 0.0, %v2294
      %2296 = vmatmul.f32.gmra.mxu0 %v1592
      %v2297 = vpop.f32.mrf.mxu0
      %v2298 = vadd.f32 0.0, %v2297
      %2299 = vmatmul.f32.gmra.mxu0 %v1594
      %v2300 = vpop.f32.mrf.mxu0
      %v2301 = vadd.f32 0.0, %v2300
      %2302 = vmatmul.f32.gmra.mxu0 %v1596
      %v2303 = vpop.f32.mrf.mxu0
      %v2304 = vadd.f32 0.0, %v2303
      %2305 = vmatmul.f32.gmra.mxu0 %v1598
      %v2306 = vpop.f32.mrf.mxu0
      %v2307 = vadd.f32 0.0, %v2306
      %2308 = vmatmul.f32.gmra.mxu0 %v1600
      %v2309 = vpop.f32.mrf.mxu0
      %v2310 = vadd.f32 0.0, %v2309
      %2311 = vmatmul.f32.gmra.mxu0 %v1602
      %v2312 = vpop.f32.mrf.mxu0
      %v2313 = vadd.f32 0.0, %v2312
      %2314 = vmatmul.f32.gmra.mxu0 %v1604
      %v2315 = vpop.f32.mrf.mxu0
      %v2316 = vadd.f32 0.0, %v2315
      %2317 = vmatmul.f32.gmra.mxu0 %v1606
      %v2318 = vpop.f32.mrf.mxu0
      %v2319 = vadd.f32 0.0, %v2318
      %2320 = vmatmul.f32.gmra.mxu0 %v1608
      %v2321 = vpop.f32.mrf.mxu0
      %v2322 = vadd.f32 0.0, %v2321
      %2323 = vmatmul.f32.gmra.mxu0 %v1610
      %v2324 = vpop.f32.mrf.mxu0
      %v2325 = vadd.f32 0.0, %v2324
      %2326 = vmatmul.f32.gmra.mxu0 %v1612
      %v2327 = vpop.f32.mrf.mxu0
      %v2328 = vadd.f32 0.0, %v2327
      %2329 = vmatmul.f32.gmra.mxu0 %v1614
      %v2330 = vpop.f32.mrf.mxu0
      %v2331 = vadd.f32 0.0, %v2330
      %2332 = vmatmul.f32.gmra.mxu0 %v1616
      %v2333 = vpop.f32.mrf.mxu0
      %v2334 = vadd.f32 0.0, %v2333
      %2335 = vmatmul.f32.gmra.mxu0 %v1618
      %v2336 = vpop.f32.mrf.mxu0
      %v2337 = vadd.f32 0.0, %v2336
      %2338 = vmatmul.f32.gmra.mxu0 %v1620
      %v2339 = vpop.f32.mrf.mxu0
      %v2340 = vadd.f32 0.0, %v2339
      %2341 = vmatmul.f32.gmra.mxu0 %v1622
      %v2342 = vpop.f32.mrf.mxu0
      %v2343 = vadd.f32 0.0, %v2342
      %2344 = vmatmul.f32.gmra.mxu0 %v1624
      %v2345 = vpop.f32.mrf.mxu0
      %v2346 = vadd.f32 0.0, %v2345
      %2347 = vmatmul.f32.gmra.mxu0 %v1626
      %v2348 = vpop.f32.mrf.mxu0
      %v2349 = vadd.f32 0.0, %v2348
      %2350 = vmatmul.f32.gmra.mxu0 %v1628
      %v2351 = vpop.f32.mrf.mxu0
      %v2352 = vadd.f32 0.0, %v2351
      %2353 = vmatmul.f32.gmra.mxu0 %v1630
      %v2354 = vpop.f32.mrf.mxu0
      %v2355 = vadd.f32 0.0, %v2354
      %2356 = vmatmul.f32.gmra.mxu0 %v1632
      %v2357 = vpop.f32.mrf.mxu0
      %v2358 = vadd.f32 0.0, %v2357
      %2359 = vmatmul.f32.gmra.mxu0 %v1634
      %v2360 = vpop.f32.mrf.mxu0
      %v2361 = vadd.f32 0.0, %v2360
      %2362 = vmatmul.f32.gmra.mxu0 %v1636
      %v2363 = vpop.f32.mrf.mxu0
      %v2364 = vadd.f32 0.0, %v2363
      %2365 = vmatmul.f32.gmra.mxu0 %v1638
      %v2366 = vpop.f32.mrf.mxu0
      %v2367 = vadd.f32 0.0, %v2366
      %2368 = vmatmul.f32.gmra.mxu0 %v1640
      %v2369 = vpop.f32.mrf.mxu0
      %v2370 = vadd.f32 0.0, %v2369
      %2371 = vmatmul.f32.gmra.mxu0 %v1642
      %v2372 = vpop.f32.mrf.mxu0
      %v2373 = vadd.f32 0.0, %v2372
      %2374 = vmatmul.f32.gmra.mxu0 %v1644
      %v2375 = vpop.f32.mrf.mxu0
      %v2376 = vadd.f32 0.0, %v2375
      %2377 = vmatmul.f32.gmra.mxu0 %v1646
      %v2378 = vpop.f32.mrf.mxu0
      %v2379 = vadd.f32 0.0, %v2378
      %2380 = vmatmul.f32.gmra.mxu0 %v1648
      %v2381 = vpop.f32.mrf.mxu0
      %v2382 = vadd.f32 0.0, %v2381
      %2383 = vmatmul.f32.gmra.mxu0 %v1650
      %v2384 = vpop.f32.mrf.mxu0
      %v2385 = vadd.f32 0.0, %v2384
      %2386 = vmatmul.f32.gmra.mxu0 %v1652
      %v2387 = vpop.f32.mrf.mxu0
      %v2388 = vadd.f32 0.0, %v2387
      %2389 = vmatmul.f32.gmra.mxu0 %v1654
      %v2390 = vpop.f32.mrf.mxu0
      %v2391 = vadd.f32 0.0, %v2390
      %2392 = vmatmul.f32.gmra.mxu0 %v1656
      %v2393 = vpop.f32.mrf.mxu0
      %v2394 = vadd.f32 0.0, %v2393
      %2395 = vmatmul.f32.gmra.mxu0 %v1658
      %v2396 = vpop.f32.mrf.mxu0
      %v2397 = vadd.f32 0.0, %v2396
      %2398 = vmatmul.f32.gmra.mxu0 %v1660
      %v2399 = vpop.f32.mrf.mxu0
      %v2400 = vadd.f32 0.0, %v2399
      %2401 = vmatmul.f32.gmra.mxu0 %v1662
      %v2402 = vpop.f32.mrf.mxu0
      %v2403 = vadd.f32 0.0, %v2402
      %2404 = vmatmul.f32.gmra.mxu0 %v1664
      %v2405 = vpop.f32.mrf.mxu0
      %v2406 = vadd.f32 0.0, %v2405
      %2407 = vmatmul.f32.gmra.mxu0 %v1666
      %v2408 = vpop.f32.mrf.mxu0
      %v2409 = vadd.f32 0.0, %v2408
      %2410 = vmatmul.f32.gmra.mxu0 %v1668
      %v2411 = vpop.f32.mrf.mxu0
      %v2412 = vadd.f32 0.0, %v2411
      %2413 = vmatmul.f32.gmra.mxu0 %v1670
      %v2414 = vpop.f32.mrf.mxu0
      %v2415 = vadd.f32 0.0, %v2414
      %2416 = vmatmul.f32.gmra.mxu0 %v1672
      %v2417 = vpop.f32.mrf.mxu0
      %v2418 = vadd.f32 0.0, %v2417
      %2419 = vmatmul.f32.gmra.mxu0 %v1674
      %v2420 = vpop.f32.mrf.mxu0
      %v2421 = vadd.f32 0.0, %v2420
      %2422 = vmatmul.f32.gmra.mxu0 %v1676
      %v2423 = vpop.f32.mrf.mxu0
      %v2424 = vadd.f32 0.0, %v2423
      %2425 = vmatmul.f32.gmra.mxu0 %v1678
      %v2426 = vpop.f32.mrf.mxu0
      %v2427 = vadd.f32 0.0, %v2426
      %2428 = vmatmul.f32.gmra.mxu0 %v1680
      %v2429 = vpop.f32.mrf.mxu0
      %v2430 = vadd.f32 0.0, %v2429
      %2431 = vmatmul.f32.gmra.mxu0 %v1682
      %v2432 = vpop.f32.mrf.mxu0
      %v2433 = vadd.f32 0.0, %v2432
      %2434 = vmatmul.f32.gmra.mxu0 %v1684
      %v2435 = vpop.f32.mrf.mxu0
      %v2436 = vadd.f32 0.0, %v2435
      %2437 = vmatmul.f32.gmra.mxu0 %v1686
      %v2438 = vpop.f32.mrf.mxu0
      %v2439 = vadd.f32 0.0, %v2438
      %2440 = vmatmul.f32.gmra.mxu0 %v1688
      %v2441 = vpop.f32.mrf.mxu0
      %v2442 = vadd.f32 0.0, %v2441
      %2443 = vmatmul.f32.gmra.mxu0 %v1690
      %v2444 = vpop.f32.mrf.mxu0
      %v2445 = vadd.f32 0.0, %v2444
      %2446 = vmatmul.f32.gmra.mxu0 %v1692
      %v2447 = vpop.f32.mrf.mxu0
      %v2448 = vadd.f32 0.0, %v2447
      %2449 = vmatmul.f32.gmra.mxu0 %v1694
      %v2450 = vpop.f32.mrf.mxu0
      %v2451 = vadd.f32 0.0, %v2450
      %2452 = vmatmul.f32.gmra.mxu0 %v1696
      %v2453 = vpop.f32.mrf.mxu0
      %v2454 = vadd.f32 0.0, %v2453
      %2455 = vmatmul.f32.gmra.mxu0 %v1698
      %v2456 = vpop.f32.mrf.mxu0
      %v2457 = vadd.f32 0.0, %v2456
      %2458 = vmatmul.f32.gmra.mxu0 %v1700
      %v2459 = vpop.f32.mrf.mxu0
      %v2460 = vadd.f32 0.0, %v2459
      %2461 = vmatmul.f32.gmra.mxu0 %v1702
      %v2462 = vpop.f32.mrf.mxu0
      %v2463 = vadd.f32 0.0, %v2462
      %2464 = vmatmul.f32.gmra.mxu0 %v1704
      %v2465 = vpop.f32.mrf.mxu0
      %v2466 = vadd.f32 0.0, %v2465
      %2467 = vmatmul.f32.gmra.mxu0 %v1706
      %v2468 = vpop.f32.mrf.mxu0
      %v2469 = vadd.f32 0.0, %v2468
      %2470 = vmatmul.f32.gmra.mxu0 %v1708
      %v2471 = vpop.f32.mrf.mxu0
      %v2472 = vadd.f32 0.0, %v2471
      %2473 = vmatmul.f32.gmra.mxu0 %v1710
      %v2474 = vpop.f32.mrf.mxu0
      %v2475 = vadd.f32 0.0, %v2474
      %2476 = vmatmul.f32.gmra.mxu0 %v1712
      %v2477 = vpop.f32.mrf.mxu0
      %v2478 = vadd.f32 0.0, %v2477
      %2479 = vmatmul.f32.gmra.mxu0 %v1714
      %v2480 = vpop.f32.mrf.mxu0
      %v2481 = vadd.f32 0.0, %v2480
      %2482 = vmatmul.f32.gmra.mxu0 %v1716
      %v2483 = vpop.f32.mrf.mxu0
      %v2484 = vadd.f32 0.0, %v2483
      %2485 = vmatmul.f32.gmra.mxu0 %v1718
      %v2486 = vpop.f32.mrf.mxu0
      %v2487 = vadd.f32 0.0, %v2486
      %2488 = vmatmul.f32.gmra.mxu0 %v1720
      %v2489 = vpop.f32.mrf.mxu0
      %v2490 = vadd.f32 0.0, %v2489
      %2491 = vmatmul.f32.gmra.mxu0 %v1722
      %v2492 = vpop.f32.mrf.mxu0
      %v2493 = vadd.f32 0.0, %v2492
      %2494 = vmatmul.f32.gmra.mxu0 %v1724
      %v2495 = vpop.f32.mrf.mxu0
      %v2496 = vadd.f32 0.0, %v2495
      %2497 = vmatmul.f32.gmra.mxu0 %v1726
      %v2498 = vpop.f32.mrf.mxu0
      %v2499 = vadd.f32 0.0, %v2498
      %2500 = vmatmul.f32.gmra.mxu0 %v1728
      %v2501 = vpop.f32.mrf.mxu0
      %v2502 = vadd.f32 0.0, %v2501
      %2503 = vmatmul.f32.gmra.mxu0 %v1730
      %v2504 = vpop.f32.mrf.mxu0
      %v2505 = vadd.f32 0.0, %v2504
      %2506 = vmatmul.f32.gmra.mxu0 %v1732
      %v2507 = vpop.f32.mrf.mxu0
      %v2508 = vadd.f32 0.0, %v2507
      %2509 = vmatmul.f32.gmra.mxu0 %v1734
      %v2510 = vpop.f32.mrf.mxu0
      %v2511 = vadd.f32 0.0, %v2510
      %2512 = vmatmul.f32.gmra.mxu0 %v1736
      %v2513 = vpop.f32.mrf.mxu0
      %v2514 = vadd.f32 0.0, %v2513
      %2515 = vmatmul.f32.gmra.mxu0 %v1738
      %v2516 = vpop.f32.mrf.mxu0
      %v2517 = vadd.f32 0.0, %v2516
      %2518 = vmatmul.f32.gmra.mxu0 %v1740
      %v2519 = vpop.f32.mrf.mxu0
      %v2520 = vadd.f32 0.0, %v2519
      %2521 = vmatmul.f32.gmra.mxu0 %v1742
      %v2522 = vpop.f32.mrf.mxu0
      %v2523 = vadd.f32 0.0, %v2522
      %2524 = vmatmul.f32.gmra.mxu0 %v1744
      %v2525 = vpop.f32.mrf.mxu0
      %v2526 = vadd.f32 0.0, %v2525
      %2527 = vmatmul.f32.gmra.mxu0 %v1746
      %v2528 = vpop.f32.mrf.mxu0
      %v2529 = vadd.f32 0.0, %v2528
      %2530 = vmatmul.f32.gmra.mxu0 %v1748
      %v2531 = vpop.f32.mrf.mxu0
      %v2532 = vadd.f32 0.0, %v2531
      %2533 = vmatmul.f32.gmra.mxu0 %v1750
      %v2534 = vpop.f32.mrf.mxu0
      %v2535 = vadd.f32 0.0, %v2534
      %2536 = vmatmul.f32.gmra.mxu0 %v1752
      %v2537 = vpop.f32.mrf.mxu0
      %v2538 = vadd.f32 0.0, %v2537
      %2539 = vmatmul.f32.gmra.mxu0 %v1754
      %v2540 = vpop.f32.mrf.mxu0
      %v2541 = vadd.f32 0.0, %v2540
      %2542 = vmatmul.f32.gmra.mxu0 %v1756
      %v2543 = vpop.f32.mrf.mxu0
      %v2544 = vadd.f32 0.0, %v2543
      %2545 = vmatmul.f32.gmra.mxu0 %v1758
      %v2546 = vpop.f32.mrf.mxu0
      %v2547 = vadd.f32 0.0, %v2546
      %2548 = vmatmul.f32.gmra.mxu0 %v1760
      %v2549 = vpop.f32.mrf.mxu0
      %v2550 = vadd.f32 0.0, %v2549
      %2551 = vmatmul.f32.gmra.mxu0 %v1762
      %v2552 = vpop.f32.mrf.mxu0
      %v2553 = vadd.f32 0.0, %v2552
      %2554 = vmatmul.f32.gmra.mxu0 %v1764
      %v2555 = vpop.f32.mrf.mxu0
      %v2556 = vadd.f32 0.0, %v2555
      %2557 = vmatmul.f32.gmra.mxu0 %v1766
      %v2558 = vpop.f32.mrf.mxu0
      %v2559 = vadd.f32 0.0, %v2558
      %2560 = vmatmul.f32.gmra.mxu0 %v1768
      %v2561 = vpop.f32.mrf.mxu0
      %v2562 = vadd.f32 0.0, %v2561
      %2563 = vmatmul.f32.gmra.mxu0 %v1770
      %v2564 = vpop.f32.mrf.mxu0
      %v2565 = vadd.f32 0.0, %v2564
      %2566 = vmatmul.f32.gmra.mxu0 %v1772
      %v2567 = vpop.f32.mrf.mxu0
      %v2568 = vadd.f32 0.0, %v2567
      %2569 = vmatmul.f32.gmra.mxu0 %v1774
      %v2570 = vpop.f32.mrf.mxu0
      %v2571 = vadd.f32 0.0, %v2570
      %2572 = vmatmul.f32.gmra.mxu0 %v1776
      %v2573 = vpop.f32.mrf.mxu0
      %v2574 = vadd.f32 0.0, %v2573
      %2575 = vmatmul.f32.gmra.mxu0 %v1778
      %v2576 = vpop.f32.mrf.mxu0
      %v2577 = vadd.f32 0.0, %v2576
      %2578 = vmatmul.f32.gmra.mxu0 %v1780
      %v2579 = vpop.f32.mrf.mxu0
      %v2580 = vadd.f32 0.0, %v2579
      %2581 = vmatmul.f32.gmra.mxu0 %v1782
      %v2582 = vpop.f32.mrf.mxu0
      %v2583 = vadd.f32 0.0, %v2582
      %2584 = vmatmul.f32.gmra.mxu0 %v1784
      %v2585 = vpop.f32.mrf.mxu0
      %v2586 = vadd.f32 0.0, %v2585
      %2587 = vmatmul.f32.gmra.mxu0 %v1786
      %v2588 = vpop.f32.mrf.mxu0
      %v2589 = vadd.f32 0.0, %v2588
      %2590 = vmatmul.f32.gmra.mxu0 %v1788
      %v2591 = vpop.f32.mrf.mxu0
      %v2592 = vadd.f32 0.0, %v2591
      %2593 = vdwg.mxu0
      %2594 = vmatpush.msra.mxu0 0.0
      %2595 = vmatpush.msra.mxu0 0.0
      %2596 = vmatpush.msra.mxu0 0.0
      %2597 = vmatpush.msra.mxu0 0.0
      %2598 = vmatpush.msra.mxu0 0.0
      %2599 = vmatpush.msra.mxu0 0.0
      %2600 = vmatpush.msra.mxu0 0.0
      %2601 = vmatpush.msra.mxu0 0.0
      %2602 = vmatpush.msra.mxu0 0.0
      %2603 = vmatpush.msra.mxu0 0.0
      %2604 = vmatpush.msra.mxu0 0.0
      %2605 = vmatpush.msra.mxu0 0.0
      %2606 = vmatpush.msra.mxu0 0.0
      %2607 = vmatpush.msra.mxu0 0.0
      %2608 = vmatpush.msra.mxu0 %v1807
      %2609 = vmatpush.msra.mxu0 %v1806
      %2610 = vmatmul.f32.gmra.mxu0 %v1810
      %v2611 = vpop.f32.mrf.mxu0
      %v2612 = vadd.f32 %v2211, %v2611
      %2613 = vmatmul.f32.gmra.mxu0 %v1813
      %v2614 = vpop.f32.mrf.mxu0
      %v2615 = vadd.f32 %v2214, %v2614
      %2616 = vmatmul.f32.gmra.mxu0 %v1816
      %v2617 = vpop.f32.mrf.mxu0
      %v2618 = vadd.f32 %v2217, %v2617
      %2619 = vmatmul.f32.gmra.mxu0 %v1819
      %v2620 = vpop.f32.mrf.mxu0
      %v2621 = vadd.f32 %v2220, %v2620
      %2622 = vmatmul.f32.gmra.mxu0 %v1822
      %v2623 = vpop.f32.mrf.mxu0
      %v2624 = vadd.f32 %v2223, %v2623
      %2625 = vmatmul.f32.gmra.mxu0 %v1825
      %v2626 = vpop.f32.mrf.mxu0
      %v2627 = vadd.f32 %v2226, %v2626
      %2628 = vmatmul.f32.gmra.mxu0 %v1828
      %v2629 = vpop.f32.mrf.mxu0
      %v2630 = vadd.f32 %v2229, %v2629
      %2631 = vmatmul.f32.gmra.mxu0 %v1831
      %v2632 = vpop.f32.mrf.mxu0
      %v2633 = vadd.f32 %v2232, %v2632
      %2634 = vmatmul.f32.gmra.mxu0 %v1834
      %v2635 = vpop.f32.mrf.mxu0
      %v2636 = vadd.f32 %v2235, %v2635
      %2637 = vmatmul.f32.gmra.mxu0 %v1837
      %v2638 = vpop.f32.mrf.mxu0
      %v2639 = vadd.f32 %v2238, %v2638
      %2640 = vmatmul.f32.gmra.mxu0 %v1840
      %v2641 = vpop.f32.mrf.mxu0
      %v2642 = vadd.f32 %v2241, %v2641
      %2643 = vmatmul.f32.gmra.mxu0 %v1843
      %v2644 = vpop.f32.mrf.mxu0
      %v2645 = vadd.f32 %v2244, %v2644
      %2646 = vmatmul.f32.gmra.mxu0 %v1846
      %v2647 = vpop.f32.mrf.mxu0
      %v2648 = vadd.f32 %v2247, %v2647
      %2649 = vmatmul.f32.gmra.mxu0 %v1849
      %v2650 = vpop.f32.mrf.mxu0
      %v2651 = vadd.f32 %v2250, %v2650
      %2652 = vmatmul.f32.gmra.mxu0 %v1852
      %v2653 = vpop.f32.mrf.mxu0
      %v2654 = vadd.f32 %v2253, %v2653
      %2655 = vmatmul.f32.gmra.mxu0 %v1855
      %v2656 = vpop.f32.mrf.mxu0
      %v2657 = vadd.f32 %v2256, %v2656
      %2658 = vmatmul.f32.gmra.mxu0 %v1858
      %v2659 = vpop.f32.mrf.mxu0
      %v2660 = vadd.f32 %v2259, %v2659
      %2661 = vmatmul.f32.gmra.mxu0 %v1861
      %v2662 = vpop.f32.mrf.mxu0
      %v2663 = vadd.f32 %v2262, %v2662
      %2664 = vmatmul.f32.gmra.mxu0 %v1864
      %v2665 = vpop.f32.mrf.mxu0
      %v2666 = vadd.f32 %v2265, %v2665
      %2667 = vmatmul.f32.gmra.mxu0 %v1867
      %v2668 = vpop.f32.mrf.mxu0
      %v2669 = vadd.f32 %v2268, %v2668
      %2670 = vmatmul.f32.gmra.mxu0 %v1870
      %v2671 = vpop.f32.mrf.mxu0
      %v2672 = vadd.f32 %v2271, %v2671
      %2673 = vmatmul.f32.gmra.mxu0 %v1873
      %v2674 = vpop.f32.mrf.mxu0
      %v2675 = vadd.f32 %v2274, %v2674
      %2676 = vmatmul.f32.gmra.mxu0 %v1876
      %v2677 = vpop.f32.mrf.mxu0
      %v2678 = vadd.f32 %v2277, %v2677
      %2679 = vmatmul.f32.gmra.mxu0 %v1879
      %v2680 = vpop.f32.mrf.mxu0
      %v2681 = vadd.f32 %v2280, %v2680
      %2682 = vmatmul.f32.gmra.mxu0 %v1882
      %v2683 = vpop.f32.mrf.mxu0
      %v2684 = vadd.f32 %v2283, %v2683
      %2685 = vmatmul.f32.gmra.mxu0 %v1885
      %v2686 = vpop.f32.mrf.mxu0
      %v2687 = vadd.f32 %v2286, %v2686
      %2688 = vmatmul.f32.gmra.mxu0 %v1888
      %v2689 = vpop.f32.mrf.mxu0
      %v2690 = vadd.f32 %v2289, %v2689
      %2691 = vmatmul.f32.gmra.mxu0 %v1891
      %v2692 = vpop.f32.mrf.mxu0
      %v2693 = vadd.f32 %v2292, %v2692
      %2694 = vmatmul.f32.gmra.mxu0 %v1894
      %v2695 = vpop.f32.mrf.mxu0
      %v2696 = vadd.f32 %v2295, %v2695
      %2697 = vmatmul.f32.gmra.mxu0 %v1897
      %v2698 = vpop.f32.mrf.mxu0
      %v2699 = vadd.f32 %v2298, %v2698
      %2700 = vmatmul.f32.gmra.mxu0 %v1900
      %v2701 = vpop.f32.mrf.mxu0
      %v2702 = vadd.f32 %v2301, %v2701
      %2703 = vmatmul.f32.gmra.mxu0 %v1903
      %v2704 = vpop.f32.mrf.mxu0
      %v2705 = vadd.f32 %v2304, %v2704
      %2706 = vmatmul.f32.gmra.mxu0 %v1906
      %v2707 = vpop.f32.mrf.mxu0
      %v2708 = vadd.f32 %v2307, %v2707
      %2709 = vmatmul.f32.gmra.mxu0 %v1909
      %v2710 = vpop.f32.mrf.mxu0
      %v2711 = vadd.f32 %v2310, %v2710
      %2712 = vmatmul.f32.gmra.mxu0 %v1912
      %v2713 = vpop.f32.mrf.mxu0
      %v2714 = vadd.f32 %v2313, %v2713
      %2715 = vmatmul.f32.gmra.mxu0 %v1915
      %v2716 = vpop.f32.mrf.mxu0
      %v2717 = vadd.f32 %v2316, %v2716
      %2718 = vmatmul.f32.gmra.mxu0 %v1918
      %v2719 = vpop.f32.mrf.mxu0
      %v2720 = vadd.f32 %v2319, %v2719
      %2721 = vmatmul.f32.gmra.mxu0 %v1921
      %v2722 = vpop.f32.mrf.mxu0
      %v2723 = vadd.f32 %v2322, %v2722
      %2724 = vmatmul.f32.gmra.mxu0 %v1924
      %v2725 = vpop.f32.mrf.mxu0
      %v2726 = vadd.f32 %v2325, %v2725
      %2727 = vmatmul.f32.gmra.mxu0 %v1927
      %v2728 = vpop.f32.mrf.mxu0
      %v2729 = vadd.f32 %v2328, %v2728
      %2730 = vmatmul.f32.gmra.mxu0 %v1930
      %v2731 = vpop.f32.mrf.mxu0
      %v2732 = vadd.f32 %v2331, %v2731
      %2733 = vmatmul.f32.gmra.mxu0 %v1933
      %v2734 = vpop.f32.mrf.mxu0
      %v2735 = vadd.f32 %v2334, %v2734
      %2736 = vmatmul.f32.gmra.mxu0 %v1936
      %v2737 = vpop.f32.mrf.mxu0
      %v2738 = vadd.f32 %v2337, %v2737
      %2739 = vmatmul.f32.gmra.mxu0 %v1939
      %v2740 = vpop.f32.mrf.mxu0
      %v2741 = vadd.f32 %v2340, %v2740
      %2742 = vmatmul.f32.gmra.mxu0 %v1942
      %v2743 = vpop.f32.mrf.mxu0
      %v2744 = vadd.f32 %v2343, %v2743
      %2745 = vmatmul.f32.gmra.mxu0 %v1945
      %v2746 = vpop.f32.mrf.mxu0
      %v2747 = vadd.f32 %v2346, %v2746
      %2748 = vmatmul.f32.gmra.mxu0 %v1948
      %v2749 = vpop.f32.mrf.mxu0
      %v2750 = vadd.f32 %v2349, %v2749
      %2751 = vmatmul.f32.gmra.mxu0 %v1951
      %v2752 = vpop.f32.mrf.mxu0
      %v2753 = vadd.f32 %v2352, %v2752
      %2754 = vmatmul.f32.gmra.mxu0 %v1954
      %v2755 = vpop.f32.mrf.mxu0
      %v2756 = vadd.f32 %v2355, %v2755
      %2757 = vmatmul.f32.gmra.mxu0 %v1957
      %v2758 = vpop.f32.mrf.mxu0
      %v2759 = vadd.f32 %v2358, %v2758
      %2760 = vmatmul.f32.gmra.mxu0 %v1960
      %v2761 = vpop.f32.mrf.mxu0
      %v2762 = vadd.f32 %v2361, %v2761
      %2763 = vmatmul.f32.gmra.mxu0 %v1963
      %v2764 = vpop.f32.mrf.mxu0
      %v2765 = vadd.f32 %v2364, %v2764
      %2766 = vmatmul.f32.gmra.mxu0 %v1966
      %v2767 = vpop.f32.mrf.mxu0
      %v2768 = vadd.f32 %v2367, %v2767
      %2769 = vmatmul.f32.gmra.mxu0 %v1969
      %v2770 = vpop.f32.mrf.mxu0
      %v2771 = vadd.f32 %v2370, %v2770
      %2772 = vmatmul.f32.gmra.mxu0 %v1972
      %v2773 = vpop.f32.mrf.mxu0
      %v2774 = vadd.f32 %v2373, %v2773
      %2775 = vmatmul.f32.gmra.mxu0 %v1975
      %v2776 = vpop.f32.mrf.mxu0
      %v2777 = vadd.f32 %v2376, %v2776
      %2778 = vmatmul.f32.gmra.mxu0 %v1978
      %v2779 = vpop.f32.mrf.mxu0
      %v2780 = vadd.f32 %v2379, %v2779
      %2781 = vmatmul.f32.gmra.mxu0 %v1981
      %v2782 = vpop.f32.mrf.mxu0
      %v2783 = vadd.f32 %v2382, %v2782
      %2784 = vmatmul.f32.gmra.mxu0 %v1984
      %v2785 = vpop.f32.mrf.mxu0
      %v2786 = vadd.f32 %v2385, %v2785
      %2787 = vmatmul.f32.gmra.mxu0 %v1987
      %v2788 = vpop.f32.mrf.mxu0
      %v2789 = vadd.f32 %v2388, %v2788
      %2790 = vmatmul.f32.gmra.mxu0 %v1990
      %v2791 = vpop.f32.mrf.mxu0
      %v2792 = vadd.f32 %v2391, %v2791
      %2793 = vmatmul.f32.gmra.mxu0 %v1993
      %v2794 = vpop.f32.mrf.mxu0
      %v2795 = vadd.f32 %v2394, %v2794
      %2796 = vmatmul.f32.gmra.mxu0 %v1996
      %v2797 = vpop.f32.mrf.mxu0
      %v2798 = vadd.f32 %v2397, %v2797
      %2799 = vmatmul.f32.gmra.mxu0 %v1999
      %v2800 = vpop.f32.mrf.mxu0
      %v2801 = vadd.f32 %v2400, %v2800
      %2802 = vmatmul.f32.gmra.mxu0 %v2002
      %v2803 = vpop.f32.mrf.mxu0
      %v2804 = vadd.f32 %v2403, %v2803
      %2805 = vmatmul.f32.gmra.mxu0 %v2005
      %v2806 = vpop.f32.mrf.mxu0
      %v2807 = vadd.f32 %v2406, %v2806
      %2808 = vmatmul.f32.gmra.mxu0 %v2008
      %v2809 = vpop.f32.mrf.mxu0
      %v2810 = vadd.f32 %v2409, %v2809
      %2811 = vmatmul.f32.gmra.mxu0 %v2011
      %v2812 = vpop.f32.mrf.mxu0
      %v2813 = vadd.f32 %v2412, %v2812
      %2814 = vmatmul.f32.gmra.mxu0 %v2014
      %v2815 = vpop.f32.mrf.mxu0
      %v2816 = vadd.f32 %v2415, %v2815
      %2817 = vmatmul.f32.gmra.mxu0 %v2017
      %v2818 = vpop.f32.mrf.mxu0
      %v2819 = vadd.f32 %v2418, %v2818
      %2820 = vmatmul.f32.gmra.mxu0 %v2020
      %v2821 = vpop.f32.mrf.mxu0
      %v2822 = vadd.f32 %v2421, %v2821
      %2823 = vmatmul.f32.gmra.mxu0 %v2023
      %v2824 = vpop.f32.mrf.mxu0
      %v2825 = vadd.f32 %v2424, %v2824
      %2826 = vmatmul.f32.gmra.mxu0 %v2026
      %v2827 = vpop.f32.mrf.mxu0
      %v2828 = vadd.f32 %v2427, %v2827
      %2829 = vmatmul.f32.gmra.mxu0 %v2029
      %v2830 = vpop.f32.mrf.mxu0
      %v2831 = vadd.f32 %v2430, %v2830
      %2832 = vmatmul.f32.gmra.mxu0 %v2032
      %v2833 = vpop.f32.mrf.mxu0
      %v2834 = vadd.f32 %v2433, %v2833
      %2835 = vmatmul.f32.gmra.mxu0 %v2035
      %v2836 = vpop.f32.mrf.mxu0
      %v2837 = vadd.f32 %v2436, %v2836
      %2838 = vmatmul.f32.gmra.mxu0 %v2038
      %v2839 = vpop.f32.mrf.mxu0
      %v2840 = vadd.f32 %v2439, %v2839
      %2841 = vmatmul.f32.gmra.mxu0 %v2041
      %v2842 = vpop.f32.mrf.mxu0
      %v2843 = vadd.f32 %v2442, %v2842
      %2844 = vmatmul.f32.gmra.mxu0 %v2044
      %v2845 = vpop.f32.mrf.mxu0
      %v2846 = vadd.f32 %v2445, %v2845
      %2847 = vmatmul.f32.gmra.mxu0 %v2047
      %v2848 = vpop.f32.mrf.mxu0
      %v2849 = vadd.f32 %v2448, %v2848
      %2850 = vmatmul.f32.gmra.mxu0 %v2050
      %v2851 = vpop.f32.mrf.mxu0
      %v2852 = vadd.f32 %v2451, %v2851
      %2853 = vmatmul.f32.gmra.mxu0 %v2053
      %v2854 = vpop.f32.mrf.mxu0
      %v2855 = vadd.f32 %v2454, %v2854
      %2856 = vmatmul.f32.gmra.mxu0 %v2056
      %v2857 = vpop.f32.mrf.mxu0
      %v2858 = vadd.f32 %v2457, %v2857
      %2859 = vmatmul.f32.gmra.mxu0 %v2059
      %v2860 = vpop.f32.mrf.mxu0
      %v2861 = vadd.f32 %v2460, %v2860
      %2862 = vmatmul.f32.gmra.mxu0 %v2062
      %v2863 = vpop.f32.mrf.mxu0
      %v2864 = vadd.f32 %v2463, %v2863
      %2865 = vmatmul.f32.gmra.mxu0 %v2065
      %v2866 = vpop.f32.mrf.mxu0
      %v2867 = vadd.f32 %v2466, %v2866
      %2868 = vmatmul.f32.gmra.mxu0 %v2068
      %v2869 = vpop.f32.mrf.mxu0
      %v2870 = vadd.f32 %v2469, %v2869
      %2871 = vmatmul.f32.gmra.mxu0 %v2071
      %v2872 = vpop.f32.mrf.mxu0
      %v2873 = vadd.f32 %v2472, %v2872
      %2874 = vmatmul.f32.gmra.mxu0 %v2074
      %v2875 = vpop.f32.mrf.mxu0
      %v2876 = vadd.f32 %v2475, %v2875
      %2877 = vmatmul.f32.gmra.mxu0 %v2077
      %v2878 = vpop.f32.mrf.mxu0
      %v2879 = vadd.f32 %v2478, %v2878
      %2880 = vmatmul.f32.gmra.mxu0 %v2080
      %v2881 = vpop.f32.mrf.mxu0
      %v2882 = vadd.f32 %v2481, %v2881
      %2883 = vmatmul.f32.gmra.mxu0 %v2083
      %v2884 = vpop.f32.mrf.mxu0
      %v2885 = vadd.f32 %v2484, %v2884
      %2886 = vmatmul.f32.gmra.mxu0 %v2086
      %v2887 = vpop.f32.mrf.mxu0
      %v2888 = vadd.f32 %v2487, %v2887
      %2889 = vmatmul.f32.gmra.mxu0 %v2089
      %v2890 = vpop.f32.mrf.mxu0
      %v2891 = vadd.f32 %v2490, %v2890
      %2892 = vmatmul.f32.gmra.mxu0 %v2092
      %v2893 = vpop.f32.mrf.mxu0
      %v2894 = vadd.f32 %v2493, %v2893
      %2895 = vmatmul.f32.gmra.mxu0 %v2095
      %v2896 = vpop.f32.mrf.mxu0
      %v2897 = vadd.f32 %v2496, %v2896
      %2898 = vmatmul.f32.gmra.mxu0 %v2098
      %v2899 = vpop.f32.mrf.mxu0
      %v2900 = vadd.f32 %v2499, %v2899
      %2901 = vmatmul.f32.gmra.mxu0 %v2101
      %v2902 = vpop.f32.mrf.mxu0
      %v2903 = vadd.f32 %v2502, %v2902
      %2904 = vmatmul.f32.gmra.mxu0 %v2104
      %v2905 = vpop.f32.mrf.mxu0
      %v2906 = vadd.f32 %v2505, %v2905
      %2907 = vmatmul.f32.gmra.mxu0 %v2107
      %v2908 = vpop.f32.mrf.mxu0
      %v2909 = vadd.f32 %v2508, %v2908
      %2910 = vmatmul.f32.gmra.mxu0 %v2110
      %v2911 = vpop.f32.mrf.mxu0
      %v2912 = vadd.f32 %v2511, %v2911
      %2913 = vmatmul.f32.gmra.mxu0 %v2113
      %v2914 = vpop.f32.mrf.mxu0
      %v2915 = vadd.f32 %v2514, %v2914
      %2916 = vmatmul.f32.gmra.mxu0 %v2116
      %v2917 = vpop.f32.mrf.mxu0
      %v2918 = vadd.f32 %v2517, %v2917
      %2919 = vmatmul.f32.gmra.mxu0 %v2119
      %v2920 = vpop.f32.mrf.mxu0
      %v2921 = vadd.f32 %v2520, %v2920
      %2922 = vmatmul.f32.gmra.mxu0 %v2122
      %v2923 = vpop.f32.mrf.mxu0
      %v2924 = vadd.f32 %v2523, %v2923
      %2925 = vmatmul.f32.gmra.mxu0 %v2125
      %v2926 = vpop.f32.mrf.mxu0
      %v2927 = vadd.f32 %v2526, %v2926
      %2928 = vmatmul.f32.gmra.mxu0 %v2128
      %v2929 = vpop.f32.mrf.mxu0
      %v2930 = vadd.f32 %v2529, %v2929
      %2931 = vmatmul.f32.gmra.mxu0 %v2131
      %v2932 = vpop.f32.mrf.mxu0
      %v2933 = vadd.f32 %v2532, %v2932
      %2934 = vmatmul.f32.gmra.mxu0 %v2134
      %v2935 = vpop.f32.mrf.mxu0
      %v2936 = vadd.f32 %v2535, %v2935
      %2937 = vmatmul.f32.gmra.mxu0 %v2137
      %v2938 = vpop.f32.mrf.mxu0
      %v2939 = vadd.f32 %v2538, %v2938
      %2940 = vmatmul.f32.gmra.mxu0 %v2140
      %v2941 = vpop.f32.mrf.mxu0
      %v2942 = vadd.f32 %v2541, %v2941
      %2943 = vmatmul.f32.gmra.mxu0 %v2143
      %v2944 = vpop.f32.mrf.mxu0
      %v2945 = vadd.f32 %v2544, %v2944
      %2946 = vmatmul.f32.gmra.mxu0 %v2146
      %v2947 = vpop.f32.mrf.mxu0
      %v2948 = vadd.f32 %v2547, %v2947
      %2949 = vmatmul.f32.gmra.mxu0 %v2149
      %v2950 = vpop.f32.mrf.mxu0
      %v2951 = vadd.f32 %v2550, %v2950
      %2952 = vmatmul.f32.gmra.mxu0 %v2152
      %v2953 = vpop.f32.mrf.mxu0
      %v2954 = vadd.f32 %v2553, %v2953
      %2955 = vmatmul.f32.gmra.mxu0 %v2155
      %v2956 = vpop.f32.mrf.mxu0
      %v2957 = vadd.f32 %v2556, %v2956
      %2958 = vmatmul.f32.gmra.mxu0 %v2158
      %v2959 = vpop.f32.mrf.mxu0
      %v2960 = vadd.f32 %v2559, %v2959
      %2961 = vmatmul.f32.gmra.mxu0 %v2161
      %v2962 = vpop.f32.mrf.mxu0
      %v2963 = vadd.f32 %v2562, %v2962
      %2964 = vmatmul.f32.gmra.mxu0 %v2164
      %v2965 = vpop.f32.mrf.mxu0
      %v2966 = vadd.f32 %v2565, %v2965
      %2967 = vmatmul.f32.gmra.mxu0 %v2167
      %v2968 = vpop.f32.mrf.mxu0
      %v2969 = vadd.f32 %v2568, %v2968
      %2970 = vmatmul.f32.gmra.mxu0 %v2170
      %v2971 = vpop.f32.mrf.mxu0
      %v2972 = vadd.f32 %v2571, %v2971
      %2973 = vmatmul.f32.gmra.mxu0 %v2173
      %v2974 = vpop.f32.mrf.mxu0
      %v2975 = vadd.f32 %v2574, %v2974
      %2976 = vmatmul.f32.gmra.mxu0 %v2176
      %v2977 = vpop.f32.mrf.mxu0
      %v2978 = vadd.f32 %v2577, %v2977
      %2979 = vmatmul.f32.gmra.mxu0 %v2179
      %v2980 = vpop.f32.mrf.mxu0
      %v2981 = vadd.f32 %v2580, %v2980
      %2982 = vmatmul.f32.gmra.mxu0 %v2182
      %v2983 = vpop.f32.mrf.mxu0
      %v2984 = vadd.f32 %v2583, %v2983
      %2985 = vmatmul.f32.gmra.mxu0 %v2185
      %v2986 = vpop.f32.mrf.mxu0
      %v2987 = vadd.f32 %v2586, %v2986
      %2988 = vmatmul.f32.gmra.mxu0 %v2188
      %v2989 = vpop.f32.mrf.mxu0
      %v2990 = vadd.f32 %v2589, %v2989
      %2991 = vmatmul.f32.gmra.mxu0 %v2191
      %v2992 = vpop.f32.mrf.mxu0
      %v2993 = vadd.f32 %v2592, %v2992
      %2994 = vdwg.mxu0
      %2995 = vst [vmem:[%s236] sm:$0xff] %v2612
      %2996 = vst [vmem:[%s236 + $0x8] sm:$0xff] %v2615
      %2997 = vst [vmem:[%s236 + $0x10] sm:$0xff] %v2618
      %2998 = vst [vmem:[%s236 + $0x18] sm:$0xff] %v2621
      %2999 = vst [vmem:[%s236 + $0x20] sm:$0xff] %v2624
      %3000 = vst [vmem:[%s236 + $0x28] sm:$0xff] %v2627
      %3001 = vst [vmem:[%s236 + $0x30] sm:$0xff] %v2630
      %3002 = vst [vmem:[%s236 + $0x38] sm:$0xff] %v2633
      %3003 = vst [vmem:[%s236 + $0x40] sm:$0xff] %v2636
      %3004 = vst [vmem:[%s236 + $0x48] sm:$0xff] %v2639
      %3005 = vst [vmem:[%s236 + $0x50] sm:$0xff] %v2642
      %3006 = vst [vmem:[%s236 + $0x58] sm:$0xff] %v2645
      %3007 = vst [vmem:[%s236 + $0x60] sm:$0xff] %v2648
      %3008 = vst [vmem:[%s236 + $0x68] sm:$0xff] %v2651
      %3009 = vst [vmem:[%s236 + $0x70] sm:$0xff] %v2654
      %3010 = vst [vmem:[%s236 + $0x78] sm:$0xff] %v2657
      %3011 = vst [vmem:[%s236 + $0x80] sm:$0xff] %v2660
      %3012 = vst [vmem:[%s236 + $0x88] sm:$0xff] %v2663
      %3013 = vst [vmem:[%s236 + $0x90] sm:$0xff] %v2666
      %3014 = vst [vmem:[%s236 + $0x98] sm:$0xff] %v2669
      %3015 = vst [vmem:[%s236 + $0xa0] sm:$0xff] %v2672
      %3016 = vst [vmem:[%s236 + $0xa8] sm:$0xff] %v2675
      %3017 = vst [vmem:[%s236 + $0xb0] sm:$0xff] %v2678
      %3018 = vst [vmem:[%s236 + $0xb8] sm:$0xff] %v2681
      %3019 = vst [vmem:[%s236 + $0xc0] sm:$0xff] %v2684
      %3020 = vst [vmem:[%s236 + $0xc8] sm:$0xff] %v2687
      %3021 = vst [vmem:[%s236 + $0xd0] sm:$0xff] %v2690
      %3022 = vst [vmem:[%s236 + $0xd8] sm:$0xff] %v2693
      %3023 = vst [vmem:[%s236 + $0xe0] sm:$0xff] %v2696
      %3024 = vst [vmem:[%s236 + $0xe8] sm:$0xff] %v2699
      %3025 = vst [vmem:[%s236 + $0xf0] sm:$0xff] %v2702
      %3026 = vst [vmem:[%s236 + $0xf8] sm:$0xff] %v2705
      %3027 = vst [vmem:[%s236 + $0x100] sm:$0xff] %v2708
      %3028 = vst [vmem:[%s236 + $0x108] sm:$0xff] %v2711
      %3029 = vst [vmem:[%s236 + $0x110] sm:$0xff] %v2714
      %3030 = vst [vmem:[%s236 + $0x118] sm:$0xff] %v2717
      %3031 = vst [vmem:[%s236 + $0x120] sm:$0xff] %v2720
      %3032 = vst [vmem:[%s236 + $0x128] sm:$0xff] %v2723
      %3033 = vst [vmem:[%s236 + $0x130] sm:$0xff] %v2726
      %3034 = vst [vmem:[%s236 + $0x138] sm:$0xff] %v2729
      %3035 = vst [vmem:[%s236 + $0x140] sm:$0xff] %v2732
      %3036 = vst [vmem:[%s236 + $0x148] sm:$0xff] %v2735
      %3037 = vst [vmem:[%s236 + $0x150] sm:$0xff] %v2738
      %3038 = vst [vmem:[%s236 + $0x158] sm:$0xff] %v2741
      %3039 = vst [vmem:[%s236 + $0x160] sm:$0xff] %v2744
      %3040 = vst [vmem:[%s236 + $0x168] sm:$0xff] %v2747
      %3041 = vst [vmem:[%s236 + $0x170] sm:$0xff] %v2750
      %3042 = vst [vmem:[%s236 + $0x178] sm:$0xff] %v2753
      %3043 = vst [vmem:[%s236 + $0x180] sm:$0xff] %v2756
      %3044 = vst [vmem:[%s236 + $0x188] sm:$0xff] %v2759
      %3045 = vst [vmem:[%s236 + $0x190] sm:$0xff] %v2762
      %3046 = vst [vmem:[%s236 + $0x198] sm:$0xff] %v2765
      %3047 = vst [vmem:[%s236 + $0x1a0] sm:$0xff] %v2768
      %3048 = vst [vmem:[%s236 + $0x1a8] sm:$0xff] %v2771
      %3049 = vst [vmem:[%s236 + $0x1b0] sm:$0xff] %v2774
      %3050 = vst [vmem:[%s236 + $0x1b8] sm:$0xff] %v2777
      %3051 = vst [vmem:[%s236 + $0x1c0] sm:$0xff] %v2780
      %3052 = vst [vmem:[%s236 + $0x1c8] sm:$0xff] %v2783
      %3053 = vst [vmem:[%s236 + $0x1d0] sm:$0xff] %v2786
      %3054 = vst [vmem:[%s236 + $0x1d8] sm:$0xff] %v2789
      %3055 = vst [vmem:[%s236 + $0x1e0] sm:$0xff] %v2792
      %3056 = vst [vmem:[%s236 + $0x1e8] sm:$0xff] %v2795
      %3057 = vst [vmem:[%s236 + $0x1f0] sm:$0xff] %v2798
      %3058 = vst [vmem:[%s236 + $0x1f8] sm:$0xff] %v2801
      %3059 = vst [vmem:[%s236 + $0x200] sm:$0xff] %v2804
      %3060 = vst [vmem:[%s236 + $0x208] sm:$0xff] %v2807
      %3061 = vst [vmem:[%s236 + $0x210] sm:$0xff] %v2810
      %3062 = vst [vmem:[%s236 + $0x218] sm:$0xff] %v2813
      %3063 = vst [vmem:[%s236 + $0x220] sm:$0xff] %v2816
      %3064 = vst [vmem:[%s236 + $0x228] sm:$0xff] %v2819
      %3065 = vst [vmem:[%s236 + $0x230] sm:$0xff] %v2822
      %3066 = vst [vmem:[%s236 + $0x238] sm:$0xff] %v2825
      %3067 = vst [vmem:[%s236 + $0x240] sm:$0xff] %v2828
      %3068 = vst [vmem:[%s236 + $0x248] sm:$0xff] %v2831
      %3069 = vst [vmem:[%s236 + $0x250] sm:$0xff] %v2834
      %3070 = vst [vmem:[%s236 + $0x258] sm:$0xff] %v2837
      %3071 = vst [vmem:[%s236 + $0x260] sm:$0xff] %v2840
      %3072 = vst [vmem:[%s236 + $0x268] sm:$0xff] %v2843
      %3073 = vst [vmem:[%s236 + $0x270] sm:$0xff] %v2846
      %3074 = vst [vmem:[%s236 + $0x278] sm:$0xff] %v2849
      %3075 = vst [vmem:[%s236 + $0x280] sm:$0xff] %v2852
      %3076 = vst [vmem:[%s236 + $0x288] sm:$0xff] %v2855
      %3077 = vst [vmem:[%s236 + $0x290] sm:$0xff] %v2858
      %3078 = vst [vmem:[%s236 + $0x298] sm:$0xff] %v2861
      %3079 = vst [vmem:[%s236 + $0x2a0] sm:$0xff] %v2864
      %3080 = vst [vmem:[%s236 + $0x2a8] sm:$0xff] %v2867
      %3081 = vst [vmem:[%s236 + $0x2b0] sm:$0xff] %v2870
      %3082 = vst [vmem:[%s236 + $0x2b8] sm:$0xff] %v2873
      %3083 = vst [vmem:[%s236 + $0x2c0] sm:$0xff] %v2876
      %3084 = vst [vmem:[%s236 + $0x2c8] sm:$0xff] %v2879
      %3085 = vst [vmem:[%s236 + $0x2d0] sm:$0xff] %v2882
      %3086 = vst [vmem:[%s236 + $0x2d8] sm:$0xff] %v2885
      %3087 = vst [vmem:[%s236 + $0x2e0] sm:$0xff] %v2888
      %3088 = vst [vmem:[%s236 + $0x2e8] sm:$0xff] %v2891
      %3089 = vst [vmem:[%s236 + $0x2f0] sm:$0xff] %v2894
      %3090 = vst [vmem:[%s236 + $0x2f8] sm:$0xff] %v2897
      %3091 = vst [vmem:[%s236 + $0x300] sm:$0xff] %v2900
      %3092 = vst [vmem:[%s236 + $0x308] sm:$0xff] %v2903
      %3093 = vst [vmem:[%s236 + $0x310] sm:$0xff] %v2906
      %3094 = vst [vmem:[%s236 + $0x318] sm:$0xff] %v2909
      %3095 = vst [vmem:[%s236 + $0x320] sm:$0xff] %v2912
      %3096 = vst [vmem:[%s236 + $0x328] sm:$0xff] %v2915
      %3097 = vst [vmem:[%s236 + $0x330] sm:$0xff] %v2918
      %3098 = vst [vmem:[%s236 + $0x338] sm:$0xff] %v2921
      %3099 = vst [vmem:[%s236 + $0x340] sm:$0xff] %v2924
      %3100 = vst [vmem:[%s236 + $0x348] sm:$0xff] %v2927
      %3101 = vst [vmem:[%s236 + $0x350] sm:$0xff] %v2930
      %3102 = vst [vmem:[%s236 + $0x358] sm:$0xff] %v2933
      %3103 = vst [vmem:[%s236 + $0x360] sm:$0xff] %v2936
      %3104 = vst [vmem:[%s236 + $0x368] sm:$0xff] %v2939
      %3105 = vst [vmem:[%s236 + $0x370] sm:$0xff] %v2942
      %3106 = vst [vmem:[%s236 + $0x378] sm:$0xff] %v2945
      %3107 = vst [vmem:[%s236 + $0x380] sm:$0xff] %v2948
      %3108 = vst [vmem:[%s236 + $0x388] sm:$0xff] %v2951
      %3109 = vst [vmem:[%s236 + $0x390] sm:$0xff] %v2954
      %3110 = vst [vmem:[%s236 + $0x398] sm:$0xff] %v2957
      %3111 = vst [vmem:[%s236 + $0x3a0] sm:$0xff] %v2960
      %3112 = vst [vmem:[%s236 + $0x3a8] sm:$0xff] %v2963
      %3113 = vst [vmem:[%s236 + $0x3b0] sm:$0xff] %v2966
      %3114 = vst [vmem:[%s236 + $0x3b8] sm:$0xff] %v2969
      %3115 = vst [vmem:[%s236 + $0x3c0] sm:$0xff] %v2972
      %3116 = vst [vmem:[%s236 + $0x3c8] sm:$0xff] %v2975
      %3117 = vst [vmem:[%s236 + $0x3d0] sm:$0xff] %v2978
      %3118 = vst [vmem:[%s236 + $0x3d8] sm:$0xff] %v2981
      %3119 = vst [vmem:[%s236 + $0x3e0] sm:$0xff] %v2984
      %3120 = vst [vmem:[%s236 + $0x3e8] sm:$0xff] %v2987
      %3121 = vst [vmem:[%s236 + $0x3f0] sm:$0xff] %v2990
      %3122 = vst [vmem:[%s236 + $0x3f8] sm:$0xff] %v2993
      %v3123 = vlaneseq
      %v3124 = vshrl.u32 %v3123, 7
      %v3125 = vadd.f32 %v2612, %v2615
      %v3126 = vadd.f32 %v3125, %v2618
      %v3127 = vadd.f32 %v3126, %v2621
      %v3128 = vadd.f32 %v3127, %v2624
      %v3129 = vadd.f32 %v3128, %v2627
      %v3130 = vadd.f32 %v3129, %v2630
      %v3131 = vadd.f32 %v3130, %v2633
      %v3132 = vadd.f32 %v3131, %v2636
      %v3133 = vadd.f32 %v3132, %v2639
      %v3134 = vadd.f32 %v3133, %v2642
      %v3135 = vadd.f32 %v3134, %v2645
      %v3136 = vadd.f32 %v3135, %v2648
      %v3137 = vadd.f32 %v3136, %v2651
      %v3138 = vadd.f32 %v3137, %v2654
      %v3139 = vadd.f32 %v3138, %v2657
      %v3140 = vadd.f32 %v3139, %v2660
      %v3141 = vadd.f32 %v3140, %v2663
      %v3142 = vadd.f32 %v3141, %v2666
      %v3143 = vadd.f32 %v3142, %v2669
      %v3144 = vadd.f32 %v3143, %v2672
      %v3145 = vadd.f32 %v3144, %v2675
      %v3146 = vadd.f32 %v3145, %v2678
      %v3147 = vadd.f32 %v3146, %v2681
      %v3148 = vadd.f32 %v3147, %v2684
      %v3149 = vadd.f32 %v3148, %v2687
      %v3150 = vadd.f32 %v3149, %v2690
      %v3151 = vadd.f32 %v3150, %v2693
      %v3152 = vadd.f32 %v3151, %v2696
      %v3153 = vadd.f32 %v3152, %v2699
      %v3154 = vadd.f32 %v3153, %v2702
      %v3155 = vadd.f32 %v3154, %v2705
      %v3156 = vadd.f32 %v3155, %v2708
      %v3157 = vadd.f32 %v3156, %v2711
      %v3158 = vadd.f32 %v3157, %v2714
      %v3159 = vadd.f32 %v3158, %v2717
      %v3160 = vadd.f32 %v3159, %v2720
      %v3161 = vadd.f32 %v3160, %v2723
      %v3162 = vadd.f32 %v3161, %v2726
      %v3163 = vadd.f32 %v3162, %v2729
      %v3164 = vadd.f32 %v3163, %v2732
      %v3165 = vadd.f32 %v3164, %v2735
      %v3166 = vadd.f32 %v3165, %v2738
      %v3167 = vadd.f32 %v3166, %v2741
      %v3168 = vadd.f32 %v3167, %v2744
      %v3169 = vadd.f32 %v3168, %v2747
      %v3170 = vadd.f32 %v3169, %v2750
      %v3171 = vadd.f32 %v3170, %v2753
      %v3172 = vadd.f32 %v3171, %v2756
      %v3173 = vadd.f32 %v3172, %v2759
      %v3174 = vadd.f32 %v3173, %v2762
      %v3175 = vadd.f32 %v3174, %v2765
      %v3176 = vadd.f32 %v3175, %v2768
      %v3177 = vadd.f32 %v3176, %v2771
      %v3178 = vadd.f32 %v3177, %v2774
      %v3179 = vadd.f32 %v3178, %v2777
      %v3180 = vadd.f32 %v3179, %v2780
      %v3181 = vadd.f32 %v3180, %v2783
      %v3182 = vadd.f32 %v3181, %v2786
      %v3183 = vadd.f32 %v3182, %v2789
      %v3184 = vadd.f32 %v3183, %v2792
      %v3185 = vadd.f32 %v3184, %v2795
      %v3186 = vadd.f32 %v3185, %v2798
      %v3187 = vadd.f32 %v3186, %v2801
      %v3188 = vadd.f32 %v3187, %v2804
      %v3189 = vadd.f32 %v3188, %v2807
      %v3190 = vadd.f32 %v3189, %v2810
      %v3191 = vadd.f32 %v3190, %v2813
      %v3192 = vadd.f32 %v3191, %v2816
      %v3193 = vadd.f32 %v3192, %v2819
      %v3194 = vadd.f32 %v3193, %v2822
      %v3195 = vadd.f32 %v3194, %v2825
      %v3196 = vadd.f32 %v3195, %v2828
      %v3197 = vadd.f32 %v3196, %v2831
      %v3198 = vadd.f32 %v3197, %v2834
      %v3199 = vadd.f32 %v3198, %v2837
      %v3200 = vadd.f32 %v3199, %v2840
      %v3201 = vadd.f32 %v3200, %v2843
      %v3202 = vadd.f32 %v3201, %v2846
      %v3203 = vadd.f32 %v3202, %v2849
      %v3204 = vadd.f32 %v3203, %v2852
      %v3205 = vadd.f32 %v3204, %v2855
      %v3206 = vadd.f32 %v3205, %v2858
      %v3207 = vadd.f32 %v3206, %v2861
      %v3208 = vadd.f32 %v3207, %v2864
      %v3209 = vadd.f32 %v3208, %v2867
      %v3210 = vadd.f32 %v3209, %v2870
      %v3211 = vadd.f32 %v3210, %v2873
      %v3212 = vadd.f32 %v3211, %v2876
      %v3213 = vadd.f32 %v3212, %v2879
      %v3214 = vadd.f32 %v3213, %v2882
      %v3215 = vadd.f32 %v3214, %v2885
      %v3216 = vadd.f32 %v3215, %v2888
      %v3217 = vadd.f32 %v3216, %v2891
      %v3218 = vadd.f32 %v3217, %v2894
      %v3219 = vadd.f32 %v3218, %v2897
      %v3220 = vadd.f32 %v3219, %v2900
      %v3221 = vadd.f32 %v3220, %v2903
      %v3222 = vadd.f32 %v3221, %v2906
      %v3223 = vadd.f32 %v3222, %v2909
      %v3224 = vadd.f32 %v3223, %v2912
      %v3225 = vadd.f32 %v3224, %v2915
      %v3226 = vadd.f32 %v3225, %v2918
      %v3227 = vadd.f32 %v3226, %v2921
      %v3228 = vadd.f32 %v3227, %v2924
      %v3229 = vadd.f32 %v3228, %v2927
      %v3230 = vadd.f32 %v3229, %v2930
      %v3231 = vadd.f32 %v3230, %v2933
      %v3232 = vadd.f32 %v3231, %v2936
      %v3233 = vadd.f32 %v3232, %v2939
      %v3234 = vadd.f32 %v3233, %v2942
      %v3235 = vadd.f32 %v3234, %v2945
      %v3236 = vadd.f32 %v3235, %v2948
      %v3237 = vadd.f32 %v3236, %v2951
      %v3238 = vadd.f32 %v3237, %v2954
      %v3239 = vadd.f32 %v3238, %v2957
      %v3240 = vadd.f32 %v3239, %v2960
      %v3241 = vadd.f32 %v3240, %v2963
      %v3242 = vadd.f32 %v3241, %v2966
      %v3243 = vadd.f32 %v3242, %v2969
      %v3244 = vadd.f32 %v3243, %v2972
      %v3245 = vadd.f32 %v3244, %v2975
      %v3246 = vadd.f32 %v3245, %v2978
      %v3247 = vadd.f32 %v3246, %v2981
      %v3248 = vadd.f32 %v3247, %v2984
      %v3249 = vadd.f32 %v3248, %v2987
      %v3250 = vadd.f32 %v3249, %v2990
      %v3251 = vadd.f32 %v3250, %v2993
      %v3252 = vrot.slane %v3251, 4
      %v3253 = vadd.f32 %v3251, %v3252
      %v3254 = vrot.slane %v3253, 2
      %v3255 = vadd.f32 %v3253, %v3254
      %v3256 = vrot.slane %v3255, 1
      %v3257 = vadd.f32 %v3255, %v3256
      %v3258 = vmul.f32 %v2612, %v2612
      %v3259 = vmul.f32 %v2615, %v2615
      %v3260 = vmul.f32 %v2618, %v2618
      %v3261 = vmul.f32 %v2621, %v2621
      %v3262 = vmul.f32 %v2624, %v2624
      %v3263 = vmul.f32 %v2627, %v2627
      %v3264 = vmul.f32 %v2630, %v2630
      %v3265 = vmul.f32 %v2633, %v2633
      %v3266 = vmul.f32 %v2636, %v2636
      %v3267 = vmul.f32 %v2639, %v2639
      %v3268 = vmul.f32 %v2642, %v2642
      %v3269 = vmul.f32 %v2645, %v2645
      %v3270 = vmul.f32 %v2648, %v2648
      %v3271 = vmul.f32 %v2651, %v2651
      %v3272 = vmul.f32 %v2654, %v2654
      %v3273 = vmul.f32 %v2657, %v2657
      %v3274 = vmul.f32 %v2660, %v2660
      %v3275 = vmul.f32 %v2663, %v2663
      %v3276 = vmul.f32 %v2666, %v2666
      %v3277 = vmul.f32 %v2669, %v2669
      %v3278 = vmul.f32 %v2672, %v2672
      %v3279 = vmul.f32 %v2675, %v2675
      %v3280 = vmul.f32 %v2678, %v2678
      %v3281 = vmul.f32 %v2681, %v2681
      %v3282 = vmul.f32 %v2684, %v2684
      %v3283 = vmul.f32 %v2687, %v2687
      %v3284 = vmul.f32 %v2690, %v2690
      %v3285 = vmul.f32 %v2693, %v2693
      %v3286 = vmul.f32 %v2696, %v2696
      %v3287 = vmul.f32 %v2699, %v2699
      %v3288 = vmul.f32 %v2702, %v2702
      %v3289 = vmul.f32 %v2705, %v2705
      %v3290 = vmul.f32 %v2708, %v2708
      %v3291 = vmul.f32 %v2711, %v2711
      %v3292 = vmul.f32 %v2714, %v2714
      %v3293 = vmul.f32 %v2717, %v2717
      %v3294 = vmul.f32 %v2720, %v2720
      %v3295 = vmul.f32 %v2723, %v2723
      %v3296 = vmul.f32 %v2726, %v2726
      %v3297 = vmul.f32 %v2729, %v2729
      %v3298 = vmul.f32 %v2732, %v2732
      %v3299 = vmul.f32 %v2735, %v2735
      %v3300 = vmul.f32 %v2738, %v2738
      %v3301 = vmul.f32 %v2741, %v2741
      %v3302 = vmul.f32 %v2744, %v2744
      %v3303 = vmul.f32 %v2747, %v2747
      %v3304 = vmul.f32 %v2750, %v2750
      %v3305 = vmul.f32 %v2753, %v2753
      %v3306 = vmul.f32 %v2756, %v2756
      %v3307 = vmul.f32 %v2759, %v2759
      %v3308 = vmul.f32 %v2762, %v2762
      %v3309 = vmul.f32 %v2765, %v2765
      %v3310 = vmul.f32 %v2768, %v2768
      %v3311 = vmul.f32 %v2771, %v2771
      %v3312 = vmul.f32 %v2774, %v2774
      %v3313 = vmul.f32 %v2777, %v2777
      %v3314 = vmul.f32 %v2780, %v2780
      %v3315 = vmul.f32 %v2783, %v2783
      %v3316 = vmul.f32 %v2786, %v2786
      %v3317 = vmul.f32 %v2789, %v2789
      %v3318 = vmul.f32 %v2792, %v2792
      %v3319 = vmul.f32 %v2795, %v2795
      %v3320 = vmul.f32 %v2798, %v2798
      %v3321 = vmul.f32 %v2801, %v2801
      %v3322 = vmul.f32 %v2804, %v2804
      %v3323 = vmul.f32 %v2807, %v2807
      %v3324 = vmul.f32 %v2810, %v2810
      %v3325 = vmul.f32 %v2813, %v2813
      %v3326 = vmul.f32 %v2816, %v2816
      %v3327 = vmul.f32 %v2819, %v2819
      %v3328 = vmul.f32 %v2822, %v2822
      %v3329 = vmul.f32 %v2825, %v2825
      %v3330 = vmul.f32 %v2828, %v2828
      %v3331 = vmul.f32 %v2831, %v2831
      %v3332 = vmul.f32 %v2834, %v2834
      %v3333 = vmul.f32 %v2837, %v2837
      %v3334 = vmul.f32 %v2840, %v2840
      %v3335 = vmul.f32 %v2843, %v2843
      %v3336 = vmul.f32 %v2846, %v2846
      %v3337 = vmul.f32 %v2849, %v2849
      %v3338 = vmul.f32 %v2852, %v2852
      %v3339 = vmul.f32 %v2855, %v2855
      %v3340 = vmul.f32 %v2858, %v2858
      %v3341 = vmul.f32 %v2861, %v2861
      %v3342 = vmul.f32 %v2864, %v2864
      %v3343 = vmul.f32 %v2867, %v2867
      %v3344 = vmul.f32 %v2870, %v2870
      %v3345 = vmul.f32 %v2873, %v2873
      %v3346 = vmul.f32 %v2876, %v2876
      %v3347 = vmul.f32 %v2879, %v2879
      %v3348 = vmul.f32 %v2882, %v2882
      %v3349 = vmul.f32 %v2885, %v2885
      %v3350 = vmul.f32 %v2888, %v2888
      %v3351 = vmul.f32 %v2891, %v2891
      %v3352 = vmul.f32 %v2894, %v2894
      %v3353 = vmul.f32 %v2897, %v2897
      %v3354 = vmul.f32 %v2900, %v2900
      %v3355 = vmul.f32 %v2903, %v2903
      %v3356 = vmul.f32 %v2906, %v2906
      %v3357 = vmul.f32 %v2909, %v2909
      %v3358 = vmul.f32 %v2912, %v2912
      %v3359 = vmul.f32 %v2915, %v2915
      %v3360 = vmul.f32 %v2918, %v2918
      %v3361 = vmul.f32 %v2921, %v2921
      %v3362 = vmul.f32 %v2924, %v2924
      %v3363 = vmul.f32 %v2927, %v2927
      %v3364 = vmul.f32 %v2930, %v2930
      %v3365 = vmul.f32 %v2933, %v2933
      %v3366 = vmul.f32 %v2936, %v2936
      %v3367 = vmul.f32 %v2939, %v2939
      %v3368 = vmul.f32 %v2942, %v2942
      %v3369 = vmul.f32 %v2945, %v2945
      %v3370 = vmul.f32 %v2948, %v2948
      %v3371 = vmul.f32 %v2951, %v2951
      %v3372 = vmul.f32 %v2954, %v2954
      %v3373 = vmul.f32 %v2957, %v2957
      %v3374 = vmul.f32 %v2960, %v2960
      %v3375 = vmul.f32 %v2963, %v2963
      %v3376 = vmul.f32 %v2966, %v2966
      %v3377 = vmul.f32 %v2969, %v2969
      %v3378 = vmul.f32 %v2972, %v2972
      %v3379 = vmul.f32 %v2975, %v2975
      %v3380 = vmul.f32 %v2978, %v2978
      %v3381 = vmul.f32 %v2981, %v2981
      %v3382 = vmul.f32 %v2984, %v2984
      %v3383 = vmul.f32 %v2987, %v2987
      %v3384 = vmul.f32 %v2990, %v2990
      %v3385 = vmul.f32 %v2993, %v2993
      %v3386 = vadd.f32 %v3258, %v3259
      %v3387 = vadd.f32 %v3386, %v3260
      %v3388 = vadd.f32 %v3387, %v3261
      %v3389 = vadd.f32 %v3388, %v3262
      %v3390 = vadd.f32 %v3389, %v3263
      %v3391 = vadd.f32 %v3390, %v3264
      %v3392 = vadd.f32 %v3391, %v3265
      %v3393 = vadd.f32 %v3392, %v3266
      %v3394 = vadd.f32 %v3393, %v3267
      %v3395 = vadd.f32 %v3394, %v3268
      %v3396 = vadd.f32 %v3395, %v3269
      %v3397 = vadd.f32 %v3396, %v3270
      %v3398 = vadd.f32 %v3397, %v3271
      %v3399 = vadd.f32 %v3398, %v3272
      %v3400 = vadd.f32 %v3399, %v3273
      %v3401 = vadd.f32 %v3400, %v3274
      %v3402 = vadd.f32 %v3401, %v3275
      %v3403 = vadd.f32 %v3402, %v3276
      %v3404 = vadd.f32 %v3403, %v3277
      %v3405 = vadd.f32 %v3404, %v3278
      %v3406 = vadd.f32 %v3405, %v3279
      %v3407 = vadd.f32 %v3406, %v3280
      %v3408 = vadd.f32 %v3407, %v3281
      %v3409 = vadd.f32 %v3408, %v3282
      %v3410 = vadd.f32 %v3409, %v3283
      %v3411 = vadd.f32 %v3410, %v3284
      %v3412 = vadd.f32 %v3411, %v3285
      %v3413 = vadd.f32 %v3412, %v3286
      %v3414 = vadd.f32 %v3413, %v3287
      %v3415 = vadd.f32 %v3414, %v3288
      %v3416 = vadd.f32 %v3415, %v3289
      %v3417 = vadd.f32 %v3416, %v3290
      %v3418 = vadd.f32 %v3417, %v3291
      %v3419 = vadd.f32 %v3418, %v3292
      %v3420 = vadd.f32 %v3419, %v3293
      %v3421 = vadd.f32 %v3420, %v3294
      %v3422 = vadd.f32 %v3421, %v3295
      %v3423 = vadd.f32 %v3422, %v3296
      %v3424 = vadd.f32 %v3423, %v3297
      %v3425 = vadd.f32 %v3424, %v3298
      %v3426 = vadd.f32 %v3425, %v3299
      %v3427 = vadd.f32 %v3426, %v3300
      %v3428 = vadd.f32 %v3427, %v3301
      %v3429 = vadd.f32 %v3428, %v3302
      %v3430 = vadd.f32 %v3429, %v3303
      %v3431 = vadd.f32 %v3430, %v3304
      %v3432 = vadd.f32 %v3431, %v3305
      %v3433 = vadd.f32 %v3432, %v3306
      %v3434 = vadd.f32 %v3433, %v3307
      %v3435 = vadd.f32 %v3434, %v3308
      %v3436 = vadd.f32 %v3435, %v3309
      %v3437 = vadd.f32 %v3436, %v3310
      %v3438 = vadd.f32 %v3437, %v3311
      %v3439 = vadd.f32 %v3438, %v3312
      %v3440 = vadd.f32 %v3439, %v3313
      %v3441 = vadd.f32 %v3440, %v3314
      %v3442 = vadd.f32 %v3441, %v3315
      %v3443 = vadd.f32 %v3442, %v3316
      %v3444 = vadd.f32 %v3443, %v3317
      %v3445 = vadd.f32 %v3444, %v3318
      %v3446 = vadd.f32 %v3445, %v3319
      %v3447 = vadd.f32 %v3446, %v3320
      %v3448 = vadd.f32 %v3447, %v3321
      %v3449 = vadd.f32 %v3448, %v3322
      %v3450 = vadd.f32 %v3449, %v3323
      %v3451 = vadd.f32 %v3450, %v3324
      %v3452 = vadd.f32 %v3451, %v3325
      %v3453 = vadd.f32 %v3452, %v3326
      %v3454 = vadd.f32 %v3453, %v3327
      %v3455 = vadd.f32 %v3454, %v3328
      %v3456 = vadd.f32 %v3455, %v3329
      %v3457 = vadd.f32 %v3456, %v3330
      %v3458 = vadd.f32 %v3457, %v3331
      %v3459 = vadd.f32 %v3458, %v3332
      %v3460 = vadd.f32 %v3459, %v3333
      %v3461 = vadd.f32 %v3460, %v3334
      %v3462 = vadd.f32 %v3461, %v3335
      %v3463 = vadd.f32 %v3462, %v3336
      %v3464 = vadd.f32 %v3463, %v3337
      %v3465 = vadd.f32 %v3464, %v3338
      %v3466 = vadd.f32 %v3465, %v3339
      %v3467 = vadd.f32 %v3466, %v3340
      %v3468 = vadd.f32 %v3467, %v3341
      %v3469 = vadd.f32 %v3468, %v3342
      %v3470 = vadd.f32 %v3469, %v3343
      %v3471 = vadd.f32 %v3470, %v3344
      %v3472 = vadd.f32 %v3471, %v3345
      %v3473 = vadd.f32 %v3472, %v3346
      %v3474 = vadd.f32 %v3473, %v3347
      %v3475 = vadd.f32 %v3474, %v3348
      %v3476 = vadd.f32 %v3475, %v3349
      %v3477 = vadd.f32 %v3476, %v3350
      %v3478 = vadd.f32 %v3477, %v3351
      %v3479 = vadd.f32 %v3478, %v3352
      %v3480 = vadd.f32 %v3479, %v3353
      %v3481 = vadd.f32 %v3480, %v3354
      %v3482 = vadd.f32 %v3481, %v3355
      %v3483 = vadd.f32 %v3482, %v3356
      %v3484 = vadd.f32 %v3483, %v3357
      %v3485 = vadd.f32 %v3484, %v3358
      %v3486 = vadd.f32 %v3485, %v3359
      %v3487 = vadd.f32 %v3486, %v3360
      %v3488 = vadd.f32 %v3487, %v3361
      %v3489 = vadd.f32 %v3488, %v3362
      %v3490 = vadd.f32 %v3489, %v3363
      %v3491 = vadd.f32 %v3490, %v3364
      %v3492 = vadd.f32 %v3491, %v3365
      %v3493 = vadd.f32 %v3492, %v3366
      %v3494 = vadd.f32 %v3493, %v3367
      %v3495 = vadd.f32 %v3494, %v3368
      %v3496 = vadd.f32 %v3495, %v3369
      %v3497 = vadd.f32 %v3496, %v3370
      %v3498 = vadd.f32 %v3497, %v3371
      %v3499 = vadd.f32 %v3498, %v3372
      %v3500 = vadd.f32 %v3499, %v3373
      %v3501 = vadd.f32 %v3500, %v3374
      %v3502 = vadd.f32 %v3501, %v3375
      %v3503 = vadd.f32 %v3502, %v3376
      %v3504 = vadd.f32 %v3503, %v3377
      %v3505 = vadd.f32 %v3504, %v3378
      %v3506 = vadd.f32 %v3505, %v3379
      %v3507 = vadd.f32 %v3506, %v3380
      %v3508 = vadd.f32 %v3507, %v3381
      %v3509 = vadd.f32 %v3508, %v3382
      %v3510 = vadd.f32 %v3509, %v3383
      %v3511 = vadd.f32 %v3510, %v3384
      %v3512 = vadd.f32 %v3511, %v3385
      %v3513 = vrot.slane %v3512, 4
      %v3514 = vadd.f32 %v3512, %v3513
      %v3515 = vrot.slane %v3514, 2
      %v3516 = vadd.f32 %v3514, %v3515
      %v3517 = vrot.slane %v3516, 1
      %v3518 = vadd.f32 %v3516, %v3517
      %vm3519 = vcmp.eq.s32.totalorder %v3124, 0
      %vm3520 = vcmp.eq.s32.totalorder %v3124, 1
      %v3521 = vsel %vm3520, %v3518, 0.0
      %v3522 = vsel %vm3519, %v3257, %v3521
      %3523 = vst [vmem:[%s241] sm:$0xff] %v3522
      %s3524 = smul.u32 128, %s17
      %p3525 = scmp.lt.s32.totalorder %s3524, 255
      %s3526 = scalar_select %p3525, %s3524, 255
      %s3527 = smul.addr %s3526, 8
      %s3528 = scalar_lea.vmem %s4, %s3527
      %p3529 = scmp.lt.s32.totalorder %s17, 1
      %s3530 = scalar_select %p3529, %s17, 1
      %s3531 = smul.addr %s3530, 8
      %s3532 = scalar_lea.vmem %s5, %s3531
      // Predicated region
      $region37: #{decoder_forward_pallas.7} parent=35 // pred_check
        %p3533 = pneg %p124
      $region38: #{decoder_forward_pallas.7} parent=35 // pred_check_branch
        %3535 = sbr.rel (%p3533) target = $region40
      $region39: #{decoder_forward_pallas.7} parent=35 // pred_region
        %s3536 = smul.u32 128, %s17
      $region40: #{decoder_forward_pallas.7} parent=35 // pred_fallthru
        _
      // Predicated region
      $region41: #{decoder_forward_pallas.7} parent=35 // pred_check
        %p3537 = pneg %p150
      $region42: #{decoder_forward_pallas.7} parent=35 // pred_check_branch
        %3539 = sbr.rel (%p3537) target = $region44
      $region43: #{decoder_forward_pallas.7} parent=35 // pred_region
        _
      $region44: #{decoder_forward_pallas.7} parent=35 // pred_fallthru
        _
    $region36: #{decoder_forward_pallas.7} parent=5 // pred_fallthru
      _
    %p3540 = scmp.le.s32.totalorder 2, %s12
    // Predicated region
    $region45: #{decoder_forward_pallas.7} parent=5 // pred_check
      %p3541 = pneg %p3540
    $region46: #{decoder_forward_pallas.7} parent=5 // pred_check_branch
      %3543 = sbr.rel (%p3541) target = $region48
    $region47: #{decoder_forward_pallas.7} parent=5 // pred_region
      %s3544 = ssub.s32 %s12, 2
      // Predicated region
      $region49: #{decoder_forward_pallas.7} parent=47 // pred_check
        %p3545 = pneg %p130
      $region50: #{decoder_forward_pallas.7} parent=47 // pred_check_branch
        %3547 = sbr.rel (%p3545) target = $region52
      $region51: #{decoder_forward_pallas.7} parent=47 // pred_region
        %s3548 = smul.u32 128, %s18
        %p3549 = scmp.lt.s32.totalorder %s3548, 255
        %s3550 = scalar_select %p3549, %s3548, 255
        %s3551 = smul.addr %s3550, 8
        %s3552 = scalar_lea.vmem %s4, %s3551
      $region52: #{decoder_forward_pallas.7} parent=47 // pred_fallthru
        _
      // Predicated region
      $region53: #{decoder_forward_pallas.7} parent=47 // pred_check
        %p3553 = pneg %p156
      $region54: #{decoder_forward_pallas.7} parent=47 // pred_check_branch
        %3555 = sbr.rel (%p3553) target = $region56
      $region55: #{decoder_forward_pallas.7} parent=47 // pred_region
        %p3556 = scmp.lt.s32.totalorder %s18, 1
        %s3557 = scalar_select %p3556, %s18, 1
        %s3558 = smul.addr %s3557, 8
        %s3559 = scalar_lea.vmem %s5, %s3558
      $region56: #{decoder_forward_pallas.7} parent=47 // pred_fallthru
        _
    $region48: #{decoder_forward_pallas.7} parent=5 // pred_fallthru
      _
  $region6: #{decoder_forward_pallas.7} parent=0 // loop_footer
    %s16 = sadd.s32 1, %s12
  $region7: #{decoder_forward_pallas.7} parent=0 // loop_footer_branch
    %11 = sbr.rel target = $region3
  $region8: #{decoder_forward_pallas.7} parent=0 // loop_exit
    _

// kernel: tile.78
$region0: #{tile.78}
  #allocation0 [shape = 's32[1]{0}', space=sflag, size = 0x4, scoped, tag = 'scoped memory for tile.78']
  %s0 = inlined_call_operand.vmem [shape: f32[4], index: 0, kind: input, shape index: {}]
  %s1 = inlined_call_operand.vmem [shape: f32[4,4], index: 1, kind: output, shape index: {}]
  // Predicated region
  $region2: #{tile.78} parent=0 // pred_check
    _
  $region3: #{tile.78} parent=0 // pred_check_branch
    %3 = sbr.rel (0) target = $region5
  $region4: #{tile.78} parent=0 // pred_region
    _
  $region5: #{tile.78} parent=0 // pred_fallthru
    _
  %v4 = vld [vmem:[%s0] ss:$0 sm:$0xff]
  %5 = vst [vmem:[%s1] sm:$0xf] %v4

// kernel: tile.79
$region0: #{tile.79}
  %s0 = inlined_call_operand.vmem [shape: f32[4,4], index: 0, kind: input, shape index: {}]
  %s1 = inlined_call_operand.vmem [shape: f32[16], index: 1, kind: output, shape index: {}]
  $region1: #{tile.79} parent=0
    #allocation0 [shape = 'u8[4096]{0}', space=vmem, size = 0x1000, scoped, tag = 'scoped mem for output reshape']
    #allocation1 [shape = 'u8[4096]{0}', space=vmem, size = 0x1000, scoped, tag = 'scoped mem for input reshape']
    %s3 = ssub.s32 16, 1
    %v4 = vld [vmem:[%s0] sm:%s3]
    %5 = vst [vmem:[#allocation1] sm:%s3] %v4
    %v6 = vld [vmem:[#allocation1] sm:$0x1]
    %vm7 = vcmask 31744
    %8 = vst.msk [vmem:[#allocation0] sm:$0x1] %vm7, %v6
    %s9 = scalar_lea.vmem [#allocation1], 3
    %v10 = vld [vmem:[%s9] sm:$0x1]
    %11 = vrot.lane.b32.xlu0 %v10, 12
    %v12 = vpop.permute.xlu0 %11
    %vm13 = vcmask 130144
    %14 = vst.msk [vmem:[#allocation0] sm:$0x1] %vm13, %v12
    %s15 = scalar_lea.vmem [#allocation1], 2
    %v16 = vld [vmem:[%s15] sm:$0x1]
    %17 = vrot.lane.b32.xlu0 %v16, 8
    %v18 = vpop.permute.xlu0 %17
    %vm19 = vcmask 97344
    %20 = vst.msk [vmem:[#allocation0] sm:$0x1] %vm19, %v18
    %s21 = scalar_lea.vmem [#allocation1], 1
    %v22 = vld [vmem:[%s21] sm:$0x1]
    %23 = vrot.lane.b32.xlu0 %v22, 4
    %v24 = vpop.permute.xlu0 %23
    %vm25 = vcmask 64544
    %26 = vst.msk [vmem:[#allocation0] sm:$0x1] %vm25, %v24
    %s28 = ssub.s32 2, 1
    %v29 = vld [vmem:[#allocation0] sm:%s28]
    %s31 = ssub.s32 2, 1
    %32 = vst [vmem:[%s1] sm:%s31] %v29

// kernel: decoder_forward_pallas.9
$region0: #{decoder_forward_pallas.9}
  #allocation0 [shape = 'u32[]', space=smem, size = 0x4, offset = 0x4, fixed_abs, tag = 'smem constant byte address 0x4 - core index']
  #allocation1 [shape = 'u32[72,128]{1,0:T(1,128)}', space=vmem, size = 0x9000, scoped, tag = 'internal scratch']
  %s0 = inlined_call_operand.vmem [shape: f32[2048,128], index: 0, kind: input, shape index: {}]
  %s1 = inlined_call_operand.vmem [shape: f32[1,128], index: 1, kind: input, shape index: {}]
  %s2 = inlined_call_operand.vmem [shape: f32[1,128], index: 2, kind: input, shape index: {}]
  %s3 = inlined_call_operand.vmem [shape: f32[128,128], index: 3, kind: input, shape index: {}]
  %s4 = inlined_call_operand.vmem [shape: f32[2048,128], index: 4, kind: output, shape index: {}]
  %s5 = sld [smem:[#allocation0]]
  $region49: #{decoder_forward_pallas.9} parent=0
    _
  %s7 = ssub.s32 1, %s5
  %s8 = scalar_select 0, %s7, %s5
  loop: start=0, step=1, limit=4
  $region2: #{decoder_forward_pallas.9} parent=0 // loop_pre_header
    _
  $region3: #{decoder_forward_pallas.9} parent=0 // loop_header
    %s10 = sphi 0, %s14
    %p11 = scmp.ge.s32.totalorder %s10, 4
    %s20 = sphi 0, %s22
    %s23 = sphi 0, %s20
    %s24 = sphi 0, %s23
    %s40 = sphi 0, %s24
    %s44 = sphi 0, %s44
    %s46 = sphi 0, %s44
    %s47 = sphi 0, %s46
    %s61 = sphi 0, %s47
    %s65 = sphi 0, %s65
    %s67 = sphi 0, %s65
    %s68 = sphi 0, %s67
    %s82 = sphi 0, %s68
    %s86 = sphi 0, %s86
    %s88 = sphi 0, %s86
    %s89 = sphi 0, %s88
    %s103 = sphi 0, %s89
    %s109 = sphi 0, %s111
    %s112 = sphi 0, %s109
    %s113 = sphi 0, %s112
    %s129 = sphi 0, %s113
  $region4: #{decoder_forward_pallas.9} parent=0 // loop_header_branch
    %13 = sbr.rel (%p11) target = $region8
  $region5: #{decoder_forward_pallas.9} parent=0 // loop_body
    %s15 = ssub.s32 %s10, 1
    %s16 = ssub.s32 %s10, 2
    %s17 = sadd.s32 %s10, 1
    %s18 = ssub.s32 %s10, %s17
    %p19 = scmp.eq.s32.totalorder %s18, 0
    %s21 = sadd.s32 %s20, 1
    %s22 = scalar_select %p19, %s20, %s21
    %p25 = pneg %p19
    %p26 = scmp.eq.s32.totalorder %s10, 1
    %p27 = por %p25, %p26
    %p28 = scmp.ne.s32.totalorder %s20, %s23
    %p29 = scmp.eq.s32.totalorder %s10, 0
    %p30 = por %p28, %p29
    %p31 = scmp.ne.s32.totalorder %s20, %s23
    %p32 = scmp.eq.s32.totalorder %s15, 1
    %p33 = por %p31, %p32
    %p34 = scmp.ne.s32.totalorder %s23, %s24
    %p35 = scmp.eq.s32.totalorder %s15, 0
    %p36 = por %p34, %p35
    %p37 = scmp.ne.s32.totalorder %s23, %s24
    %p38 = scmp.eq.s32.totalorder %s16, 1
    %p39 = por %p37, %p38
    %p41 = scmp.ne.s32.totalorder %s24, %s40
    %p42 = scmp.eq.s32.totalorder %s16, 0
    %p43 = por %p41, %p42
    %s45 = sadd.s32 %s44, 1
    %p48 = scmp.eq.s32.totalorder %s10, 1
    %p49 = scmp.ne.s32.totalorder %s44, %s46
    %p50 = scmp.eq.s32.totalorder %s10, 0
    %p51 = por %p49, %p50
    %p52 = scmp.ne.s32.totalorder %s44, %s46
    %p53 = scmp.eq.s32.totalorder %s15, 1
    %p54 = por %p52, %p53
    %p55 = scmp.ne.s32.totalorder %s46, %s47
    %p56 = scmp.eq.s32.totalorder %s15, 0
    %p57 = por %p55, %p56
    %p58 = scmp.ne.s32.totalorder %s46, %s47
    %p59 = scmp.eq.s32.totalorder %s16, 1
    %p60 = por %p58, %p59
    %p62 = scmp.ne.s32.totalorder %s47, %s61
    %p63 = scmp.eq.s32.totalorder %s16, 0
    %p64 = por %p62, %p63
    %s66 = sadd.s32 %s65, 1
    %p69 = scmp.eq.s32.totalorder %s10, 1
    %p70 = scmp.ne.s32.totalorder %s65, %s67
    %p71 = scmp.eq.s32.totalorder %s10, 0
    %p72 = por %p70, %p71
    %p73 = scmp.ne.s32.totalorder %s65, %s67
    %p74 = scmp.eq.s32.totalorder %s15, 1
    %p75 = por %p73, %p74
    %p76 = scmp.ne.s32.totalorder %s67, %s68
    %p77 = scmp.eq.s32.totalorder %s15, 0
    %p78 = por %p76, %p77
    %p79 = scmp.ne.s32.totalorder %s67, %s68
    %p80 = scmp.eq.s32.totalorder %s16, 1
    %p81 = por %p79, %p80
    %p83 = scmp.ne.s32.totalorder %s68, %s82
    %p84 = scmp.eq.s32.totalorder %s16, 0
    %p85 = por %p83, %p84
    %s87 = sadd.s32 %s86, 1
    %p90 = scmp.eq.s32.totalorder %s10, 1
    %p91 = scmp.ne.s32.totalorder %s86, %s88
    %p92 = scmp.eq.s32.totalorder %s10, 0
    %p93 = por %p91, %p92
    %p94 = scmp.ne.s32.totalorder %s86, %s88
    %p95 = scmp.eq.s32.totalorder %s15, 1
    %p96 = por %p94, %p95
    %p97 = scmp.ne.s32.totalorder %s88, %s89
    %p98 = scmp.eq.s32.totalorder %s15, 0
    %p99 = por %p97, %p98
    %p100 = scmp.ne.s32.totalorder %s88, %s89
    %p101 = scmp.eq.s32.totalorder %s16, 1
    %p102 = por %p100, %p101
    %p104 = scmp.ne.s32.totalorder %s89, %s103
    %p105 = scmp.eq.s32.totalorder %s16, 0
    %p106 = por %p104, %p105
    %s107 = ssub.s32 %s10, %s17
    %p108 = scmp.eq.s32.totalorder %s107, 0
    %s110 = sadd.s32 %s109, 1
    %s111 = scalar_select %p108, %s109, %s110
    %p114 = pneg %p108
    %p115 = scmp.eq.s32.totalorder %s10, 1
    %p116 = por %p114, %p115
    %p117 = scmp.ne.s32.totalorder %s109, %s112
    %p118 = scmp.eq.s32.totalorder %s10, 0
    %p119 = por %p117, %p118
    %p120 = scmp.ne.s32.totalorder %s109, %s112
    %p121 = scmp.eq.s32.totalorder %s15, 1
    %p122 = por %p120, %p121
    %p123 = scmp.ne.s32.totalorder %s112, %s113
    %p124 = scmp.eq.s32.totalorder %s15, 0
    %p125 = por %p123, %p124
    %p126 = scmp.ne.s32.totalorder %s112, %s113
    %p127 = scmp.eq.s32.totalorder %s16, 1
    %p128 = por %p126, %p127
    %p130 = scmp.ne.s32.totalorder %s113, %s129
    %p131 = scmp.eq.s32.totalorder %s16, 0
    %p132 = por %p130, %p131
    %p133 = scmp.le.s32.totalorder 1, %s10
    %p134 = scmp.lt.s32.totalorder %s10, 3
    %p135 = pnand %p133, %p134
    %p136 = pneg %p135
    // Predicated region
    $region9: #{decoder_forward_pallas.9} parent=5 // pred_check
      _
    $region10: #{decoder_forward_pallas.9} parent=5 // pred_check_branch
      %138 = sbr.rel (%p135) target = $region12
    $region11: #{decoder_forward_pallas.9} parent=5 // pred_region
      %s139 = ssub.s32 %s10, 1
      // Predicated region
      $region13: #{decoder_forward_pallas.9} parent=11 // pred_check
        %p140 = pneg %p57
      $region14: #{decoder_forward_pallas.9} parent=11 // pred_check_branch
        %142 = sbr.rel (%p140) target = $region16
      $region15: #{decoder_forward_pallas.9} parent=11 // pred_region
        _
      $region16: #{decoder_forward_pallas.9} parent=11 // pred_fallthru
        _
      // Predicated region
      $region17: #{decoder_forward_pallas.9} parent=11 // pred_check
        %p143 = pneg %p78
      $region18: #{decoder_forward_pallas.9} parent=11 // pred_check_branch
        %145 = sbr.rel (%p143) target = $region20
      $region19: #{decoder_forward_pallas.9} parent=11 // pred_region
        _
      $region20: #{decoder_forward_pallas.9} parent=11 // pred_fallthru
        _
      // Predicated region
      $region21: #{decoder_forward_pallas.9} parent=11 // pred_check
        %p146 = pneg %p99
      $region22: #{decoder_forward_pallas.9} parent=11 // pred_check_branch
        %148 = sbr.rel (%p146) target = $region24
      $region23: #{decoder_forward_pallas.9} parent=11 // pred_region
        _
      $region24: #{decoder_forward_pallas.9} parent=11 // pred_fallthru
        _
    $region12: #{decoder_forward_pallas.9} parent=5 // pred_fallthru
      _
    %p149 = scmp.lt.s32.totalorder %s10, 2
    // Predicated region
    $region25: #{decoder_forward_pallas.9} parent=5 // pred_check
      %p150 = pneg %p149
    $region26: #{decoder_forward_pallas.9} parent=5 // pred_check_branch
      %152 = sbr.rel (%p150) target = $region28
    $region27: #{decoder_forward_pallas.9} parent=5 // pred_region
      // Predicated region
      $region29: #{decoder_forward_pallas.9} parent=27 // pred_check
        %p153 = pneg %p30
      $region30: #{decoder_forward_pallas.9} parent=27 // pred_check_branch
        %155 = sbr.rel (%p153) target = $region32
      $region31: #{decoder_forward_pallas.9} parent=27 // pred_region
        %s156 = smul.u32 128, %s10
        %p157 = scmp.lt.s32.totalorder %s156, 255
        %s158 = scalar_select %p157, %s156, 255
        %s159 = smul.addr %s158, 8
        %s160 = scalar_lea.vmem %s0, %s159
        %s161 = smul.u32 128, %s10
      $region32: #{decoder_forward_pallas.9} parent=27 // pred_fallthru
        _
    $region28: #{decoder_forward_pallas.9} parent=5 // pred_fallthru
      _
    %p162 = scmp.le.s32.totalorder 1, %s10
    %p163 = scmp.lt.s32.totalorder %s10, 3
    %p164 = pnand %p162, %p163
    %p165 = pneg %p164
    // Predicated region
    $region33: #{decoder_forward_pallas.9} parent=5 // pred_check
      _
    $region34: #{decoder_forward_pallas.9} parent=5 // pred_check_branch
      %167 = sbr.rel (%p164) target = $region36
    $region35: #{decoder_forward_pallas.9} parent=5 // pred_region
      %s168 = ssub.s32 %s10, 1
      %s169 = smul.u32 128, %s15
      %p170 = scmp.lt.s32.totalorder %s169, 255
      %s171 = scalar_select %p170, %s169, 255
      %s172 = smul.addr %s171, 8
      %s173 = scalar_lea.vmem %s0, %s172
      %p174 = pneg %p36
      %p175 = pneg %p33
      %p176 = pneg %p57
      %p177 = pneg %p54
      %p178 = pneg %p78
      %p179 = pneg %p75
      %p180 = pneg %p99
      %p181 = pneg %p96
      %p182 = pneg %p125
      %p183 = pneg %p122
      %s184 = smul.u32 128, %s15
      %p185 = scmp.lt.s32.totalorder %s184, 255
      %s186 = scalar_select %p185, %s184, 255
      %s187 = smul.addr %s186, 8
      %s188 = scalar_lea.vmem %s4, %s187
      %s189 = smul.u32 128, %s15
      %p190 = scmp.lt.s32.totalorder %s189, 255
      %s191 = scalar_select %p190, %s189, 255
      %s192 = smul.addr %s191, 8
      %s193 = scalar_lea.vmem %s0, %s192
      %s194 = smul.u32 128, %s15
      %s195 = smul.u32 128, %s15
      %p196 = scmp.lt.s32.totalorder %s195, 255
      %s197 = scalar_select %p196, %s195, 255
      %s198 = smul.addr %s197, 8
      %s199 = scalar_lea.vmem %s4, %s198
      %s200 = smul.u32 128, %s15
      %v201 = vld [vmem:[%s193] sm:$0xff]
      %v202 = vld [vmem:[%s193 + $0x8] sm:$0xff]
      %v203 = vld [vmem:[%s193 + $0x10] sm:$0xff]
      %v204 = vld [vmem:[%s193 + $0x18] sm:$0xff]
      %v205 = vld [vmem:[%s193 + $0x20] sm:$0xff]
      %v206 = vld [vmem:[%s193 + $0x28] sm:$0xff]
      %v207 = vld [vmem:[%s193 + $0x30] sm:$0xff]
      %v208 = vld [vmem:[%s193 + $0x38] sm:$0xff]
      %v209 = vld [vmem:[%s193 + $0x40] sm:$0xff]
      %v210 = vld [vmem:[%s193 + $0x48] sm:$0xff]
      %v211 = vld [vmem:[%s193 + $0x50] sm:$0xff]
      %v212 = vld [vmem:[%s193 + $0x58] sm:$0xff]
      %v213 = vld [vmem:[%s193 + $0x60] sm:$0xff]
      %v214 = vld [vmem:[%s193 + $0x68] sm:$0xff]
      %v215 = vld [vmem:[%s193 + $0x70] sm:$0xff]
      %v216 = vld [vmem:[%s193 + $0x78] sm:$0xff]
      %v217 = vld [vmem:[%s193 + $0x80] sm:$0xff]
      %v218 = vld [vmem:[%s193 + $0x88] sm:$0xff]
      %v219 = vld [vmem:[%s193 + $0x90] sm:$0xff]
      %v220 = vld [vmem:[%s193 + $0x98] sm:$0xff]
      %v221 = vld [vmem:[%s193 + $0xa0] sm:$0xff]
      %v222 = vld [vmem:[%s193 + $0xa8] sm:$0xff]
      %v223 = vld [vmem:[%s193 + $0xb0] sm:$0xff]
      %v224 = vld [vmem:[%s193 + $0xb8] sm:$0xff]
      %v225 = vld [vmem:[%s193 + $0xc0] sm:$0xff]
      %v226 = vld [vmem:[%s193 + $0xc8] sm:$0xff]
      %v227 = vld [vmem:[%s193 + $0xd0] sm:$0xff]
      %v228 = vld [vmem:[%s193 + $0xd8] sm:$0xff]
      %v229 = vld [vmem:[%s193 + $0xe0] sm:$0xff]
      %v230 = vld [vmem:[%s193 + $0xe8] sm:$0xff]
      %v231 = vld [vmem:[%s193 + $0xf0] sm:$0xff]
      %v232 = vld [vmem:[%s193 + $0xf8] sm:$0xff]
      %v233 = vld [vmem:[%s193 + $0x100] sm:$0xff]
      %v234 = vld [vmem:[%s193 + $0x108] sm:$0xff]
      %v235 = vld [vmem:[%s193 + $0x110] sm:$0xff]
      %v236 = vld [vmem:[%s193 + $0x118] sm:$0xff]
      %v237 = vld [vmem:[%s193 + $0x120] sm:$0xff]
      %v238 = vld [vmem:[%s193 + $0x128] sm:$0xff]
      %v239 = vld [vmem:[%s193 + $0x130] sm:$0xff]
      %v240 = vld [vmem:[%s193 + $0x138] sm:$0xff]
      %v241 = vld [vmem:[%s193 + $0x140] sm:$0xff]
      %v242 = vld [vmem:[%s193 + $0x148] sm:$0xff]
      %v243 = vld [vmem:[%s193 + $0x150] sm:$0xff]
      %v244 = vld [vmem:[%s193 + $0x158] sm:$0xff]
      %v245 = vld [vmem:[%s193 + $0x160] sm:$0xff]
      %v246 = vld [vmem:[%s193 + $0x168] sm:$0xff]
      %v247 = vld [vmem:[%s193 + $0x170] sm:$0xff]
      %v248 = vld [vmem:[%s193 + $0x178] sm:$0xff]
      %v249 = vld [vmem:[%s193 + $0x180] sm:$0xff]
      %v250 = vld [vmem:[%s193 + $0x188] sm:$0xff]
      %v251 = vld [vmem:[%s193 + $0x190] sm:$0xff]
      %v252 = vld [vmem:[%s193 + $0x198] sm:$0xff]
      %v253 = vld [vmem:[%s193 + $0x1a0] sm:$0xff]
      %v254 = vld [vmem:[%s193 + $0x1a8] sm:$0xff]
      %v255 = vld [vmem:[%s193 + $0x1b0] sm:$0xff]
      %v256 = vld [vmem:[%s193 + $0x1b8] sm:$0xff]
      %v257 = vld [vmem:[%s193 + $0x1c0] sm:$0xff]
      %v258 = vld [vmem:[%s193 + $0x1c8] sm:$0xff]
      %v259 = vld [vmem:[%s193 + $0x1d0] sm:$0xff]
      %v260 = vld [vmem:[%s193 + $0x1d8] sm:$0xff]
      %v261 = vld [vmem:[%s193 + $0x1e0] sm:$0xff]
      %v262 = vld [vmem:[%s193 + $0x1e8] sm:$0xff]
      %v263 = vld [vmem:[%s193 + $0x1f0] sm:$0xff]
      %v264 = vld [vmem:[%s193 + $0x1f8] sm:$0xff]
      %v265 = vld [vmem:[%s193 + $0x200] sm:$0xff]
      %v266 = vld [vmem:[%s193 + $0x208] sm:$0xff]
      %v267 = vld [vmem:[%s193 + $0x210] sm:$0xff]
      %v268 = vld [vmem:[%s193 + $0x218] sm:$0xff]
      %v269 = vld [vmem:[%s193 + $0x220] sm:$0xff]
      %v270 = vld [vmem:[%s193 + $0x228] sm:$0xff]
      %v271 = vld [vmem:[%s193 + $0x230] sm:$0xff]
      %v272 = vld [vmem:[%s193 + $0x238] sm:$0xff]
      %v273 = vld [vmem:[%s193 + $0x240] sm:$0xff]
      %v274 = vld [vmem:[%s193 + $0x248] sm:$0xff]
      %v275 = vld [vmem:[%s193 + $0x250] sm:$0xff]
      %v276 = vld [vmem:[%s193 + $0x258] sm:$0xff]
      %v277 = vld [vmem:[%s193 + $0x260] sm:$0xff]
      %v278 = vld [vmem:[%s193 + $0x268] sm:$0xff]
      %v279 = vld [vmem:[%s193 + $0x270] sm:$0xff]
      %v280 = vld [vmem:[%s193 + $0x278] sm:$0xff]
      %v281 = vld [vmem:[%s193 + $0x280] sm:$0xff]
      %v282 = vld [vmem:[%s193 + $0x288] sm:$0xff]
      %v283 = vld [vmem:[%s193 + $0x290] sm:$0xff]
      %v284 = vld [vmem:[%s193 + $0x298] sm:$0xff]
      %v285 = vld [vmem:[%s193 + $0x2a0] sm:$0xff]
      %v286 = vld [vmem:[%s193 + $0x2a8] sm:$0xff]
      %v287 = vld [vmem:[%s193 + $0x2b0] sm:$0xff]
      %v288 = vld [vmem:[%s193 + $0x2b8] sm:$0xff]
      %v289 = vld [vmem:[%s193 + $0x2c0] sm:$0xff]
      %v290 = vld [vmem:[%s193 + $0x2c8] sm:$0xff]
      %v291 = vld [vmem:[%s193 + $0x2d0] sm:$0xff]
      %v292 = vld [vmem:[%s193 + $0x2d8] sm:$0xff]
      %v293 = vld [vmem:[%s193 + $0x2e0] sm:$0xff]
      %v294 = vld [vmem:[%s193 + $0x2e8] sm:$0xff]
      %v295 = vld [vmem:[%s193 + $0x2f0] sm:$0xff]
      %v296 = vld [vmem:[%s193 + $0x2f8] sm:$0xff]
      %v297 = vld [vmem:[%s193 + $0x300] sm:$0xff]
      %v298 = vld [vmem:[%s193 + $0x308] sm:$0xff]
      %v299 = vld [vmem:[%s193 + $0x310] sm:$0xff]
      %v300 = vld [vmem:[%s193 + $0x318] sm:$0xff]
      %v301 = vld [vmem:[%s193 + $0x320] sm:$0xff]
      %v302 = vld [vmem:[%s193 + $0x328] sm:$0xff]
      %v303 = vld [vmem:[%s193 + $0x330] sm:$0xff]
      %v304 = vld [vmem:[%s193 + $0x338] sm:$0xff]
      %v305 = vld [vmem:[%s193 + $0x340] sm:$0xff]
      %v306 = vld [vmem:[%s193 + $0x348] sm:$0xff]
      %v307 = vld [vmem:[%s193 + $0x350] sm:$0xff]
      %v308 = vld [vmem:[%s193 + $0x358] sm:$0xff]
      %v309 = vld [vmem:[%s193 + $0x360] sm:$0xff]
      %v310 = vld [vmem:[%s193 + $0x368] sm:$0xff]
      %v311 = vld [vmem:[%s193 + $0x370] sm:$0xff]
      %v312 = vld [vmem:[%s193 + $0x378] sm:$0xff]
      %v313 = vld [vmem:[%s193 + $0x380] sm:$0xff]
      %v314 = vld [vmem:[%s193 + $0x388] sm:$0xff]
      %v315 = vld [vmem:[%s193 + $0x390] sm:$0xff]
      %v316 = vld [vmem:[%s193 + $0x398] sm:$0xff]
      %v317 = vld [vmem:[%s193 + $0x3a0] sm:$0xff]
      %v318 = vld [vmem:[%s193 + $0x3a8] sm:$0xff]
      %v319 = vld [vmem:[%s193 + $0x3b0] sm:$0xff]
      %v320 = vld [vmem:[%s193 + $0x3b8] sm:$0xff]
      %v321 = vld [vmem:[%s193 + $0x3c0] sm:$0xff]
      %v322 = vld [vmem:[%s193 + $0x3c8] sm:$0xff]
      %v323 = vld [vmem:[%s193 + $0x3d0] sm:$0xff]
      %v324 = vld [vmem:[%s193 + $0x3d8] sm:$0xff]
      %v325 = vld [vmem:[%s193 + $0x3e0] sm:$0xff]
      %v326 = vld [vmem:[%s193 + $0x3e8] sm:$0xff]
      %v327 = vld [vmem:[%s193 + $0x3f0] sm:$0xff]
      %v328 = vld [vmem:[%s193 + $0x3f8] sm:$0xff]
      %v329 = vld [vmem:[%s1] sm:$0x1]
      %v331 = vperm.slane %v329, 0
      %v333 = vmul.f32 %v201, %v331
      %v334 = vmul.f32 %v202, %v331
      %v335 = vmul.f32 %v203, %v331
      %v336 = vmul.f32 %v204, %v331
      %v337 = vmul.f32 %v205, %v331
      %v338 = vmul.f32 %v206, %v331
      %v339 = vmul.f32 %v207, %v331
      %v340 = vmul.f32 %v208, %v331
      %v341 = vmul.f32 %v209, %v331
      %v342 = vmul.f32 %v210, %v331
      %v343 = vmul.f32 %v211, %v331
      %v344 = vmul.f32 %v212, %v331
      %v345 = vmul.f32 %v213, %v331
      %v346 = vmul.f32 %v214, %v331
      %v347 = vmul.f32 %v215, %v331
      %v348 = vmul.f32 %v216, %v331
      %v349 = vmul.f32 %v217, %v331
      %v350 = vmul.f32 %v218, %v331
      %v351 = vmul.f32 %v219, %v331
      %v352 = vmul.f32 %v220, %v331
      %v353 = vmul.f32 %v221, %v331
      %v354 = vmul.f32 %v222, %v331
      %v355 = vmul.f32 %v223, %v331
      %v356 = vmul.f32 %v224, %v331
      %v357 = vmul.f32 %v225, %v331
      %v358 = vmul.f32 %v226, %v331
      %v359 = vmul.f32 %v227, %v331
      %v360 = vmul.f32 %v228, %v331
      %v361 = vmul.f32 %v229, %v331
      %v362 = vmul.f32 %v230, %v331
      %v363 = vmul.f32 %v231, %v331
      %v364 = vmul.f32 %v232, %v331
      %v365 = vmul.f32 %v233, %v331
      %v366 = vmul.f32 %v234, %v331
      %v367 = vmul.f32 %v235, %v331
      %v368 = vmul.f32 %v236, %v331
      %v369 = vmul.f32 %v237, %v331
      %v370 = vmul.f32 %v238, %v331
      %v371 = vmul.f32 %v239, %v331
      %v372 = vmul.f32 %v240, %v331
      %v373 = vmul.f32 %v241, %v331
      %v374 = vmul.f32 %v242, %v331
      %v375 = vmul.f32 %v243, %v331
      %v376 = vmul.f32 %v244, %v331
      %v377 = vmul.f32 %v245, %v331
      %v378 = vmul.f32 %v246, %v331
      %v379 = vmul.f32 %v247, %v331
      %v380 = vmul.f32 %v248, %v331
      %v381 = vmul.f32 %v249, %v331
      %v382 = vmul.f32 %v250, %v331
      %v383 = vmul.f32 %v251, %v331
      %v384 = vmul.f32 %v252, %v331
      %v385 = vmul.f32 %v253, %v331
      %v386 = vmul.f32 %v254, %v331
      %v387 = vmul.f32 %v255, %v331
      %v388 = vmul.f32 %v256, %v331
      %v389 = vmul.f32 %v257, %v331
      %v390 = vmul.f32 %v258, %v331
      %v391 = vmul.f32 %v259, %v331
      %v392 = vmul.f32 %v260, %v331
      %v393 = vmul.f32 %v261, %v331
      %v394 = vmul.f32 %v262, %v331
      %v395 = vmul.f32 %v263, %v331
      %v396 = vmul.f32 %v264, %v331
      %v397 = vmul.f32 %v265, %v331
      %v398 = vmul.f32 %v266, %v331
      %v399 = vmul.f32 %v267, %v331
      %v400 = vmul.f32 %v268, %v331
      %v401 = vmul.f32 %v269, %v331
      %v402 = vmul.f32 %v270, %v331
      %v403 = vmul.f32 %v271, %v331
      %v404 = vmul.f32 %v272, %v331
      %v405 = vmul.f32 %v273, %v331
      %v406 = vmul.f32 %v274, %v331
      %v407 = vmul.f32 %v275, %v331
      %v408 = vmul.f32 %v276, %v331
      %v409 = vmul.f32 %v277, %v331
      %v410 = vmul.f32 %v278, %v331
      %v411 = vmul.f32 %v279, %v331
      %v412 = vmul.f32 %v280, %v331
      %v413 = vmul.f32 %v281, %v331
      %v414 = vmul.f32 %v282, %v331
      %v415 = vmul.f32 %v283, %v331
      %v416 = vmul.f32 %v284, %v331
      %v417 = vmul.f32 %v285, %v331
      %v418 = vmul.f32 %v286, %v331
      %v419 = vmul.f32 %v287, %v331
      %v420 = vmul.f32 %v288, %v331
      %v421 = vmul.f32 %v289, %v331
      %v422 = vmul.f32 %v290, %v331
      %v423 = vmul.f32 %v291, %v331
      %v424 = vmul.f32 %v292, %v331
      %v425 = vmul.f32 %v293, %v331
      %v426 = vmul.f32 %v294, %v331
      %v427 = vmul.f32 %v295, %v331
      %v428 = vmul.f32 %v296, %v331
      %v429 = vmul.f32 %v297, %v331
      %v430 = vmul.f32 %v298, %v331
      %v431 = vmul.f32 %v299, %v331
      %v432 = vmul.f32 %v300, %v331
      %v433 = vmul.f32 %v301, %v331
      %v434 = vmul.f32 %v302, %v331
      %v435 = vmul.f32 %v303, %v331
      %v436 = vmul.f32 %v304, %v331
      %v437 = vmul.f32 %v305, %v331
      %v438 = vmul.f32 %v306, %v331
      %v439 = vmul.f32 %v307, %v331
      %v440 = vmul.f32 %v308, %v331
      %v441 = vmul.f32 %v309, %v331
      %v442 = vmul.f32 %v310, %v331
      %v443 = vmul.f32 %v311, %v331
      %v444 = vmul.f32 %v312, %v331
      %v445 = vmul.f32 %v313, %v331
      %v446 = vmul.f32 %v314, %v331
      %v447 = vmul.f32 %v315, %v331
      %v448 = vmul.f32 %v316, %v331
      %v449 = vmul.f32 %v317, %v331
      %v450 = vmul.f32 %v318, %v331
      %v451 = vmul.f32 %v319, %v331
      %v452 = vmul.f32 %v320, %v331
      %v453 = vmul.f32 %v321, %v331
      %v454 = vmul.f32 %v322, %v331
      %v455 = vmul.f32 %v323, %v331
      %v456 = vmul.f32 %v324, %v331
      %v457 = vmul.f32 %v325, %v331
      %v458 = vmul.f32 %v326, %v331
      %v459 = vmul.f32 %v327, %v331
      %v460 = vmul.f32 %v328, %v331
      %v461 = vld [vmem:[%s2] sm:$0x1]
      %v463 = vperm.slane %v461, 0
      %v465 = vadd.f32 %v333, %v463
      %v466 = vadd.f32 %v334, %v463
      %v467 = vadd.f32 %v335, %v463
      %v468 = vadd.f32 %v336, %v463
      %v469 = vadd.f32 %v337, %v463
      %v470 = vadd.f32 %v338, %v463
      %v471 = vadd.f32 %v339, %v463
      %v472 = vadd.f32 %v340, %v463
      %v473 = vadd.f32 %v341, %v463
      %v474 = vadd.f32 %v342, %v463
      %v475 = vadd.f32 %v343, %v463
      %v476 = vadd.f32 %v344, %v463
      %v477 = vadd.f32 %v345, %v463
      %v478 = vadd.f32 %v346, %v463
      %v479 = vadd.f32 %v347, %v463
      %v480 = vadd.f32 %v348, %v463
      %v481 = vadd.f32 %v349, %v463
      %v482 = vadd.f32 %v350, %v463
      %v483 = vadd.f32 %v351, %v463
      %v484 = vadd.f32 %v352, %v463
      %v485 = vadd.f32 %v353, %v463
      %v486 = vadd.f32 %v354, %v463
      %v487 = vadd.f32 %v355, %v463
      %v488 = vadd.f32 %v356, %v463
      %v489 = vadd.f32 %v357, %v463
      %v490 = vadd.f32 %v358, %v463
      %v491 = vadd.f32 %v359, %v463
      %v492 = vadd.f32 %v360, %v463
      %v493 = vadd.f32 %v361, %v463
      %v494 = vadd.f32 %v362, %v463
      %v495 = vadd.f32 %v363, %v463
      %v496 = vadd.f32 %v364, %v463
      %v497 = vadd.f32 %v365, %v463
      %v498 = vadd.f32 %v366, %v463
      %v499 = vadd.f32 %v367, %v463
      %v500 = vadd.f32 %v368, %v463
      %v501 = vadd.f32 %v369, %v463
      %v502 = vadd.f32 %v370, %v463
      %v503 = vadd.f32 %v371, %v463
      %v504 = vadd.f32 %v372, %v463
      %v505 = vadd.f32 %v373, %v463
      %v506 = vadd.f32 %v374, %v463
      %v507 = vadd.f32 %v375, %v463
      %v508 = vadd.f32 %v376, %v463
      %v509 = vadd.f32 %v377, %v463
      %v510 = vadd.f32 %v378, %v463
      %v511 = vadd.f32 %v379, %v463
      %v512 = vadd.f32 %v380, %v463
      %v513 = vadd.f32 %v381, %v463
      %v514 = vadd.f32 %v382, %v463
      %v515 = vadd.f32 %v383, %v463
      %v516 = vadd.f32 %v384, %v463
      %v517 = vadd.f32 %v385, %v463
      %v518 = vadd.f32 %v386, %v463
      %v519 = vadd.f32 %v387, %v463
      %v520 = vadd.f32 %v388, %v463
      %v521 = vadd.f32 %v389, %v463
      %v522 = vadd.f32 %v390, %v463
      %v523 = vadd.f32 %v391, %v463
      %v524 = vadd.f32 %v392, %v463
      %v525 = vadd.f32 %v393, %v463
      %v526 = vadd.f32 %v394, %v463
      %v527 = vadd.f32 %v395, %v463
      %v528 = vadd.f32 %v396, %v463
      %v529 = vadd.f32 %v397, %v463
      %v530 = vadd.f32 %v398, %v463
      %v531 = vadd.f32 %v399, %v463
      %v532 = vadd.f32 %v400, %v463
      %v533 = vadd.f32 %v401, %v463
      %v534 = vadd.f32 %v402, %v463
      %v535 = vadd.f32 %v403, %v463
      %v536 = vadd.f32 %v404, %v463
      %v537 = vadd.f32 %v405, %v463
      %v538 = vadd.f32 %v406, %v463
      %v539 = vadd.f32 %v407, %v463
      %v540 = vadd.f32 %v408, %v463
      %v541 = vadd.f32 %v409, %v463
      %v542 = vadd.f32 %v410, %v463
      %v543 = vadd.f32 %v411, %v463
      %v544 = vadd.f32 %v412, %v463
      %v545 = vadd.f32 %v413, %v463
      %v546 = vadd.f32 %v414, %v463
      %v547 = vadd.f32 %v415, %v463
      %v548 = vadd.f32 %v416, %v463
      %v549 = vadd.f32 %v417, %v463
      %v550 = vadd.f32 %v418, %v463
      %v551 = vadd.f32 %v419, %v463
      %v552 = vadd.f32 %v420, %v463
      %v553 = vadd.f32 %v421, %v463
      %v554 = vadd.f32 %v422, %v463
      %v555 = vadd.f32 %v423, %v463
      %v556 = vadd.f32 %v424, %v463
      %v557 = vadd.f32 %v425, %v463
      %v558 = vadd.f32 %v426, %v463
      %v559 = vadd.f32 %v427, %v463
      %v560 = vadd.f32 %v428, %v463
      %v561 = vadd.f32 %v429, %v463
      %v562 = vadd.f32 %v430, %v463
      %v563 = vadd.f32 %v431, %v463
      %v564 = vadd.f32 %v432, %v463
      %v565 = vadd.f32 %v433, %v463
      %v566 = vadd.f32 %v434, %v463
      %v567 = vadd.f32 %v435, %v463
      %v568 = vadd.f32 %v436, %v463
      %v569 = vadd.f32 %v437, %v463
      %v570 = vadd.f32 %v438, %v463
      %v571 = vadd.f32 %v439, %v463
      %v572 = vadd.f32 %v440, %v463
      %v573 = vadd.f32 %v441, %v463
      %v574 = vadd.f32 %v442, %v463
      %v575 = vadd.f32 %v443, %v463
      %v576 = vadd.f32 %v444, %v463
      %v577 = vadd.f32 %v445, %v463
      %v578 = vadd.f32 %v446, %v463
      %v579 = vadd.f32 %v447, %v463
      %v580 = vadd.f32 %v448, %v463
      %v581 = vadd.f32 %v449, %v463
      %v582 = vadd.f32 %v450, %v463
      %v583 = vadd.f32 %v451, %v463
      %v584 = vadd.f32 %v452, %v463
      %v585 = vadd.f32 %v453, %v463
      %v586 = vadd.f32 %v454, %v463
      %v587 = vadd.f32 %v455, %v463
      %v588 = vadd.f32 %v456, %v463
      %v589 = vadd.f32 %v457, %v463
      %v590 = vadd.f32 %v458, %v463
      %v591 = vadd.f32 %v459, %v463
      %v592 = vadd.f32 %v460, %v463
      %vm593 = vcmp.ge.f32.partialorder %v465, 0.0
      %vm594 = vcmp.ge.f32.partialorder %v466, 0.0
      %vm595 = vcmp.ge.f32.partialorder %v467, 0.0
      %vm596 = vcmp.ge.f32.partialorder %v468, 0.0
      %vm597 = vcmp.ge.f32.partialorder %v469, 0.0
      %vm598 = vcmp.ge.f32.partialorder %v470, 0.0
      %vm599 = vcmp.ge.f32.partialorder %v471, 0.0
      %vm600 = vcmp.ge.f32.partialorder %v472, 0.0
      %vm601 = vcmp.ge.f32.partialorder %v473, 0.0
      %vm602 = vcmp.ge.f32.partialorder %v474, 0.0
      %vm603 = vcmp.ge.f32.partialorder %v475, 0.0
      %vm604 = vcmp.ge.f32.partialorder %v476, 0.0
      %vm605 = vcmp.ge.f32.partialorder %v477, 0.0
      %vm606 = vcmp.ge.f32.partialorder %v478, 0.0
      %vm607 = vcmp.ge.f32.partialorder %v479, 0.0
      %vm608 = vcmp.ge.f32.partialorder %v480, 0.0
      %vm609 = vcmp.ge.f32.partialorder %v481, 0.0
      %vm610 = vcmp.ge.f32.partialorder %v482, 0.0
      %vm611 = vcmp.ge.f32.partialorder %v483, 0.0
      %vm612 = vcmp.ge.f32.partialorder %v484, 0.0
      %vm613 = vcmp.ge.f32.partialorder %v485, 0.0
      %vm614 = vcmp.ge.f32.partialorder %v486, 0.0
      %vm615 = vcmp.ge.f32.partialorder %v487, 0.0
      %vm616 = vcmp.ge.f32.partialorder %v488, 0.0
      %vm617 = vcmp.ge.f32.partialorder %v489, 0.0
      %vm618 = vcmp.ge.f32.partialorder %v490, 0.0
      %vm619 = vcmp.ge.f32.partialorder %v491, 0.0
      %vm620 = vcmp.ge.f32.partialorder %v492, 0.0
      %vm621 = vcmp.ge.f32.partialorder %v493, 0.0
      %vm622 = vcmp.ge.f32.partialorder %v494, 0.0
      %vm623 = vcmp.ge.f32.partialorder %v495, 0.0
      %vm624 = vcmp.ge.f32.partialorder %v496, 0.0
      %vm625 = vcmp.ge.f32.partialorder %v497, 0.0
      %vm626 = vcmp.ge.f32.partialorder %v498, 0.0
      %vm627 = vcmp.ge.f32.partialorder %v499, 0.0
      %vm628 = vcmp.ge.f32.partialorder %v500, 0.0
      %vm629 = vcmp.ge.f32.partialorder %v501, 0.0
      %vm630 = vcmp.ge.f32.partialorder %v502, 0.0
      %vm631 = vcmp.ge.f32.partialorder %v503, 0.0
      %vm632 = vcmp.ge.f32.partialorder %v504, 0.0
      %vm633 = vcmp.ge.f32.partialorder %v505, 0.0
      %vm634 = vcmp.ge.f32.partialorder %v506, 0.0
      %vm635 = vcmp.ge.f32.partialorder %v507, 0.0
      %vm636 = vcmp.ge.f32.partialorder %v508, 0.0
      %vm637 = vcmp.ge.f32.partialorder %v509, 0.0
      %vm638 = vcmp.ge.f32.partialorder %v510, 0.0
      %vm639 = vcmp.ge.f32.partialorder %v511, 0.0
      %vm640 = vcmp.ge.f32.partialorder %v512, 0.0
      %vm641 = vcmp.ge.f32.partialorder %v513, 0.0
      %vm642 = vcmp.ge.f32.partialorder %v514, 0.0
      %vm643 = vcmp.ge.f32.partialorder %v515, 0.0
      %vm644 = vcmp.ge.f32.partialorder %v516, 0.0
      %vm645 = vcmp.ge.f32.partialorder %v517, 0.0
      %vm646 = vcmp.ge.f32.partialorder %v518, 0.0
      %vm647 = vcmp.ge.f32.partialorder %v519, 0.0
      %vm648 = vcmp.ge.f32.partialorder %v520, 0.0
      %vm649 = vcmp.ge.f32.partialorder %v521, 0.0
      %vm650 = vcmp.ge.f32.partialorder %v522, 0.0
      %vm651 = vcmp.ge.f32.partialorder %v523, 0.0
      %vm652 = vcmp.ge.f32.partialorder %v524, 0.0
      %vm653 = vcmp.ge.f32.partialorder %v525, 0.0
      %vm654 = vcmp.ge.f32.partialorder %v526, 0.0
      %vm655 = vcmp.ge.f32.partialorder %v527, 0.0
      %vm656 = vcmp.ge.f32.partialorder %v528, 0.0
      %vm657 = vcmp.ge.f32.partialorder %v529, 0.0
      %vm658 = vcmp.ge.f32.partialorder %v530, 0.0
      %vm659 = vcmp.ge.f32.partialorder %v531, 0.0
      %vm660 = vcmp.ge.f32.partialorder %v532, 0.0
      %vm661 = vcmp.ge.f32.partialorder %v533, 0.0
      %vm662 = vcmp.ge.f32.partialorder %v534, 0.0
      %vm663 = vcmp.ge.f32.partialorder %v535, 0.0
      %vm664 = vcmp.ge.f32.partialorder %v536, 0.0
      %vm665 = vcmp.ge.f32.partialorder %v537, 0.0
      %vm666 = vcmp.ge.f32.partialorder %v538, 0.0
      %vm667 = vcmp.ge.f32.partialorder %v539, 0.0
      %vm668 = vcmp.ge.f32.partialorder %v540, 0.0
      %vm669 = vcmp.ge.f32.partialorder %v541, 0.0
      %vm670 = vcmp.ge.f32.partialorder %v542, 0.0
      %vm671 = vcmp.ge.f32.partialorder %v543, 0.0
      %vm672 = vcmp.ge.f32.partialorder %v544, 0.0
      %vm673 = vcmp.ge.f32.partialorder %v545, 0.0
      %vm674 = vcmp.ge.f32.partialorder %v546, 0.0
      %vm675 = vcmp.ge.f32.partialorder %v547, 0.0
      %vm676 = vcmp.ge.f32.partialorder %v548, 0.0
      %vm677 = vcmp.ge.f32.partialorder %v549, 0.0
      %vm678 = vcmp.ge.f32.partialorder %v550, 0.0
      %vm679 = vcmp.ge.f32.partialorder %v551, 0.0
      %vm680 = vcmp.ge.f32.partialorder %v552, 0.0
      %vm681 = vcmp.ge.f32.partialorder %v553, 0.0
      %vm682 = vcmp.ge.f32.partialorder %v554, 0.0
      %vm683 = vcmp.ge.f32.partialorder %v555, 0.0
      %vm684 = vcmp.ge.f32.partialorder %v556, 0.0
      %vm685 = vcmp.ge.f32.partialorder %v557, 0.0
      %vm686 = vcmp.ge.f32.partialorder %v558, 0.0
      %vm687 = vcmp.ge.f32.partialorder %v559, 0.0
      %vm688 = vcmp.ge.f32.partialorder %v560, 0.0
      %vm689 = vcmp.ge.f32.partialorder %v561, 0.0
      %vm690 = vcmp.ge.f32.partialorder %v562, 0.0
      %vm691 = vcmp.ge.f32.partialorder %v563, 0.0
      %vm692 = vcmp.ge.f32.partialorder %v564, 0.0
      %vm693 = vcmp.ge.f32.partialorder %v565, 0.0
      %vm694 = vcmp.ge.f32.partialorder %v566, 0.0
      %vm695 = vcmp.ge.f32.partialorder %v567, 0.0
      %vm696 = vcmp.ge.f32.partialorder %v568, 0.0
      %vm697 = vcmp.ge.f32.partialorder %v569, 0.0
      %vm698 = vcmp.ge.f32.partialorder %v570, 0.0
      %vm699 = vcmp.ge.f32.partialorder %v571, 0.0
      %vm700 = vcmp.ge.f32.partialorder %v572, 0.0
      %vm701 = vcmp.ge.f32.partialorder %v573, 0.0
      %vm702 = vcmp.ge.f32.partialorder %v574, 0.0
      %vm703 = vcmp.ge.f32.partialorder %v575, 0.0
      %vm704 = vcmp.ge.f32.partialorder %v576, 0.0
      %vm705 = vcmp.ge.f32.partialorder %v577, 0.0
      %vm706 = vcmp.ge.f32.partialorder %v578, 0.0
      %vm707 = vcmp.ge.f32.partialorder %v579, 0.0
      %vm708 = vcmp.ge.f32.partialorder %v580, 0.0
      %vm709 = vcmp.ge.f32.partialorder %v581, 0.0
      %vm710 = vcmp.ge.f32.partialorder %v582, 0.0
      %vm711 = vcmp.ge.f32.partialorder %v583, 0.0
      %vm712 = vcmp.ge.f32.partialorder %v584, 0.0
      %vm713 = vcmp.ge.f32.partialorder %v585, 0.0
      %vm714 = vcmp.ge.f32.partialorder %v586, 0.0
      %vm715 = vcmp.ge.f32.partialorder %v587, 0.0
      %vm716 = vcmp.ge.f32.partialorder %v588, 0.0
      %vm717 = vcmp.ge.f32.partialorder %v589, 0.0
      %vm718 = vcmp.ge.f32.partialorder %v590, 0.0
      %vm719 = vcmp.ge.f32.partialorder %v591, 0.0
      %vm720 = vcmp.ge.f32.partialorder %v592, 0.0
      %v721 = vmul.f32 %v465, 0.1
      %v722 = vmul.f32 %v466, 0.1
      %v723 = vmul.f32 %v467, 0.1
      %v724 = vmul.f32 %v468, 0.1
      %v725 = vmul.f32 %v469, 0.1
      %v726 = vmul.f32 %v470, 0.1
      %v727 = vmul.f32 %v471, 0.1
      %v728 = vmul.f32 %v472, 0.1
      %v729 = vmul.f32 %v473, 0.1
      %v730 = vmul.f32 %v474, 0.1
      %v731 = vmul.f32 %v475, 0.1
      %v732 = vmul.f32 %v476, 0.1
      %v733 = vmul.f32 %v477, 0.1
      %v734 = vmul.f32 %v478, 0.1
      %v735 = vmul.f32 %v479, 0.1
      %v736 = vmul.f32 %v480, 0.1
      %v737 = vmul.f32 %v481, 0.1
      %v738 = vmul.f32 %v482, 0.1
      %v739 = vmul.f32 %v483, 0.1
      %v740 = vmul.f32 %v484, 0.1
      %v741 = vmul.f32 %v485, 0.1
      %v742 = vmul.f32 %v486, 0.1
      %v743 = vmul.f32 %v487, 0.1
      %v744 = vmul.f32 %v488, 0.1
      %v745 = vmul.f32 %v489, 0.1
      %v746 = vmul.f32 %v490, 0.1
      %v747 = vmul.f32 %v491, 0.1
      %v748 = vmul.f32 %v492, 0.1
      %v749 = vmul.f32 %v493, 0.1
      %v750 = vmul.f32 %v494, 0.1
      %v751 = vmul.f32 %v495, 0.1
      %v752 = vmul.f32 %v496, 0.1
      %v753 = vmul.f32 %v497, 0.1
      %v754 = vmul.f32 %v498, 0.1
      %v755 = vmul.f32 %v499, 0.1
      %v756 = vmul.f32 %v500, 0.1
      %v757 = vmul.f32 %v501, 0.1
      %v758 = vmul.f32 %v502, 0.1
      %v759 = vmul.f32 %v503, 0.1
      %v760 = vmul.f32 %v504, 0.1
      %v761 = vmul.f32 %v505, 0.1
      %v762 = vmul.f32 %v506, 0.1
      %v763 = vmul.f32 %v507, 0.1
      %v764 = vmul.f32 %v508, 0.1
      %v765 = vmul.f32 %v509, 0.1
      %v766 = vmul.f32 %v510, 0.1
      %v767 = vmul.f32 %v511, 0.1
      %v768 = vmul.f32 %v512, 0.1
      %v769 = vmul.f32 %v513, 0.1
      %v770 = vmul.f32 %v514, 0.1
      %v771 = vmul.f32 %v515, 0.1
      %v772 = vmul.f32 %v516, 0.1
      %v773 = vmul.f32 %v517, 0.1
      %v774 = vmul.f32 %v518, 0.1
      %v775 = vmul.f32 %v519, 0.1
      %v776 = vmul.f32 %v520, 0.1
      %v777 = vmul.f32 %v521, 0.1
      %v778 = vmul.f32 %v522, 0.1
      %v779 = vmul.f32 %v523, 0.1
      %v780 = vmul.f32 %v524, 0.1
      %v781 = vmul.f32 %v525, 0.1
      %v782 = vmul.f32 %v526, 0.1
      %v783 = vmul.f32 %v527, 0.1
      %v784 = vmul.f32 %v528, 0.1
      %v785 = vmul.f32 %v529, 0.1
      %v786 = vmul.f32 %v530, 0.1
      %v787 = vmul.f32 %v531, 0.1
      %v788 = vmul.f32 %v532, 0.1
      %v789 = vmul.f32 %v533, 0.1
      %v790 = vmul.f32 %v534, 0.1
      %v791 = vmul.f32 %v535, 0.1
      %v792 = vmul.f32 %v536, 0.1
      %v793 = vmul.f32 %v537, 0.1
      %v794 = vmul.f32 %v538, 0.1
      %v795 = vmul.f32 %v539, 0.1
      %v796 = vmul.f32 %v540, 0.1
      %v797 = vmul.f32 %v541, 0.1
      %v798 = vmul.f32 %v542, 0.1
      %v799 = vmul.f32 %v543, 0.1
      %v800 = vmul.f32 %v544, 0.1
      %v801 = vmul.f32 %v545, 0.1
      %v802 = vmul.f32 %v546, 0.1
      %v803 = vmul.f32 %v547, 0.1
      %v804 = vmul.f32 %v548, 0.1
      %v805 = vmul.f32 %v549, 0.1
      %v806 = vmul.f32 %v550, 0.1
      %v807 = vmul.f32 %v551, 0.1
      %v808 = vmul.f32 %v552, 0.1
      %v809 = vmul.f32 %v553, 0.1
      %v810 = vmul.f32 %v554, 0.1
      %v811 = vmul.f32 %v555, 0.1
      %v812 = vmul.f32 %v556, 0.1
      %v813 = vmul.f32 %v557, 0.1
      %v814 = vmul.f32 %v558, 0.1
      %v815 = vmul.f32 %v559, 0.1
      %v816 = vmul.f32 %v560, 0.1
      %v817 = vmul.f32 %v561, 0.1
      %v818 = vmul.f32 %v562, 0.1
      %v819 = vmul.f32 %v563, 0.1
      %v820 = vmul.f32 %v564, 0.1
      %v821 = vmul.f32 %v565, 0.1
      %v822 = vmul.f32 %v566, 0.1
      %v823 = vmul.f32 %v567, 0.1
      %v824 = vmul.f32 %v568, 0.1
      %v825 = vmul.f32 %v569, 0.1
      %v826 = vmul.f32 %v570, 0.1
      %v827 = vmul.f32 %v571, 0.1
      %v828 = vmul.f32 %v572, 0.1
      %v829 = vmul.f32 %v573, 0.1
      %v830 = vmul.f32 %v574, 0.1
      %v831 = vmul.f32 %v575, 0.1
      %v832 = vmul.f32 %v576, 0.1
      %v833 = vmul.f32 %v577, 0.1
      %v834 = vmul.f32 %v578, 0.1
      %v835 = vmul.f32 %v579, 0.1
      %v836 = vmul.f32 %v580, 0.1
      %v837 = vmul.f32 %v581, 0.1
      %v838 = vmul.f32 %v582, 0.1
      %v839 = vmul.f32 %v583, 0.1
      %v840 = vmul.f32 %v584, 0.1
      %v841 = vmul.f32 %v585, 0.1
      %v842 = vmul.f32 %v586, 0.1
      %v843 = vmul.f32 %v587, 0.1
      %v844 = vmul.f32 %v588, 0.1
      %v845 = vmul.f32 %v589, 0.1
      %v846 = vmul.f32 %v590, 0.1
      %v847 = vmul.f32 %v591, 0.1
      %v848 = vmul.f32 %v592, 0.1
      %v849 = vsel %vm593, %v465, %v721
      %v850 = vsel %vm594, %v466, %v722
      %v851 = vsel %vm595, %v467, %v723
      %v852 = vsel %vm596, %v468, %v724
      %v853 = vsel %vm597, %v469, %v725
      %v854 = vsel %vm598, %v470, %v726
      %v855 = vsel %vm599, %v471, %v727
      %v856 = vsel %vm600, %v472, %v728
      %v857 = vsel %vm601, %v473, %v729
      %v858 = vsel %vm602, %v474, %v730
      %v859 = vsel %vm603, %v475, %v731
      %v860 = vsel %vm604, %v476, %v732
      %v861 = vsel %vm605, %v477, %v733
      %v862 = vsel %vm606, %v478, %v734
      %v863 = vsel %vm607, %v479, %v735
      %v864 = vsel %vm608, %v480, %v736
      %v865 = vsel %vm609, %v481, %v737
      %v866 = vsel %vm610, %v482, %v738
      %v867 = vsel %vm611, %v483, %v739
      %v868 = vsel %vm612, %v484, %v740
      %v869 = vsel %vm613, %v485, %v741
      %v870 = vsel %vm614, %v486, %v742
      %v871 = vsel %vm615, %v487, %v743
      %v872 = vsel %vm616, %v488, %v744
      %v873 = vsel %vm617, %v489, %v745
      %v874 = vsel %vm618, %v490, %v746
      %v875 = vsel %vm619, %v491, %v747
      %v876 = vsel %vm620, %v492, %v748
      %v877 = vsel %vm621, %v493, %v749
      %v878 = vsel %vm622, %v494, %v750
      %v879 = vsel %vm623, %v495, %v751
      %v880 = vsel %vm624, %v496, %v752
      %v881 = vsel %vm625, %v497, %v753
      %v882 = vsel %vm626, %v498, %v754
      %v883 = vsel %vm627, %v499, %v755
      %v884 = vsel %vm628, %v500, %v756
      %v885 = vsel %vm629, %v501, %v757
      %v886 = vsel %vm630, %v502, %v758
      %v887 = vsel %vm631, %v503, %v759
      %v888 = vsel %vm632, %v504, %v760
      %v889 = vsel %vm633, %v505, %v761
      %v890 = vsel %vm634, %v506, %v762
      %v891 = vsel %vm635, %v507, %v763
      %v892 = vsel %vm636, %v508, %v764
      %v893 = vsel %vm637, %v509, %v765
      %v894 = vsel %vm638, %v510, %v766
      %v895 = vsel %vm639, %v511, %v767
      %v896 = vsel %vm640, %v512, %v768
      %v897 = vsel %vm641, %v513, %v769
      %v898 = vsel %vm642, %v514, %v770
      %v899 = vsel %vm643, %v515, %v771
      %v900 = vsel %vm644, %v516, %v772
      %v901 = vsel %vm645, %v517, %v773
      %v902 = vsel %vm646, %v518, %v774
      %v903 = vsel %vm647, %v519, %v775
      %v904 = vsel %vm648, %v520, %v776
      %v905 = vsel %vm649, %v521, %v777
      %v906 = vsel %vm650, %v522, %v778
      %v907 = vsel %vm651, %v523, %v779
      %v908 = vsel %vm652, %v524, %v780
      %v909 = vsel %vm653, %v525, %v781
      %v910 = vsel %vm654, %v526, %v782
      %v911 = vsel %vm655, %v527, %v783
      %v912 = vsel %vm656, %v528, %v784
      %v913 = vsel %vm657, %v529, %v785
      %v914 = vsel %vm658, %v530, %v786
      %v915 = vsel %vm659, %v531, %v787
      %v916 = vsel %vm660, %v532, %v788
      %v917 = vsel %vm661, %v533, %v789
      %v918 = vsel %vm662, %v534, %v790
      %v919 = vsel %vm663, %v535, %v791
      %v920 = vsel %vm664, %v536, %v792
      %v921 = vsel %vm665, %v537, %v793
      %v922 = vsel %vm666, %v538, %v794
      %v923 = vsel %vm667, %v539, %v795
      %v924 = vsel %vm668, %v540, %v796
      %v925 = vsel %vm669, %v541, %v797
      %v926 = vsel %vm670, %v542, %v798
      %v927 = vsel %vm671, %v543, %v799
      %v928 = vsel %vm672, %v544, %v800
      %v929 = vsel %vm673, %v545, %v801
      %v930 = vsel %vm674, %v546, %v802
      %v931 = vsel %vm675, %v547, %v803
      %v932 = vsel %vm676, %v548, %v804
      %v933 = vsel %vm677, %v549, %v805
      %v934 = vsel %vm678, %v550, %v806
      %v935 = vsel %vm679, %v551, %v807
      %v936 = vsel %vm680, %v552, %v808
      %v937 = vsel %vm681, %v553, %v809
      %v938 = vsel %vm682, %v554, %v810
      %v939 = vsel %vm683, %v555, %v811
      %v940 = vsel %vm684, %v556, %v812
      %v941 = vsel %vm685, %v557, %v813
      %v942 = vsel %vm686, %v558, %v814
      %v943 = vsel %vm687, %v559, %v815
      %v944 = vsel %vm688, %v560, %v816
      %v945 = vsel %vm689, %v561, %v817
      %v946 = vsel %vm690, %v562, %v818
      %v947 = vsel %vm691, %v563, %v819
      %v948 = vsel %vm692, %v564, %v820
      %v949 = vsel %vm693, %v565, %v821
      %v950 = vsel %vm694, %v566, %v822
      %v951 = vsel %vm695, %v567, %v823
      %v952 = vsel %vm696, %v568, %v824
      %v953 = vsel %vm697, %v569, %v825
      %v954 = vsel %vm698, %v570, %v826
      %v955 = vsel %vm699, %v571, %v827
      %v956 = vsel %vm700, %v572, %v828
      %v957 = vsel %vm701, %v573, %v829
      %v958 = vsel %vm702, %v574, %v830
      %v959 = vsel %vm703, %v575, %v831
      %v960 = vsel %vm704, %v576, %v832
      %v961 = vsel %vm705, %v577, %v833
      %v962 = vsel %vm706, %v578, %v834
      %v963 = vsel %vm707, %v579, %v835
      %v964 = vsel %vm708, %v580, %v836
      %v965 = vsel %vm709, %v581, %v837
      %v966 = vsel %vm710, %v582, %v838
      %v967 = vsel %vm711, %v583, %v839
      %v968 = vsel %vm712, %v584, %v840
      %v969 = vsel %vm713, %v585, %v841
      %v970 = vsel %vm714, %v586, %v842
      %v971 = vsel %vm715, %v587, %v843
      %v972 = vsel %vm716, %v588, %v844
      %v973 = vsel %vm717, %v589, %v845
      %v974 = vsel %vm718, %v590, %v846
      %v975 = vsel %vm719, %v591, %v847
      %v976 = vsel %vm720, %v592, %v848
      %v977 = vld [vmem:[%s3] sm:$0xff]
      %v978 = vld [vmem:[%s3 + $0x8] sm:$0xff]
      %v979 = vld [vmem:[%s3 + $0x10] sm:$0xff]
      %v980 = vld [vmem:[%s3 + $0x18] sm:$0xff]
      %v981 = vld [vmem:[%s3 + $0x20] sm:$0xff]
      %v982 = vld [vmem:[%s3 + $0x28] sm:$0xff]
      %v983 = vld [vmem:[%s3 + $0x30] sm:$0xff]
      %v984 = vld [vmem:[%s3 + $0x38] sm:$0xff]
      %v985 = vld [vmem:[%s3 + $0x40] sm:$0xff]
      %v986 = vld [vmem:[%s3 + $0x48] sm:$0xff]
      %v987 = vld [vmem:[%s3 + $0x50] sm:$0xff]
      %v988 = vld [vmem:[%s3 + $0x58] sm:$0xff]
      %v989 = vld [vmem:[%s3 + $0x60] sm:$0xff]
      %v990 = vld [vmem:[%s3 + $0x68] sm:$0xff]
      %v991 = vld [vmem:[%s3 + $0x70] sm:$0xff]
      %v992 = vld [vmem:[%s3 + $0x78] sm:$0xff]
      %993 = vmatpush.msra.mxu0 %v992
      %994 = vmatpush.msra.mxu0 %v991
      %995 = vmatpush.msra.mxu0 %v990
      %996 = vmatpush.msra.mxu0 %v989
      %997 = vmatpush.msra.mxu0 %v988
      %998 = vmatpush.msra.mxu0 %v987
      %999 = vmatpush.msra.mxu0 %v986
      %1000 = vmatpush.msra.mxu0 %v985
      %1001 = vmatpush.msra.mxu0 %v984
      %1002 = vmatpush.msra.mxu0 %v983
      %1003 = vmatpush.msra.mxu0 %v982
      %1004 = vmatpush.msra.mxu0 %v981
      %1005 = vmatpush.msra.mxu0 %v980
      %1006 = vmatpush.msra.mxu0 %v979
      %1007 = vmatpush.msra.mxu0 %v978
      %1008 = vmatpush.msra.mxu0 %v977
      %1009 = vmatmul.f32.gmra.mxu0 %v849
      %v1010 = vpop.f32.mrf.mxu0
      %v1011 = vadd.f32 0.0, %v1010
      %1012 = vmatmul.f32.gmra.mxu0 %v850
      %v1013 = vpop.f32.mrf.mxu0
      %v1014 = vadd.f32 0.0, %v1013
      %1015 = vmatmul.f32.gmra.mxu0 %v851
      %v1016 = vpop.f32.mrf.mxu0
      %v1017 = vadd.f32 0.0, %v1016
      %1018 = vmatmul.f32.gmra.mxu0 %v852
      %v1019 = vpop.f32.mrf.mxu0
      %v1020 = vadd.f32 0.0, %v1019
      %1021 = vmatmul.f32.gmra.mxu0 %v853
      %v1022 = vpop.f32.mrf.mxu0
      %v1023 = vadd.f32 0.0, %v1022
      %1024 = vmatmul.f32.gmra.mxu0 %v854
      %v1025 = vpop.f32.mrf.mxu0
      %v1026 = vadd.f32 0.0, %v1025
      %1027 = vmatmul.f32.gmra.mxu0 %v855
      %v1028 = vpop.f32.mrf.mxu0
      %v1029 = vadd.f32 0.0, %v1028
      %1030 = vmatmul.f32.gmra.mxu0 %v856
      %v1031 = vpop.f32.mrf.mxu0
      %v1032 = vadd.f32 0.0, %v1031
      %1033 = vmatmul.f32.gmra.mxu0 %v857
      %v1034 = vpop.f32.mrf.mxu0
      %v1035 = vadd.f32 0.0, %v1034
      %1036 = vmatmul.f32.gmra.mxu0 %v858
      %v1037 = vpop.f32.mrf.mxu0
      %v1038 = vadd.f32 0.0, %v1037
      %1039 = vmatmul.f32.gmra.mxu0 %v859
      %v1040 = vpop.f32.mrf.mxu0
      %v1041 = vadd.f32 0.0, %v1040
      %1042 = vmatmul.f32.gmra.mxu0 %v860
      %v1043 = vpop.f32.mrf.mxu0
      %v1044 = vadd.f32 0.0, %v1043
      %1045 = vmatmul.f32.gmra.mxu0 %v861
      %v1046 = vpop.f32.mrf.mxu0
      %v1047 = vadd.f32 0.0, %v1046
      %1048 = vmatmul.f32.gmra.mxu0 %v862
      %v1049 = vpop.f32.mrf.mxu0
      %v1050 = vadd.f32 0.0, %v1049
      %1051 = vmatmul.f32.gmra.mxu0 %v863
      %v1052 = vpop.f32.mrf.mxu0
      %v1053 = vadd.f32 0.0, %v1052
      %1054 = vmatmul.f32.gmra.mxu0 %v864
      %v1055 = vpop.f32.mrf.mxu0
      %v1056 = vadd.f32 0.0, %v1055
      %1057 = vmatmul.f32.gmra.mxu0 %v865
      %v1058 = vpop.f32.mrf.mxu0
      %v1059 = vadd.f32 0.0, %v1058
      %1060 = vmatmul.f32.gmra.mxu0 %v866
      %v1061 = vpop.f32.mrf.mxu0
      %v1062 = vadd.f32 0.0, %v1061
      %1063 = vmatmul.f32.gmra.mxu0 %v867
      %v1064 = vpop.f32.mrf.mxu0
      %v1065 = vadd.f32 0.0, %v1064
      %1066 = vmatmul.f32.gmra.mxu0 %v868
      %v1067 = vpop.f32.mrf.mxu0
      %v1068 = vadd.f32 0.0, %v1067
      %1069 = vmatmul.f32.gmra.mxu0 %v869
      %v1070 = vpop.f32.mrf.mxu0
      %v1071 = vadd.f32 0.0, %v1070
      %1072 = vmatmul.f32.gmra.mxu0 %v870
      %v1073 = vpop.f32.mrf.mxu0
      %v1074 = vadd.f32 0.0, %v1073
      %1075 = vmatmul.f32.gmra.mxu0 %v871
      %v1076 = vpop.f32.mrf.mxu0
      %v1077 = vadd.f32 0.0, %v1076
      %1078 = vmatmul.f32.gmra.mxu0 %v872
      %v1079 = vpop.f32.mrf.mxu0
      %v1080 = vadd.f32 0.0, %v1079
      %1081 = vmatmul.f32.gmra.mxu0 %v873
      %v1082 = vpop.f32.mrf.mxu0
      %v1083 = vadd.f32 0.0, %v1082
      %1084 = vmatmul.f32.gmra.mxu0 %v874
      %v1085 = vpop.f32.mrf.mxu0
      %v1086 = vadd.f32 0.0, %v1085
      %1087 = vmatmul.f32.gmra.mxu0 %v875
      %v1088 = vpop.f32.mrf.mxu0
      %v1089 = vadd.f32 0.0, %v1088
      %1090 = vmatmul.f32.gmra.mxu0 %v876
      %v1091 = vpop.f32.mrf.mxu0
      %v1092 = vadd.f32 0.0, %v1091
      %1093 = vmatmul.f32.gmra.mxu0 %v877
      %v1094 = vpop.f32.mrf.mxu0
      %v1095 = vadd.f32 0.0, %v1094
      %1096 = vmatmul.f32.gmra.mxu0 %v878
      %v1097 = vpop.f32.mrf.mxu0
      %v1098 = vadd.f32 0.0, %v1097
      %1099 = vmatmul.f32.gmra.mxu0 %v879
      %v1100 = vpop.f32.mrf.mxu0
      %v1101 = vadd.f32 0.0, %v1100
      %1102 = vmatmul.f32.gmra.mxu0 %v880
      %v1103 = vpop.f32.mrf.mxu0
      %v1104 = vadd.f32 0.0, %v1103
      %1105 = vmatmul.f32.gmra.mxu0 %v881
      %v1106 = vpop.f32.mrf.mxu0
      %v1107 = vadd.f32 0.0, %v1106
      %1108 = vmatmul.f32.gmra.mxu0 %v882
      %v1109 = vpop.f32.mrf.mxu0
      %v1110 = vadd.f32 0.0, %v1109
      %1111 = vmatmul.f32.gmra.mxu0 %v883
      %v1112 = vpop.f32.mrf.mxu0
      %v1113 = vadd.f32 0.0, %v1112
      %1114 = vmatmul.f32.gmra.mxu0 %v884
      %v1115 = vpop.f32.mrf.mxu0
      %v1116 = vadd.f32 0.0, %v1115
      %1117 = vmatmul.f32.gmra.mxu0 %v885
      %v1118 = vpop.f32.mrf.mxu0
      %v1119 = vadd.f32 0.0, %v1118
      %1120 = vmatmul.f32.gmra.mxu0 %v886
      %v1121 = vpop.f32.mrf.mxu0
      %v1122 = vadd.f32 0.0, %v1121
      %1123 = vmatmul.f32.gmra.mxu0 %v887
      %v1124 = vpop.f32.mrf.mxu0
      %v1125 = vadd.f32 0.0, %v1124
      %1126 = vmatmul.f32.gmra.mxu0 %v888
      %v1127 = vpop.f32.mrf.mxu0
      %v1128 = vadd.f32 0.0, %v1127
      %1129 = vmatmul.f32.gmra.mxu0 %v889
      %v1130 = vpop.f32.mrf.mxu0
      %v1131 = vadd.f32 0.0, %v1130
      %1132 = vmatmul.f32.gmra.mxu0 %v890
      %v1133 = vpop.f32.mrf.mxu0
      %v1134 = vadd.f32 0.0, %v1133
      %1135 = vmatmul.f32.gmra.mxu0 %v891
      %v1136 = vpop.f32.mrf.mxu0
      %v1137 = vadd.f32 0.0, %v1136
      %1138 = vmatmul.f32.gmra.mxu0 %v892
      %v1139 = vpop.f32.mrf.mxu0
      %v1140 = vadd.f32 0.0, %v1139
      %1141 = vmatmul.f32.gmra.mxu0 %v893
      %v1142 = vpop.f32.mrf.mxu0
      %v1143 = vadd.f32 0.0, %v1142
      %1144 = vmatmul.f32.gmra.mxu0 %v894
      %v1145 = vpop.f32.mrf.mxu0
      %v1146 = vadd.f32 0.0, %v1145
      %1147 = vmatmul.f32.gmra.mxu0 %v895
      %v1148 = vpop.f32.mrf.mxu0
      %v1149 = vadd.f32 0.0, %v1148
      %1150 = vmatmul.f32.gmra.mxu0 %v896
      %v1151 = vpop.f32.mrf.mxu0
      %v1152 = vadd.f32 0.0, %v1151
      %1153 = vmatmul.f32.gmra.mxu0 %v897
      %v1154 = vpop.f32.mrf.mxu0
      %v1155 = vadd.f32 0.0, %v1154
      %1156 = vmatmul.f32.gmra.mxu0 %v898
      %v1157 = vpop.f32.mrf.mxu0
      %v1158 = vadd.f32 0.0, %v1157
      %1159 = vmatmul.f32.gmra.mxu0 %v899
      %v1160 = vpop.f32.mrf.mxu0
      %v1161 = vadd.f32 0.0, %v1160
      %1162 = vmatmul.f32.gmra.mxu0 %v900
      %v1163 = vpop.f32.mrf.mxu0
      %v1164 = vadd.f32 0.0, %v1163
      %1165 = vmatmul.f32.gmra.mxu0 %v901
      %v1166 = vpop.f32.mrf.mxu0
      %v1167 = vadd.f32 0.0, %v1166
      %1168 = vmatmul.f32.gmra.mxu0 %v902
      %v1169 = vpop.f32.mrf.mxu0
      %v1170 = vadd.f32 0.0, %v1169
      %1171 = vmatmul.f32.gmra.mxu0 %v903
      %v1172 = vpop.f32.mrf.mxu0
      %v1173 = vadd.f32 0.0, %v1172
      %1174 = vmatmul.f32.gmra.mxu0 %v904
      %v1175 = vpop.f32.mrf.mxu0
      %v1176 = vadd.f32 0.0, %v1175
      %1177 = vmatmul.f32.gmra.mxu0 %v905
      %v1178 = vpop.f32.mrf.mxu0
      %v1179 = vadd.f32 0.0, %v1178
      %1180 = vmatmul.f32.gmra.mxu0 %v906
      %v1181 = vpop.f32.mrf.mxu0
      %v1182 = vadd.f32 0.0, %v1181
      %1183 = vmatmul.f32.gmra.mxu0 %v907
      %v1184 = vpop.f32.mrf.mxu0
      %v1185 = vadd.f32 0.0, %v1184
      %1186 = vmatmul.f32.gmra.mxu0 %v908
      %v1187 = vpop.f32.mrf.mxu0
      %v1188 = vadd.f32 0.0, %v1187
      %1189 = vmatmul.f32.gmra.mxu0 %v909
      %v1190 = vpop.f32.mrf.mxu0
      %v1191 = vadd.f32 0.0, %v1190
      %1192 = vmatmul.f32.gmra.mxu0 %v910
      %v1193 = vpop.f32.mrf.mxu0
      %v1194 = vadd.f32 0.0, %v1193
      %1195 = vmatmul.f32.gmra.mxu0 %v911
      %v1196 = vpop.f32.mrf.mxu0
      %v1197 = vadd.f32 0.0, %v1196
      %1198 = vmatmul.f32.gmra.mxu0 %v912
      %v1199 = vpop.f32.mrf.mxu0
      %v1200 = vadd.f32 0.0, %v1199
      %1201 = vmatmul.f32.gmra.mxu0 %v913
      %v1202 = vpop.f32.mrf.mxu0
      %v1203 = vadd.f32 0.0, %v1202
      %1204 = vmatmul.f32.gmra.mxu0 %v914
      %v1205 = vpop.f32.mrf.mxu0
      %v1206 = vadd.f32 0.0, %v1205
      %1207 = vmatmul.f32.gmra.mxu0 %v915
      %v1208 = vpop.f32.mrf.mxu0
      %v1209 = vadd.f32 0.0, %v1208
      %1210 = vmatmul.f32.gmra.mxu0 %v916
      %v1211 = vpop.f32.mrf.mxu0
      %v1212 = vadd.f32 0.0, %v1211
      %1213 = vmatmul.f32.gmra.mxu0 %v917
      %v1214 = vpop.f32.mrf.mxu0
      %v1215 = vadd.f32 0.0, %v1214
      %1216 = vmatmul.f32.gmra.mxu0 %v918
      %v1217 = vpop.f32.mrf.mxu0
      %v1218 = vadd.f32 0.0, %v1217
      %1219 = vmatmul.f32.gmra.mxu0 %v919
      %v1220 = vpop.f32.mrf.mxu0
      %v1221 = vadd.f32 0.0, %v1220
      %1222 = vmatmul.f32.gmra.mxu0 %v920
      %v1223 = vpop.f32.mrf.mxu0
      %v1224 = vadd.f32 0.0, %v1223
      %1225 = vmatmul.f32.gmra.mxu0 %v921
      %v1226 = vpop.f32.mrf.mxu0
      %v1227 = vadd.f32 0.0, %v1226
      %1228 = vmatmul.f32.gmra.mxu0 %v922
      %v1229 = vpop.f32.mrf.mxu0
      %v1230 = vadd.f32 0.0, %v1229
      %1231 = vmatmul.f32.gmra.mxu0 %v923
      %v1232 = vpop.f32.mrf.mxu0
      %v1233 = vadd.f32 0.0, %v1232
      %1234 = vmatmul.f32.gmra.mxu0 %v924
      %v1235 = vpop.f32.mrf.mxu0
      %v1236 = vadd.f32 0.0, %v1235
      %1237 = vmatmul.f32.gmra.mxu0 %v925
      %v1238 = vpop.f32.mrf.mxu0
      %v1239 = vadd.f32 0.0, %v1238
      %1240 = vmatmul.f32.gmra.mxu0 %v926
      %v1241 = vpop.f32.mrf.mxu0
      %v1242 = vadd.f32 0.0, %v1241
      %1243 = vmatmul.f32.gmra.mxu0 %v927
      %v1244 = vpop.f32.mrf.mxu0
      %v1245 = vadd.f32 0.0, %v1244
      %1246 = vmatmul.f32.gmra.mxu0 %v928
      %v1247 = vpop.f32.mrf.mxu0
      %v1248 = vadd.f32 0.0, %v1247
      %1249 = vmatmul.f32.gmra.mxu0 %v929
      %v1250 = vpop.f32.mrf.mxu0
      %v1251 = vadd.f32 0.0, %v1250
      %1252 = vmatmul.f32.gmra.mxu0 %v930
      %v1253 = vpop.f32.mrf.mxu0
      %v1254 = vadd.f32 0.0, %v1253
      %1255 = vmatmul.f32.gmra.mxu0 %v931
      %v1256 = vpop.f32.mrf.mxu0
      %v1257 = vadd.f32 0.0, %v1256
      %1258 = vmatmul.f32.gmra.mxu0 %v932
      %v1259 = vpop.f32.mrf.mxu0
      %v1260 = vadd.f32 0.0, %v1259
      %1261 = vmatmul.f32.gmra.mxu0 %v933
      %v1262 = vpop.f32.mrf.mxu0
      %v1263 = vadd.f32 0.0, %v1262
      %1264 = vmatmul.f32.gmra.mxu0 %v934
      %v1265 = vpop.f32.mrf.mxu0
      %v1266 = vadd.f32 0.0, %v1265
      %1267 = vmatmul.f32.gmra.mxu0 %v935
      %v1268 = vpop.f32.mrf.mxu0
      %v1269 = vadd.f32 0.0, %v1268
      %1270 = vmatmul.f32.gmra.mxu0 %v936
      %v1271 = vpop.f32.mrf.mxu0
      %v1272 = vadd.f32 0.0, %v1271
      %1273 = vmatmul.f32.gmra.mxu0 %v937
      %v1274 = vpop.f32.mrf.mxu0
      %v1275 = vadd.f32 0.0, %v1274
      %1276 = vmatmul.f32.gmra.mxu0 %v938
      %v1277 = vpop.f32.mrf.mxu0
      %v1278 = vadd.f32 0.0, %v1277
      %1279 = vmatmul.f32.gmra.mxu0 %v939
      %v1280 = vpop.f32.mrf.mxu0
      %v1281 = vadd.f32 0.0, %v1280
      %1282 = vmatmul.f32.gmra.mxu0 %v940
      %v1283 = vpop.f32.mrf.mxu0
      %v1284 = vadd.f32 0.0, %v1283
      %1285 = vmatmul.f32.gmra.mxu0 %v941
      %v1286 = vpop.f32.mrf.mxu0
      %v1287 = vadd.f32 0.0, %v1286
      %1288 = vmatmul.f32.gmra.mxu0 %v942
      %v1289 = vpop.f32.mrf.mxu0
      %v1290 = vadd.f32 0.0, %v1289
      %1291 = vmatmul.f32.gmra.mxu0 %v943
      %v1292 = vpop.f32.mrf.mxu0
      %v1293 = vadd.f32 0.0, %v1292
      %1294 = vmatmul.f32.gmra.mxu0 %v944
      %v1295 = vpop.f32.mrf.mxu0
      %v1296 = vadd.f32 0.0, %v1295
      %1297 = vmatmul.f32.gmra.mxu0 %v945
      %v1298 = vpop.f32.mrf.mxu0
      %v1299 = vadd.f32 0.0, %v1298
      %1300 = vmatmul.f32.gmra.mxu0 %v946
      %v1301 = vpop.f32.mrf.mxu0
      %v1302 = vadd.f32 0.0, %v1301
      %1303 = vmatmul.f32.gmra.mxu0 %v947
      %v1304 = vpop.f32.mrf.mxu0
      %v1305 = vadd.f32 0.0, %v1304
      %1306 = vmatmul.f32.gmra.mxu0 %v948
      %v1307 = vpop.f32.mrf.mxu0
      %v1308 = vadd.f32 0.0, %v1307
      %1309 = vmatmul.f32.gmra.mxu0 %v949
      %v1310 = vpop.f32.mrf.mxu0
      %v1311 = vadd.f32 0.0, %v1310
      %1312 = vmatmul.f32.gmra.mxu0 %v950
      %v1313 = vpop.f32.mrf.mxu0
      %v1314 = vadd.f32 0.0, %v1313
      %1315 = vmatmul.f32.gmra.mxu0 %v951
      %v1316 = vpop.f32.mrf.mxu0
      %v1317 = vadd.f32 0.0, %v1316
      %1318 = vmatmul.f32.gmra.mxu0 %v952
      %v1319 = vpop.f32.mrf.mxu0
      %v1320 = vadd.f32 0.0, %v1319
      %1321 = vmatmul.f32.gmra.mxu0 %v953
      %v1322 = vpop.f32.mrf.mxu0
      %v1323 = vadd.f32 0.0, %v1322
      %1324 = vmatmul.f32.gmra.mxu0 %v954
      %v1325 = vpop.f32.mrf.mxu0
      %v1326 = vadd.f32 0.0, %v1325
      %1327 = vmatmul.f32.gmra.mxu0 %v955
      %v1328 = vpop.f32.mrf.mxu0
      %v1329 = vadd.f32 0.0, %v1328
      %1330 = vmatmul.f32.gmra.mxu0 %v956
      %v1331 = vpop.f32.mrf.mxu0
      %v1332 = vadd.f32 0.0, %v1331
      %1333 = vmatmul.f32.gmra.mxu0 %v957
      %v1334 = vpop.f32.mrf.mxu0
      %v1335 = vadd.f32 0.0, %v1334
      %1336 = vmatmul.f32.gmra.mxu0 %v958
      %v1337 = vpop.f32.mrf.mxu0
      %v1338 = vadd.f32 0.0, %v1337
      %1339 = vmatmul.f32.gmra.mxu0 %v959
      %v1340 = vpop.f32.mrf.mxu0
      %v1341 = vadd.f32 0.0, %v1340
      %1342 = vmatmul.f32.gmra.mxu0 %v960
      %v1343 = vpop.f32.mrf.mxu0
      %v1344 = vadd.f32 0.0, %v1343
      %1345 = vmatmul.f32.gmra.mxu0 %v961
      %v1346 = vpop.f32.mrf.mxu0
      %v1347 = vadd.f32 0.0, %v1346
      %1348 = vmatmul.f32.gmra.mxu0 %v962
      %v1349 = vpop.f32.mrf.mxu0
      %v1350 = vadd.f32 0.0, %v1349
      %1351 = vmatmul.f32.gmra.mxu0 %v963
      %v1352 = vpop.f32.mrf.mxu0
      %v1353 = vadd.f32 0.0, %v1352
      %1354 = vmatmul.f32.gmra.mxu0 %v964
      %v1355 = vpop.f32.mrf.mxu0
      %v1356 = vadd.f32 0.0, %v1355
      %1357 = vmatmul.f32.gmra.mxu0 %v965
      %v1358 = vpop.f32.mrf.mxu0
      %v1359 = vadd.f32 0.0, %v1358
      %1360 = vmatmul.f32.gmra.mxu0 %v966
      %v1361 = vpop.f32.mrf.mxu0
      %v1362 = vadd.f32 0.0, %v1361
      %1363 = vmatmul.f32.gmra.mxu0 %v967
      %v1364 = vpop.f32.mrf.mxu0
      %v1365 = vadd.f32 0.0, %v1364
      %1366 = vmatmul.f32.gmra.mxu0 %v968
      %v1367 = vpop.f32.mrf.mxu0
      %v1368 = vadd.f32 0.0, %v1367
      %1369 = vmatmul.f32.gmra.mxu0 %v969
      %v1370 = vpop.f32.mrf.mxu0
      %v1371 = vadd.f32 0.0, %v1370
      %1372 = vmatmul.f32.gmra.mxu0 %v970
      %v1373 = vpop.f32.mrf.mxu0
      %v1374 = vadd.f32 0.0, %v1373
      %1375 = vmatmul.f32.gmra.mxu0 %v971
      %v1376 = vpop.f32.mrf.mxu0
      %v1377 = vadd.f32 0.0, %v1376
      %1378 = vmatmul.f32.gmra.mxu0 %v972
      %v1379 = vpop.f32.mrf.mxu0
      %v1380 = vadd.f32 0.0, %v1379
      %1381 = vmatmul.f32.gmra.mxu0 %v973
      %v1382 = vpop.f32.mrf.mxu0
      %v1383 = vadd.f32 0.0, %v1382
      %1384 = vmatmul.f32.gmra.mxu0 %v974
      %v1385 = vpop.f32.mrf.mxu0
      %v1386 = vadd.f32 0.0, %v1385
      %1387 = vmatmul.f32.gmra.mxu0 %v975
      %v1388 = vpop.f32.mrf.mxu0
      %v1389 = vadd.f32 0.0, %v1388
      %1390 = vmatmul.f32.gmra.mxu0 %v976
      %v1391 = vpop.f32.mrf.mxu0
      %v1392 = vadd.f32 0.0, %v1391
      %1393 = vdwg.mxu0
      %v1394 = vtanh.pop %v1011
      %v1395 = vtanh.pop %v1014
      %v1396 = vtanh.pop %v1017
      %v1397 = vtanh.pop %v1020
      %v1398 = vtanh.pop %v1023
      %v1399 = vtanh.pop %v1026
      %v1400 = vtanh.pop %v1029
      %v1401 = vtanh.pop %v1032
      %v1402 = vtanh.pop %v1035
      %v1403 = vtanh.pop %v1038
      %v1404 = vtanh.pop %v1041
      %v1405 = vtanh.pop %v1044
      %v1406 = vtanh.pop %v1047
      %v1407 = vtanh.pop %v1050
      %v1408 = vtanh.pop %v1053
      %v1409 = vtanh.pop %v1056
      %v1410 = vtanh.pop %v1059
      %v1411 = vtanh.pop %v1062
      %v1412 = vtanh.pop %v1065
      %v1413 = vtanh.pop %v1068
      %v1414 = vtanh.pop %v1071
      %v1415 = vtanh.pop %v1074
      %v1416 = vtanh.pop %v1077
      %v1417 = vtanh.pop %v1080
      %v1418 = vtanh.pop %v1083
      %v1419 = vtanh.pop %v1086
      %v1420 = vtanh.pop %v1089
      %v1421 = vtanh.pop %v1092
      %v1422 = vtanh.pop %v1095
      %v1423 = vtanh.pop %v1098
      %v1424 = vtanh.pop %v1101
      %v1425 = vtanh.pop %v1104
      %v1426 = vtanh.pop %v1107
      %v1427 = vtanh.pop %v1110
      %v1428 = vtanh.pop %v1113
      %v1429 = vtanh.pop %v1116
      %v1430 = vtanh.pop %v1119
      %v1431 = vtanh.pop %v1122
      %v1432 = vtanh.pop %v1125
      %v1433 = vtanh.pop %v1128
      %v1434 = vtanh.pop %v1131
      %v1435 = vtanh.pop %v1134
      %v1436 = vtanh.pop %v1137
      %v1437 = vtanh.pop %v1140
      %v1438 = vtanh.pop %v1143
      %v1439 = vtanh.pop %v1146
      %v1440 = vtanh.pop %v1149
      %v1441 = vtanh.pop %v1152
      %v1442 = vtanh.pop %v1155
      %v1443 = vtanh.pop %v1158
      %v1444 = vtanh.pop %v1161
      %v1445 = vtanh.pop %v1164
      %v1446 = vtanh.pop %v1167
      %v1447 = vtanh.pop %v1170
      %v1448 = vtanh.pop %v1173
      %v1449 = vtanh.pop %v1176
      %v1450 = vtanh.pop %v1179
      %v1451 = vtanh.pop %v1182
      %v1452 = vtanh.pop %v1185
      %v1453 = vtanh.pop %v1188
      %v1454 = vtanh.pop %v1191
      %v1455 = vtanh.pop %v1194
      %v1456 = vtanh.pop %v1197
      %v1457 = vtanh.pop %v1200
      %v1458 = vtanh.pop %v1203
      %v1459 = vtanh.pop %v1206
      %v1460 = vtanh.pop %v1209
      %v1461 = vtanh.pop %v1212
      %v1462 = vtanh.pop %v1215
      %v1463 = vtanh.pop %v1218
      %v1464 = vtanh.pop %v1221
      %v1465 = vtanh.pop %v1224
      %v1466 = vtanh.pop %v1227
      %v1467 = vtanh.pop %v1230
      %v1468 = vtanh.pop %v1233
      %v1469 = vtanh.pop %v1236
      %v1470 = vtanh.pop %v1239
      %v1471 = vtanh.pop %v1242
      %v1472 = vtanh.pop %v1245
      %v1473 = vtanh.pop %v1248
      %v1474 = vtanh.pop %v1251
      %v1475 = vtanh.pop %v1254
      %v1476 = vtanh.pop %v1257
      %v1477 = vtanh.pop %v1260
      %v1478 = vtanh.pop %v1263
      %v1479 = vtanh.pop %v1266
      %v1480 = vtanh.pop %v1269
      %v1481 = vtanh.pop %v1272
      %v1482 = vtanh.pop %v1275
      %v1483 = vtanh.pop %v1278
      %v1484 = vtanh.pop %v1281
      %v1485 = vtanh.pop %v1284
      %v1486 = vtanh.pop %v1287
      %v1487 = vtanh.pop %v1290
      %v1488 = vtanh.pop %v1293
      %v1489 = vtanh.pop %v1296
      %v1490 = vtanh.pop %v1299
      %v1491 = vtanh.pop %v1302
      %v1492 = vtanh.pop %v1305
      %v1493 = vtanh.pop %v1308
      %v1494 = vtanh.pop %v1311
      %v1495 = vtanh.pop %v1314
      %v1496 = vtanh.pop %v1317
      %v1497 = vtanh.pop %v1320
      %v1498 = vtanh.pop %v1323
      %v1499 = vtanh.pop %v1326
      %v1500 = vtanh.pop %v1329
      %v1501 = vtanh.pop %v1332
      %v1502 = vtanh.pop %v1335
      %v1503 = vtanh.pop %v1338
      %v1504 = vtanh.pop %v1341
      %v1505 = vtanh.pop %v1344
      %v1506 = vtanh.pop %v1347
      %v1507 = vtanh.pop %v1350
      %v1508 = vtanh.pop %v1353
      %v1509 = vtanh.pop %v1356
      %v1510 = vtanh.pop %v1359
      %v1511 = vtanh.pop %v1362
      %v1512 = vtanh.pop %v1365
      %v1513 = vtanh.pop %v1368
      %v1514 = vtanh.pop %v1371
      %v1515 = vtanh.pop %v1374
      %v1516 = vtanh.pop %v1377
      %v1517 = vtanh.pop %v1380
      %v1518 = vtanh.pop %v1383
      %v1519 = vtanh.pop %v1386
      %v1520 = vtanh.pop %v1389
      %v1521 = vtanh.pop %v1392
      %1522 = vst [vmem:[%s199] sm:$0xff] %v1394
      %1523 = vst [vmem:[%s199 + $0x8] sm:$0xff] %v1395
      %1524 = vst [vmem:[%s199 + $0x10] sm:$0xff] %v1396
      %1525 = vst [vmem:[%s199 + $0x18] sm:$0xff] %v1397
      %1526 = vst [vmem:[%s199 + $0x20] sm:$0xff] %v1398
      %1527 = vst [vmem:[%s199 + $0x28] sm:$0xff] %v1399
      %1528 = vst [vmem:[%s199 + $0x30] sm:$0xff] %v1400
      %1529 = vst [vmem:[%s199 + $0x38] sm:$0xff] %v1401
      %1530 = vst [vmem:[%s199 + $0x40] sm:$0xff] %v1402
      %1531 = vst [vmem:[%s199 + $0x48] sm:$0xff] %v1403
      %1532 = vst [vmem:[%s199 + $0x50] sm:$0xff] %v1404
      %1533 = vst [vmem:[%s199 + $0x58] sm:$0xff] %v1405
      %1534 = vst [vmem:[%s199 + $0x60] sm:$0xff] %v1406
      %1535 = vst [vmem:[%s199 + $0x68] sm:$0xff] %v1407
      %1536 = vst [vmem:[%s199 + $0x70] sm:$0xff] %v1408
      %1537 = vst [vmem:[%s199 + $0x78] sm:$0xff] %v1409
      %1538 = vst [vmem:[%s199 + $0x80] sm:$0xff] %v1410
      %1539 = vst [vmem:[%s199 + $0x88] sm:$0xff] %v1411
      %1540 = vst [vmem:[%s199 + $0x90] sm:$0xff] %v1412
      %1541 = vst [vmem:[%s199 + $0x98] sm:$0xff] %v1413
      %1542 = vst [vmem:[%s199 + $0xa0] sm:$0xff] %v1414
      %1543 = vst [vmem:[%s199 + $0xa8] sm:$0xff] %v1415
      %1544 = vst [vmem:[%s199 + $0xb0] sm:$0xff] %v1416
      %1545 = vst [vmem:[%s199 + $0xb8] sm:$0xff] %v1417
      %1546 = vst [vmem:[%s199 + $0xc0] sm:$0xff] %v1418
      %1547 = vst [vmem:[%s199 + $0xc8] sm:$0xff] %v1419
      %1548 = vst [vmem:[%s199 + $0xd0] sm:$0xff] %v1420
      %1549 = vst [vmem:[%s199 + $0xd8] sm:$0xff] %v1421
      %1550 = vst [vmem:[%s199 + $0xe0] sm:$0xff] %v1422
      %1551 = vst [vmem:[%s199 + $0xe8] sm:$0xff] %v1423
      %1552 = vst [vmem:[%s199 + $0xf0] sm:$0xff] %v1424
      %1553 = vst [vmem:[%s199 + $0xf8] sm:$0xff] %v1425
      %1554 = vst [vmem:[%s199 + $0x100] sm:$0xff] %v1426
      %1555 = vst [vmem:[%s199 + $0x108] sm:$0xff] %v1427
      %1556 = vst [vmem:[%s199 + $0x110] sm:$0xff] %v1428
      %1557 = vst [vmem:[%s199 + $0x118] sm:$0xff] %v1429
      %1558 = vst [vmem:[%s199 + $0x120] sm:$0xff] %v1430
      %1559 = vst [vmem:[%s199 + $0x128] sm:$0xff] %v1431
      %1560 = vst [vmem:[%s199 + $0x130] sm:$0xff] %v1432
      %1561 = vst [vmem:[%s199 + $0x138] sm:$0xff] %v1433
      %1562 = vst [vmem:[%s199 + $0x140] sm:$0xff] %v1434
      %1563 = vst [vmem:[%s199 + $0x148] sm:$0xff] %v1435
      %1564 = vst [vmem:[%s199 + $0x150] sm:$0xff] %v1436
      %1565 = vst [vmem:[%s199 + $0x158] sm:$0xff] %v1437
      %1566 = vst [vmem:[%s199 + $0x160] sm:$0xff] %v1438
      %1567 = vst [vmem:[%s199 + $0x168] sm:$0xff] %v1439
      %1568 = vst [vmem:[%s199 + $0x170] sm:$0xff] %v1440
      %1569 = vst [vmem:[%s199 + $0x178] sm:$0xff] %v1441
      %1570 = vst [vmem:[%s199 + $0x180] sm:$0xff] %v1442
      %1571 = vst [vmem:[%s199 + $0x188] sm:$0xff] %v1443
      %1572 = vst [vmem:[%s199 + $0x190] sm:$0xff] %v1444
      %1573 = vst [vmem:[%s199 + $0x198] sm:$0xff] %v1445
      %1574 = vst [vmem:[%s199 + $0x1a0] sm:$0xff] %v1446
      %1575 = vst [vmem:[%s199 + $0x1a8] sm:$0xff] %v1447
      %1576 = vst [vmem:[%s199 + $0x1b0] sm:$0xff] %v1448
      %1577 = vst [vmem:[%s199 + $0x1b8] sm:$0xff] %v1449
      %1578 = vst [vmem:[%s199 + $0x1c0] sm:$0xff] %v1450
      %1579 = vst [vmem:[%s199 + $0x1c8] sm:$0xff] %v1451
      %1580 = vst [vmem:[%s199 + $0x1d0] sm:$0xff] %v1452
      %1581 = vst [vmem:[%s199 + $0x1d8] sm:$0xff] %v1453
      %1582 = vst [vmem:[%s199 + $0x1e0] sm:$0xff] %v1454
      %1583 = vst [vmem:[%s199 + $0x1e8] sm:$0xff] %v1455
      %1584 = vst [vmem:[%s199 + $0x1f0] sm:$0xff] %v1456
      %1585 = vst [vmem:[%s199 + $0x1f8] sm:$0xff] %v1457
      %1586 = vst [vmem:[%s199 + $0x200] sm:$0xff] %v1458
      %1587 = vst [vmem:[%s199 + $0x208] sm:$0xff] %v1459
      %1588 = vst [vmem:[%s199 + $0x210] sm:$0xff] %v1460
      %1589 = vst [vmem:[%s199 + $0x218] sm:$0xff] %v1461
      %1590 = vst [vmem:[%s199 + $0x220] sm:$0xff] %v1462
      %1591 = vst [vmem:[%s199 + $0x228] sm:$0xff] %v1463
      %1592 = vst [vmem:[%s199 + $0x230] sm:$0xff] %v1464
      %1593 = vst [vmem:[%s199 + $0x238] sm:$0xff] %v1465
      %1594 = vst [vmem:[%s199 + $0x240] sm:$0xff] %v1466
      %1595 = vst [vmem:[%s199 + $0x248] sm:$0xff] %v1467
      %1596 = vst [vmem:[%s199 + $0x250] sm:$0xff] %v1468
      %1597 = vst [vmem:[%s199 + $0x258] sm:$0xff] %v1469
      %1598 = vst [vmem:[%s199 + $0x260] sm:$0xff] %v1470
      %1599 = vst [vmem:[%s199 + $0x268] sm:$0xff] %v1471
      %1600 = vst [vmem:[%s199 + $0x270] sm:$0xff] %v1472
      %1601 = vst [vmem:[%s199 + $0x278] sm:$0xff] %v1473
      %1602 = vst [vmem:[%s199 + $0x280] sm:$0xff] %v1474
      %1603 = vst [vmem:[%s199 + $0x288] sm:$0xff] %v1475
      %1604 = vst [vmem:[%s199 + $0x290] sm:$0xff] %v1476
      %1605 = vst [vmem:[%s199 + $0x298] sm:$0xff] %v1477
      %1606 = vst [vmem:[%s199 + $0x2a0] sm:$0xff] %v1478
      %1607 = vst [vmem:[%s199 + $0x2a8] sm:$0xff] %v1479
      %1608 = vst [vmem:[%s199 + $0x2b0] sm:$0xff] %v1480
      %1609 = vst [vmem:[%s199 + $0x2b8] sm:$0xff] %v1481
      %1610 = vst [vmem:[%s199 + $0x2c0] sm:$0xff] %v1482
      %1611 = vst [vmem:[%s199 + $0x2c8] sm:$0xff] %v1483
      %1612 = vst [vmem:[%s199 + $0x2d0] sm:$0xff] %v1484
      %1613 = vst [vmem:[%s199 + $0x2d8] sm:$0xff] %v1485
      %1614 = vst [vmem:[%s199 + $0x2e0] sm:$0xff] %v1486
      %1615 = vst [vmem:[%s199 + $0x2e8] sm:$0xff] %v1487
      %1616 = vst [vmem:[%s199 + $0x2f0] sm:$0xff] %v1488
      %1617 = vst [vmem:[%s199 + $0x2f8] sm:$0xff] %v1489
      %1618 = vst [vmem:[%s199 + $0x300] sm:$0xff] %v1490
      %1619 = vst [vmem:[%s199 + $0x308] sm:$0xff] %v1491
      %1620 = vst [vmem:[%s199 + $0x310] sm:$0xff] %v1492
      %1621 = vst [vmem:[%s199 + $0x318] sm:$0xff] %v1493
      %1622 = vst [vmem:[%s199 + $0x320] sm:$0xff] %v1494
      %1623 = vst [vmem:[%s199 + $0x328] sm:$0xff] %v1495
      %1624 = vst [vmem:[%s199 + $0x330] sm:$0xff] %v1496
      %1625 = vst [vmem:[%s199 + $0x338] sm:$0xff] %v1497
      %1626 = vst [vmem:[%s199 + $0x340] sm:$0xff] %v1498
      %1627 = vst [vmem:[%s199 + $0x348] sm:$0xff] %v1499
      %1628 = vst [vmem:[%s199 + $0x350] sm:$0xff] %v1500
      %1629 = vst [vmem:[%s199 + $0x358] sm:$0xff] %v1501
      %1630 = vst [vmem:[%s199 + $0x360] sm:$0xff] %v1502
      %1631 = vst [vmem:[%s199 + $0x368] sm:$0xff] %v1503
      %1632 = vst [vmem:[%s199 + $0x370] sm:$0xff] %v1504
      %1633 = vst [vmem:[%s199 + $0x378] sm:$0xff] %v1505
      %1634 = vst [vmem:[%s199 + $0x380] sm:$0xff] %v1506
      %1635 = vst [vmem:[%s199 + $0x388] sm:$0xff] %v1507
      %1636 = vst [vmem:[%s199 + $0x390] sm:$0xff] %v1508
      %1637 = vst [vmem:[%s199 + $0x398] sm:$0xff] %v1509
      %1638 = vst [vmem:[%s199 + $0x3a0] sm:$0xff] %v1510
      %1639 = vst [vmem:[%s199 + $0x3a8] sm:$0xff] %v1511
      %1640 = vst [vmem:[%s199 + $0x3b0] sm:$0xff] %v1512
      %1641 = vst [vmem:[%s199 + $0x3b8] sm:$0xff] %v1513
      %1642 = vst [vmem:[%s199 + $0x3c0] sm:$0xff] %v1514
      %1643 = vst [vmem:[%s199 + $0x3c8] sm:$0xff] %v1515
      %1644 = vst [vmem:[%s199 + $0x3d0] sm:$0xff] %v1516
      %1645 = vst [vmem:[%s199 + $0x3d8] sm:$0xff] %v1517
      %1646 = vst [vmem:[%s199 + $0x3e0] sm:$0xff] %v1518
      %1647 = vst [vmem:[%s199 + $0x3e8] sm:$0xff] %v1519
      %1648 = vst [vmem:[%s199 + $0x3f0] sm:$0xff] %v1520
      %1649 = vst [vmem:[%s199 + $0x3f8] sm:$0xff] %v1521
      %s1650 = smul.u32 128, %s15
      %p1651 = scmp.lt.s32.totalorder %s1650, 255
      %s1652 = scalar_select %p1651, %s1650, 255
      %s1653 = smul.addr %s1652, 8
      %s1654 = scalar_lea.vmem %s4, %s1653
      // Predicated region
      $region37: #{decoder_forward_pallas.9} parent=35 // pred_check
        %p1655 = pneg %p122
      $region38: #{decoder_forward_pallas.9} parent=35 // pred_check_branch
        %1657 = sbr.rel (%p1655) target = $region40
      $region39: #{decoder_forward_pallas.9} parent=35 // pred_region
        %s1658 = smul.u32 128, %s15
      $region40: #{decoder_forward_pallas.9} parent=35 // pred_fallthru
        _
    $region36: #{decoder_forward_pallas.9} parent=5 // pred_fallthru
      _
    %p1659 = scmp.le.s32.totalorder 2, %s10
    // Predicated region
    $region41: #{decoder_forward_pallas.9} parent=5 // pred_check
      %p1660 = pneg %p1659
    $region42: #{decoder_forward_pallas.9} parent=5 // pred_check_branch
      %1662 = sbr.rel (%p1660) target = $region44
    $region43: #{decoder_forward_pallas.9} parent=5 // pred_region
      %s1663 = ssub.s32 %s10, 2
      // Predicated region
      $region45: #{decoder_forward_pallas.9} parent=43 // pred_check
        %p1664 = pneg %p128
      $region46: #{decoder_forward_pallas.9} parent=43 // pred_check_branch
        %1666 = sbr.rel (%p1664) target = $region48
      $region47: #{decoder_forward_pallas.9} parent=43 // pred_region
        %s1667 = smul.u32 128, %s16
        %p1668 = scmp.lt.s32.totalorder %s1667, 255
        %s1669 = scalar_select %p1668, %s1667, 255
        %s1670 = smul.addr %s1669, 8
        %s1671 = scalar_lea.vmem %s4, %s1670
      $region48: #{decoder_forward_pallas.9} parent=43 // pred_fallthru
        _
    $region44: #{decoder_forward_pallas.9} parent=5 // pred_fallthru
      _
  $region6: #{decoder_forward_pallas.9} parent=0 // loop_footer
    %s14 = sadd.s32 1, %s10
  $region7: #{decoder_forward_pallas.9} parent=0 // loop_footer_branch
    %9 = sbr.rel target = $region3
  $region8: #{decoder_forward_pallas.9} parent=0 // loop_exit
    _

</llo_original>
